<compile_context>
chip_gen: v7x
topology: tpu7x:2x2x1
jax: 0.10.0
libtpu: 0.0.40
codegen_flags: <defaults>
</compile_context>

<pallas_src>
import functools
import math

import jax
import jax.numpy as jnp
from jax.experimental import pallas as pl
from jax.experimental.pallas import tpu as pltpu


# ----------------------------------------------------------------------------
# helpers
# ----------------------------------------------------------------------------

def _round_up(x, m):
    return ((x + m - 1) // m) * m


def _choose_row_tile(M, cap):
    """Pick a sublane(8)-aligned row tile; prefer one that divides M (no pad)."""
    cap = min(cap, _round_up(M, 8))
    for t in range(cap, 7, -8):
        if M % t == 0:
            return t, M
    return cap, _round_up(M, cap)


# ----------------------------------------------------------------------------
# Pallas kernels
# ----------------------------------------------------------------------------

def _mm_kernel(a_ref, b_ref, scale_ref, shift_ref, bias_ref, o_ref, acc_ref,
               *, fuse_in):
    """out = [relu(a*scale+shift)] @ b + bias, K-tiled, f32 accumulate on MXU."""
    k = pl.program_id(2)

    @pl.when(k == 0)
    def _():
        acc_ref[...] = jnp.zeros_like(acc_ref)

    a = a_ref[...]                                           # (tm, tk) bf16
    if fuse_in:
        a32 = a.astype(jnp.float32) * scale_ref[...] + shift_ref[...]
        a = jnp.maximum(a32, 0.0).astype(jnp.bfloat16)       # fused BN + ReLU
    acc_ref[...] += jnp.dot(a, b_ref[...], preferred_element_type=jnp.float32)

    @pl.when(k == pl.num_programs(2) - 1)
    def _():
        o_ref[...] = (acc_ref[...] + bias_ref[...]).astype(o_ref.dtype)


def _bn_stats_kernel(x_ref, gamma_ref, beta_ref, scale_ref, shift_ref,
                     sum_sc, ssq_sc, *, count, eps):
    """Per-channel batch stats over an M-tiled reduction; emit (scale, shift)."""
    i = pl.program_id(0)

    @pl.when(i == 0)
    def _():
        sum_sc[...] = jnp.zeros_like(sum_sc)
        ssq_sc[...] = jnp.zeros_like(ssq_sc)

    x = x_ref[...].astype(jnp.float32)                       # (tm, C)
    sum_sc[...] += jnp.sum(x, axis=0, keepdims=True)
    ssq_sc[...] += jnp.sum(x * x, axis=0, keepdims=True)

    @pl.when(i == pl.num_programs(0) - 1)
    def _():
        inv_n = 1.0 / count
        mean = sum_sc[...] * inv_n
        var = jnp.maximum(ssq_sc[...] * inv_n - mean * mean, 0.0)
        inv = jax.lax.rsqrt(var + eps)
        g = gamma_ref[...] * inv
        scale_ref[...] = g
        shift_ref[...] = beta_ref[...] - mean * g


def _affine_relu_kernel(x_ref, scale_ref, shift_ref, o_ref):
    y = x_ref[...].astype(jnp.float32) * scale_ref[...] + shift_ref[...]
    o_ref[...] = jnp.maximum(y, 0.0).astype(o_ref.dtype)


def _pool_reduce_kernel(s_ref, o_ref, *, op, inv_k):
    x = s_ref[...].astype(jnp.float32)                       # (Kw, tm, C)
    if op == "max":
        r = jnp.max(x, axis=0)
    else:
        r = jnp.sum(x, axis=0) * inv_k
    o_ref[...] = r.astype(o_ref.dtype)


def _global_pool_bn_kernel(x_ref, scale_ref, shift_ref, o_ref, *, inv_hw):
    # fused norm5-affine + ReLU + global average pool
    x = x_ref[...].astype(jnp.float32)                       # (N, HW, C)
    y = jnp.maximum(x * scale_ref[...][None] + shift_ref[...][None], 0.0)
    o_ref[...] = jnp.sum(y, axis=1) * inv_hw                 # (N, C) f32


# ----------------------------------------------------------------------------
# wrappers
# ----------------------------------------------------------------------------

def pallas_matmul(a, b, *, in_scale=None, in_shift=None, bias=None,
                  out_dtype=jnp.bfloat16):
    """(M, K) @ (K, N) [+ bias] with optional fused input affine+ReLU on A."""
    M, K = a.shape
    K2, Ncols = b.shape
    assert K == K2
    a = a.astype(jnp.bfloat16)
    b = b.astype(jnp.bfloat16)

    # Lane-pad output columns to a multiple of 128 (dense vst, full MXU cols).
    Np = _round_up(max(Ncols, 128), 128)
    if Np != Ncols:
        b = jnp.pad(b, ((0, 0), (0, Np - Ncols)))

    # K tiling (bounded VMEM working set; pad only when K is large & ragged).
    if K <= 2048:
        tk, Kp = K, K
    else:
        tk = 512
        Kp = _round_up(K, tk)
    if Kp != K:
        a = jnp.pad(a, ((0, 0), (0, Kp - K)))
        b = jnp.pad(b, ((0, Kp - K), (0, 0)))

    # M tiling (prefer a divisor of M to avoid any host pad).
    tm, Mp = _choose_row_tile(M, 256)
    if Mp != M:
        a = jnp.pad(a, ((0, Mp - M), (0, 0)))

    tn = 256 if Np % 256 == 0 else 128

    fuse_in = in_scale is not None
    if fuse_in:
        sc = in_scale.reshape(1, K).astype(jnp.float32)
        sh = in_shift.reshape(1, K).astype(jnp.float32)
        if Kp != K:
            sc = jnp.pad(sc, ((0, 0), (0, Kp - K)))
            sh = jnp.pad(sh, ((0, 0), (0, Kp - K)))
    else:
        sc = jnp.zeros((1, Kp), jnp.float32)
        sh = jnp.zeros((1, Kp), jnp.float32)

    if bias is None:
        bias_p = jnp.zeros((1, Np), jnp.float32)
    else:
        bias_p = bias.reshape(1, Ncols).astype(jnp.float32)
        if Np != Ncols:
            bias_p = jnp.pad(bias_p, ((0, 0), (0, Np - Ncols)))

    grid = (Mp // tm, Np // tn, Kp // tk)
    out = pl.pallas_call(
        functools.partial(_mm_kernel, fuse_in=fuse_in),
        out_shape=jax.ShapeDtypeStruct((Mp, Np), out_dtype),
        grid=grid,
        in_specs=[
            pl.BlockSpec((tm, tk), lambda i, j, k: (i, k)),
            pl.BlockSpec((tk, tn), lambda i, j, k: (k, j)),
            pl.BlockSpec((1, tk), lambda i, j, k: (0, k)),
            pl.BlockSpec((1, tk), lambda i, j, k: (0, k)),
            pl.BlockSpec((1, tn), lambda i, j, k: (0, j)),
        ],
        out_specs=pl.BlockSpec((tm, tn), lambda i, j, k: (i, j)),
        scratch_shapes=[pltpu.VMEM((tm, tn), jnp.float32)],
        compiler_params=pltpu.CompilerParams(
            dimension_semantics=("parallel", "parallel", "arbitrary")),
    )(a, b, sc, sh, bias_p)
    return out[:M, :Ncols]


def pallas_bn_stats(x2d, gamma, beta, eps=1e-5):
    """Training-mode BN batch stats -> per-channel (scale, shift), each (1, C)."""
    M, C = x2d.shape
    tm, Mp = _choose_row_tile(M, 512)
    xp = x2d if Mp == M else jnp.pad(x2d, ((0, Mp - M), (0, 0)))  # zero rows: sums unaffected
    kern = functools.partial(_bn_stats_kernel, count=float(M), eps=eps)
    scale, shift = pl.pallas_call(
        kern,
        out_shape=(jax.ShapeDtypeStruct((1, C), jnp.float32),
                   jax.ShapeDtypeStruct((1, C), jnp.float32)),
        grid=(Mp // tm,),
        in_specs=[
            pl.BlockSpec((tm, C), lambda i: (i, 0)),
            pl.BlockSpec((1, C), lambda i: (0, 0)),
            pl.BlockSpec((1, C), lambda i: (0, 0)),
        ],
        out_specs=(pl.BlockSpec((1, C), lambda i: (0, 0)),
                   pl.BlockSpec((1, C), lambda i: (0, 0))),
        scratch_shapes=[pltpu.VMEM((1, C), jnp.float32),
                        pltpu.VMEM((1, C), jnp.float32)],
        compiler_params=pltpu.CompilerParams(
            dimension_semantics=("arbitrary",)),
    )(xp, gamma.reshape(1, C).astype(jnp.float32),
      beta.reshape(1, C).astype(jnp.float32))
    return scale, shift


def pallas_affine_relu(x2d, scale, shift):
    M, C = x2d.shape
    tm, Mp = _choose_row_tile(M, 512)
    xp = x2d if Mp == M else jnp.pad(x2d, ((0, Mp - M), (0, 0)))
    out = pl.pallas_call(
        _affine_relu_kernel,
        out_shape=jax.ShapeDtypeStruct((Mp, C), jnp.bfloat16),
        grid=(Mp // tm,),
        in_specs=[
            pl.BlockSpec((tm, C), lambda i: (i, 0)),
            pl.BlockSpec((1, C), lambda i: (0, 0)),
            pl.BlockSpec((1, C), lambda i: (0, 0)),
        ],
        out_specs=pl.BlockSpec((tm, C), lambda i: (i, 0)),
        compiler_params=pltpu.CompilerParams(
            dimension_semantics=("parallel",)),
    )(xp, scale, shift)
    return out[:M]


def pallas_pool_reduce(stacked, op):
    """Reduce the leading window axis of (Kw, M, C), M-tiled."""
    Kw, M, C = stacked.shape
    tm, Mp = _choose_row_tile(M, 512)
    if Mp != M:
        stacked = jnp.pad(stacked, ((0, 0), (0, Mp - M), (0, 0)))
    kern = functools.partial(_pool_reduce_kernel, op=op, inv_k=1.0 / Kw)
    out = pl.pallas_call(
        kern,
        out_shape=jax.ShapeDtypeStruct((Mp, C), jnp.bfloat16),
        grid=(Mp // tm,),
        in_specs=[pl.BlockSpec((Kw, tm, C), lambda i: (0, i, 0))],
        out_specs=pl.BlockSpec((tm, C), lambda i: (i, 0)),
        compiler_params=pltpu.CompilerParams(
            dimension_semantics=("parallel",)),
    )(stacked)
    return out[:M]


def pallas_global_pool_bn_relu(x_nhwc, scale, shift):
    """relu(x*scale+shift) averaged over HxW -> (N, C), fused in one kernel."""
    N, H, W, C = x_nhwc.shape
    x = x_nhwc.reshape(N, H * W, C)
    kern = functools.partial(_global_pool_bn_kernel, inv_hw=1.0 / (H * W))
    return pl.pallas_call(
        kern,
        out_shape=jax.ShapeDtypeStruct((N, C), jnp.float32),
        grid=(1,),
        in_specs=[
            pl.BlockSpec((N, H * W, C), lambda i: (0, 0, 0)),
            pl.BlockSpec((1, C), lambda i: (0, 0)),
            pl.BlockSpec((1, C), lambda i: (0, 0)),
        ],
        out_specs=pl.BlockSpec((N, C), lambda i: (0, 0)),
    )(x, scale, shift)


# ----------------------------------------------------------------------------
# glue: im2col / conv / pool wrappers (data rearrangement only)
# ----------------------------------------------------------------------------

def _im2col(x, kh, kw, stride, pad):
    N, H, W, C = x.shape
    Ho = (H + 2 * pad - kh) // stride + 1
    Wo = (W + 2 * pad - kw) // stride + 1
    xp = jnp.pad(x, ((0, 0), (pad, pad), (pad, pad), (0, 0)))
    cols = []
    for i in range(kh):
        for j in range(kw):
            cols.append(
                xp[:, i:i + stride * (Ho - 1) + 1:stride,
                      j:j + stride * (Wo - 1) + 1:stride, :])
    patches = jnp.stack(cols, axis=3)                        # (N, Ho, Wo, kh*kw, C)
    return patches.reshape(N * Ho * Wo, kh * kw * C), Ho, Wo


def conv2d(x_nhwc, w_oihw, stride, pad, in_scale=None, in_shift=None):
    Cout, Cin, KH, KW = w_oihw.shape
    N = x_nhwc.shape[0]
    if KH == 1 and KW == 1 and stride == 1 and pad == 0:
        _, H, W, C = x_nhwc.shape
        A, Ho, Wo = x_nhwc.reshape(N * H * W, C), H, W
    else:
        # Fused BN-prologue unsupported here: zero-padding must apply to the
        # BN output (PyTorch order is norm -> relu -> conv with zero pad).
        assert in_scale is None and in_shift is None
        A, Ho, Wo = _im2col(x_nhwc, KH, KW, stride, pad)
    w_mat = jnp.transpose(w_oihw, (2, 3, 1, 0)).reshape(KH * KW * Cin, Cout)
    out = pallas_matmul(A, w_mat, in_scale=in_scale, in_shift=in_shift)
    return out.reshape(N, Ho, Wo, Cout)


def maxpool_3x3_s2_p1(x):
    # Input is post-ReLU (>= 0), so zero padding is equivalent to -inf padding.
    N, H, W, C = x.shape
    Ho = (H + 2 - 3) // 2 + 1
    Wo = (W + 2 - 3) // 2 + 1
    xp = jnp.pad(x, ((0, 0), (1, 1), (1, 1), (0, 0)))
    slices = [xp[:, i:i + 2 * (Ho - 1) + 1:2, j:j + 2 * (Wo - 1) + 1:2, :]
              for i in range(3) for j in range(3)]
    stacked = jnp.stack(slices, 0).reshape(9, N * Ho * Wo, C)
    return pallas_pool_reduce(stacked, "max").reshape(N, Ho, Wo, C)


def avgpool_2x2_s2(x):
    N, H, W, C = x.shape
    Ho, Wo = H // 2, W // 2
    x = x[:, :2 * Ho, :2 * Wo, :]                            # floor (PyTorch AvgPool2d(2,2))
    slices = [x[:, i::2, j::2, :] for i in range(2) for j in range(2)]
    stacked = jnp.stack(slices, 0).reshape(4, N * Ho * Wo, C)
    return pallas_pool_reduce(stacked, "mean").reshape(N, Ho, Wo, C)


def _bn_stats_nhwc(x_nhwc, gamma, beta):
    N, H, W, C = x_nhwc.shape
    return pallas_bn_stats(x_nhwc.reshape(N * H * W, C), gamma, beta)


def _affine_relu_nhwc(x_nhwc, scale, shift):
    N, H, W, C = x_nhwc.shape
    return pallas_affine_relu(x_nhwc.reshape(N * H * W, C), scale, shift
                              ).reshape(N, H, W, C)


# ----------------------------------------------------------------------------
# parameter construction (mirrors module __init__ shapes / inits)
# ----------------------------------------------------------------------------

def init_params(key, growth_rate, block_config, num_init_features, bn_size,
                num_classes):
    keys = iter(jax.random.split(key, 256))

    def conv_w(cout, cin, kh, kw):
        fan_in = cin * kh * kw
        return (jax.random.normal(next(keys), (cout, cin, kh, kw), jnp.float32)
                * math.sqrt(2.0 / fan_in))                   # kaiming_normal_

    def bn_p(c):
        return (jnp.ones((c,), jnp.float32), jnp.zeros((c,), jnp.float32))

    params = {}
    params["conv0"] = conv_w(num_init_features, 3, 7, 7)
    params["norm0"] = bn_p(num_init_features)

    nf = num_init_features
    blocks, transitions = [], []
    for i, num_layers in enumerate(block_config):
        layers = []
        for l in range(num_layers):
            cin = nf + l * growth_rate
            layers.append(dict(
                norm1=bn_p(cin),
                conv1=conv_w(bn_size * growth_rate, cin, 1, 1),
                norm2=bn_p(bn_size * growth_rate),
                conv2=conv_w(growth_rate, bn_size * growth_rate, 3, 3),
            ))
        blocks.append(layers)
        nf = nf + num_layers * growth_rate
        if i != len(block_config) - 1:
            transitions.append(dict(norm=bn_p(nf), conv=conv_w(nf // 2, nf, 1, 1)))
            nf = nf // 2
    params["blocks"] = blocks
    params["transitions"] = transitions
    params["norm5"] = bn_p(nf)

    bound = 1.0 / math.sqrt(nf)
    params["fc_w"] = jax.random.uniform(next(keys), (num_classes, nf),
                                        jnp.float32, -bound, bound)
    params["fc_b"] = jnp.zeros((num_classes,), jnp.float32)  # constant_(bias, 0)
    return params


# ----------------------------------------------------------------------------
# DenseNet forward
# ----------------------------------------------------------------------------

def densenet_forward(params, x_nchw):
    x = jnp.transpose(x_nchw, (0, 2, 3, 1)).astype(jnp.bfloat16)   # NCHW -> NHWC

    # features.conv0 / norm0 / relu0 / pool0
    x = conv2d(x, params["conv0"], stride=2, pad=3)
    s0, t0 = _bn_stats_nhwc(x, *params["norm0"])
    x = _affine_relu_nhwc(x, s0, t0)
    x = maxpool_3x3_s2_p1(x)

    n_blocks = len(params["blocks"])
    for bi, layers in enumerate(params["blocks"]):
        feats = [x]
        for layer in layers:
            cat = jnp.concatenate(feats, axis=-1)            # torch.cat(inputs, 1)
            s1, t1 = _bn_stats_nhwc(cat, *layer["norm1"])
            # norm1 + relu1 fused into the 1x1 conv1 matmul (no materialized BN output)
            bott = conv2d(cat, layer["conv1"], stride=1, pad=0,
                          in_scale=s1, in_shift=t1)
            s2, t2 = _bn_stats_nhwc(bott, *layer["norm2"])
            h = _affine_relu_nhwc(bott, s2, t2)              # norm2 + relu2
            new = conv2d(h, layer["conv2"], stride=1, pad=1)  # 3x3 conv
            feats.append(new)
        x = jnp.concatenate(feats, axis=-1)
        if bi != n_blocks - 1:
            tr = params["transitions"][bi]
            st, tt = _bn_stats_nhwc(x, *tr["norm"])
            # transition norm + relu fused into its 1x1 conv
            x = conv2d(x, tr["conv"], stride=1, pad=0, in_scale=st, in_shift=tt)
            x = avgpool_2x2_s2(x)                            # AvgPool2d(2, 2)

    # norm5 + F.relu + adaptive_avg_pool2d(1,1) fused; then classifier
    s5, t5 = _bn_stats_nhwc(x, *params["norm5"])
    pooled = pallas_global_pool_bn_relu(x, s5, t5)           # (N, C) f32
    logits = pallas_matmul(pooled, params["fc_w"].T, bias=params["fc_b"],
                           out_dtype=jnp.float32)
    return logits


# ----------------------------------------------------------------------------
# main
# ----------------------------------------------------------------------------

if __name__ == "__main__":
    key = jax.random.PRNGKey(0)
    k_param, k_data = jax.random.split(key)

    # Small DenseNet-BC config (same architecture, small hyper-parameters)
    GROWTH_RATE = 8
    BLOCK_CONFIG = (2, 2)
    NUM_INIT_FEATURES = 16
    BN_SIZE = 2
    NUM_CLASSES = 10

    params = init_params(k_param, GROWTH_RATE, BLOCK_CONFIG,
                         NUM_INIT_FEATURES, BN_SIZE, NUM_CLASSES)

    # PyTorch-convention NCHW input: batch=2, channels=3, 32x32 spatial
    x = jax.random.normal(k_data, (2, 3, 32, 32), jnp.float32)

    fwd = jax.jit(densenet_forward)
    logits = jax.block_until_ready(fwd(params, x))
    assert logits.shape == (2, NUM_CLASSES)
    assert bool(jnp.all(jnp.isfinite(logits)))
    print("KERNEL_OK")
</pallas_src>

<mosaic_0001>
module attributes {stable_mosaic.version = 11 : i64} {
  func.func @_mm_kernel(%arg0: i32, %arg1: i32, %arg2: i32, %arg3: memref<256x147xbf16, #tpu.memory_space<vmem>>, %arg4: memref<147x128xbf16, #tpu.memory_space<vmem>>, %arg5: memref<1x147xf32, #tpu.memory_space<vmem>>, %arg6: memref<1x147xf32, #tpu.memory_space<vmem>>, %arg7: memref<1x128xf32, #tpu.memory_space<vmem>>, %arg8: memref<256x128xbf16, #tpu.memory_space<vmem>>, %arg9: memref<256x128xf32, #tpu.memory_space<vmem>>) attributes {dimension_semantics = [#tpu.dimension_semantics<parallel>, #tpu.dimension_semantics<parallel>, #tpu.dimension_semantics<arbitrary>], iteration_bounds = array<i64: 2, 1, 1>, scalar_prefetch = 0 : i64, scratch_operands = 1 : i64, tpu.core_type = #tpu.core_type<tc>, window_params = [{transform_indices = @transform_0, window_bounds = array<i64: 256, 147>}, {transform_indices = @transform_1, window_bounds = array<i64: 147, 128>}, {transform_indices = @transform_2, window_bounds = array<i64: 1, 147>}, {transform_indices = @transform_3, window_bounds = array<i64: 1, 147>}, {transform_indices = @transform_4, window_bounds = array<i64: 1, 128>}, {transform_indices = @transform_5, window_bounds = array<i64: 256, 128>}]} {
    %c0_i32 = arith.constant 0 : i32
    %0 = arith.cmpi eq, %arg2, %c0_i32 : i32
    %1 = arith.extui %0 : i1 to i32
    %c0_i32_0 = arith.constant 0 : i32
    %2 = arith.cmpi ne, %1, %c0_i32_0 : i32
    scf.if %2 {
      %cst_10 = arith.constant 0.000000e+00 : f32
      %12 = vector.broadcast %cst_10 : f32 to vector<256x128xf32>
      %c0_11 = arith.constant 0 : index
      %c0_12 = arith.constant 0 : index
      %13 = vector.load %arg9[%c0_11, %c0_12] : memref<256x128xf32, #tpu.memory_space<vmem>>, vector<256x128xf32>
      tpu.vector_store %arg9[%c0_11, %c0_12], %12 {strides = array<i32>} : memref<256x128xf32, #tpu.memory_space<vmem>>, vector<256x128xf32>,
    } else {
    }
    %c0 = arith.constant 0 : index
    %c0_1 = arith.constant 0 : index
    %3 = vector.load %arg3[%c0, %c0_1] : memref<256x147xbf16, #tpu.memory_space<vmem>>, vector<256x147xbf16>
    %c0_2 = arith.constant 0 : index
    %c0_3 = arith.constant 0 : index
    %4 = vector.load %arg9[%c0_2, %c0_3] : memref<256x128xf32, #tpu.memory_space<vmem>>, vector<256x128xf32>
    %c0_4 = arith.constant 0 : index
    %c0_5 = arith.constant 0 : index
    %5 = vector.load %arg4[%c0_4, %c0_5] : memref<147x128xbf16, #tpu.memory_space<vmem>>, vector<147x128xbf16>
    %cst = arith.constant dense<0.000000e+00> : vector<256x128xf32>
    %6 = tpu.matmul %3, %5, %cst {dimension_numbers = #tpu.dot_dimension_numbers<[1], [0], [0], [1], [0, 0, 1, 1], [], []>} : vector<256x147xbf16>, vector<147x128xbf16>, vector<256x128xf32> -> vector<256x128xf32>
    %7 = arith.addf %4, %6 : vector<256x128xf32>
    %c0_6 = arith.constant 0 : index
    %c0_7 = arith.constant 0 : index
    %8 = vector.load %arg9[%c0_6, %c0_7] : memref<256x128xf32, #tpu.memory_space<vmem>>, vector<256x128xf32>
    tpu.vector_store %arg9[%c0_6, %c0_7], %7 {strides = array<i32>} : memref<256x128xf32, #tpu.memory_space<vmem>>, vector<256x128xf32>,
    %c0_i32_8 = arith.constant 0 : i32
    %9 = arith.cmpi eq, %arg2, %c0_i32_8 : i32
    %10 = arith.extui %9 : i1 to i32
    %c0_i32_9 = arith.constant 0 : i32
    %11 = arith.cmpi ne, %10, %c0_i32_9 : i32
    scf.if %11 {
      %c0_10 = arith.constant 0 : index
      %c0_11 = arith.constant 0 : index
      %12 = vector.load %arg9[%c0_10, %c0_11] : memref<256x128xf32, #tpu.memory_space<vmem>>, vector<256x128xf32>
      %c0_12 = arith.constant 0 : index
      %c0_13 = arith.constant 0 : index
      %13 = vector.load %arg7[%c0_12, %c0_13] : memref<1x128xf32, #tpu.memory_space<vmem>>, vector<1x128xf32>
      %14 = vector.broadcast %13 : vector<1x128xf32> to vector<256x128xf32>
      %15 = arith.addf %12, %14 : vector<256x128xf32>
      %16 = arith.truncf %15 : vector<256x128xf32> to vector<256x128xbf16>
      %c0_14 = arith.constant 0 : index
      %c0_15 = arith.constant 0 : index
      %17 = vector.load %arg8[%c0_14, %c0_15] : memref<256x128xbf16, #tpu.memory_space<vmem>>, vector<256x128xbf16>
      tpu.vector_store %arg8[%c0_14, %c0_15], %16 {strides = array<i32>} : memref<256x128xbf16, #tpu.memory_space<vmem>>, vector<256x128xbf16>,
    } else {
    }
    return
  }
  func.func @transform_0(%arg0: i32, %arg1: i32, %arg2: i32) -> (i32, i32) {
    %c0_i32 = arith.constant 0 : i32
    return %arg0, %arg2 : i32, i32
  }
  func.func @transform_1(%arg0: i32, %arg1: i32, %arg2: i32) -> (i32, i32) {
    %c0_i32 = arith.constant 0 : i32
    return %arg2, %arg1 : i32, i32
  }
  func.func @transform_2(%arg0: i32, %arg1: i32, %arg2: i32) -> (i32, i32) {
    %c0_i32 = arith.constant 0 : i32
    %c0_i32_0 = arith.constant 0 : i32
    return %c0_i32, %arg2 : i32, i32
  }
  func.func @transform_3(%arg0: i32, %arg1: i32, %arg2: i32) -> (i32, i32) {
    %c0_i32 = arith.constant 0 : i32
    %c0_i32_0 = arith.constant 0 : i32
    return %c0_i32, %arg2 : i32, i32
  }
  func.func @transform_4(%arg0: i32, %arg1: i32, %arg2: i32) -> (i32, i32) {
    %c0_i32 = arith.constant 0 : i32
    %c0_i32_0 = arith.constant 0 : i32
    return %c0_i32, %arg1 : i32, i32
  }
  func.func @transform_5(%arg0: i32, %arg1: i32, %arg2: i32) -> (i32, i32) {
    %c0_i32 = arith.constant 0 : i32
    return %arg0, %arg1 : i32, i32
  }
}

module attributes {stable_mosaic.version = 11 : i64} {
  func.func @_bn_stats_kernel(%arg0: i32, %arg1: memref<512x16xbf16, #tpu.memory_space<vmem>>, %arg2: memref<1x16xf32, #tpu.memory_space<vmem>>, %arg3: memref<1x16xf32, #tpu.memory_space<vmem>>, %arg4: memref<1x16xf32, #tpu.memory_space<vmem>>, %arg5: memref<1x16xf32, #tpu.memory_space<vmem>>, %arg6: memref<1x16xf32, #tpu.memory_space<vmem>>, %arg7: memref<1x16xf32, #tpu.memory_space<vmem>>) attributes {dimension_semantics = [#tpu.dimension_semantics<arbitrary>], iteration_bounds = array<i64: 1>, scalar_prefetch = 0 : i64, scratch_operands = 2 : i64, tpu.core_type = #tpu.core_type<tc>, window_params = [{transform_indices = @transform_0, window_bounds = array<i64: 512, 16>}, {pipeline_mode = #tpu.pipeline_mode<synchronous>, transform_indices = @transform_1, window_bounds = array<i64: 1, 16>}, {pipeline_mode = #tpu.pipeline_mode<synchronous>, transform_indices = @transform_2, window_bounds = array<i64: 1, 16>}, {pipeline_mode = #tpu.pipeline_mode<synchronous>, transform_indices = @transform_3, window_bounds = array<i64: 1, 16>}, {pipeline_mode = #tpu.pipeline_mode<synchronous>, transform_indices = @transform_4, window_bounds = array<i64: 1, 16>}]} {
    %c0_i32 = arith.constant 0 : i32
    %0 = arith.cmpi eq, %arg0, %c0_i32 : i32
    %1 = arith.extui %0 : i1 to i32
    %c0_i32_0 = arith.constant 0 : i32
    %2 = arith.cmpi ne, %1, %c0_i32_0 : i32
    scf.if %2 {
      %cst_13 = arith.constant 0.000000e+00 : f32
      %19 = vector.broadcast %cst_13 : f32 to vector<1x16xf32>
      %c0_14 = arith.constant 0 : index
      %c0_15 = arith.constant 0 : index
      %20 = vector.load %arg6[%c0_14, %c0_15] : memref<1x16xf32, #tpu.memory_space<vmem>>, vector<1x16xf32>
      tpu.vector_store %arg6[%c0_14, %c0_15], %19 {strides = array<i32>} : memref<1x16xf32, #tpu.memory_space<vmem>>, vector<1x16xf32>,
      %cst_16 = arith.constant 0.000000e+00 : f32
      %21 = vector.broadcast %cst_16 : f32 to vector<1x16xf32>
      %c0_17 = arith.constant 0 : index
      %c0_18 = arith.constant 0 : index
      %22 = vector.load %arg7[%c0_17, %c0_18] : memref<1x16xf32, #tpu.memory_space<vmem>>, vector<1x16xf32>
      tpu.vector_store %arg7[%c0_17, %c0_18], %21 {strides = array<i32>} : memref<1x16xf32, #tpu.memory_space<vmem>>, vector<1x16xf32>,
    } else {
    }
    %c0 = arith.constant 0 : index
    %c0_1 = arith.constant 0 : index
    %3 = vector.load %arg1[%c0, %c0_1] : memref<512x16xbf16, #tpu.memory_space<vmem>>, vector<512x16xbf16>
    %4 = arith.extf %3 : vector<512x16xbf16> to vector<512x16xf32>
    %c0_2 = arith.constant 0 : index
    %c0_3 = arith.constant 0 : index
    %5 = vector.load %arg6[%c0_2, %c0_3] : memref<1x16xf32, #tpu.memory_space<vmem>>, vector<1x16xf32>
    %cst = arith.constant dense<0.000000e+00> : vector<16xf32>
    %6 = vector.multi_reduction <add>, %4, %cst [0] : vector<512x16xf32> to vector<16xf32>
    %7 = vector.shape_cast %6 : vector<16xf32> to vector<1x16xf32>
    %8 = arith.addf %5, %7 : vector<1x16xf32>
    %c0_4 = arith.constant 0 : index
    %c0_5 = arith.constant 0 : index
    %9 = vector.load %arg6[%c0_4, %c0_5] : memref<1x16xf32, #tpu.memory_space<vmem>>, vector<1x16xf32>
    tpu.vector_store %arg6[%c0_4, %c0_5], %8 {strides = array<i32>} : memref<1x16xf32, #tpu.memory_space<vmem>>, vector<1x16xf32>,
    %c0_6 = arith.constant 0 : index
    %c0_7 = arith.constant 0 : index
    %10 = vector.load %arg7[%c0_6, %c0_7] : memref<1x16xf32, #tpu.memory_space<vmem>>, vector<1x16xf32>
    %11 = arith.mulf %4, %4 : vector<512x16xf32>
    %cst_8 = arith.constant dense<0.000000e+00> : vector<16xf32>
    %12 = vector.multi_reduction <add>, %11, %cst_8 [0] : vector<512x16xf32> to vector<16xf32>
    %13 = vector.shape_cast %12 : vector<16xf32> to vector<1x16xf32>
    %14 = arith.addf %10, %13 : vector<1x16xf32>
    %c0_9 = arith.constant 0 : index
    %c0_10 = arith.constant 0 : index
    %15 = vector.load %arg7[%c0_9, %c0_10] : memref<1x16xf32, #tpu.memory_space<vmem>>, vector<1x16xf32>
    tpu.vector_store %arg7[%c0_9, %c0_10], %14 {strides = array<i32>} : memref<1x16xf32, #tpu.memory_space<vmem>>, vector<1x16xf32>,
    %c0_i32_11 = arith.constant 0 : i32
    %16 = arith.cmpi eq, %arg0, %c0_i32_11 : i32
    %17 = arith.extui %16 : i1 to i32
    %c0_i32_12 = arith.constant 0 : i32
    %18 = arith.cmpi ne, %17, %c0_i32_12 : i32
    scf.if %18 {
      %c0_13 = arith.constant 0 : index
      %c0_14 = arith.constant 0 : index
      %19 = vector.load %arg6[%c0_13, %c0_14] : memref<1x16xf32, #tpu.memory_space<vmem>>, vector<1x16xf32>
      %cst_15 = arith.constant 0.001953125 : f32
      %20 = vector.broadcast %cst_15 : f32 to vector<1x16xf32>
      %21 = arith.mulf %19, %20 : vector<1x16xf32>
      %c0_16 = arith.constant 0 : index
      %c0_17 = arith.constant 0 : index
      %22 = vector.load %arg7[%c0_16, %c0_17] : memref<1x16xf32, #tpu.memory_space<vmem>>, vector<1x16xf32>
      %cst_18 = arith.constant 0.001953125 : f32
      %23 = vector.broadcast %cst_18 : f32 to vector<1x16xf32>
      %24 = arith.mulf %22, %23 : vector<1x16xf32>
      %25 = arith.mulf %21, %21 : vector<1x16xf32>
      %26 = arith.subf %24, %25 : vector<1x16xf32>
      %cst_19 = arith.constant 0.000000e+00 : f32
      %27 = vector.broadcast %cst_19 : f32 to vector<1x16xf32>
      %28 = arith.maximumf %26, %27 : vector<1x16xf32>
      %cst_20 = arith.constant 9.99999974E-6 : f32
      %29 = vector.broadcast %cst_20 : f32 to vector<1x16xf32>
      %30 = arith.addf %28, %29 : vector<1x16xf32>
      %31 = math.rsqrt %30 : vector<1x16xf32>
      %c0_21 = arith.constant 0 : index
      %c0_22 = arith.constant 0 : index
      %32 = vector.load %arg2[%c0_21, %c0_22] : memref<1x16xf32, #tpu.memory_space<vmem>>, vector<1x16xf32>
      %33 = arith.mulf %32, %31 : vector<1x16xf32>
      %c0_23 = arith.constant 0 : index
      %c0_24 = arith.constant 0 : index
      %34 = vector.load %arg4[%c0_23, %c0_24] : memref<1x16xf32, #tpu.memory_space<vmem>>, vector<1x16xf32>
      tpu.vector_store %arg4[%c0_23, %c0_24], %33 {strides = array<i32>} : memref<1x16xf32, #tpu.memory_space<vmem>>, vector<1x16xf32>,
      %c0_25 = arith.constant 0 : index
      %c0_26 = arith.constant 0 : index
      %35 = vector.load %arg3[%c0_25, %c0_26] : memref<1x16xf32, #tpu.memory_space<vmem>>, vector<1x16xf32>
      %36 = arith.mulf %21, %33 : vector<1x16xf32>
      %37 = arith.subf %35, %36 : vector<1x16xf32>
      %c0_27 = arith.constant 0 : index
      %c0_28 = arith.constant 0 : index
      %38 = vector.load %arg5[%c0_27, %c0_28] : memref<1x16xf32, #tpu.memory_space<vmem>>, vector<1x16xf32>
      tpu.vector_store %arg5[%c0_27, %c0_28], %37 {strides = array<i32>} : memref<1x16xf32, #tpu.memory_space<vmem>>, vector<1x16xf32>,
    } else {
    }
    return
  }
  func.func @transform_0(%arg0: i32) -> (i32, i32) {
    %c0_i32 = arith.constant 0 : i32
    %c0_i32_0 = arith.constant 0 : i32
    return %arg0, %c0_i32 : i32, i32
  }
  func.func @transform_1(%arg0: i32) -> (i32, i32) {
    %c0_i32 = arith.constant 0 : i32
    %c0_i32_0 = arith.constant 0 : i32
    %c0_i32_1 = arith.constant 0 : i32
    return %c0_i32, %c0_i32_0 : i32, i32
  }
  func.func @transform_2(%arg0: i32) -> (i32, i32) {
    %c0_i32 = arith.constant 0 : i32
    %c0_i32_0 = arith.constant 0 : i32
    %c0_i32_1 = arith.constant 0 : i32
    return %c0_i32, %c0_i32_0 : i32, i32
  }
  func.func @transform_3(%arg0: i32) -> (i32, i32) {
    %c0_i32 = arith.constant 0 : i32
    %c0_i32_0 = arith.constant 0 : i32
    %c0_i32_1 = arith.constant 0 : i32
    return %c0_i32, %c0_i32_0 : i32, i32
  }
  func.func @transform_4(%arg0: i32) -> (i32, i32) {
    %c0_i32 = arith.constant 0 : i32
    %c0_i32_0 = arith.constant 0 : i32
    %c0_i32_1 = arith.constant 0 : i32
    return %c0_i32, %c0_i32_0 : i32, i32
  }
}

module attributes {stable_mosaic.version = 11 : i64} {
  func.func @_affine_relu_kernel(%arg0: i32, %arg1: memref<512x16xbf16, #tpu.memory_space<vmem>>, %arg2: memref<1x16xf32, #tpu.memory_space<vmem>>, %arg3: memref<1x16xf32, #tpu.memory_space<vmem>>, %arg4: memref<512x16xbf16, #tpu.memory_space<vmem>>) attributes {dimension_semantics = [#tpu.dimension_semantics<parallel>], iteration_bounds = array<i64: 1>, scalar_prefetch = 0 : i64, scratch_operands = 0 : i64, tpu.core_type = #tpu.core_type<tc>, window_params = [{transform_indices = @transform_0, window_bounds = array<i64: 512, 16>}, {pipeline_mode = #tpu.pipeline_mode<synchronous>, transform_indices = @transform_1, window_bounds = array<i64: 1, 16>}, {pipeline_mode = #tpu.pipeline_mode<synchronous>, transform_indices = @transform_2, window_bounds = array<i64: 1, 16>}, {transform_indices = @transform_3, window_bounds = array<i64: 512, 16>}]} {
    %c0 = arith.constant 0 : index
    %c0_0 = arith.constant 0 : index
    %0 = vector.load %arg1[%c0, %c0_0] : memref<512x16xbf16, #tpu.memory_space<vmem>>, vector<512x16xbf16>
    %1 = arith.extf %0 : vector<512x16xbf16> to vector<512x16xf32>
    %c0_1 = arith.constant 0 : index
    %c0_2 = arith.constant 0 : index
    %2 = vector.load %arg2[%c0_1, %c0_2] : memref<1x16xf32, #tpu.memory_space<vmem>>, vector<1x16xf32>
    %3 = vector.broadcast %2 : vector<1x16xf32> to vector<512x16xf32>
    %4 = arith.mulf %1, %3 : vector<512x16xf32>
    %c0_3 = arith.constant 0 : index
    %c0_4 = arith.constant 0 : index
    %5 = vector.load %arg3[%c0_3, %c0_4] : memref<1x16xf32, #tpu.memory_space<vmem>>, vector<1x16xf32>
    %6 = vector.broadcast %5 : vector<1x16xf32> to vector<512x16xf32>
    %7 = arith.addf %4, %6 : vector<512x16xf32>
    %cst = arith.constant 0.000000e+00 : f32
    %8 = vector.broadcast %cst : f32 to vector<512x16xf32>
    %9 = arith.maximumf %7, %8 : vector<512x16xf32>
    %10 = arith.truncf %9 : vector<512x16xf32> to vector<512x16xbf16>
    %c0_5 = arith.constant 0 : index
    %c0_6 = arith.constant 0 : index
    %11 = vector.load %arg4[%c0_5, %c0_6] : memref<512x16xbf16, #tpu.memory_space<vmem>>, vector<512x16xbf16>
    tpu.vector_store %arg4[%c0_5, %c0_6], %10 {strides = array<i32>} : memref<512x16xbf16, #tpu.memory_space<vmem>>, vector<512x16xbf16>,
    return
  }
  func.func @transform_0(%arg0: i32) -> (i32, i32) {
    %c0_i32 = arith.constant 0 : i32
    %c0_i32_0 = arith.constant 0 : i32
    return %arg0, %c0_i32 : i32, i32
  }
  func.func @transform_1(%arg0: i32) -> (i32, i32) {
    %c0_i32 = arith.constant 0 : i32
    %c0_i32_0 = arith.constant 0 : i32
    %c0_i32_1 = arith.constant 0 : i32
    return %c0_i32, %c0_i32_0 : i32, i32
  }
  func.func @transform_2(%arg0: i32) -> (i32, i32) {
    %c0_i32 = arith.constant 0 : i32
    %c0_i32_0 = arith.constant 0 : i32
    %c0_i32_1 = arith.constant 0 : i32
    return %c0_i32, %c0_i32_0 : i32, i32
  }
  func.func @transform_3(%arg0: i32) -> (i32, i32) {
    %c0_i32 = arith.constant 0 : i32
    %c0_i32_0 = arith.constant 0 : i32
    return %arg0, %c0_i32 : i32, i32
  }
}

module attributes {stable_mosaic.version = 11 : i64} {
  func.func @_pool_reduce_kernel(%arg0: i32, %arg1: memref<9x128x16xbf16, #tpu.memory_space<vmem>>, %arg2: memref<128x16xbf16, #tpu.memory_space<vmem>>) attributes {dimension_semantics = [#tpu.dimension_semantics<parallel>], iteration_bounds = array<i64: 1>, scalar_prefetch = 0 : i64, scratch_operands = 0 : i64, tpu.core_type = #tpu.core_type<tc>, window_params = [{transform_indices = @transform_0, window_bounds = array<i64: 9, 128, 16>}, {transform_indices = @transform_1, window_bounds = array<i64: 128, 16>}]} {
    %c0 = arith.constant 0 : index
    %c0_0 = arith.constant 0 : index
    %c0_1 = arith.constant 0 : index
    %0 = vector.load %arg1[%c0, %c0_0, %c0_1] : memref<9x128x16xbf16, #tpu.memory_space<vmem>>, vector<9x128x16xbf16>
    %1 = arith.extf %0 : vector<9x128x16xbf16> to vector<9x128x16xf32>
    %cst = arith.constant dense<0xFF800000> : vector<128x16xf32>
    %2 = vector.multi_reduction <maximumf>, %1, %cst [0] : vector<9x128x16xf32> to vector<128x16xf32>
    %3 = arith.truncf %2 : vector<128x16xf32> to vector<128x16xbf16>
    %c0_2 = arith.constant 0 : index
    %c0_3 = arith.constant 0 : index
    %4 = vector.load %arg2[%c0_2, %c0_3] : memref<128x16xbf16, #tpu.memory_space<vmem>>, vector<128x16xbf16>
    tpu.vector_store %arg2[%c0_2, %c0_3], %3 {strides = array<i32>} : memref<128x16xbf16, #tpu.memory_space<vmem>>, vector<128x16xbf16>,
    return
  }
  func.func @transform_0(%arg0: i32) -> (i32, i32, i32) {
    %c0_i32 = arith.constant 0 : i32
    %c0_i32_0 = arith.constant 0 : i32
    %c0_i32_1 = arith.constant 0 : i32
    return %c0_i32, %arg0, %c0_i32_0 : i32, i32, i32
  }
  func.func @transform_1(%arg0: i32) -> (i32, i32) {
    %c0_i32 = arith.constant 0 : i32
    %c0_i32_0 = arith.constant 0 : i32
    return %arg0, %c0_i32 : i32, i32
  }
}

module attributes {stable_mosaic.version = 11 : i64} {
  func.func @_mm_kernel(%arg0: i32, %arg1: i32, %arg2: i32, %arg3: memref<128x16xbf16, #tpu.memory_space<vmem>>, %arg4: memref<16x128xbf16, #tpu.memory_space<vmem>>, %arg5: memref<1x16xf32, #tpu.memory_space<vmem>>, %arg6: memref<1x16xf32, #tpu.memory_space<vmem>>, %arg7: memref<1x128xf32, #tpu.memory_space<vmem>>, %arg8: memref<128x128xbf16, #tpu.memory_space<vmem>>, %arg9: memref<128x128xf32, #tpu.memory_space<vmem>>) attributes {dimension_semantics = [#tpu.dimension_semantics<parallel>, #tpu.dimension_semantics<parallel>, #tpu.dimension_semantics<arbitrary>], iteration_bounds = array<i64: 1, 1, 1>, scalar_prefetch = 0 : i64, scratch_operands = 1 : i64, tpu.core_type = #tpu.core_type<tc>, window_params = [{transform_indices = @transform_0, window_bounds = array<i64: 128, 16>}, {transform_indices = @transform_1, window_bounds = array<i64: 16, 128>}, {transform_indices = @transform_2, window_bounds = array<i64: 1, 16>}, {transform_indices = @transform_3, window_bounds = array<i64: 1, 16>}, {transform_indices = @transform_4, window_bounds = array<i64: 1, 128>}, {transform_indices = @transform_5, window_bounds = array<i64: 128, 128>}]} {
    %c0_i32 = arith.constant 0 : i32
    %0 = arith.cmpi eq, %arg2, %c0_i32 : i32
    %1 = arith.extui %0 : i1 to i32
    %c0_i32_0 = arith.constant 0 : i32
    %2 = arith.cmpi ne, %1, %c0_i32_0 : i32
    scf.if %2 {
      %cst_15 = arith.constant 0.000000e+00 : f32
      %22 = vector.broadcast %cst_15 : f32 to vector<128x128xf32>
      %c0_16 = arith.constant 0 : index
      %c0_17 = arith.constant 0 : index
      %23 = vector.load %arg9[%c0_16, %c0_17] : memref<128x128xf32, #tpu.memory_space<vmem>>, vector<128x128xf32>
      tpu.vector_store %arg9[%c0_16, %c0_17], %22 {strides = array<i32>} : memref<128x128xf32, #tpu.memory_space<vmem>>, vector<128x128xf32>,
    } else {
    }
    %c0 = arith.constant 0 : index
    %c0_1 = arith.constant 0 : index
    %3 = vector.load %arg3[%c0, %c0_1] : memref<128x16xbf16, #tpu.memory_space<vmem>>, vector<128x16xbf16>
    %4 = arith.extf %3 : vector<128x16xbf16> to vector<128x16xf32>
    %c0_2 = arith.constant 0 : index
    %c0_3 = arith.constant 0 : index
    %5 = vector.load %arg5[%c0_2, %c0_3] : memref<1x16xf32, #tpu.memory_space<vmem>>, vector<1x16xf32>
    %6 = vector.broadcast %5 : vector<1x16xf32> to vector<128x16xf32>
    %7 = arith.mulf %4, %6 : vector<128x16xf32>
    %c0_4 = arith.constant 0 : index
    %c0_5 = arith.constant 0 : index
    %8 = vector.load %arg6[%c0_4, %c0_5] : memref<1x16xf32, #tpu.memory_space<vmem>>, vector<1x16xf32>
    %9 = vector.broadcast %8 : vector<1x16xf32> to vector<128x16xf32>
    %10 = arith.addf %7, %9 : vector<128x16xf32>
    %cst = arith.constant 0.000000e+00 : f32
    %11 = vector.broadcast %cst : f32 to vector<128x16xf32>
    %12 = arith.maximumf %10, %11 : vector<128x16xf32>
    %13 = arith.truncf %12 : vector<128x16xf32> to vector<128x16xbf16>
    %c0_6 = arith.constant 0 : index
    %c0_7 = arith.constant 0 : index
    %14 = vector.load %arg9[%c0_6, %c0_7] : memref<128x128xf32, #tpu.memory_space<vmem>>, vector<128x128xf32>
    %c0_8 = arith.constant 0 : index
    %c0_9 = arith.constant 0 : index
    %15 = vector.load %arg4[%c0_8, %c0_9] : memref<16x128xbf16, #tpu.memory_space<vmem>>, vector<16x128xbf16>
    %cst_10 = arith.constant dense<0.000000e+00> : vector<128x128xf32>
    %16 = tpu.matmul %13, %15, %cst_10 {dimension_numbers = #tpu.dot_dimension_numbers<[1], [0], [0], [1], [0, 0, 1, 1], [], []>} : vector<128x16xbf16>, vector<16x128xbf16>, vector<128x128xf32> -> vector<128x128xf32>
    %17 = arith.addf %14, %16 : vector<128x128xf32>
    %c0_11 = arith.constant 0 : index
    %c0_12 = arith.constant 0 : index
    %18 = vector.load %arg9[%c0_11, %c0_12] : memref<128x128xf32, #tpu.memory_space<vmem>>, vector<128x128xf32>
    tpu.vector_store %arg9[%c0_11, %c0_12], %17 {strides = array<i32>} : memref<128x128xf32, #tpu.memory_space<vmem>>, vector<128x128xf32>,
    %c0_i32_13 = arith.constant 0 : i32
    %19 = arith.cmpi eq, %arg2, %c0_i32_13 : i32
    %20 = arith.extui %19 : i1 to i32
    %c0_i32_14 = arith.constant 0 : i32
    %21 = arith.cmpi ne, %20, %c0_i32_14 : i32
    scf.if %21 {
      %c0_15 = arith.constant 0 : index
      %c0_16 = arith.constant 0 : index
      %22 = vector.load %arg9[%c0_15, %c0_16] : memref<128x128xf32, #tpu.memory_space<vmem>>, vector<128x128xf32>
      %c0_17 = arith.constant 0 : index
      %c0_18 = arith.constant 0 : index
      %23 = vector.load %arg7[%c0_17, %c0_18] : memref<1x128xf32, #tpu.memory_space<vmem>>, vector<1x128xf32>
      %24 = vector.broadcast %23 : vector<1x128xf32> to vector<128x128xf32>
      %25 = arith.addf %22, %24 : vector<128x128xf32>
      %26 = arith.truncf %25 : vector<128x128xf32> to vector<128x128xbf16>
      %c0_19 = arith.constant 0 : index
      %c0_20 = arith.constant 0 : index
      %27 = vector.load %arg8[%c0_19, %c0_20] : memref<128x128xbf16, #tpu.memory_space<vmem>>, vector<128x128xbf16>
      tpu.vector_store %arg8[%c0_19, %c0_20], %26 {strides = array<i32>} : memref<128x128xbf16, #tpu.memory_space<vmem>>, vector<128x128xbf16>,
    } else {
    }
    return
  }
  func.func @transform_0(%arg0: i32, %arg1: i32, %arg2: i32) -> (i32, i32) {
    %c0_i32 = arith.constant 0 : i32
    return %arg0, %arg2 : i32, i32
  }
  func.func @transform_1(%arg0: i32, %arg1: i32, %arg2: i32) -> (i32, i32) {
    %c0_i32 = arith.constant 0 : i32
    return %arg2, %arg1 : i32, i32
  }
  func.func @transform_2(%arg0: i32, %arg1: i32, %arg2: i32) -> (i32, i32) {
    %c0_i32 = arith.constant 0 : i32
    %c0_i32_0 = arith.constant 0 : i32
    return %c0_i32, %arg2 : i32, i32
  }
  func.func @transform_3(%arg0: i32, %arg1: i32, %arg2: i32) -> (i32, i32) {
    %c0_i32 = arith.constant 0 : i32
    %c0_i32_0 = arith.constant 0 : i32
    return %c0_i32, %arg2 : i32, i32
  }
  func.func @transform_4(%arg0: i32, %arg1: i32, %arg2: i32) -> (i32, i32) {
    %c0_i32 = arith.constant 0 : i32
    %c0_i32_0 = arith.constant 0 : i32
    return %c0_i32, %arg1 : i32, i32
  }
  func.func @transform_5(%arg0: i32, %arg1: i32, %arg2: i32) -> (i32, i32) {
    %c0_i32 = arith.constant 0 : i32
    return %arg0, %arg1 : i32, i32
  }
}

module attributes {stable_mosaic.version = 11 : i64} {
  func.func @_bn_stats_kernel(%arg0: i32, %arg1: memref<128x16xbf16, #tpu.memory_space<vmem>>, %arg2: memref<1x16xf32, #tpu.memory_space<vmem>>, %arg3: memref<1x16xf32, #tpu.memory_space<vmem>>, %arg4: memref<1x16xf32, #tpu.memory_space<vmem>>, %arg5: memref<1x16xf32, #tpu.memory_space<vmem>>, %arg6: memref<1x16xf32, #tpu.memory_space<vmem>>, %arg7: memref<1x16xf32, #tpu.memory_space<vmem>>) attributes {dimension_semantics = [#tpu.dimension_semantics<arbitrary>], iteration_bounds = array<i64: 1>, scalar_prefetch = 0 : i64, scratch_operands = 2 : i64, tpu.core_type = #tpu.core_type<tc>, window_params = [{transform_indices = @transform_0, window_bounds = array<i64: 128, 16>}, {pipeline_mode = #tpu.pipeline_mode<synchronous>, transform_indices = @transform_1, window_bounds = array<i64: 1, 16>}, {pipeline_mode = #tpu.pipeline_mode<synchronous>, transform_indices = @transform_2, window_bounds = array<i64: 1, 16>}, {pipeline_mode = #tpu.pipeline_mode<synchronous>, transform_indices = @transform_3, window_bounds = array<i64: 1, 16>}, {pipeline_mode = #tpu.pipeline_mode<synchronous>, transform_indices = @transform_4, window_bounds = array<i64: 1, 16>}]} {
    %c0_i32 = arith.constant 0 : i32
    %0 = arith.cmpi eq, %arg0, %c0_i32 : i32
    %1 = arith.extui %0 : i1 to i32
    %c0_i32_0 = arith.constant 0 : i32
    %2 = arith.cmpi ne, %1, %c0_i32_0 : i32
    scf.if %2 {
      %cst_13 = arith.constant 0.000000e+00 : f32
      %19 = vector.broadcast %cst_13 : f32 to vector<1x16xf32>
      %c0_14 = arith.constant 0 : index
      %c0_15 = arith.constant 0 : index
      %20 = vector.load %arg6[%c0_14, %c0_15] : memref<1x16xf32, #tpu.memory_space<vmem>>, vector<1x16xf32>
      tpu.vector_store %arg6[%c0_14, %c0_15], %19 {strides = array<i32>} : memref<1x16xf32, #tpu.memory_space<vmem>>, vector<1x16xf32>,
      %cst_16 = arith.constant 0.000000e+00 : f32
      %21 = vector.broadcast %cst_16 : f32 to vector<1x16xf32>
      %c0_17 = arith.constant 0 : index
      %c0_18 = arith.constant 0 : index
      %22 = vector.load %arg7[%c0_17, %c0_18] : memref<1x16xf32, #tpu.memory_space<vmem>>, vector<1x16xf32>
      tpu.vector_store %arg7[%c0_17, %c0_18], %21 {strides = array<i32>} : memref<1x16xf32, #tpu.memory_space<vmem>>, vector<1x16xf32>,
    } else {
    }
    %c0 = arith.constant 0 : index
    %c0_1 = arith.constant 0 : index
    %3 = vector.load %arg1[%c0, %c0_1] : memref<128x16xbf16, #tpu.memory_space<vmem>>, vector<128x16xbf16>
    %4 = arith.extf %3 : vector<128x16xbf16> to vector<128x16xf32>
    %c0_2 = arith.constant 0 : index
    %c0_3 = arith.constant 0 : index
    %5 = vector.load %arg6[%c0_2, %c0_3] : memref<1x16xf32, #tpu.memory_space<vmem>>, vector<1x16xf32>
    %cst = arith.constant dense<0.000000e+00> : vector<16xf32>
    %6 = vector.multi_reduction <add>, %4, %cst [0] : vector<128x16xf32> to vector<16xf32>
    %7 = vector.shape_cast %6 : vector<16xf32> to vector<1x16xf32>
    %8 = arith.addf %5, %7 : vector<1x16xf32>
    %c0_4 = arith.constant 0 : index
    %c0_5 = arith.constant 0 : index
    %9 = vector.load %arg6[%c0_4, %c0_5] : memref<1x16xf32, #tpu.memory_space<vmem>>, vector<1x16xf32>
    tpu.vector_store %arg6[%c0_4, %c0_5], %8 {strides = array<i32>} : memref<1x16xf32, #tpu.memory_space<vmem>>, vector<1x16xf32>,
    %c0_6 = arith.constant 0 : index
    %c0_7 = arith.constant 0 : index
    %10 = vector.load %arg7[%c0_6, %c0_7] : memref<1x16xf32, #tpu.memory_space<vmem>>, vector<1x16xf32>
    %11 = arith.mulf %4, %4 : vector<128x16xf32>
    %cst_8 = arith.constant dense<0.000000e+00> : vector<16xf32>
    %12 = vector.multi_reduction <add>, %11, %cst_8 [0] : vector<128x16xf32> to vector<16xf32>
    %13 = vector.shape_cast %12 : vector<16xf32> to vector<1x16xf32>
    %14 = arith.addf %10, %13 : vector<1x16xf32>
    %c0_9 = arith.constant 0 : index
    %c0_10 = arith.constant 0 : index
    %15 = vector.load %arg7[%c0_9, %c0_10] : memref<1x16xf32, #tpu.memory_space<vmem>>, vector<1x16xf32>
    tpu.vector_store %arg7[%c0_9, %c0_10], %14 {strides = array<i32>} : memref<1x16xf32, #tpu.memory_space<vmem>>, vector<1x16xf32>,
    %c0_i32_11 = arith.constant 0 : i32
    %16 = arith.cmpi eq, %arg0, %c0_i32_11 : i32
    %17 = arith.extui %16 : i1 to i32
    %c0_i32_12 = arith.constant 0 : i32
    %18 = arith.cmpi ne, %17, %c0_i32_12 : i32
    scf.if %18 {
      %c0_13 = arith.constant 0 : index
      %c0_14 = arith.constant 0 : index
      %19 = vector.load %arg6[%c0_13, %c0_14] : memref<1x16xf32, #tpu.memory_space<vmem>>, vector<1x16xf32>
      %cst_15 = arith.constant 7.812500e-03 : f32
      %20 = vector.broadcast %cst_15 : f32 to vector<1x16xf32>
      %21 = arith.mulf %19, %20 : vector<1x16xf32>
      %c0_16 = arith.constant 0 : index
      %c0_17 = arith.constant 0 : index
      %22 = vector.load %arg7[%c0_16, %c0_17] : memref<1x16xf32, #tpu.memory_space<vmem>>, vector<1x16xf32>
      %cst_18 = arith.constant 7.812500e-03 : f32
      %23 = vector.broadcast %cst_18 : f32 to vector<1x16xf32>
      %24 = arith.mulf %22, %23 : vector<1x16xf32>
      %25 = arith.mulf %21, %21 : vector<1x16xf32>
      %26 = arith.subf %24, %25 : vector<1x16xf32>
      %cst_19 = arith.constant 0.000000e+00 : f32
      %27 = vector.broadcast %cst_19 : f32 to vector<1x16xf32>
      %28 = arith.maximumf %26, %27 : vector<1x16xf32>
      %cst_20 = arith.constant 9.99999974E-6 : f32
      %29 = vector.broadcast %cst_20 : f32 to vector<1x16xf32>
      %30 = arith.addf %28, %29 : vector<1x16xf32>
      %31 = math.rsqrt %30 : vector<1x16xf32>
      %c0_21 = arith.constant 0 : index
      %c0_22 = arith.constant 0 : index
      %32 = vector.load %arg2[%c0_21, %c0_22] : memref<1x16xf32, #tpu.memory_space<vmem>>, vector<1x16xf32>
      %33 = arith.mulf %32, %31 : vector<1x16xf32>
      %c0_23 = arith.constant 0 : index
      %c0_24 = arith.constant 0 : index
      %34 = vector.load %arg4[%c0_23, %c0_24] : memref<1x16xf32, #tpu.memory_space<vmem>>, vector<1x16xf32>
      tpu.vector_store %arg4[%c0_23, %c0_24], %33 {strides = array<i32>} : memref<1x16xf32, #tpu.memory_space<vmem>>, vector<1x16xf32>,
      %c0_25 = arith.constant 0 : index
      %c0_26 = arith.constant 0 : index
      %35 = vector.load %arg3[%c0_25, %c0_26] : memref<1x16xf32, #tpu.memory_space<vmem>>, vector<1x16xf32>
      %36 = arith.mulf %21, %33 : vector<1x16xf32>
      %37 = arith.subf %35, %36 : vector<1x16xf32>
      %c0_27 = arith.constant 0 : index
      %c0_28 = arith.constant 0 : index
      %38 = vector.load %arg5[%c0_27, %c0_28] : memref<1x16xf32, #tpu.memory_space<vmem>>, vector<1x16xf32>
      tpu.vector_store %arg5[%c0_27, %c0_28], %37 {strides = array<i32>} : memref<1x16xf32, #tpu.memory_space<vmem>>, vector<1x16xf32>,
    } else {
    }
    return
  }
  func.func @transform_0(%arg0: i32) -> (i32, i32) {
    %c0_i32 = arith.constant 0 : i32
    %c0_i32_0 = arith.constant 0 : i32
    return %arg0, %c0_i32 : i32, i32
  }
  func.func @transform_1(%arg0: i32) -> (i32, i32) {
    %c0_i32 = arith.constant 0 : i32
    %c0_i32_0 = arith.constant 0 : i32
    %c0_i32_1 = arith.constant 0 : i32
    return %c0_i32, %c0_i32_0 : i32, i32
  }
  func.func @transform_2(%arg0: i32) -> (i32, i32) {
    %c0_i32 = arith.constant 0 : i32
    %c0_i32_0 = arith.constant 0 : i32
    %c0_i32_1 = arith.constant 0 : i32
    return %c0_i32, %c0_i32_0 : i32, i32
  }
  func.func @transform_3(%arg0: i32) -> (i32, i32) {
    %c0_i32 = arith.constant 0 : i32
    %c0_i32_0 = arith.constant 0 : i32
    %c0_i32_1 = arith.constant 0 : i32
    return %c0_i32, %c0_i32_0 : i32, i32
  }
  func.func @transform_4(%arg0: i32) -> (i32, i32) {
    %c0_i32 = arith.constant 0 : i32
    %c0_i32_0 = arith.constant 0 : i32
    %c0_i32_1 = arith.constant 0 : i32
    return %c0_i32, %c0_i32_0 : i32, i32
  }
}

module attributes {stable_mosaic.version = 11 : i64} {
  func.func @_affine_relu_kernel(%arg0: i32, %arg1: memref<128x16xbf16, #tpu.memory_space<vmem>>, %arg2: memref<1x16xf32, #tpu.memory_space<vmem>>, %arg3: memref<1x16xf32, #tpu.memory_space<vmem>>, %arg4: memref<128x16xbf16, #tpu.memory_space<vmem>>) attributes {dimension_semantics = [#tpu.dimension_semantics<parallel>], iteration_bounds = array<i64: 1>, scalar_prefetch = 0 : i64, scratch_operands = 0 : i64, tpu.core_type = #tpu.core_type<tc>, window_params = [{transform_indices = @transform_0, window_bounds = array<i64: 128, 16>}, {pipeline_mode = #tpu.pipeline_mode<synchronous>, transform_indices = @transform_1, window_bounds = array<i64: 1, 16>}, {pipeline_mode = #tpu.pipeline_mode<synchronous>, transform_indices = @transform_2, window_bounds = array<i64: 1, 16>}, {transform_indices = @transform_3, window_bounds = array<i64: 128, 16>}]} {
    %c0 = arith.constant 0 : index
    %c0_0 = arith.constant 0 : index
    %0 = vector.load %arg1[%c0, %c0_0] : memref<128x16xbf16, #tpu.memory_space<vmem>>, vector<128x16xbf16>
    %1 = arith.extf %0 : vector<128x16xbf16> to vector<128x16xf32>
    %c0_1 = arith.constant 0 : index
    %c0_2 = arith.constant 0 : index
    %2 = vector.load %arg2[%c0_1, %c0_2] : memref<1x16xf32, #tpu.memory_space<vmem>>, vector<1x16xf32>
    %3 = vector.broadcast %2 : vector<1x16xf32> to vector<128x16xf32>
    %4 = arith.mulf %1, %3 : vector<128x16xf32>
    %c0_3 = arith.constant 0 : index
    %c0_4 = arith.constant 0 : index
    %5 = vector.load %arg3[%c0_3, %c0_4] : memref<1x16xf32, #tpu.memory_space<vmem>>, vector<1x16xf32>
    %6 = vector.broadcast %5 : vector<1x16xf32> to vector<128x16xf32>
    %7 = arith.addf %4, %6 : vector<128x16xf32>
    %cst = arith.constant 0.000000e+00 : f32
    %8 = vector.broadcast %cst : f32 to vector<128x16xf32>
    %9 = arith.maximumf %7, %8 : vector<128x16xf32>
    %10 = arith.truncf %9 : vector<128x16xf32> to vector<128x16xbf16>
    %c0_5 = arith.constant 0 : index
    %c0_6 = arith.constant 0 : index
    %11 = vector.load %arg4[%c0_5, %c0_6] : memref<128x16xbf16, #tpu.memory_space<vmem>>, vector<128x16xbf16>
    tpu.vector_store %arg4[%c0_5, %c0_6], %10 {strides = array<i32>} : memref<128x16xbf16, #tpu.memory_space<vmem>>, vector<128x16xbf16>,
    return
  }
  func.func @transform_0(%arg0: i32) -> (i32, i32) {
    %c0_i32 = arith.constant 0 : i32
    %c0_i32_0 = arith.constant 0 : i32
    return %arg0, %c0_i32 : i32, i32
  }
  func.func @transform_1(%arg0: i32) -> (i32, i32) {
    %c0_i32 = arith.constant 0 : i32
    %c0_i32_0 = arith.constant 0 : i32
    %c0_i32_1 = arith.constant 0 : i32
    return %c0_i32, %c0_i32_0 : i32, i32
  }
  func.func @transform_2(%arg0: i32) -> (i32, i32) {
    %c0_i32 = arith.constant 0 : i32
    %c0_i32_0 = arith.constant 0 : i32
    %c0_i32_1 = arith.constant 0 : i32
    return %c0_i32, %c0_i32_0 : i32, i32
  }
  func.func @transform_3(%arg0: i32) -> (i32, i32) {
    %c0_i32 = arith.constant 0 : i32
    %c0_i32_0 = arith.constant 0 : i32
    return %arg0, %c0_i32 : i32, i32
  }
}

module attributes {stable_mosaic.version = 11 : i64} {
  func.func @_mm_kernel(%arg0: i32, %arg1: i32, %arg2: i32, %arg3: memref<128x144xbf16, #tpu.memory_space<vmem>>, %arg4: memref<144x128xbf16, #tpu.memory_space<vmem>>, %arg5: memref<1x144xf32, #tpu.memory_space<vmem>>, %arg6: memref<1x144xf32, #tpu.memory_space<vmem>>, %arg7: memref<1x128xf32, #tpu.memory_space<vmem>>, %arg8: memref<128x128xbf16, #tpu.memory_space<vmem>>, %arg9: memref<128x128xf32, #tpu.memory_space<vmem>>) attributes {dimension_semantics = [#tpu.dimension_semantics<parallel>, #tpu.dimension_semantics<parallel>, #tpu.dimension_semantics<arbitrary>], iteration_bounds = array<i64: 1, 1, 1>, scalar_prefetch = 0 : i64, scratch_operands = 1 : i64, tpu.core_type = #tpu.core_type<tc>, window_params = [{transform_indices = @transform_0, window_bounds = array<i64: 128, 144>}, {transform_indices = @transform_1, window_bounds = array<i64: 144, 128>}, {transform_indices = @transform_2, window_bounds = array<i64: 1, 144>}, {transform_indices = @transform_3, window_bounds = array<i64: 1, 144>}, {transform_indices = @transform_4, window_bounds = array<i64: 1, 128>}, {transform_indices = @transform_5, window_bounds = array<i64: 128, 128>}]} {
    %c0_i32 = arith.constant 0 : i32
    %0 = arith.cmpi eq, %arg2, %c0_i32 : i32
    %1 = arith.extui %0 : i1 to i32
    %c0_i32_0 = arith.constant 0 : i32
    %2 = arith.cmpi ne, %1, %c0_i32_0 : i32
    scf.if %2 {
      %cst_10 = arith.constant 0.000000e+00 : f32
      %12 = vector.broadcast %cst_10 : f32 to vector<128x128xf32>
      %c0_11 = arith.constant 0 : index
      %c0_12 = arith.constant 0 : index
      %13 = vector.load %arg9[%c0_11, %c0_12] : memref<128x128xf32, #tpu.memory_space<vmem>>, vector<128x128xf32>
      tpu.vector_store %arg9[%c0_11, %c0_12], %12 {strides = array<i32>} : memref<128x128xf32, #tpu.memory_space<vmem>>, vector<128x128xf32>,
    } else {
    }
    %c0 = arith.constant 0 : index
    %c0_1 = arith.constant 0 : index
    %3 = vector.load %arg3[%c0, %c0_1] : memref<128x144xbf16, #tpu.memory_space<vmem>>, vector<128x144xbf16>
    %c0_2 = arith.constant 0 : index
    %c0_3 = arith.constant 0 : index
    %4 = vector.load %arg9[%c0_2, %c0_3] : memref<128x128xf32, #tpu.memory_space<vmem>>, vector<128x128xf32>
    %c0_4 = arith.constant 0 : index
    %c0_5 = arith.constant 0 : index
    %5 = vector.load %arg4[%c0_4, %c0_5] : memref<144x128xbf16, #tpu.memory_space<vmem>>, vector<144x128xbf16>
    %cst = arith.constant dense<0.000000e+00> : vector<128x128xf32>
    %6 = tpu.matmul %3, %5, %cst {dimension_numbers = #tpu.dot_dimension_numbers<[1], [0], [0], [1], [0, 0, 1, 1], [], []>} : vector<128x144xbf16>, vector<144x128xbf16>, vector<128x128xf32> -> vector<128x128xf32>
    %7 = arith.addf %4, %6 : vector<128x128xf32>
    %c0_6 = arith.constant 0 : index
    %c0_7 = arith.constant 0 : index
    %8 = vector.load %arg9[%c0_6, %c0_7] : memref<128x128xf32, #tpu.memory_space<vmem>>, vector<128x128xf32>
    tpu.vector_store %arg9[%c0_6, %c0_7], %7 {strides = array<i32>} : memref<128x128xf32, #tpu.memory_space<vmem>>, vector<128x128xf32>,
    %c0_i32_8 = arith.constant 0 : i32
    %9 = arith.cmpi eq, %arg2, %c0_i32_8 : i32
    %10 = arith.extui %9 : i1 to i32
    %c0_i32_9 = arith.constant 0 : i32
    %11 = arith.cmpi ne, %10, %c0_i32_9 : i32
    scf.if %11 {
      %c0_10 = arith.constant 0 : index
      %c0_11 = arith.constant 0 : index
      %12 = vector.load %arg9[%c0_10, %c0_11] : memref<128x128xf32, #tpu.memory_space<vmem>>, vector<128x128xf32>
      %c0_12 = arith.constant 0 : index
      %c0_13 = arith.constant 0 : index
      %13 = vector.load %arg7[%c0_12, %c0_13] : memref<1x128xf32, #tpu.memory_space<vmem>>, vector<1x128xf32>
      %14 = vector.broadcast %13 : vector<1x128xf32> to vector<128x128xf32>
      %15 = arith.addf %12, %14 : vector<128x128xf32>
      %16 = arith.truncf %15 : vector<128x128xf32> to vector<128x128xbf16>
      %c0_14 = arith.constant 0 : index
      %c0_15 = arith.constant 0 : index
      %17 = vector.load %arg8[%c0_14, %c0_15] : memref<128x128xbf16, #tpu.memory_space<vmem>>, vector<128x128xbf16>
      tpu.vector_store %arg8[%c0_14, %c0_15], %16 {strides = array<i32>} : memref<128x128xbf16, #tpu.memory_space<vmem>>, vector<128x128xbf16>,
    } else {
    }
    return
  }
  func.func @transform_0(%arg0: i32, %arg1: i32, %arg2: i32) -> (i32, i32) {
    %c0_i32 = arith.constant 0 : i32
    return %arg0, %arg2 : i32, i32
  }
  func.func @transform_1(%arg0: i32, %arg1: i32, %arg2: i32) -> (i32, i32) {
    %c0_i32 = arith.constant 0 : i32
    return %arg2, %arg1 : i32, i32
  }
  func.func @transform_2(%arg0: i32, %arg1: i32, %arg2: i32) -> (i32, i32) {
    %c0_i32 = arith.constant 0 : i32
    %c0_i32_0 = arith.constant 0 : i32
    return %c0_i32, %arg2 : i32, i32
  }
  func.func @transform_3(%arg0: i32, %arg1: i32, %arg2: i32) -> (i32, i32) {
    %c0_i32 = arith.constant 0 : i32
    %c0_i32_0 = arith.constant 0 : i32
    return %c0_i32, %arg2 : i32, i32
  }
  func.func @transform_4(%arg0: i32, %arg1: i32, %arg2: i32) -> (i32, i32) {
    %c0_i32 = arith.constant 0 : i32
    %c0_i32_0 = arith.constant 0 : i32
    return %c0_i32, %arg1 : i32, i32
  }
  func.func @transform_5(%arg0: i32, %arg1: i32, %arg2: i32) -> (i32, i32) {
    %c0_i32 = arith.constant 0 : i32
    return %arg0, %arg1 : i32, i32
  }
}

module attributes {stable_mosaic.version = 11 : i64} {
  func.func @_bn_stats_kernel(%arg0: i32, %arg1: memref<128x24xbf16, #tpu.memory_space<vmem>>, %arg2: memref<1x24xf32, #tpu.memory_space<vmem>>, %arg3: memref<1x24xf32, #tpu.memory_space<vmem>>, %arg4: memref<1x24xf32, #tpu.memory_space<vmem>>, %arg5: memref<1x24xf32, #tpu.memory_space<vmem>>, %arg6: memref<1x24xf32, #tpu.memory_space<vmem>>, %arg7: memref<1x24xf32, #tpu.memory_space<vmem>>) attributes {dimension_semantics = [#tpu.dimension_semantics<arbitrary>], iteration_bounds = array<i64: 1>, scalar_prefetch = 0 : i64, scratch_operands = 2 : i64, tpu.core_type = #tpu.core_type<tc>, window_params = [{transform_indices = @transform_0, window_bounds = array<i64: 128, 24>}, {pipeline_mode = #tpu.pipeline_mode<synchronous>, transform_indices = @transform_1, window_bounds = array<i64: 1, 24>}, {pipeline_mode = #tpu.pipeline_mode<synchronous>, transform_indices = @transform_2, window_bounds = array<i64: 1, 24>}, {pipeline_mode = #tpu.pipeline_mode<synchronous>, transform_indices = @transform_3, window_bounds = array<i64: 1, 24>}, {pipeline_mode = #tpu.pipeline_mode<synchronous>, transform_indices = @transform_4, window_bounds = array<i64: 1, 24>}]} {
    %c0_i32 = arith.constant 0 : i32
    %0 = arith.cmpi eq, %arg0, %c0_i32 : i32
    %1 = arith.extui %0 : i1 to i32
    %c0_i32_0 = arith.constant 0 : i32
    %2 = arith.cmpi ne, %1, %c0_i32_0 : i32
    scf.if %2 {
      %cst_13 = arith.constant 0.000000e+00 : f32
      %19 = vector.broadcast %cst_13 : f32 to vector<1x24xf32>
      %c0_14 = arith.constant 0 : index
      %c0_15 = arith.constant 0 : index
      %20 = vector.load %arg6[%c0_14, %c0_15] : memref<1x24xf32, #tpu.memory_space<vmem>>, vector<1x24xf32>
      tpu.vector_store %arg6[%c0_14, %c0_15], %19 {strides = array<i32>} : memref<1x24xf32, #tpu.memory_space<vmem>>, vector<1x24xf32>,
      %cst_16 = arith.constant 0.000000e+00 : f32
      %21 = vector.broadcast %cst_16 : f32 to vector<1x24xf32>
      %c0_17 = arith.constant 0 : index
      %c0_18 = arith.constant 0 : index
      %22 = vector.load %arg7[%c0_17, %c0_18] : memref<1x24xf32, #tpu.memory_space<vmem>>, vector<1x24xf32>
      tpu.vector_store %arg7[%c0_17, %c0_18], %21 {strides = array<i32>} : memref<1x24xf32, #tpu.memory_space<vmem>>, vector<1x24xf32>,
    } else {
    }
    %c0 = arith.constant 0 : index
    %c0_1 = arith.constant 0 : index
    %3 = vector.load %arg1[%c0, %c0_1] : memref<128x24xbf16, #tpu.memory_space<vmem>>, vector<128x24xbf16>
    %4 = arith.extf %3 : vector<128x24xbf16> to vector<128x24xf32>
    %c0_2 = arith.constant 0 : index
    %c0_3 = arith.constant 0 : index
    %5 = vector.load %arg6[%c0_2, %c0_3] : memref<1x24xf32, #tpu.memory_space<vmem>>, vector<1x24xf32>
    %cst = arith.constant dense<0.000000e+00> : vector<24xf32>
    %6 = vector.multi_reduction <add>, %4, %cst [0] : vector<128x24xf32> to vector<24xf32>
    %7 = vector.shape_cast %6 : vector<24xf32> to vector<1x24xf32>
    %8 = arith.addf %5, %7 : vector<1x24xf32>
    %c0_4 = arith.constant 0 : index
    %c0_5 = arith.constant 0 : index
    %9 = vector.load %arg6[%c0_4, %c0_5] : memref<1x24xf32, #tpu.memory_space<vmem>>, vector<1x24xf32>
    tpu.vector_store %arg6[%c0_4, %c0_5], %8 {strides = array<i32>} : memref<1x24xf32, #tpu.memory_space<vmem>>, vector<1x24xf32>,
    %c0_6 = arith.constant 0 : index
    %c0_7 = arith.constant 0 : index
    %10 = vector.load %arg7[%c0_6, %c0_7] : memref<1x24xf32, #tpu.memory_space<vmem>>, vector<1x24xf32>
    %11 = arith.mulf %4, %4 : vector<128x24xf32>
    %cst_8 = arith.constant dense<0.000000e+00> : vector<24xf32>
    %12 = vector.multi_reduction <add>, %11, %cst_8 [0] : vector<128x24xf32> to vector<24xf32>
    %13 = vector.shape_cast %12 : vector<24xf32> to vector<1x24xf32>
    %14 = arith.addf %10, %13 : vector<1x24xf32>
    %c0_9 = arith.constant 0 : index
    %c0_10 = arith.constant 0 : index
    %15 = vector.load %arg7[%c0_9, %c0_10] : memref<1x24xf32, #tpu.memory_space<vmem>>, vector<1x24xf32>
    tpu.vector_store %arg7[%c0_9, %c0_10], %14 {strides = array<i32>} : memref<1x24xf32, #tpu.memory_space<vmem>>, vector<1x24xf32>,
    %c0_i32_11 = arith.constant 0 : i32
    %16 = arith.cmpi eq, %arg0, %c0_i32_11 : i32
    %17 = arith.extui %16 : i1 to i32
    %c0_i32_12 = arith.constant 0 : i32
    %18 = arith.cmpi ne, %17, %c0_i32_12 : i32
    scf.if %18 {
      %c0_13 = arith.constant 0 : index
      %c0_14 = arith.constant 0 : index
      %19 = vector.load %arg6[%c0_13, %c0_14] : memref<1x24xf32, #tpu.memory_space<vmem>>, vector<1x24xf32>
      %cst_15 = arith.constant 7.812500e-03 : f32
      %20 = vector.broadcast %cst_15 : f32 to vector<1x24xf32>
      %21 = arith.mulf %19, %20 : vector<1x24xf32>
      %c0_16 = arith.constant 0 : index
      %c0_17 = arith.constant 0 : index
      %22 = vector.load %arg7[%c0_16, %c0_17] : memref<1x24xf32, #tpu.memory_space<vmem>>, vector<1x24xf32>
      %cst_18 = arith.constant 7.812500e-03 : f32
      %23 = vector.broadcast %cst_18 : f32 to vector<1x24xf32>
      %24 = arith.mulf %22, %23 : vector<1x24xf32>
      %25 = arith.mulf %21, %21 : vector<1x24xf32>
      %26 = arith.subf %24, %25 : vector<1x24xf32>
      %cst_19 = arith.constant 0.000000e+00 : f32
      %27 = vector.broadcast %cst_19 : f32 to vector<1x24xf32>
      %28 = arith.maximumf %26, %27 : vector<1x24xf32>
      %cst_20 = arith.constant 9.99999974E-6 : f32
      %29 = vector.broadcast %cst_20 : f32 to vector<1x24xf32>
      %30 = arith.addf %28, %29 : vector<1x24xf32>
      %31 = math.rsqrt %30 : vector<1x24xf32>
      %c0_21 = arith.constant 0 : index
      %c0_22 = arith.constant 0 : index
      %32 = vector.load %arg2[%c0_21, %c0_22] : memref<1x24xf32, #tpu.memory_space<vmem>>, vector<1x24xf32>
      %33 = arith.mulf %32, %31 : vector<1x24xf32>
      %c0_23 = arith.constant 0 : index
      %c0_24 = arith.constant 0 : index
      %34 = vector.load %arg4[%c0_23, %c0_24] : memref<1x24xf32, #tpu.memory_space<vmem>>, vector<1x24xf32>
      tpu.vector_store %arg4[%c0_23, %c0_24], %33 {strides = array<i32>} : memref<1x24xf32, #tpu.memory_space<vmem>>, vector<1x24xf32>,
      %c0_25 = arith.constant 0 : index
      %c0_26 = arith.constant 0 : index
      %35 = vector.load %arg3[%c0_25, %c0_26] : memref<1x24xf32, #tpu.memory_space<vmem>>, vector<1x24xf32>
      %36 = arith.mulf %21, %33 : vector<1x24xf32>
      %37 = arith.subf %35, %36 : vector<1x24xf32>
      %c0_27 = arith.constant 0 : index
      %c0_28 = arith.constant 0 : index
      %38 = vector.load %arg5[%c0_27, %c0_28] : memref<1x24xf32, #tpu.memory_space<vmem>>, vector<1x24xf32>
      tpu.vector_store %arg5[%c0_27, %c0_28], %37 {strides = array<i32>} : memref<1x24xf32, #tpu.memory_space<vmem>>, vector<1x24xf32>,
    } else {
    }
    return
  }
  func.func @transform_0(%arg0: i32) -> (i32, i32) {
    %c0_i32 = arith.constant 0 : i32
    %c0_i32_0 = arith.constant 0 : i32
    return %arg0, %c0_i32 : i32, i32
  }
  func.func @transform_1(%arg0: i32) -> (i32, i32) {
    %c0_i32 = arith.constant 0 : i32
    %c0_i32_0 = arith.constant 0 : i32
    %c0_i32_1 = arith.constant 0 : i32
    return %c0_i32, %c0_i32_0 : i32, i32
  }
  func.func @transform_2(%arg0: i32) -> (i32, i32) {
    %c0_i32 = arith.constant 0 : i32
    %c0_i32_0 = arith.constant 0 : i32
    %c0_i32_1 = arith.constant 0 : i32
    return %c0_i32, %c0_i32_0 : i32, i32
  }
  func.func @transform_3(%arg0: i32) -> (i32, i32) {
    %c0_i32 = arith.constant 0 : i32
    %c0_i32_0 = arith.constant 0 : i32
    %c0_i32_1 = arith.constant 0 : i32
    return %c0_i32, %c0_i32_0 : i32, i32
  }
  func.func @transform_4(%arg0: i32) -> (i32, i32) {
    %c0_i32 = arith.constant 0 : i32
    %c0_i32_0 = arith.constant 0 : i32
    %c0_i32_1 = arith.constant 0 : i32
    return %c0_i32, %c0_i32_0 : i32, i32
  }
}

module attributes {stable_mosaic.version = 11 : i64} {
  func.func @_mm_kernel(%arg0: i32, %arg1: i32, %arg2: i32, %arg3: memref<128x24xbf16, #tpu.memory_space<vmem>>, %arg4: memref<24x128xbf16, #tpu.memory_space<vmem>>, %arg5: memref<1x24xf32, #tpu.memory_space<vmem>>, %arg6: memref<1x24xf32, #tpu.memory_space<vmem>>, %arg7: memref<1x128xf32, #tpu.memory_space<vmem>>, %arg8: memref<128x128xbf16, #tpu.memory_space<vmem>>, %arg9: memref<128x128xf32, #tpu.memory_space<vmem>>) attributes {dimension_semantics = [#tpu.dimension_semantics<parallel>, #tpu.dimension_semantics<parallel>, #tpu.dimension_semantics<arbitrary>], iteration_bounds = array<i64: 1, 1, 1>, scalar_prefetch = 0 : i64, scratch_operands = 1 : i64, tpu.core_type = #tpu.core_type<tc>, window_params = [{transform_indices = @transform_0, window_bounds = array<i64: 128, 24>}, {transform_indices = @transform_1, window_bounds = array<i64: 24, 128>}, {transform_indices = @transform_2, window_bounds = array<i64: 1, 24>}, {transform_indices = @transform_3, window_bounds = array<i64: 1, 24>}, {transform_indices = @transform_4, window_bounds = array<i64: 1, 128>}, {transform_indices = @transform_5, window_bounds = array<i64: 128, 128>}]} {
    %c0_i32 = arith.constant 0 : i32
    %0 = arith.cmpi eq, %arg2, %c0_i32 : i32
    %1 = arith.extui %0 : i1 to i32
    %c0_i32_0 = arith.constant 0 : i32
    %2 = arith.cmpi ne, %1, %c0_i32_0 : i32
    scf.if %2 {
      %cst_15 = arith.constant 0.000000e+00 : f32
      %22 = vector.broadcast %cst_15 : f32 to vector<128x128xf32>
      %c0_16 = arith.constant 0 : index
      %c0_17 = arith.constant 0 : index
      %23 = vector.load %arg9[%c0_16, %c0_17] : memref<128x128xf32, #tpu.memory_space<vmem>>, vector<128x128xf32>
      tpu.vector_store %arg9[%c0_16, %c0_17], %22 {strides = array<i32>} : memref<128x128xf32, #tpu.memory_space<vmem>>, vector<128x128xf32>,
    } else {
    }
    %c0 = arith.constant 0 : index
    %c0_1 = arith.constant 0 : index
    %3 = vector.load %arg3[%c0, %c0_1] : memref<128x24xbf16, #tpu.memory_space<vmem>>, vector<128x24xbf16>
    %4 = arith.extf %3 : vector<128x24xbf16> to vector<128x24xf32>
    %c0_2 = arith.constant 0 : index
    %c0_3 = arith.constant 0 : index
    %5 = vector.load %arg5[%c0_2, %c0_3] : memref<1x24xf32, #tpu.memory_space<vmem>>, vector<1x24xf32>
    %6 = vector.broadcast %5 : vector<1x24xf32> to vector<128x24xf32>
    %7 = arith.mulf %4, %6 : vector<128x24xf32>
    %c0_4 = arith.constant 0 : index
    %c0_5 = arith.constant 0 : index
    %8 = vector.load %arg6[%c0_4, %c0_5] : memref<1x24xf32, #tpu.memory_space<vmem>>, vector<1x24xf32>
    %9 = vector.broadcast %8 : vector<1x24xf32> to vector<128x24xf32>
    %10 = arith.addf %7, %9 : vector<128x24xf32>
    %cst = arith.constant 0.000000e+00 : f32
    %11 = vector.broadcast %cst : f32 to vector<128x24xf32>
    %12 = arith.maximumf %10, %11 : vector<128x24xf32>
    %13 = arith.truncf %12 : vector<128x24xf32> to vector<128x24xbf16>
    %c0_6 = arith.constant 0 : index
    %c0_7 = arith.constant 0 : index
    %14 = vector.load %arg9[%c0_6, %c0_7] : memref<128x128xf32, #tpu.memory_space<vmem>>, vector<128x128xf32>
    %c0_8 = arith.constant 0 : index
    %c0_9 = arith.constant 0 : index
    %15 = vector.load %arg4[%c0_8, %c0_9] : memref<24x128xbf16, #tpu.memory_space<vmem>>, vector<24x128xbf16>
    %cst_10 = arith.constant dense<0.000000e+00> : vector<128x128xf32>
    %16 = tpu.matmul %13, %15, %cst_10 {dimension_numbers = #tpu.dot_dimension_numbers<[1], [0], [0], [1], [0, 0, 1, 1], [], []>} : vector<128x24xbf16>, vector<24x128xbf16>, vector<128x128xf32> -> vector<128x128xf32>
    %17 = arith.addf %14, %16 : vector<128x128xf32>
    %c0_11 = arith.constant 0 : index
    %c0_12 = arith.constant 0 : index
    %18 = vector.load %arg9[%c0_11, %c0_12] : memref<128x128xf32, #tpu.memory_space<vmem>>, vector<128x128xf32>
    tpu.vector_store %arg9[%c0_11, %c0_12], %17 {strides = array<i32>} : memref<128x128xf32, #tpu.memory_space<vmem>>, vector<128x128xf32>,
    %c0_i32_13 = arith.constant 0 : i32
    %19 = arith.cmpi eq, %arg2, %c0_i32_13 : i32
    %20 = arith.extui %19 : i1 to i32
    %c0_i32_14 = arith.constant 0 : i32
    %21 = arith.cmpi ne, %20, %c0_i32_14 : i32
    scf.if %21 {
      %c0_15 = arith.constant 0 : index
      %c0_16 = arith.constant 0 : index
      %22 = vector.load %arg9[%c0_15, %c0_16] : memref<128x128xf32, #tpu.memory_space<vmem>>, vector<128x128xf32>
      %c0_17 = arith.constant 0 : index
      %c0_18 = arith.constant 0 : index
      %23 = vector.load %arg7[%c0_17, %c0_18] : memref<1x128xf32, #tpu.memory_space<vmem>>, vector<1x128xf32>
      %24 = vector.broadcast %23 : vector<1x128xf32> to vector<128x128xf32>
      %25 = arith.addf %22, %24 : vector<128x128xf32>
      %26 = arith.truncf %25 : vector<128x128xf32> to vector<128x128xbf16>
      %c0_19 = arith.constant 0 : index
      %c0_20 = arith.constant 0 : index
      %27 = vector.load %arg8[%c0_19, %c0_20] : memref<128x128xbf16, #tpu.memory_space<vmem>>, vector<128x128xbf16>
      tpu.vector_store %arg8[%c0_19, %c0_20], %26 {strides = array<i32>} : memref<128x128xbf16, #tpu.memory_space<vmem>>, vector<128x128xbf16>,
    } else {
    }
    return
  }
  func.func @transform_0(%arg0: i32, %arg1: i32, %arg2: i32) -> (i32, i32) {
    %c0_i32 = arith.constant 0 : i32
    return %arg0, %arg2 : i32, i32
  }
  func.func @transform_1(%arg0: i32, %arg1: i32, %arg2: i32) -> (i32, i32) {
    %c0_i32 = arith.constant 0 : i32
    return %arg2, %arg1 : i32, i32
  }
  func.func @transform_2(%arg0: i32, %arg1: i32, %arg2: i32) -> (i32, i32) {
    %c0_i32 = arith.constant 0 : i32
    %c0_i32_0 = arith.constant 0 : i32
    return %c0_i32, %arg2 : i32, i32
  }
  func.func @transform_3(%arg0: i32, %arg1: i32, %arg2: i32) -> (i32, i32) {
    %c0_i32 = arith.constant 0 : i32
    %c0_i32_0 = arith.constant 0 : i32
    return %c0_i32, %arg2 : i32, i32
  }
  func.func @transform_4(%arg0: i32, %arg1: i32, %arg2: i32) -> (i32, i32) {
    %c0_i32 = arith.constant 0 : i32
    %c0_i32_0 = arith.constant 0 : i32
    return %c0_i32, %arg1 : i32, i32
  }
  func.func @transform_5(%arg0: i32, %arg1: i32, %arg2: i32) -> (i32, i32) {
    %c0_i32 = arith.constant 0 : i32
    return %arg0, %arg1 : i32, i32
  }
}

module attributes {stable_mosaic.version = 11 : i64} {
  func.func @_bn_stats_kernel(%arg0: i32, %arg1: memref<128x32xbf16, #tpu.memory_space<vmem>>, %arg2: memref<1x32xf32, #tpu.memory_space<vmem>>, %arg3: memref<1x32xf32, #tpu.memory_space<vmem>>, %arg4: memref<1x32xf32, #tpu.memory_space<vmem>>, %arg5: memref<1x32xf32, #tpu.memory_space<vmem>>, %arg6: memref<1x32xf32, #tpu.memory_space<vmem>>, %arg7: memref<1x32xf32, #tpu.memory_space<vmem>>) attributes {dimension_semantics = [#tpu.dimension_semantics<arbitrary>], iteration_bounds = array<i64: 1>, scalar_prefetch = 0 : i64, scratch_operands = 2 : i64, tpu.core_type = #tpu.core_type<tc>, window_params = [{transform_indices = @transform_0, window_bounds = array<i64: 128, 32>}, {pipeline_mode = #tpu.pipeline_mode<synchronous>, transform_indices = @transform_1, window_bounds = array<i64: 1, 32>}, {pipeline_mode = #tpu.pipeline_mode<synchronous>, transform_indices = @transform_2, window_bounds = array<i64: 1, 32>}, {pipeline_mode = #tpu.pipeline_mode<synchronous>, transform_indices = @transform_3, window_bounds = array<i64: 1, 32>}, {pipeline_mode = #tpu.pipeline_mode<synchronous>, transform_indices = @transform_4, window_bounds = array<i64: 1, 32>}]} {
    %c0_i32 = arith.constant 0 : i32
    %0 = arith.cmpi eq, %arg0, %c0_i32 : i32
    %1 = arith.extui %0 : i1 to i32
    %c0_i32_0 = arith.constant 0 : i32
    %2 = arith.cmpi ne, %1, %c0_i32_0 : i32
    scf.if %2 {
      %cst_13 = arith.constant 0.000000e+00 : f32
      %19 = vector.broadcast %cst_13 : f32 to vector<1x32xf32>
      %c0_14 = arith.constant 0 : index
      %c0_15 = arith.constant 0 : index
      %20 = vector.load %arg6[%c0_14, %c0_15] : memref<1x32xf32, #tpu.memory_space<vmem>>, vector<1x32xf32>
      tpu.vector_store %arg6[%c0_14, %c0_15], %19 {strides = array<i32>} : memref<1x32xf32, #tpu.memory_space<vmem>>, vector<1x32xf32>,
      %cst_16 = arith.constant 0.000000e+00 : f32
      %21 = vector.broadcast %cst_16 : f32 to vector<1x32xf32>
      %c0_17 = arith.constant 0 : index
      %c0_18 = arith.constant 0 : index
      %22 = vector.load %arg7[%c0_17, %c0_18] : memref<1x32xf32, #tpu.memory_space<vmem>>, vector<1x32xf32>
      tpu.vector_store %arg7[%c0_17, %c0_18], %21 {strides = array<i32>} : memref<1x32xf32, #tpu.memory_space<vmem>>, vector<1x32xf32>,
    } else {
    }
    %c0 = arith.constant 0 : index
    %c0_1 = arith.constant 0 : index
    %3 = vector.load %arg1[%c0, %c0_1] : memref<128x32xbf16, #tpu.memory_space<vmem>>, vector<128x32xbf16>
    %4 = arith.extf %3 : vector<128x32xbf16> to vector<128x32xf32>
    %c0_2 = arith.constant 0 : index
    %c0_3 = arith.constant 0 : index
    %5 = vector.load %arg6[%c0_2, %c0_3] : memref<1x32xf32, #tpu.memory_space<vmem>>, vector<1x32xf32>
    %cst = arith.constant dense<0.000000e+00> : vector<32xf32>
    %6 = vector.multi_reduction <add>, %4, %cst [0] : vector<128x32xf32> to vector<32xf32>
    %7 = vector.shape_cast %6 : vector<32xf32> to vector<1x32xf32>
    %8 = arith.addf %5, %7 : vector<1x32xf32>
    %c0_4 = arith.constant 0 : index
    %c0_5 = arith.constant 0 : index
    %9 = vector.load %arg6[%c0_4, %c0_5] : memref<1x32xf32, #tpu.memory_space<vmem>>, vector<1x32xf32>
    tpu.vector_store %arg6[%c0_4, %c0_5], %8 {strides = array<i32>} : memref<1x32xf32, #tpu.memory_space<vmem>>, vector<1x32xf32>,
    %c0_6 = arith.constant 0 : index
    %c0_7 = arith.constant 0 : index
    %10 = vector.load %arg7[%c0_6, %c0_7] : memref<1x32xf32, #tpu.memory_space<vmem>>, vector<1x32xf32>
    %11 = arith.mulf %4, %4 : vector<128x32xf32>
    %cst_8 = arith.constant dense<0.000000e+00> : vector<32xf32>
    %12 = vector.multi_reduction <add>, %11, %cst_8 [0] : vector<128x32xf32> to vector<32xf32>
    %13 = vector.shape_cast %12 : vector<32xf32> to vector<1x32xf32>
    %14 = arith.addf %10, %13 : vector<1x32xf32>
    %c0_9 = arith.constant 0 : index
    %c0_10 = arith.constant 0 : index
    %15 = vector.load %arg7[%c0_9, %c0_10] : memref<1x32xf32, #tpu.memory_space<vmem>>, vector<1x32xf32>
    tpu.vector_store %arg7[%c0_9, %c0_10], %14 {strides = array<i32>} : memref<1x32xf32, #tpu.memory_space<vmem>>, vector<1x32xf32>,
    %c0_i32_11 = arith.constant 0 : i32
    %16 = arith.cmpi eq, %arg0, %c0_i32_11 : i32
    %17 = arith.extui %16 : i1 to i32
    %c0_i32_12 = arith.constant 0 : i32
    %18 = arith.cmpi ne, %17, %c0_i32_12 : i32
    scf.if %18 {
      %c0_13 = arith.constant 0 : index
      %c0_14 = arith.constant 0 : index
      %19 = vector.load %arg6[%c0_13, %c0_14] : memref<1x32xf32, #tpu.memory_space<vmem>>, vector<1x32xf32>
      %cst_15 = arith.constant 7.812500e-03 : f32
      %20 = vector.broadcast %cst_15 : f32 to vector<1x32xf32>
      %21 = arith.mulf %19, %20 : vector<1x32xf32>
      %c0_16 = arith.constant 0 : index
      %c0_17 = arith.constant 0 : index
      %22 = vector.load %arg7[%c0_16, %c0_17] : memref<1x32xf32, #tpu.memory_space<vmem>>, vector<1x32xf32>
      %cst_18 = arith.constant 7.812500e-03 : f32
      %23 = vector.broadcast %cst_18 : f32 to vector<1x32xf32>
      %24 = arith.mulf %22, %23 : vector<1x32xf32>
      %25 = arith.mulf %21, %21 : vector<1x32xf32>
      %26 = arith.subf %24, %25 : vector<1x32xf32>
      %cst_19 = arith.constant 0.000000e+00 : f32
      %27 = vector.broadcast %cst_19 : f32 to vector<1x32xf32>
      %28 = arith.maximumf %26, %27 : vector<1x32xf32>
      %cst_20 = arith.constant 9.99999974E-6 : f32
      %29 = vector.broadcast %cst_20 : f32 to vector<1x32xf32>
      %30 = arith.addf %28, %29 : vector<1x32xf32>
      %31 = math.rsqrt %30 : vector<1x32xf32>
      %c0_21 = arith.constant 0 : index
      %c0_22 = arith.constant 0 : index
      %32 = vector.load %arg2[%c0_21, %c0_22] : memref<1x32xf32, #tpu.memory_space<vmem>>, vector<1x32xf32>
      %33 = arith.mulf %32, %31 : vector<1x32xf32>
      %c0_23 = arith.constant 0 : index
      %c0_24 = arith.constant 0 : index
      %34 = vector.load %arg4[%c0_23, %c0_24] : memref<1x32xf32, #tpu.memory_space<vmem>>, vector<1x32xf32>
      tpu.vector_store %arg4[%c0_23, %c0_24], %33 {strides = array<i32>} : memref<1x32xf32, #tpu.memory_space<vmem>>, vector<1x32xf32>,
      %c0_25 = arith.constant 0 : index
      %c0_26 = arith.constant 0 : index
      %35 = vector.load %arg3[%c0_25, %c0_26] : memref<1x32xf32, #tpu.memory_space<vmem>>, vector<1x32xf32>
      %36 = arith.mulf %21, %33 : vector<1x32xf32>
      %37 = arith.subf %35, %36 : vector<1x32xf32>
      %c0_27 = arith.constant 0 : index
      %c0_28 = arith.constant 0 : index
      %38 = vector.load %arg5[%c0_27, %c0_28] : memref<1x32xf32, #tpu.memory_space<vmem>>, vector<1x32xf32>
      tpu.vector_store %arg5[%c0_27, %c0_28], %37 {strides = array<i32>} : memref<1x32xf32, #tpu.memory_space<vmem>>, vector<1x32xf32>,
    } else {
    }
    return
  }
  func.func @transform_0(%arg0: i32) -> (i32, i32) {
    %c0_i32 = arith.constant 0 : i32
    %c0_i32_0 = arith.constant 0 : i32
    return %arg0, %c0_i32 : i32, i32
  }
  func.func @transform_1(%arg0: i32) -> (i32, i32) {
    %c0_i32 = arith.constant 0 : i32
    %c0_i32_0 = arith.constant 0 : i32
    %c0_i32_1 = arith.constant 0 : i32
    return %c0_i32, %c0_i32_0 : i32, i32
  }
  func.func @transform_2(%arg0: i32) -> (i32, i32) {
    %c0_i32 = arith.constant 0 : i32
    %c0_i32_0 = arith.constant 0 : i32
    %c0_i32_1 = arith.constant 0 : i32
    return %c0_i32, %c0_i32_0 : i32, i32
  }
  func.func @transform_3(%arg0: i32) -> (i32, i32) {
    %c0_i32 = arith.constant 0 : i32
    %c0_i32_0 = arith.constant 0 : i32
    %c0_i32_1 = arith.constant 0 : i32
    return %c0_i32, %c0_i32_0 : i32, i32
  }
  func.func @transform_4(%arg0: i32) -> (i32, i32) {
    %c0_i32 = arith.constant 0 : i32
    %c0_i32_0 = arith.constant 0 : i32
    %c0_i32_1 = arith.constant 0 : i32
    return %c0_i32, %c0_i32_0 : i32, i32
  }
}

module attributes {stable_mosaic.version = 11 : i64} {
  func.func @_mm_kernel(%arg0: i32, %arg1: i32, %arg2: i32, %arg3: memref<128x32xbf16, #tpu.memory_space<vmem>>, %arg4: memref<32x128xbf16, #tpu.memory_space<vmem>>, %arg5: memref<1x32xf32, #tpu.memory_space<vmem>>, %arg6: memref<1x32xf32, #tpu.memory_space<vmem>>, %arg7: memref<1x128xf32, #tpu.memory_space<vmem>>, %arg8: memref<128x128xbf16, #tpu.memory_space<vmem>>, %arg9: memref<128x128xf32, #tpu.memory_space<vmem>>) attributes {dimension_semantics = [#tpu.dimension_semantics<parallel>, #tpu.dimension_semantics<parallel>, #tpu.dimension_semantics<arbitrary>], iteration_bounds = array<i64: 1, 1, 1>, scalar_prefetch = 0 : i64, scratch_operands = 1 : i64, tpu.core_type = #tpu.core_type<tc>, window_params = [{transform_indices = @transform_0, window_bounds = array<i64: 128, 32>}, {transform_indices = @transform_1, window_bounds = array<i64: 32, 128>}, {transform_indices = @transform_2, window_bounds = array<i64: 1, 32>}, {transform_indices = @transform_3, window_bounds = array<i64: 1, 32>}, {transform_indices = @transform_4, window_bounds = array<i64: 1, 128>}, {transform_indices = @transform_5, window_bounds = array<i64: 128, 128>}]} {
    %c0_i32 = arith.constant 0 : i32
    %0 = arith.cmpi eq, %arg2, %c0_i32 : i32
    %1 = arith.extui %0 : i1 to i32
    %c0_i32_0 = arith.constant 0 : i32
    %2 = arith.cmpi ne, %1, %c0_i32_0 : i32
    scf.if %2 {
      %cst_15 = arith.constant 0.000000e+00 : f32
      %22 = vector.broadcast %cst_15 : f32 to vector<128x128xf32>
      %c0_16 = arith.constant 0 : index
      %c0_17 = arith.constant 0 : index
      %23 = vector.load %arg9[%c0_16, %c0_17] : memref<128x128xf32, #tpu.memory_space<vmem>>, vector<128x128xf32>
      tpu.vector_store %arg9[%c0_16, %c0_17], %22 {strides = array<i32>} : memref<128x128xf32, #tpu.memory_space<vmem>>, vector<128x128xf32>,
    } else {
    }
    %c0 = arith.constant 0 : index
    %c0_1 = arith.constant 0 : index
    %3 = vector.load %arg3[%c0, %c0_1] : memref<128x32xbf16, #tpu.memory_space<vmem>>, vector<128x32xbf16>
    %4 = arith.extf %3 : vector<128x32xbf16> to vector<128x32xf32>
    %c0_2 = arith.constant 0 : index
    %c0_3 = arith.constant 0 : index
    %5 = vector.load %arg5[%c0_2, %c0_3] : memref<1x32xf32, #tpu.memory_space<vmem>>, vector<1x32xf32>
    %6 = vector.broadcast %5 : vector<1x32xf32> to vector<128x32xf32>
    %7 = arith.mulf %4, %6 : vector<128x32xf32>
    %c0_4 = arith.constant 0 : index
    %c0_5 = arith.constant 0 : index
    %8 = vector.load %arg6[%c0_4, %c0_5] : memref<1x32xf32, #tpu.memory_space<vmem>>, vector<1x32xf32>
    %9 = vector.broadcast %8 : vector<1x32xf32> to vector<128x32xf32>
    %10 = arith.addf %7, %9 : vector<128x32xf32>
    %cst = arith.constant 0.000000e+00 : f32
    %11 = vector.broadcast %cst : f32 to vector<128x32xf32>
    %12 = arith.maximumf %10, %11 : vector<128x32xf32>
    %13 = arith.truncf %12 : vector<128x32xf32> to vector<128x32xbf16>
    %c0_6 = arith.constant 0 : index
    %c0_7 = arith.constant 0 : index
    %14 = vector.load %arg9[%c0_6, %c0_7] : memref<128x128xf32, #tpu.memory_space<vmem>>, vector<128x128xf32>
    %c0_8 = arith.constant 0 : index
    %c0_9 = arith.constant 0 : index
    %15 = vector.load %arg4[%c0_8, %c0_9] : memref<32x128xbf16, #tpu.memory_space<vmem>>, vector<32x128xbf16>
    %cst_10 = arith.constant dense<0.000000e+00> : vector<128x128xf32>
    %16 = tpu.matmul %13, %15, %cst_10 {dimension_numbers = #tpu.dot_dimension_numbers<[1], [0], [0], [1], [0, 0, 1, 1], [], []>} : vector<128x32xbf16>, vector<32x128xbf16>, vector<128x128xf32> -> vector<128x128xf32>
    %17 = arith.addf %14, %16 : vector<128x128xf32>
    %c0_11 = arith.constant 0 : index
    %c0_12 = arith.constant 0 : index
    %18 = vector.load %arg9[%c0_11, %c0_12] : memref<128x128xf32, #tpu.memory_space<vmem>>, vector<128x128xf32>
    tpu.vector_store %arg9[%c0_11, %c0_12], %17 {strides = array<i32>} : memref<128x128xf32, #tpu.memory_space<vmem>>, vector<128x128xf32>,
    %c0_i32_13 = arith.constant 0 : i32
    %19 = arith.cmpi eq, %arg2, %c0_i32_13 : i32
    %20 = arith.extui %19 : i1 to i32
    %c0_i32_14 = arith.constant 0 : i32
    %21 = arith.cmpi ne, %20, %c0_i32_14 : i32
    scf.if %21 {
      %c0_15 = arith.constant 0 : index
      %c0_16 = arith.constant 0 : index
      %22 = vector.load %arg9[%c0_15, %c0_16] : memref<128x128xf32, #tpu.memory_space<vmem>>, vector<128x128xf32>
      %c0_17 = arith.constant 0 : index
      %c0_18 = arith.constant 0 : index
      %23 = vector.load %arg7[%c0_17, %c0_18] : memref<1x128xf32, #tpu.memory_space<vmem>>, vector<1x128xf32>
      %24 = vector.broadcast %23 : vector<1x128xf32> to vector<128x128xf32>
      %25 = arith.addf %22, %24 : vector<128x128xf32>
      %26 = arith.truncf %25 : vector<128x128xf32> to vector<128x128xbf16>
      %c0_19 = arith.constant 0 : index
      %c0_20 = arith.constant 0 : index
      %27 = vector.load %arg8[%c0_19, %c0_20] : memref<128x128xbf16, #tpu.memory_space<vmem>>, vector<128x128xbf16>
      tpu.vector_store %arg8[%c0_19, %c0_20], %26 {strides = array<i32>} : memref<128x128xbf16, #tpu.memory_space<vmem>>, vector<128x128xbf16>,
    } else {
    }
    return
  }
  func.func @transform_0(%arg0: i32, %arg1: i32, %arg2: i32) -> (i32, i32) {
    %c0_i32 = arith.constant 0 : i32
    return %arg0, %arg2 : i32, i32
  }
  func.func @transform_1(%arg0: i32, %arg1: i32, %arg2: i32) -> (i32, i32) {
    %c0_i32 = arith.constant 0 : i32
    return %arg2, %arg1 : i32, i32
  }
  func.func @transform_2(%arg0: i32, %arg1: i32, %arg2: i32) -> (i32, i32) {
    %c0_i32 = arith.constant 0 : i32
    %c0_i32_0 = arith.constant 0 : i32
    return %c0_i32, %arg2 : i32, i32
  }
  func.func @transform_3(%arg0: i32, %arg1: i32, %arg2: i32) -> (i32, i32) {
    %c0_i32 = arith.constant 0 : i32
    %c0_i32_0 = arith.constant 0 : i32
    return %c0_i32, %arg2 : i32, i32
  }
  func.func @transform_4(%arg0: i32, %arg1: i32, %arg2: i32) -> (i32, i32) {
    %c0_i32 = arith.constant 0 : i32
    %c0_i32_0 = arith.constant 0 : i32
    return %c0_i32, %arg1 : i32, i32
  }
  func.func @transform_5(%arg0: i32, %arg1: i32, %arg2: i32) -> (i32, i32) {
    %c0_i32 = arith.constant 0 : i32
    return %arg0, %arg1 : i32, i32
  }
}

module attributes {stable_mosaic.version = 11 : i64} {
  func.func @_pool_reduce_kernel(%arg0: i32, %arg1: memref<4x32x16xbf16, #tpu.memory_space<vmem>>, %arg2: memref<32x16xbf16, #tpu.memory_space<vmem>>) attributes {dimension_semantics = [#tpu.dimension_semantics<parallel>], iteration_bounds = array<i64: 1>, scalar_prefetch = 0 : i64, scratch_operands = 0 : i64, tpu.core_type = #tpu.core_type<tc>, window_params = [{transform_indices = @transform_0, window_bounds = array<i64: 4, 32, 16>}, {transform_indices = @transform_1, window_bounds = array<i64: 32, 16>}]} {
    %c0 = arith.constant 0 : index
    %c0_0 = arith.constant 0 : index
    %c0_1 = arith.constant 0 : index
    %0 = vector.load %arg1[%c0, %c0_0, %c0_1] : memref<4x32x16xbf16, #tpu.memory_space<vmem>>, vector<4x32x16xbf16>
    %1 = arith.extf %0 : vector<4x32x16xbf16> to vector<4x32x16xf32>
    %cst = arith.constant dense<0.000000e+00> : vector<32x16xf32>
    %2 = vector.multi_reduction <add>, %1, %cst [0] : vector<4x32x16xf32> to vector<32x16xf32>
    %cst_2 = arith.constant 2.500000e-01 : f32
    %3 = vector.broadcast %cst_2 : f32 to vector<32x16xf32>
    %4 = arith.mulf %2, %3 : vector<32x16xf32>
    %5 = arith.truncf %4 : vector<32x16xf32> to vector<32x16xbf16>
    %c0_3 = arith.constant 0 : index
    %c0_4 = arith.constant 0 : index
    %6 = vector.load %arg2[%c0_3, %c0_4] : memref<32x16xbf16, #tpu.memory_space<vmem>>, vector<32x16xbf16>
    tpu.vector_store %arg2[%c0_3, %c0_4], %5 {strides = array<i32>} : memref<32x16xbf16, #tpu.memory_space<vmem>>, vector<32x16xbf16>,
    return
  }
  func.func @transform_0(%arg0: i32) -> (i32, i32, i32) {
    %c0_i32 = arith.constant 0 : i32
    %c0_i32_0 = arith.constant 0 : i32
    %c0_i32_1 = arith.constant 0 : i32
    return %c0_i32, %arg0, %c0_i32_0 : i32, i32, i32
  }
  func.func @transform_1(%arg0: i32) -> (i32, i32) {
    %c0_i32 = arith.constant 0 : i32
    %c0_i32_0 = arith.constant 0 : i32
    return %arg0, %c0_i32 : i32, i32
  }
}

module attributes {stable_mosaic.version = 11 : i64} {
  func.func @_bn_stats_kernel(%arg0: i32, %arg1: memref<32x16xbf16, #tpu.memory_space<vmem>>, %arg2: memref<1x16xf32, #tpu.memory_space<vmem>>, %arg3: memref<1x16xf32, #tpu.memory_space<vmem>>, %arg4: memref<1x16xf32, #tpu.memory_space<vmem>>, %arg5: memref<1x16xf32, #tpu.memory_space<vmem>>, %arg6: memref<1x16xf32, #tpu.memory_space<vmem>>, %arg7: memref<1x16xf32, #tpu.memory_space<vmem>>) attributes {dimension_semantics = [#tpu.dimension_semantics<arbitrary>], iteration_bounds = array<i64: 1>, scalar_prefetch = 0 : i64, scratch_operands = 2 : i64, tpu.core_type = #tpu.core_type<tc>, window_params = [{transform_indices = @transform_0, window_bounds = array<i64: 32, 16>}, {pipeline_mode = #tpu.pipeline_mode<synchronous>, transform_indices = @transform_1, window_bounds = array<i64: 1, 16>}, {pipeline_mode = #tpu.pipeline_mode<synchronous>, transform_indices = @transform_2, window_bounds = array<i64: 1, 16>}, {pipeline_mode = #tpu.pipeline_mode<synchronous>, transform_indices = @transform_3, window_bounds = array<i64: 1, 16>}, {pipeline_mode = #tpu.pipeline_mode<synchronous>, transform_indices = @transform_4, window_bounds = array<i64: 1, 16>}]} {
    %c0_i32 = arith.constant 0 : i32
    %0 = arith.cmpi eq, %arg0, %c0_i32 : i32
    %1 = arith.extui %0 : i1 to i32
    %c0_i32_0 = arith.constant 0 : i32
    %2 = arith.cmpi ne, %1, %c0_i32_0 : i32
    scf.if %2 {
      %cst_13 = arith.constant 0.000000e+00 : f32
      %19 = vector.broadcast %cst_13 : f32 to vector<1x16xf32>
      %c0_14 = arith.constant 0 : index
      %c0_15 = arith.constant 0 : index
      %20 = vector.load %arg6[%c0_14, %c0_15] : memref<1x16xf32, #tpu.memory_space<vmem>>, vector<1x16xf32>
      tpu.vector_store %arg6[%c0_14, %c0_15], %19 {strides = array<i32>} : memref<1x16xf32, #tpu.memory_space<vmem>>, vector<1x16xf32>,
      %cst_16 = arith.constant 0.000000e+00 : f32
      %21 = vector.broadcast %cst_16 : f32 to vector<1x16xf32>
      %c0_17 = arith.constant 0 : index
      %c0_18 = arith.constant 0 : index
      %22 = vector.load %arg7[%c0_17, %c0_18] : memref<1x16xf32, #tpu.memory_space<vmem>>, vector<1x16xf32>
      tpu.vector_store %arg7[%c0_17, %c0_18], %21 {strides = array<i32>} : memref<1x16xf32, #tpu.memory_space<vmem>>, vector<1x16xf32>,
    } else {
    }
    %c0 = arith.constant 0 : index
    %c0_1 = arith.constant 0 : index
    %3 = vector.load %arg1[%c0, %c0_1] : memref<32x16xbf16, #tpu.memory_space<vmem>>, vector<32x16xbf16>
    %4 = arith.extf %3 : vector<32x16xbf16> to vector<32x16xf32>
    %c0_2 = arith.constant 0 : index
    %c0_3 = arith.constant 0 : index
    %5 = vector.load %arg6[%c0_2, %c0_3] : memref<1x16xf32, #tpu.memory_space<vmem>>, vector<1x16xf32>
    %cst = arith.constant dense<0.000000e+00> : vector<16xf32>
    %6 = vector.multi_reduction <add>, %4, %cst [0] : vector<32x16xf32> to vector<16xf32>
    %7 = vector.shape_cast %6 : vector<16xf32> to vector<1x16xf32>
    %8 = arith.addf %5, %7 : vector<1x16xf32>
    %c0_4 = arith.constant 0 : index
    %c0_5 = arith.constant 0 : index
    %9 = vector.load %arg6[%c0_4, %c0_5] : memref<1x16xf32, #tpu.memory_space<vmem>>, vector<1x16xf32>
    tpu.vector_store %arg6[%c0_4, %c0_5], %8 {strides = array<i32>} : memref<1x16xf32, #tpu.memory_space<vmem>>, vector<1x16xf32>,
    %c0_6 = arith.constant 0 : index
    %c0_7 = arith.constant 0 : index
    %10 = vector.load %arg7[%c0_6, %c0_7] : memref<1x16xf32, #tpu.memory_space<vmem>>, vector<1x16xf32>
    %11 = arith.mulf %4, %4 : vector<32x16xf32>
    %cst_8 = arith.constant dense<0.000000e+00> : vector<16xf32>
    %12 = vector.multi_reduction <add>, %11, %cst_8 [0] : vector<32x16xf32> to vector<16xf32>
    %13 = vector.shape_cast %12 : vector<16xf32> to vector<1x16xf32>
    %14 = arith.addf %10, %13 : vector<1x16xf32>
    %c0_9 = arith.constant 0 : index
    %c0_10 = arith.constant 0 : index
    %15 = vector.load %arg7[%c0_9, %c0_10] : memref<1x16xf32, #tpu.memory_space<vmem>>, vector<1x16xf32>
    tpu.vector_store %arg7[%c0_9, %c0_10], %14 {strides = array<i32>} : memref<1x16xf32, #tpu.memory_space<vmem>>, vector<1x16xf32>,
    %c0_i32_11 = arith.constant 0 : i32
    %16 = arith.cmpi eq, %arg0, %c0_i32_11 : i32
    %17 = arith.extui %16 : i1 to i32
    %c0_i32_12 = arith.constant 0 : i32
    %18 = arith.cmpi ne, %17, %c0_i32_12 : i32
    scf.if %18 {
      %c0_13 = arith.constant 0 : index
      %c0_14 = arith.constant 0 : index
      %19 = vector.load %arg6[%c0_13, %c0_14] : memref<1x16xf32, #tpu.memory_space<vmem>>, vector<1x16xf32>
      %cst_15 = arith.constant 3.125000e-02 : f32
      %20 = vector.broadcast %cst_15 : f32 to vector<1x16xf32>
      %21 = arith.mulf %19, %20 : vector<1x16xf32>
      %c0_16 = arith.constant 0 : index
      %c0_17 = arith.constant 0 : index
      %22 = vector.load %arg7[%c0_16, %c0_17] : memref<1x16xf32, #tpu.memory_space<vmem>>, vector<1x16xf32>
      %cst_18 = arith.constant 3.125000e-02 : f32
      %23 = vector.broadcast %cst_18 : f32 to vector<1x16xf32>
      %24 = arith.mulf %22, %23 : vector<1x16xf32>
      %25 = arith.mulf %21, %21 : vector<1x16xf32>
      %26 = arith.subf %24, %25 : vector<1x16xf32>
      %cst_19 = arith.constant 0.000000e+00 : f32
      %27 = vector.broadcast %cst_19 : f32 to vector<1x16xf32>
      %28 = arith.maximumf %26, %27 : vector<1x16xf32>
      %cst_20 = arith.constant 9.99999974E-6 : f32
      %29 = vector.broadcast %cst_20 : f32 to vector<1x16xf32>
      %30 = arith.addf %28, %29 : vector<1x16xf32>
      %31 = math.rsqrt %30 : vector<1x16xf32>
      %c0_21 = arith.constant 0 : index
      %c0_22 = arith.constant 0 : index
      %32 = vector.load %arg2[%c0_21, %c0_22] : memref<1x16xf32, #tpu.memory_space<vmem>>, vector<1x16xf32>
      %33 = arith.mulf %32, %31 : vector<1x16xf32>
      %c0_23 = arith.constant 0 : index
      %c0_24 = arith.constant 0 : index
      %34 = vector.load %arg4[%c0_23, %c0_24] : memref<1x16xf32, #tpu.memory_space<vmem>>, vector<1x16xf32>
      tpu.vector_store %arg4[%c0_23, %c0_24], %33 {strides = array<i32>} : memref<1x16xf32, #tpu.memory_space<vmem>>, vector<1x16xf32>,
      %c0_25 = arith.constant 0 : index
      %c0_26 = arith.constant 0 : index
      %35 = vector.load %arg3[%c0_25, %c0_26] : memref<1x16xf32, #tpu.memory_space<vmem>>, vector<1x16xf32>
      %36 = arith.mulf %21, %33 : vector<1x16xf32>
      %37 = arith.subf %35, %36 : vector<1x16xf32>
      %c0_27 = arith.constant 0 : index
      %c0_28 = arith.constant 0 : index
      %38 = vector.load %arg5[%c0_27, %c0_28] : memref<1x16xf32, #tpu.memory_space<vmem>>, vector<1x16xf32>
      tpu.vector_store %arg5[%c0_27, %c0_28], %37 {strides = array<i32>} : memref<1x16xf32, #tpu.memory_space<vmem>>, vector<1x16xf32>,
    } else {
    }
    return
  }
  func.func @transform_0(%arg0: i32) -> (i32, i32) {
    %c0_i32 = arith.constant 0 : i32
    %c0_i32_0 = arith.constant 0 : i32
    return %arg0, %c0_i32 : i32, i32
  }
  func.func @transform_1(%arg0: i32) -> (i32, i32) {
    %c0_i32 = arith.constant 0 : i32
    %c0_i32_0 = arith.constant 0 : i32
    %c0_i32_1 = arith.constant 0 : i32
    return %c0_i32, %c0_i32_0 : i32, i32
  }
  func.func @transform_2(%arg0: i32) -> (i32, i32) {
    %c0_i32 = arith.constant 0 : i32
    %c0_i32_0 = arith.constant 0 : i32
    %c0_i32_1 = arith.constant 0 : i32
    return %c0_i32, %c0_i32_0 : i32, i32
  }
  func.func @transform_3(%arg0: i32) -> (i32, i32) {
    %c0_i32 = arith.constant 0 : i32
    %c0_i32_0 = arith.constant 0 : i32
    %c0_i32_1 = arith.constant 0 : i32
    return %c0_i32, %c0_i32_0 : i32, i32
  }
  func.func @transform_4(%arg0: i32) -> (i32, i32) {
    %c0_i32 = arith.constant 0 : i32
    %c0_i32_0 = arith.constant 0 : i32
    %c0_i32_1 = arith.constant 0 : i32
    return %c0_i32, %c0_i32_0 : i32, i32
  }
}

module attributes {stable_mosaic.version = 11 : i64} {
  func.func @_affine_relu_kernel(%arg0: i32, %arg1: memref<32x16xbf16, #tpu.memory_space<vmem>>, %arg2: memref<1x16xf32, #tpu.memory_space<vmem>>, %arg3: memref<1x16xf32, #tpu.memory_space<vmem>>, %arg4: memref<32x16xbf16, #tpu.memory_space<vmem>>) attributes {dimension_semantics = [#tpu.dimension_semantics<parallel>], iteration_bounds = array<i64: 1>, scalar_prefetch = 0 : i64, scratch_operands = 0 : i64, tpu.core_type = #tpu.core_type<tc>, window_params = [{transform_indices = @transform_0, window_bounds = array<i64: 32, 16>}, {pipeline_mode = #tpu.pipeline_mode<synchronous>, transform_indices = @transform_1, window_bounds = array<i64: 1, 16>}, {pipeline_mode = #tpu.pipeline_mode<synchronous>, transform_indices = @transform_2, window_bounds = array<i64: 1, 16>}, {transform_indices = @transform_3, window_bounds = array<i64: 32, 16>}]} {
    %c0 = arith.constant 0 : index
    %c0_0 = arith.constant 0 : index
    %0 = vector.load %arg1[%c0, %c0_0] : memref<32x16xbf16, #tpu.memory_space<vmem>>, vector<32x16xbf16>
    %1 = arith.extf %0 : vector<32x16xbf16> to vector<32x16xf32>
    %c0_1 = arith.constant 0 : index
    %c0_2 = arith.constant 0 : index
    %2 = vector.load %arg2[%c0_1, %c0_2] : memref<1x16xf32, #tpu.memory_space<vmem>>, vector<1x16xf32>
    %3 = vector.broadcast %2 : vector<1x16xf32> to vector<32x16xf32>
    %4 = arith.mulf %1, %3 : vector<32x16xf32>
    %c0_3 = arith.constant 0 : index
    %c0_4 = arith.constant 0 : index
    %5 = vector.load %arg3[%c0_3, %c0_4] : memref<1x16xf32, #tpu.memory_space<vmem>>, vector<1x16xf32>
    %6 = vector.broadcast %5 : vector<1x16xf32> to vector<32x16xf32>
    %7 = arith.addf %4, %6 : vector<32x16xf32>
    %cst = arith.constant 0.000000e+00 : f32
    %8 = vector.broadcast %cst : f32 to vector<32x16xf32>
    %9 = arith.maximumf %7, %8 : vector<32x16xf32>
    %10 = arith.truncf %9 : vector<32x16xf32> to vector<32x16xbf16>
    %c0_5 = arith.constant 0 : index
    %c0_6 = arith.constant 0 : index
    %11 = vector.load %arg4[%c0_5, %c0_6] : memref<32x16xbf16, #tpu.memory_space<vmem>>, vector<32x16xbf16>
    tpu.vector_store %arg4[%c0_5, %c0_6], %10 {strides = array<i32>} : memref<32x16xbf16, #tpu.memory_space<vmem>>, vector<32x16xbf16>,
    return
  }
  func.func @transform_0(%arg0: i32) -> (i32, i32) {
    %c0_i32 = arith.constant 0 : i32
    %c0_i32_0 = arith.constant 0 : i32
    return %arg0, %c0_i32 : i32, i32
  }
  func.func @transform_1(%arg0: i32) -> (i32, i32) {
    %c0_i32 = arith.constant 0 : i32
    %c0_i32_0 = arith.constant 0 : i32
    %c0_i32_1 = arith.constant 0 : i32
    return %c0_i32, %c0_i32_0 : i32, i32
  }
  func.func @transform_2(%arg0: i32) -> (i32, i32) {
    %c0_i32 = arith.constant 0 : i32
    %c0_i32_0 = arith.constant 0 : i32
    %c0_i32_1 = arith.constant 0 : i32
    return %c0_i32, %c0_i32_0 : i32, i32
  }
  func.func @transform_3(%arg0: i32) -> (i32, i32) {
    %c0_i32 = arith.constant 0 : i32
    %c0_i32_0 = arith.constant 0 : i32
    return %arg0, %c0_i32 : i32, i32
  }
}

module attributes {stable_mosaic.version = 11 : i64} {
  func.func @_mm_kernel(%arg0: i32, %arg1: i32, %arg2: i32, %arg3: memref<32x16xbf16, #tpu.memory_space<vmem>>, %arg4: memref<16x128xbf16, #tpu.memory_space<vmem>>, %arg5: memref<1x16xf32, #tpu.memory_space<vmem>>, %arg6: memref<1x16xf32, #tpu.memory_space<vmem>>, %arg7: memref<1x128xf32, #tpu.memory_space<vmem>>, %arg8: memref<32x128xbf16, #tpu.memory_space<vmem>>, %arg9: memref<32x128xf32, #tpu.memory_space<vmem>>) attributes {dimension_semantics = [#tpu.dimension_semantics<parallel>, #tpu.dimension_semantics<parallel>, #tpu.dimension_semantics<arbitrary>], iteration_bounds = array<i64: 1, 1, 1>, scalar_prefetch = 0 : i64, scratch_operands = 1 : i64, tpu.core_type = #tpu.core_type<tc>, window_params = [{transform_indices = @transform_0, window_bounds = array<i64: 32, 16>}, {transform_indices = @transform_1, window_bounds = array<i64: 16, 128>}, {transform_indices = @transform_2, window_bounds = array<i64: 1, 16>}, {transform_indices = @transform_3, window_bounds = array<i64: 1, 16>}, {transform_indices = @transform_4, window_bounds = array<i64: 1, 128>}, {transform_indices = @transform_5, window_bounds = array<i64: 32, 128>}]} {
    %c0_i32 = arith.constant 0 : i32
    %0 = arith.cmpi eq, %arg2, %c0_i32 : i32
    %1 = arith.extui %0 : i1 to i32
    %c0_i32_0 = arith.constant 0 : i32
    %2 = arith.cmpi ne, %1, %c0_i32_0 : i32
    scf.if %2 {
      %cst_15 = arith.constant 0.000000e+00 : f32
      %22 = vector.broadcast %cst_15 : f32 to vector<32x128xf32>
      %c0_16 = arith.constant 0 : index
      %c0_17 = arith.constant 0 : index
      %23 = vector.load %arg9[%c0_16, %c0_17] : memref<32x128xf32, #tpu.memory_space<vmem>>, vector<32x128xf32>
      tpu.vector_store %arg9[%c0_16, %c0_17], %22 {strides = array<i32>} : memref<32x128xf32, #tpu.memory_space<vmem>>, vector<32x128xf32>,
    } else {
    }
    %c0 = arith.constant 0 : index
    %c0_1 = arith.constant 0 : index
    %3 = vector.load %arg3[%c0, %c0_1] : memref<32x16xbf16, #tpu.memory_space<vmem>>, vector<32x16xbf16>
    %4 = arith.extf %3 : vector<32x16xbf16> to vector<32x16xf32>
    %c0_2 = arith.constant 0 : index
    %c0_3 = arith.constant 0 : index
    %5 = vector.load %arg5[%c0_2, %c0_3] : memref<1x16xf32, #tpu.memory_space<vmem>>, vector<1x16xf32>
    %6 = vector.broadcast %5 : vector<1x16xf32> to vector<32x16xf32>
    %7 = arith.mulf %4, %6 : vector<32x16xf32>
    %c0_4 = arith.constant 0 : index
    %c0_5 = arith.constant 0 : index
    %8 = vector.load %arg6[%c0_4, %c0_5] : memref<1x16xf32, #tpu.memory_space<vmem>>, vector<1x16xf32>
    %9 = vector.broadcast %8 : vector<1x16xf32> to vector<32x16xf32>
    %10 = arith.addf %7, %9 : vector<32x16xf32>
    %cst = arith.constant 0.000000e+00 : f32
    %11 = vector.broadcast %cst : f32 to vector<32x16xf32>
    %12 = arith.maximumf %10, %11 : vector<32x16xf32>
    %13 = arith.truncf %12 : vector<32x16xf32> to vector<32x16xbf16>
    %c0_6 = arith.constant 0 : index
    %c0_7 = arith.constant 0 : index
    %14 = vector.load %arg9[%c0_6, %c0_7] : memref<32x128xf32, #tpu.memory_space<vmem>>, vector<32x128xf32>
    %c0_8 = arith.constant 0 : index
    %c0_9 = arith.constant 0 : index
    %15 = vector.load %arg4[%c0_8, %c0_9] : memref<16x128xbf16, #tpu.memory_space<vmem>>, vector<16x128xbf16>
    %cst_10 = arith.constant dense<0.000000e+00> : vector<32x128xf32>
    %16 = tpu.matmul %13, %15, %cst_10 {dimension_numbers = #tpu.dot_dimension_numbers<[1], [0], [0], [1], [0, 0, 1, 1], [], []>} : vector<32x16xbf16>, vector<16x128xbf16>, vector<32x128xf32> -> vector<32x128xf32>
    %17 = arith.addf %14, %16 : vector<32x128xf32>
    %c0_11 = arith.constant 0 : index
    %c0_12 = arith.constant 0 : index
    %18 = vector.load %arg9[%c0_11, %c0_12] : memref<32x128xf32, #tpu.memory_space<vmem>>, vector<32x128xf32>
    tpu.vector_store %arg9[%c0_11, %c0_12], %17 {strides = array<i32>} : memref<32x128xf32, #tpu.memory_space<vmem>>, vector<32x128xf32>,
    %c0_i32_13 = arith.constant 0 : i32
    %19 = arith.cmpi eq, %arg2, %c0_i32_13 : i32
    %20 = arith.extui %19 : i1 to i32
    %c0_i32_14 = arith.constant 0 : i32
    %21 = arith.cmpi ne, %20, %c0_i32_14 : i32
    scf.if %21 {
      %c0_15 = arith.constant 0 : index
      %c0_16 = arith.constant 0 : index
      %22 = vector.load %arg9[%c0_15, %c0_16] : memref<32x128xf32, #tpu.memory_space<vmem>>, vector<32x128xf32>
      %c0_17 = arith.constant 0 : index
      %c0_18 = arith.constant 0 : index
      %23 = vector.load %arg7[%c0_17, %c0_18] : memref<1x128xf32, #tpu.memory_space<vmem>>, vector<1x128xf32>
      %24 = vector.broadcast %23 : vector<1x128xf32> to vector<32x128xf32>
      %25 = arith.addf %22, %24 : vector<32x128xf32>
      %26 = arith.truncf %25 : vector<32x128xf32> to vector<32x128xbf16>
      %c0_19 = arith.constant 0 : index
      %c0_20 = arith.constant 0 : index
      %27 = vector.load %arg8[%c0_19, %c0_20] : memref<32x128xbf16, #tpu.memory_space<vmem>>, vector<32x128xbf16>
      tpu.vector_store %arg8[%c0_19, %c0_20], %26 {strides = array<i32>} : memref<32x128xbf16, #tpu.memory_space<vmem>>, vector<32x128xbf16>,
    } else {
    }
    return
  }
  func.func @transform_0(%arg0: i32, %arg1: i32, %arg2: i32) -> (i32, i32) {
    %c0_i32 = arith.constant 0 : i32
    return %arg0, %arg2 : i32, i32
  }
  func.func @transform_1(%arg0: i32, %arg1: i32, %arg2: i32) -> (i32, i32) {
    %c0_i32 = arith.constant 0 : i32
    return %arg2, %arg1 : i32, i32
  }
  func.func @transform_2(%arg0: i32, %arg1: i32, %arg2: i32) -> (i32, i32) {
    %c0_i32 = arith.constant 0 : i32
    %c0_i32_0 = arith.constant 0 : i32
    return %c0_i32, %arg2 : i32, i32
  }
  func.func @transform_3(%arg0: i32, %arg1: i32, %arg2: i32) -> (i32, i32) {
    %c0_i32 = arith.constant 0 : i32
    %c0_i32_0 = arith.constant 0 : i32
    return %c0_i32, %arg2 : i32, i32
  }
  func.func @transform_4(%arg0: i32, %arg1: i32, %arg2: i32) -> (i32, i32) {
    %c0_i32 = arith.constant 0 : i32
    %c0_i32_0 = arith.constant 0 : i32
    return %c0_i32, %arg1 : i32, i32
  }
  func.func @transform_5(%arg0: i32, %arg1: i32, %arg2: i32) -> (i32, i32) {
    %c0_i32 = arith.constant 0 : i32
    return %arg0, %arg1 : i32, i32
  }
}

module attributes {stable_mosaic.version = 11 : i64} {
  func.func @_mm_kernel(%arg0: i32, %arg1: i32, %arg2: i32, %arg3: memref<32x144xbf16, #tpu.memory_space<vmem>>, %arg4: memref<144x128xbf16, #tpu.memory_space<vmem>>, %arg5: memref<1x144xf32, #tpu.memory_space<vmem>>, %arg6: memref<1x144xf32, #tpu.memory_space<vmem>>, %arg7: memref<1x128xf32, #tpu.memory_space<vmem>>, %arg8: memref<32x128xbf16, #tpu.memory_space<vmem>>, %arg9: memref<32x128xf32, #tpu.memory_space<vmem>>) attributes {dimension_semantics = [#tpu.dimension_semantics<parallel>, #tpu.dimension_semantics<parallel>, #tpu.dimension_semantics<arbitrary>], iteration_bounds = array<i64: 1, 1, 1>, scalar_prefetch = 0 : i64, scratch_operands = 1 : i64, tpu.core_type = #tpu.core_type<tc>, window_params = [{transform_indices = @transform_0, window_bounds = array<i64: 32, 144>}, {transform_indices = @transform_1, window_bounds = array<i64: 144, 128>}, {transform_indices = @transform_2, window_bounds = array<i64: 1, 144>}, {transform_indices = @transform_3, window_bounds = array<i64: 1, 144>}, {transform_indices = @transform_4, window_bounds = array<i64: 1, 128>}, {transform_indices = @transform_5, window_bounds = array<i64: 32, 128>}]} {
    %c0_i32 = arith.constant 0 : i32
    %0 = arith.cmpi eq, %arg2, %c0_i32 : i32
    %1 = arith.extui %0 : i1 to i32
    %c0_i32_0 = arith.constant 0 : i32
    %2 = arith.cmpi ne, %1, %c0_i32_0 : i32
    scf.if %2 {
      %cst_10 = arith.constant 0.000000e+00 : f32
      %12 = vector.broadcast %cst_10 : f32 to vector<32x128xf32>
      %c0_11 = arith.constant 0 : index
      %c0_12 = arith.constant 0 : index
      %13 = vector.load %arg9[%c0_11, %c0_12] : memref<32x128xf32, #tpu.memory_space<vmem>>, vector<32x128xf32>
      tpu.vector_store %arg9[%c0_11, %c0_12], %12 {strides = array<i32>} : memref<32x128xf32, #tpu.memory_space<vmem>>, vector<32x128xf32>,
    } else {
    }
    %c0 = arith.constant 0 : index
    %c0_1 = arith.constant 0 : index
    %3 = vector.load %arg3[%c0, %c0_1] : memref<32x144xbf16, #tpu.memory_space<vmem>>, vector<32x144xbf16>
    %c0_2 = arith.constant 0 : index
    %c0_3 = arith.constant 0 : index
    %4 = vector.load %arg9[%c0_2, %c0_3] : memref<32x128xf32, #tpu.memory_space<vmem>>, vector<32x128xf32>
    %c0_4 = arith.constant 0 : index
    %c0_5 = arith.constant 0 : index
    %5 = vector.load %arg4[%c0_4, %c0_5] : memref<144x128xbf16, #tpu.memory_space<vmem>>, vector<144x128xbf16>
    %cst = arith.constant dense<0.000000e+00> : vector<32x128xf32>
    %6 = tpu.matmul %3, %5, %cst {dimension_numbers = #tpu.dot_dimension_numbers<[1], [0], [0], [1], [0, 0, 1, 1], [], []>} : vector<32x144xbf16>, vector<144x128xbf16>, vector<32x128xf32> -> vector<32x128xf32>
    %7 = arith.addf %4, %6 : vector<32x128xf32>
    %c0_6 = arith.constant 0 : index
    %c0_7 = arith.constant 0 : index
    %8 = vector.load %arg9[%c0_6, %c0_7] : memref<32x128xf32, #tpu.memory_space<vmem>>, vector<32x128xf32>
    tpu.vector_store %arg9[%c0_6, %c0_7], %7 {strides = array<i32>} : memref<32x128xf32, #tpu.memory_space<vmem>>, vector<32x128xf32>,
    %c0_i32_8 = arith.constant 0 : i32
    %9 = arith.cmpi eq, %arg2, %c0_i32_8 : i32
    %10 = arith.extui %9 : i1 to i32
    %c0_i32_9 = arith.constant 0 : i32
    %11 = arith.cmpi ne, %10, %c0_i32_9 : i32
    scf.if %11 {
      %c0_10 = arith.constant 0 : index
      %c0_11 = arith.constant 0 : index
      %12 = vector.load %arg9[%c0_10, %c0_11] : memref<32x128xf32, #tpu.memory_space<vmem>>, vector<32x128xf32>
      %c0_12 = arith.constant 0 : index
      %c0_13 = arith.constant 0 : index
      %13 = vector.load %arg7[%c0_12, %c0_13] : memref<1x128xf32, #tpu.memory_space<vmem>>, vector<1x128xf32>
      %14 = vector.broadcast %13 : vector<1x128xf32> to vector<32x128xf32>
      %15 = arith.addf %12, %14 : vector<32x128xf32>
      %16 = arith.truncf %15 : vector<32x128xf32> to vector<32x128xbf16>
      %c0_14 = arith.constant 0 : index
      %c0_15 = arith.constant 0 : index
      %17 = vector.load %arg8[%c0_14, %c0_15] : memref<32x128xbf16, #tpu.memory_space<vmem>>, vector<32x128xbf16>
      tpu.vector_store %arg8[%c0_14, %c0_15], %16 {strides = array<i32>} : memref<32x128xbf16, #tpu.memory_space<vmem>>, vector<32x128xbf16>,
    } else {
    }
    return
  }
  func.func @transform_0(%arg0: i32, %arg1: i32, %arg2: i32) -> (i32, i32) {
    %c0_i32 = arith.constant 0 : i32
    return %arg0, %arg2 : i32, i32
  }
  func.func @transform_1(%arg0: i32, %arg1: i32, %arg2: i32) -> (i32, i32) {
    %c0_i32 = arith.constant 0 : i32
    return %arg2, %arg1 : i32, i32
  }
  func.func @transform_2(%arg0: i32, %arg1: i32, %arg2: i32) -> (i32, i32) {
    %c0_i32 = arith.constant 0 : i32
    %c0_i32_0 = arith.constant 0 : i32
    return %c0_i32, %arg2 : i32, i32
  }
  func.func @transform_3(%arg0: i32, %arg1: i32, %arg2: i32) -> (i32, i32) {
    %c0_i32 = arith.constant 0 : i32
    %c0_i32_0 = arith.constant 0 : i32
    return %c0_i32, %arg2 : i32, i32
  }
  func.func @transform_4(%arg0: i32, %arg1: i32, %arg2: i32) -> (i32, i32) {
    %c0_i32 = arith.constant 0 : i32
    %c0_i32_0 = arith.constant 0 : i32
    return %c0_i32, %arg1 : i32, i32
  }
  func.func @transform_5(%arg0: i32, %arg1: i32, %arg2: i32) -> (i32, i32) {
    %c0_i32 = arith.constant 0 : i32
    return %arg0, %arg1 : i32, i32
  }
}

module attributes {stable_mosaic.version = 11 : i64} {
  func.func @_bn_stats_kernel(%arg0: i32, %arg1: memref<32x24xbf16, #tpu.memory_space<vmem>>, %arg2: memref<1x24xf32, #tpu.memory_space<vmem>>, %arg3: memref<1x24xf32, #tpu.memory_space<vmem>>, %arg4: memref<1x24xf32, #tpu.memory_space<vmem>>, %arg5: memref<1x24xf32, #tpu.memory_space<vmem>>, %arg6: memref<1x24xf32, #tpu.memory_space<vmem>>, %arg7: memref<1x24xf32, #tpu.memory_space<vmem>>) attributes {dimension_semantics = [#tpu.dimension_semantics<arbitrary>], iteration_bounds = array<i64: 1>, scalar_prefetch = 0 : i64, scratch_operands = 2 : i64, tpu.core_type = #tpu.core_type<tc>, window_params = [{transform_indices = @transform_0, window_bounds = array<i64: 32, 24>}, {pipeline_mode = #tpu.pipeline_mode<synchronous>, transform_indices = @transform_1, window_bounds = array<i64: 1, 24>}, {pipeline_mode = #tpu.pipeline_mode<synchronous>, transform_indices = @transform_2, window_bounds = array<i64: 1, 24>}, {pipeline_mode = #tpu.pipeline_mode<synchronous>, transform_indices = @transform_3, window_bounds = array<i64: 1, 24>}, {pipeline_mode = #tpu.pipeline_mode<synchronous>, transform_indices = @transform_4, window_bounds = array<i64: 1, 24>}]} {
    %c0_i32 = arith.constant 0 : i32
    %0 = arith.cmpi eq, %arg0, %c0_i32 : i32
    %1 = arith.extui %0 : i1 to i32
    %c0_i32_0 = arith.constant 0 : i32
    %2 = arith.cmpi ne, %1, %c0_i32_0 : i32
    scf.if %2 {
      %cst_13 = arith.constant 0.000000e+00 : f32
      %19 = vector.broadcast %cst_13 : f32 to vector<1x24xf32>
      %c0_14 = arith.constant 0 : index
      %c0_15 = arith.constant 0 : index
      %20 = vector.load %arg6[%c0_14, %c0_15] : memref<1x24xf32, #tpu.memory_space<vmem>>, vector<1x24xf32>
      tpu.vector_store %arg6[%c0_14, %c0_15], %19 {strides = array<i32>} : memref<1x24xf32, #tpu.memory_space<vmem>>, vector<1x24xf32>,
      %cst_16 = arith.constant 0.000000e+00 : f32
      %21 = vector.broadcast %cst_16 : f32 to vector<1x24xf32>
      %c0_17 = arith.constant 0 : index
      %c0_18 = arith.constant 0 : index
      %22 = vector.load %arg7[%c0_17, %c0_18] : memref<1x24xf32, #tpu.memory_space<vmem>>, vector<1x24xf32>
      tpu.vector_store %arg7[%c0_17, %c0_18], %21 {strides = array<i32>} : memref<1x24xf32, #tpu.memory_space<vmem>>, vector<1x24xf32>,
    } else {
    }
    %c0 = arith.constant 0 : index
    %c0_1 = arith.constant 0 : index
    %3 = vector.load %arg1[%c0, %c0_1] : memref<32x24xbf16, #tpu.memory_space<vmem>>, vector<32x24xbf16>
    %4 = arith.extf %3 : vector<32x24xbf16> to vector<32x24xf32>
    %c0_2 = arith.constant 0 : index
    %c0_3 = arith.constant 0 : index
    %5 = vector.load %arg6[%c0_2, %c0_3] : memref<1x24xf32, #tpu.memory_space<vmem>>, vector<1x24xf32>
    %cst = arith.constant dense<0.000000e+00> : vector<24xf32>
    %6 = vector.multi_reduction <add>, %4, %cst [0] : vector<32x24xf32> to vector<24xf32>
    %7 = vector.shape_cast %6 : vector<24xf32> to vector<1x24xf32>
    %8 = arith.addf %5, %7 : vector<1x24xf32>
    %c0_4 = arith.constant 0 : index
    %c0_5 = arith.constant 0 : index
    %9 = vector.load %arg6[%c0_4, %c0_5] : memref<1x24xf32, #tpu.memory_space<vmem>>, vector<1x24xf32>
    tpu.vector_store %arg6[%c0_4, %c0_5], %8 {strides = array<i32>} : memref<1x24xf32, #tpu.memory_space<vmem>>, vector<1x24xf32>,
    %c0_6 = arith.constant 0 : index
    %c0_7 = arith.constant 0 : index
    %10 = vector.load %arg7[%c0_6, %c0_7] : memref<1x24xf32, #tpu.memory_space<vmem>>, vector<1x24xf32>
    %11 = arith.mulf %4, %4 : vector<32x24xf32>
    %cst_8 = arith.constant dense<0.000000e+00> : vector<24xf32>
    %12 = vector.multi_reduction <add>, %11, %cst_8 [0] : vector<32x24xf32> to vector<24xf32>
    %13 = vector.shape_cast %12 : vector<24xf32> to vector<1x24xf32>
    %14 = arith.addf %10, %13 : vector<1x24xf32>
    %c0_9 = arith.constant 0 : index
    %c0_10 = arith.constant 0 : index
    %15 = vector.load %arg7[%c0_9, %c0_10] : memref<1x24xf32, #tpu.memory_space<vmem>>, vector<1x24xf32>
    tpu.vector_store %arg7[%c0_9, %c0_10], %14 {strides = array<i32>} : memref<1x24xf32, #tpu.memory_space<vmem>>, vector<1x24xf32>,
    %c0_i32_11 = arith.constant 0 : i32
    %16 = arith.cmpi eq, %arg0, %c0_i32_11 : i32
    %17 = arith.extui %16 : i1 to i32
    %c0_i32_12 = arith.constant 0 : i32
    %18 = arith.cmpi ne, %17, %c0_i32_12 : i32
    scf.if %18 {
      %c0_13 = arith.constant 0 : index
      %c0_14 = arith.constant 0 : index
      %19 = vector.load %arg6[%c0_13, %c0_14] : memref<1x24xf32, #tpu.memory_space<vmem>>, vector<1x24xf32>
      %cst_15 = arith.constant 3.125000e-02 : f32
      %20 = vector.broadcast %cst_15 : f32 to vector<1x24xf32>
      %21 = arith.mulf %19, %20 : vector<1x24xf32>
      %c0_16 = arith.constant 0 : index
      %c0_17 = arith.constant 0 : index
      %22 = vector.load %arg7[%c0_16, %c0_17] : memref<1x24xf32, #tpu.memory_space<vmem>>, vector<1x24xf32>
      %cst_18 = arith.constant 3.125000e-02 : f32
      %23 = vector.broadcast %cst_18 : f32 to vector<1x24xf32>
      %24 = arith.mulf %22, %23 : vector<1x24xf32>
      %25 = arith.mulf %21, %21 : vector<1x24xf32>
      %26 = arith.subf %24, %25 : vector<1x24xf32>
      %cst_19 = arith.constant 0.000000e+00 : f32
      %27 = vector.broadcast %cst_19 : f32 to vector<1x24xf32>
      %28 = arith.maximumf %26, %27 : vector<1x24xf32>
      %cst_20 = arith.constant 9.99999974E-6 : f32
      %29 = vector.broadcast %cst_20 : f32 to vector<1x24xf32>
      %30 = arith.addf %28, %29 : vector<1x24xf32>
      %31 = math.rsqrt %30 : vector<1x24xf32>
      %c0_21 = arith.constant 0 : index
      %c0_22 = arith.constant 0 : index
      %32 = vector.load %arg2[%c0_21, %c0_22] : memref<1x24xf32, #tpu.memory_space<vmem>>, vector<1x24xf32>
      %33 = arith.mulf %32, %31 : vector<1x24xf32>
      %c0_23 = arith.constant 0 : index
      %c0_24 = arith.constant 0 : index
      %34 = vector.load %arg4[%c0_23, %c0_24] : memref<1x24xf32, #tpu.memory_space<vmem>>, vector<1x24xf32>
      tpu.vector_store %arg4[%c0_23, %c0_24], %33 {strides = array<i32>} : memref<1x24xf32, #tpu.memory_space<vmem>>, vector<1x24xf32>,
      %c0_25 = arith.constant 0 : index
      %c0_26 = arith.constant 0 : index
      %35 = vector.load %arg3[%c0_25, %c0_26] : memref<1x24xf32, #tpu.memory_space<vmem>>, vector<1x24xf32>
      %36 = arith.mulf %21, %33 : vector<1x24xf32>
      %37 = arith.subf %35, %36 : vector<1x24xf32>
      %c0_27 = arith.constant 0 : index
      %c0_28 = arith.constant 0 : index
      %38 = vector.load %arg5[%c0_27, %c0_28] : memref<1x24xf32, #tpu.memory_space<vmem>>, vector<1x24xf32>
      tpu.vector_store %arg5[%c0_27, %c0_28], %37 {strides = array<i32>} : memref<1x24xf32, #tpu.memory_space<vmem>>, vector<1x24xf32>,
    } else {
    }
    return
  }
  func.func @transform_0(%arg0: i32) -> (i32, i32) {
    %c0_i32 = arith.constant 0 : i32
    %c0_i32_0 = arith.constant 0 : i32
    return %arg0, %c0_i32 : i32, i32
  }
  func.func @transform_1(%arg0: i32) -> (i32, i32) {
    %c0_i32 = arith.constant 0 : i32
    %c0_i32_0 = arith.constant 0 : i32
    %c0_i32_1 = arith.constant 0 : i32
    return %c0_i32, %c0_i32_0 : i32, i32
  }
  func.func @transform_2(%arg0: i32) -> (i32, i32) {
    %c0_i32 = arith.constant 0 : i32
    %c0_i32_0 = arith.constant 0 : i32
    %c0_i32_1 = arith.constant 0 : i32
    return %c0_i32, %c0_i32_0 : i32, i32
  }
  func.func @transform_3(%arg0: i32) -> (i32, i32) {
    %c0_i32 = arith.constant 0 : i32
    %c0_i32_0 = arith.constant 0 : i32
    %c0_i32_1 = arith.constant 0 : i32
    return %c0_i32, %c0_i32_0 : i32, i32
  }
  func.func @transform_4(%arg0: i32) -> (i32, i32) {
    %c0_i32 = arith.constant 0 : i32
    %c0_i32_0 = arith.constant 0 : i32
    %c0_i32_1 = arith.constant 0 : i32
    return %c0_i32, %c0_i32_0 : i32, i32
  }
}

module attributes {stable_mosaic.version = 11 : i64} {
  func.func @_mm_kernel(%arg0: i32, %arg1: i32, %arg2: i32, %arg3: memref<32x24xbf16, #tpu.memory_space<vmem>>, %arg4: memref<24x128xbf16, #tpu.memory_space<vmem>>, %arg5: memref<1x24xf32, #tpu.memory_space<vmem>>, %arg6: memref<1x24xf32, #tpu.memory_space<vmem>>, %arg7: memref<1x128xf32, #tpu.memory_space<vmem>>, %arg8: memref<32x128xbf16, #tpu.memory_space<vmem>>, %arg9: memref<32x128xf32, #tpu.memory_space<vmem>>) attributes {dimension_semantics = [#tpu.dimension_semantics<parallel>, #tpu.dimension_semantics<parallel>, #tpu.dimension_semantics<arbitrary>], iteration_bounds = array<i64: 1, 1, 1>, scalar_prefetch = 0 : i64, scratch_operands = 1 : i64, tpu.core_type = #tpu.core_type<tc>, window_params = [{transform_indices = @transform_0, window_bounds = array<i64: 32, 24>}, {transform_indices = @transform_1, window_bounds = array<i64: 24, 128>}, {transform_indices = @transform_2, window_bounds = array<i64: 1, 24>}, {transform_indices = @transform_3, window_bounds = array<i64: 1, 24>}, {transform_indices = @transform_4, window_bounds = array<i64: 1, 128>}, {transform_indices = @transform_5, window_bounds = array<i64: 32, 128>}]} {
    %c0_i32 = arith.constant 0 : i32
    %0 = arith.cmpi eq, %arg2, %c0_i32 : i32
    %1 = arith.extui %0 : i1 to i32
    %c0_i32_0 = arith.constant 0 : i32
    %2 = arith.cmpi ne, %1, %c0_i32_0 : i32
    scf.if %2 {
      %cst_15 = arith.constant 0.000000e+00 : f32
      %22 = vector.broadcast %cst_15 : f32 to vector<32x128xf32>
      %c0_16 = arith.constant 0 : index
      %c0_17 = arith.constant 0 : index
      %23 = vector.load %arg9[%c0_16, %c0_17] : memref<32x128xf32, #tpu.memory_space<vmem>>, vector<32x128xf32>
      tpu.vector_store %arg9[%c0_16, %c0_17], %22 {strides = array<i32>} : memref<32x128xf32, #tpu.memory_space<vmem>>, vector<32x128xf32>,
    } else {
    }
    %c0 = arith.constant 0 : index
    %c0_1 = arith.constant 0 : index
    %3 = vector.load %arg3[%c0, %c0_1] : memref<32x24xbf16, #tpu.memory_space<vmem>>, vector<32x24xbf16>
    %4 = arith.extf %3 : vector<32x24xbf16> to vector<32x24xf32>
    %c0_2 = arith.constant 0 : index
    %c0_3 = arith.constant 0 : index
    %5 = vector.load %arg5[%c0_2, %c0_3] : memref<1x24xf32, #tpu.memory_space<vmem>>, vector<1x24xf32>
    %6 = vector.broadcast %5 : vector<1x24xf32> to vector<32x24xf32>
    %7 = arith.mulf %4, %6 : vector<32x24xf32>
    %c0_4 = arith.constant 0 : index
    %c0_5 = arith.constant 0 : index
    %8 = vector.load %arg6[%c0_4, %c0_5] : memref<1x24xf32, #tpu.memory_space<vmem>>, vector<1x24xf32>
    %9 = vector.broadcast %8 : vector<1x24xf32> to vector<32x24xf32>
    %10 = arith.addf %7, %9 : vector<32x24xf32>
    %cst = arith.constant 0.000000e+00 : f32
    %11 = vector.broadcast %cst : f32 to vector<32x24xf32>
    %12 = arith.maximumf %10, %11 : vector<32x24xf32>
    %13 = arith.truncf %12 : vector<32x24xf32> to vector<32x24xbf16>
    %c0_6 = arith.constant 0 : index
    %c0_7 = arith.constant 0 : index
    %14 = vector.load %arg9[%c0_6, %c0_7] : memref<32x128xf32, #tpu.memory_space<vmem>>, vector<32x128xf32>
    %c0_8 = arith.constant 0 : index
    %c0_9 = arith.constant 0 : index
    %15 = vector.load %arg4[%c0_8, %c0_9] : memref<24x128xbf16, #tpu.memory_space<vmem>>, vector<24x128xbf16>
    %cst_10 = arith.constant dense<0.000000e+00> : vector<32x128xf32>
    %16 = tpu.matmul %13, %15, %cst_10 {dimension_numbers = #tpu.dot_dimension_numbers<[1], [0], [0], [1], [0, 0, 1, 1], [], []>} : vector<32x24xbf16>, vector<24x128xbf16>, vector<32x128xf32> -> vector<32x128xf32>
    %17 = arith.addf %14, %16 : vector<32x128xf32>
    %c0_11 = arith.constant 0 : index
    %c0_12 = arith.constant 0 : index
    %18 = vector.load %arg9[%c0_11, %c0_12] : memref<32x128xf32, #tpu.memory_space<vmem>>, vector<32x128xf32>
    tpu.vector_store %arg9[%c0_11, %c0_12], %17 {strides = array<i32>} : memref<32x128xf32, #tpu.memory_space<vmem>>, vector<32x128xf32>,
    %c0_i32_13 = arith.constant 0 : i32
    %19 = arith.cmpi eq, %arg2, %c0_i32_13 : i32
    %20 = arith.extui %19 : i1 to i32
    %c0_i32_14 = arith.constant 0 : i32
    %21 = arith.cmpi ne, %20, %c0_i32_14 : i32
    scf.if %21 {
      %c0_15 = arith.constant 0 : index
      %c0_16 = arith.constant 0 : index
      %22 = vector.load %arg9[%c0_15, %c0_16] : memref<32x128xf32, #tpu.memory_space<vmem>>, vector<32x128xf32>
      %c0_17 = arith.constant 0 : index
      %c0_18 = arith.constant 0 : index
      %23 = vector.load %arg7[%c0_17, %c0_18] : memref<1x128xf32, #tpu.memory_space<vmem>>, vector<1x128xf32>
      %24 = vector.broadcast %23 : vector<1x128xf32> to vector<32x128xf32>
      %25 = arith.addf %22, %24 : vector<32x128xf32>
      %26 = arith.truncf %25 : vector<32x128xf32> to vector<32x128xbf16>
      %c0_19 = arith.constant 0 : index
      %c0_20 = arith.constant 0 : index
      %27 = vector.load %arg8[%c0_19, %c0_20] : memref<32x128xbf16, #tpu.memory_space<vmem>>, vector<32x128xbf16>
      tpu.vector_store %arg8[%c0_19, %c0_20], %26 {strides = array<i32>} : memref<32x128xbf16, #tpu.memory_space<vmem>>, vector<32x128xbf16>,
    } else {
    }
    return
  }
  func.func @transform_0(%arg0: i32, %arg1: i32, %arg2: i32) -> (i32, i32) {
    %c0_i32 = arith.constant 0 : i32
    return %arg0, %arg2 : i32, i32
  }
  func.func @transform_1(%arg0: i32, %arg1: i32, %arg2: i32) -> (i32, i32) {
    %c0_i32 = arith.constant 0 : i32
    return %arg2, %arg1 : i32, i32
  }
  func.func @transform_2(%arg0: i32, %arg1: i32, %arg2: i32) -> (i32, i32) {
    %c0_i32 = arith.constant 0 : i32
    %c0_i32_0 = arith.constant 0 : i32
    return %c0_i32, %arg2 : i32, i32
  }
  func.func @transform_3(%arg0: i32, %arg1: i32, %arg2: i32) -> (i32, i32) {
    %c0_i32 = arith.constant 0 : i32
    %c0_i32_0 = arith.constant 0 : i32
    return %c0_i32, %arg2 : i32, i32
  }
  func.func @transform_4(%arg0: i32, %arg1: i32, %arg2: i32) -> (i32, i32) {
    %c0_i32 = arith.constant 0 : i32
    %c0_i32_0 = arith.constant 0 : i32
    return %c0_i32, %arg1 : i32, i32
  }
  func.func @transform_5(%arg0: i32, %arg1: i32, %arg2: i32) -> (i32, i32) {
    %c0_i32 = arith.constant 0 : i32
    return %arg0, %arg1 : i32, i32
  }
}

module attributes {stable_mosaic.version = 11 : i64} {
  func.func @_bn_stats_kernel(%arg0: i32, %arg1: memref<32x32xbf16, #tpu.memory_space<vmem>>, %arg2: memref<1x32xf32, #tpu.memory_space<vmem>>, %arg3: memref<1x32xf32, #tpu.memory_space<vmem>>, %arg4: memref<1x32xf32, #tpu.memory_space<vmem>>, %arg5: memref<1x32xf32, #tpu.memory_space<vmem>>, %arg6: memref<1x32xf32, #tpu.memory_space<vmem>>, %arg7: memref<1x32xf32, #tpu.memory_space<vmem>>) attributes {dimension_semantics = [#tpu.dimension_semantics<arbitrary>], iteration_bounds = array<i64: 1>, scalar_prefetch = 0 : i64, scratch_operands = 2 : i64, tpu.core_type = #tpu.core_type<tc>, window_params = [{transform_indices = @transform_0, window_bounds = array<i64: 32, 32>}, {pipeline_mode = #tpu.pipeline_mode<synchronous>, transform_indices = @transform_1, window_bounds = array<i64: 1, 32>}, {pipeline_mode = #tpu.pipeline_mode<synchronous>, transform_indices = @transform_2, window_bounds = array<i64: 1, 32>}, {pipeline_mode = #tpu.pipeline_mode<synchronous>, transform_indices = @transform_3, window_bounds = array<i64: 1, 32>}, {pipeline_mode = #tpu.pipeline_mode<synchronous>, transform_indices = @transform_4, window_bounds = array<i64: 1, 32>}]} {
    %c0_i32 = arith.constant 0 : i32
    %0 = arith.cmpi eq, %arg0, %c0_i32 : i32
    %1 = arith.extui %0 : i1 to i32
    %c0_i32_0 = arith.constant 0 : i32
    %2 = arith.cmpi ne, %1, %c0_i32_0 : i32
    scf.if %2 {
      %cst_13 = arith.constant 0.000000e+00 : f32
      %19 = vector.broadcast %cst_13 : f32 to vector<1x32xf32>
      %c0_14 = arith.constant 0 : index
      %c0_15 = arith.constant 0 : index
      %20 = vector.load %arg6[%c0_14, %c0_15] : memref<1x32xf32, #tpu.memory_space<vmem>>, vector<1x32xf32>
      tpu.vector_store %arg6[%c0_14, %c0_15], %19 {strides = array<i32>} : memref<1x32xf32, #tpu.memory_space<vmem>>, vector<1x32xf32>,
      %cst_16 = arith.constant 0.000000e+00 : f32
      %21 = vector.broadcast %cst_16 : f32 to vector<1x32xf32>
      %c0_17 = arith.constant 0 : index
      %c0_18 = arith.constant 0 : index
      %22 = vector.load %arg7[%c0_17, %c0_18] : memref<1x32xf32, #tpu.memory_space<vmem>>, vector<1x32xf32>
      tpu.vector_store %arg7[%c0_17, %c0_18], %21 {strides = array<i32>} : memref<1x32xf32, #tpu.memory_space<vmem>>, vector<1x32xf32>,
    } else {
    }
    %c0 = arith.constant 0 : index
    %c0_1 = arith.constant 0 : index
    %3 = vector.load %arg1[%c0, %c0_1] : memref<32x32xbf16, #tpu.memory_space<vmem>>, vector<32x32xbf16>
    %4 = arith.extf %3 : vector<32x32xbf16> to vector<32x32xf32>
    %c0_2 = arith.constant 0 : index
    %c0_3 = arith.constant 0 : index
    %5 = vector.load %arg6[%c0_2, %c0_3] : memref<1x32xf32, #tpu.memory_space<vmem>>, vector<1x32xf32>
    %cst = arith.constant dense<0.000000e+00> : vector<32xf32>
    %6 = vector.multi_reduction <add>, %4, %cst [0] : vector<32x32xf32> to vector<32xf32>
    %7 = vector.shape_cast %6 : vector<32xf32> to vector<1x32xf32>
    %8 = arith.addf %5, %7 : vector<1x32xf32>
    %c0_4 = arith.constant 0 : index
    %c0_5 = arith.constant 0 : index
    %9 = vector.load %arg6[%c0_4, %c0_5] : memref<1x32xf32, #tpu.memory_space<vmem>>, vector<1x32xf32>
    tpu.vector_store %arg6[%c0_4, %c0_5], %8 {strides = array<i32>} : memref<1x32xf32, #tpu.memory_space<vmem>>, vector<1x32xf32>,
    %c0_6 = arith.constant 0 : index
    %c0_7 = arith.constant 0 : index
    %10 = vector.load %arg7[%c0_6, %c0_7] : memref<1x32xf32, #tpu.memory_space<vmem>>, vector<1x32xf32>
    %11 = arith.mulf %4, %4 : vector<32x32xf32>
    %cst_8 = arith.constant dense<0.000000e+00> : vector<32xf32>
    %12 = vector.multi_reduction <add>, %11, %cst_8 [0] : vector<32x32xf32> to vector<32xf32>
    %13 = vector.shape_cast %12 : vector<32xf32> to vector<1x32xf32>
    %14 = arith.addf %10, %13 : vector<1x32xf32>
    %c0_9 = arith.constant 0 : index
    %c0_10 = arith.constant 0 : index
    %15 = vector.load %arg7[%c0_9, %c0_10] : memref<1x32xf32, #tpu.memory_space<vmem>>, vector<1x32xf32>
    tpu.vector_store %arg7[%c0_9, %c0_10], %14 {strides = array<i32>} : memref<1x32xf32, #tpu.memory_space<vmem>>, vector<1x32xf32>,
    %c0_i32_11 = arith.constant 0 : i32
    %16 = arith.cmpi eq, %arg0, %c0_i32_11 : i32
    %17 = arith.extui %16 : i1 to i32
    %c0_i32_12 = arith.constant 0 : i32
    %18 = arith.cmpi ne, %17, %c0_i32_12 : i32
    scf.if %18 {
      %c0_13 = arith.constant 0 : index
      %c0_14 = arith.constant 0 : index
      %19 = vector.load %arg6[%c0_13, %c0_14] : memref<1x32xf32, #tpu.memory_space<vmem>>, vector<1x32xf32>
      %cst_15 = arith.constant 3.125000e-02 : f32
      %20 = vector.broadcast %cst_15 : f32 to vector<1x32xf32>
      %21 = arith.mulf %19, %20 : vector<1x32xf32>
      %c0_16 = arith.constant 0 : index
      %c0_17 = arith.constant 0 : index
      %22 = vector.load %arg7[%c0_16, %c0_17] : memref<1x32xf32, #tpu.memory_space<vmem>>, vector<1x32xf32>
      %cst_18 = arith.constant 3.125000e-02 : f32
      %23 = vector.broadcast %cst_18 : f32 to vector<1x32xf32>
      %24 = arith.mulf %22, %23 : vector<1x32xf32>
      %25 = arith.mulf %21, %21 : vector<1x32xf32>
      %26 = arith.subf %24, %25 : vector<1x32xf32>
      %cst_19 = arith.constant 0.000000e+00 : f32
      %27 = vector.broadcast %cst_19 : f32 to vector<1x32xf32>
      %28 = arith.maximumf %26, %27 : vector<1x32xf32>
      %cst_20 = arith.constant 9.99999974E-6 : f32
      %29 = vector.broadcast %cst_20 : f32 to vector<1x32xf32>
      %30 = arith.addf %28, %29 : vector<1x32xf32>
      %31 = math.rsqrt %30 : vector<1x32xf32>
      %c0_21 = arith.constant 0 : index
      %c0_22 = arith.constant 0 : index
      %32 = vector.load %arg2[%c0_21, %c0_22] : memref<1x32xf32, #tpu.memory_space<vmem>>, vector<1x32xf32>
      %33 = arith.mulf %32, %31 : vector<1x32xf32>
      %c0_23 = arith.constant 0 : index
      %c0_24 = arith.constant 0 : index
      %34 = vector.load %arg4[%c0_23, %c0_24] : memref<1x32xf32, #tpu.memory_space<vmem>>, vector<1x32xf32>
      tpu.vector_store %arg4[%c0_23, %c0_24], %33 {strides = array<i32>} : memref<1x32xf32, #tpu.memory_space<vmem>>, vector<1x32xf32>,
      %c0_25 = arith.constant 0 : index
      %c0_26 = arith.constant 0 : index
      %35 = vector.load %arg3[%c0_25, %c0_26] : memref<1x32xf32, #tpu.memory_space<vmem>>, vector<1x32xf32>
      %36 = arith.mulf %21, %33 : vector<1x32xf32>
      %37 = arith.subf %35, %36 : vector<1x32xf32>
      %c0_27 = arith.constant 0 : index
      %c0_28 = arith.constant 0 : index
      %38 = vector.load %arg5[%c0_27, %c0_28] : memref<1x32xf32, #tpu.memory_space<vmem>>, vector<1x32xf32>
      tpu.vector_store %arg5[%c0_27, %c0_28], %37 {strides = array<i32>} : memref<1x32xf32, #tpu.memory_space<vmem>>, vector<1x32xf32>,
    } else {
    }
    return
  }
  func.func @transform_0(%arg0: i32) -> (i32, i32) {
    %c0_i32 = arith.constant 0 : i32
    %c0_i32_0 = arith.constant 0 : i32
    return %arg0, %c0_i32 : i32, i32
  }
  func.func @transform_1(%arg0: i32) -> (i32, i32) {
    %c0_i32 = arith.constant 0 : i32
    %c0_i32_0 = arith.constant 0 : i32
    %c0_i32_1 = arith.constant 0 : i32
    return %c0_i32, %c0_i32_0 : i32, i32
  }
  func.func @transform_2(%arg0: i32) -> (i32, i32) {
    %c0_i32 = arith.constant 0 : i32
    %c0_i32_0 = arith.constant 0 : i32
    %c0_i32_1 = arith.constant 0 : i32
    return %c0_i32, %c0_i32_0 : i32, i32
  }
  func.func @transform_3(%arg0: i32) -> (i32, i32) {
    %c0_i32 = arith.constant 0 : i32
    %c0_i32_0 = arith.constant 0 : i32
    %c0_i32_1 = arith.constant 0 : i32
    return %c0_i32, %c0_i32_0 : i32, i32
  }
  func.func @transform_4(%arg0: i32) -> (i32, i32) {
    %c0_i32 = arith.constant 0 : i32
    %c0_i32_0 = arith.constant 0 : i32
    %c0_i32_1 = arith.constant 0 : i32
    return %c0_i32, %c0_i32_0 : i32, i32
  }
}

module attributes {stable_mosaic.version = 11 : i64} {
  func.func @_global_pool_bn_kernel(%arg0: i32, %arg1: memref<2x16x32xbf16, #tpu.memory_space<vmem>>, %arg2: memref<1x32xf32, #tpu.memory_space<vmem>>, %arg3: memref<1x32xf32, #tpu.memory_space<vmem>>, %arg4: memref<2x32xf32, #tpu.memory_space<vmem>>) attributes {dimension_semantics = [#tpu.dimension_semantics<arbitrary>], iteration_bounds = array<i64: 1>, scalar_prefetch = 0 : i64, scratch_operands = 0 : i64, tpu.core_type = #tpu.core_type<tc>, window_params = [{pipeline_mode = #tpu.pipeline_mode<synchronous>, transform_indices = @transform_0, window_bounds = array<i64: 2, 16, 32>}, {pipeline_mode = #tpu.pipeline_mode<synchronous>, transform_indices = @transform_1, window_bounds = array<i64: 1, 32>}, {pipeline_mode = #tpu.pipeline_mode<synchronous>, transform_indices = @transform_2, window_bounds = array<i64: 1, 32>}, {pipeline_mode = #tpu.pipeline_mode<synchronous>, transform_indices = @transform_3, window_bounds = array<i64: 2, 32>}]} {
    %c0 = arith.constant 0 : index
    %c0_0 = arith.constant 0 : index
    %c0_1 = arith.constant 0 : index
    %0 = vector.load %arg1[%c0, %c0_0, %c0_1] : memref<2x16x32xbf16, #tpu.memory_space<vmem>>, vector<2x16x32xbf16>
    %1 = arith.extf %0 : vector<2x16x32xbf16> to vector<2x16x32xf32>
    %c0_2 = arith.constant 0 : index
    %c0_3 = arith.constant 0 : index
    %2 = vector.load %arg2[%c0_2, %c0_3] : memref<1x32xf32, #tpu.memory_space<vmem>>, vector<1x32xf32>
    %3 = vector.shape_cast %2 : vector<1x32xf32> to vector<1x1x32xf32>
    %4 = vector.broadcast %3 : vector<1x1x32xf32> to vector<2x16x32xf32>
    %5 = arith.mulf %1, %4 : vector<2x16x32xf32>
    %c0_4 = arith.constant 0 : index
    %c0_5 = arith.constant 0 : index
    %6 = vector.load %arg3[%c0_4, %c0_5] : memref<1x32xf32, #tpu.memory_space<vmem>>, vector<1x32xf32>
    %7 = vector.shape_cast %6 : vector<1x32xf32> to vector<1x1x32xf32>
    %8 = vector.broadcast %7 : vector<1x1x32xf32> to vector<2x16x32xf32>
    %9 = arith.addf %5, %8 : vector<2x16x32xf32>
    %cst = arith.constant 0.000000e+00 : f32
    %10 = vector.broadcast %cst : f32 to vector<2x16x32xf32>
    %11 = arith.maximumf %9, %10 : vector<2x16x32xf32>
    %cst_6 = arith.constant dense<0.000000e+00> : vector<2x32xf32>
    %12 = vector.multi_reduction <add>, %11, %cst_6 [1] : vector<2x16x32xf32> to vector<2x32xf32>
    %cst_7 = arith.constant 6.250000e-02 : f32
    %13 = vector.broadcast %cst_7 : f32 to vector<2x32xf32>
    %14 = arith.mulf %12, %13 : vector<2x32xf32>
    %c0_8 = arith.constant 0 : index
    %c0_9 = arith.constant 0 : index
    %15 = vector.load %arg4[%c0_8, %c0_9] : memref<2x32xf32, #tpu.memory_space<vmem>>, vector<2x32xf32>
    tpu.vector_store %arg4[%c0_8, %c0_9], %14 {strides = array<i32>} : memref<2x32xf32, #tpu.memory_space<vmem>>, vector<2x32xf32>,
    return
  }
  func.func @transform_0(%arg0: i32) -> (i32, i32, i32) {
    %c0_i32 = arith.constant 0 : i32
    %c0_i32_0 = arith.constant 0 : i32
    %c0_i32_1 = arith.constant 0 : i32
    %c0_i32_2 = arith.constant 0 : i32
    return %c0_i32, %c0_i32_0, %c0_i32_1 : i32, i32, i32
  }
  func.func @transform_1(%arg0: i32) -> (i32, i32) {
    %c0_i32 = arith.constant 0 : i32
    %c0_i32_0 = arith.constant 0 : i32
    %c0_i32_1 = arith.constant 0 : i32
    return %c0_i32, %c0_i32_0 : i32, i32
  }
  func.func @transform_2(%arg0: i32) -> (i32, i32) {
    %c0_i32 = arith.constant 0 : i32
    %c0_i32_0 = arith.constant 0 : i32
    %c0_i32_1 = arith.constant 0 : i32
    return %c0_i32, %c0_i32_0 : i32, i32
  }
  func.func @transform_3(%arg0: i32) -> (i32, i32) {
    %c0_i32 = arith.constant 0 : i32
    %c0_i32_0 = arith.constant 0 : i32
    %c0_i32_1 = arith.constant 0 : i32
    return %c0_i32, %c0_i32_0 : i32, i32
  }
}

module attributes {stable_mosaic.version = 11 : i64} {
  func.func @_mm_kernel(%arg0: i32, %arg1: i32, %arg2: i32, %arg3: memref<8x32xbf16, #tpu.memory_space<vmem>>, %arg4: memref<32x128xbf16, #tpu.memory_space<vmem>>, %arg5: memref<1x32xf32, #tpu.memory_space<vmem>>, %arg6: memref<1x32xf32, #tpu.memory_space<vmem>>, %arg7: memref<1x128xf32, #tpu.memory_space<vmem>>, %arg8: memref<8x128xf32, #tpu.memory_space<vmem>>, %arg9: memref<8x128xf32, #tpu.memory_space<vmem>>) attributes {dimension_semantics = [#tpu.dimension_semantics<parallel>, #tpu.dimension_semantics<parallel>, #tpu.dimension_semantics<arbitrary>], iteration_bounds = array<i64: 1, 1, 1>, scalar_prefetch = 0 : i64, scratch_operands = 1 : i64, tpu.core_type = #tpu.core_type<tc>, window_params = [{transform_indices = @transform_0, window_bounds = array<i64: 8, 32>}, {transform_indices = @transform_1, window_bounds = array<i64: 32, 128>}, {transform_indices = @transform_2, window_bounds = array<i64: 1, 32>}, {transform_indices = @transform_3, window_bounds = array<i64: 1, 32>}, {transform_indices = @transform_4, window_bounds = array<i64: 1, 128>}, {transform_indices = @transform_5, window_bounds = array<i64: 8, 128>}]} {
    %c0_i32 = arith.constant 0 : i32
    %0 = arith.cmpi eq, %arg2, %c0_i32 : i32
    %1 = arith.extui %0 : i1 to i32
    %c0_i32_0 = arith.constant 0 : i32
    %2 = arith.cmpi ne, %1, %c0_i32_0 : i32
    scf.if %2 {
      %cst_10 = arith.constant 0.000000e+00 : f32
      %12 = vector.broadcast %cst_10 : f32 to vector<8x128xf32>
      %c0_11 = arith.constant 0 : index
      %c0_12 = arith.constant 0 : index
      %13 = vector.load %arg9[%c0_11, %c0_12] : memref<8x128xf32, #tpu.memory_space<vmem>>, vector<8x128xf32>
      tpu.vector_store %arg9[%c0_11, %c0_12], %12 {strides = array<i32>} : memref<8x128xf32, #tpu.memory_space<vmem>>, vector<8x128xf32>,
    } else {
    }
    %c0 = arith.constant 0 : index
    %c0_1 = arith.constant 0 : index
    %3 = vector.load %arg3[%c0, %c0_1] : memref<8x32xbf16, #tpu.memory_space<vmem>>, vector<8x32xbf16>
    %c0_2 = arith.constant 0 : index
    %c0_3 = arith.constant 0 : index
    %4 = vector.load %arg9[%c0_2, %c0_3] : memref<8x128xf32, #tpu.memory_space<vmem>>, vector<8x128xf32>
    %c0_4 = arith.constant 0 : index
    %c0_5 = arith.constant 0 : index
    %5 = vector.load %arg4[%c0_4, %c0_5] : memref<32x128xbf16, #tpu.memory_space<vmem>>, vector<32x128xbf16>
    %cst = arith.constant dense<0.000000e+00> : vector<8x128xf32>
    %6 = tpu.matmul %3, %5, %cst {dimension_numbers = #tpu.dot_dimension_numbers<[1], [0], [0], [1], [0, 0, 1, 1], [], []>} : vector<8x32xbf16>, vector<32x128xbf16>, vector<8x128xf32> -> vector<8x128xf32>
    %7 = arith.addf %4, %6 : vector<8x128xf32>
    %c0_6 = arith.constant 0 : index
    %c0_7 = arith.constant 0 : index
    %8 = vector.load %arg9[%c0_6, %c0_7] : memref<8x128xf32, #tpu.memory_space<vmem>>, vector<8x128xf32>
    tpu.vector_store %arg9[%c0_6, %c0_7], %7 {strides = array<i32>} : memref<8x128xf32, #tpu.memory_space<vmem>>, vector<8x128xf32>,
    %c0_i32_8 = arith.constant 0 : i32
    %9 = arith.cmpi eq, %arg2, %c0_i32_8 : i32
    %10 = arith.extui %9 : i1 to i32
    %c0_i32_9 = arith.constant 0 : i32
    %11 = arith.cmpi ne, %10, %c0_i32_9 : i32
    scf.if %11 {
      %c0_10 = arith.constant 0 : index
      %c0_11 = arith.constant 0 : index
      %12 = vector.load %arg9[%c0_10, %c0_11] : memref<8x128xf32, #tpu.memory_space<vmem>>, vector<8x128xf32>
      %c0_12 = arith.constant 0 : index
      %c0_13 = arith.constant 0 : index
      %13 = vector.load %arg7[%c0_12, %c0_13] : memref<1x128xf32, #tpu.memory_space<vmem>>, vector<1x128xf32>
      %14 = vector.broadcast %13 : vector<1x128xf32> to vector<8x128xf32>
      %15 = arith.addf %12, %14 : vector<8x128xf32>
      %c0_14 = arith.constant 0 : index
      %c0_15 = arith.constant 0 : index
      %16 = vector.load %arg8[%c0_14, %c0_15] : memref<8x128xf32, #tpu.memory_space<vmem>>, vector<8x128xf32>
      tpu.vector_store %arg8[%c0_14, %c0_15], %15 {strides = array<i32>} : memref<8x128xf32, #tpu.memory_space<vmem>>, vector<8x128xf32>,
    } else {
    }
    return
  }
  func.func @transform_0(%arg0: i32, %arg1: i32, %arg2: i32) -> (i32, i32) {
    %c0_i32 = arith.constant 0 : i32
    return %arg0, %arg2 : i32, i32
  }
  func.func @transform_1(%arg0: i32, %arg1: i32, %arg2: i32) -> (i32, i32) {
    %c0_i32 = arith.constant 0 : i32
    return %arg2, %arg1 : i32, i32
  }
  func.func @transform_2(%arg0: i32, %arg1: i32, %arg2: i32) -> (i32, i32) {
    %c0_i32 = arith.constant 0 : i32
    %c0_i32_0 = arith.constant 0 : i32
    return %c0_i32, %arg2 : i32, i32
  }
  func.func @transform_3(%arg0: i32, %arg1: i32, %arg2: i32) -> (i32, i32) {
    %c0_i32 = arith.constant 0 : i32
    %c0_i32_0 = arith.constant 0 : i32
    return %c0_i32, %arg2 : i32, i32
  }
  func.func @transform_4(%arg0: i32, %arg1: i32, %arg2: i32) -> (i32, i32) {
    %c0_i32 = arith.constant 0 : i32
    %c0_i32_0 = arith.constant 0 : i32
    return %c0_i32, %arg1 : i32, i32
  }
  func.func @transform_5(%arg0: i32, %arg1: i32, %arg2: i32) -> (i32, i32) {
    %c0_i32 = arith.constant 0 : i32
    return %arg0, %arg1 : i32, i32
  }
}

</mosaic_0001>

<llo_original>
// kernel: densenet_forward.31
$region0: #{densenet_forward.31}
  #allocation0 [shape = 'u32[]', space=smem, size = 0x4, offset = 0x4, fixed_abs, tag = 'smem constant byte address 0x4 - core index']
  #allocation1 [shape = 'u32[144,128]{1,0:T(1,128)}', space=vmem, size = 0x12000, scoped, tag = 'internal scratch']
  #allocation2 [shape = 'f32[1,16]{1,0:T(1,128)}', space=vmem, size = 0x200, scoped, tag = 'scratch operand']
  #allocation3 [shape = 'f32[1,16]{1,0:T(1,128)}', space=vmem, size = 0x200, scoped, tag = 'scratch operand']
  %s0 = inlined_call_operand.vmem [shape: bf16[512,16], index: 0, kind: input, shape index: {}]
  %s1 = inlined_call_operand.vmem [shape: f32[1,16], index: 1, kind: input, shape index: {}]
  %s2 = inlined_call_operand.vmem [shape: f32[1,16], index: 2, kind: input, shape index: {}]
  %s3 = inlined_call_operand.vmem [shape: f32[1,16], index: 3, kind: output, shape index: {0}]
  %s4 = inlined_call_operand.vmem [shape: f32[1,16], index: 4, kind: output, shape index: {1}]
  %5 = xla_tuple %s3, %s4
  %s6 = sld [smem:[#allocation0]]
  $region38: #{densenet_forward.31} parent=0
    _
  %s8 = ssub.s32 1, %s6
  %s9 = scalar_select 0, %s8, %s6
  // Predicated region
  $region2: #{densenet_forward.31} parent=0 // pred_check
    _
  $region3: #{densenet_forward.31} parent=0 // pred_check_branch
    %11 = sbr.rel (0) target = $region5
  $region4: #{densenet_forward.31} parent=0 // pred_region
    _
  $region5: #{densenet_forward.31} parent=0 // pred_fallthru
    _
  // Predicated region
  $region6: #{densenet_forward.31} parent=0 // pred_check
    _
  $region7: #{densenet_forward.31} parent=0 // pred_check_branch
    %13 = sbr.rel (0) target = $region9
  $region8: #{densenet_forward.31} parent=0 // pred_region
    _
  $region9: #{densenet_forward.31} parent=0 // pred_fallthru
    _
  // Predicated region
  $region10: #{densenet_forward.31} parent=0 // pred_check
    _
  $region11: #{densenet_forward.31} parent=0 // pred_check_branch
    %15 = sbr.rel (0) target = $region13
  $region12: #{densenet_forward.31} parent=0 // pred_region
    _
  $region13: #{densenet_forward.31} parent=0 // pred_fallthru
    _
  %p16 = scmp.eq.s32.totalorder 0, 0
  // Predicated region
  $region14: #{densenet_forward.31} parent=0 // pred_check
    %p17 = pneg %p16
  $region15: #{densenet_forward.31} parent=0 // pred_check_branch
    %19 = sbr.rel (%p17) target = $region17
  $region16: #{densenet_forward.31} parent=0 // pred_region
    %vm20 = vcmask 122880
    %21 = vst.msk [vmem:[#allocation2] sm:$0x1] %vm20, 0.0
    %22 = vst.msk [vmem:[#allocation3] sm:$0x1] %vm20, 0.0
  $region17: #{densenet_forward.31} parent=0 // pred_fallthru
    _
  %v23 = vld [vmem:[%s0] sm:$0xf]
  %v24 = vld [vmem:[%s0 + $0x4] sm:$0xf]
  %v25 = vld [vmem:[%s0 + $0x8] sm:$0xf]
  %v26 = vld [vmem:[%s0 + $0xc] sm:$0xf]
  %v27 = vld [vmem:[%s0 + $0x10] sm:$0xf]
  %v28 = vld [vmem:[%s0 + $0x14] sm:$0xf]
  %v29 = vld [vmem:[%s0 + $0x18] sm:$0xf]
  %v30 = vld [vmem:[%s0 + $0x1c] sm:$0xf]
  %v31 = vld [vmem:[%s0 + $0x20] sm:$0xf]
  %v32 = vld [vmem:[%s0 + $0x24] sm:$0xf]
  %v33 = vld [vmem:[%s0 + $0x28] sm:$0xf]
  %v34 = vld [vmem:[%s0 + $0x2c] sm:$0xf]
  %v35 = vld [vmem:[%s0 + $0x30] sm:$0xf]
  %v36 = vld [vmem:[%s0 + $0x34] sm:$0xf]
  %v37 = vld [vmem:[%s0 + $0x38] sm:$0xf]
  %v38 = vld [vmem:[%s0 + $0x3c] sm:$0xf]
  %v39 = vld [vmem:[%s0 + $0x40] sm:$0xf]
  %v40 = vld [vmem:[%s0 + $0x44] sm:$0xf]
  %v41 = vld [vmem:[%s0 + $0x48] sm:$0xf]
  %v42 = vld [vmem:[%s0 + $0x4c] sm:$0xf]
  %v43 = vld [vmem:[%s0 + $0x50] sm:$0xf]
  %v44 = vld [vmem:[%s0 + $0x54] sm:$0xf]
  %v45 = vld [vmem:[%s0 + $0x58] sm:$0xf]
  %v46 = vld [vmem:[%s0 + $0x5c] sm:$0xf]
  %v47 = vld [vmem:[%s0 + $0x60] sm:$0xf]
  %v48 = vld [vmem:[%s0 + $0x64] sm:$0xf]
  %v49 = vld [vmem:[%s0 + $0x68] sm:$0xf]
  %v50 = vld [vmem:[%s0 + $0x6c] sm:$0xf]
  %v51 = vld [vmem:[%s0 + $0x70] sm:$0xf]
  %v52 = vld [vmem:[%s0 + $0x74] sm:$0xf]
  %v53 = vld [vmem:[%s0 + $0x78] sm:$0xf]
  %v54 = vld [vmem:[%s0 + $0x7c] sm:$0xf]
  %v55 = vld [vmem:[%s0 + $0x80] sm:$0xf]
  %v56 = vld [vmem:[%s0 + $0x84] sm:$0xf]
  %v57 = vld [vmem:[%s0 + $0x88] sm:$0xf]
  %v58 = vld [vmem:[%s0 + $0x8c] sm:$0xf]
  %v59 = vld [vmem:[%s0 + $0x90] sm:$0xf]
  %v60 = vld [vmem:[%s0 + $0x94] sm:$0xf]
  %v61 = vld [vmem:[%s0 + $0x98] sm:$0xf]
  %v62 = vld [vmem:[%s0 + $0x9c] sm:$0xf]
  %v63 = vld [vmem:[%s0 + $0xa0] sm:$0xf]
  %v64 = vld [vmem:[%s0 + $0xa4] sm:$0xf]
  %v65 = vld [vmem:[%s0 + $0xa8] sm:$0xf]
  %v66 = vld [vmem:[%s0 + $0xac] sm:$0xf]
  %v67 = vld [vmem:[%s0 + $0xb0] sm:$0xf]
  %v68 = vld [vmem:[%s0 + $0xb4] sm:$0xf]
  %v69 = vld [vmem:[%s0 + $0xb8] sm:$0xf]
  %v70 = vld [vmem:[%s0 + $0xbc] sm:$0xf]
  %v71 = vld [vmem:[%s0 + $0xc0] sm:$0xf]
  %v72 = vld [vmem:[%s0 + $0xc4] sm:$0xf]
  %v73 = vld [vmem:[%s0 + $0xc8] sm:$0xf]
  %v74 = vld [vmem:[%s0 + $0xcc] sm:$0xf]
  %v75 = vld [vmem:[%s0 + $0xd0] sm:$0xf]
  %v76 = vld [vmem:[%s0 + $0xd4] sm:$0xf]
  %v77 = vld [vmem:[%s0 + $0xd8] sm:$0xf]
  %v78 = vld [vmem:[%s0 + $0xdc] sm:$0xf]
  %v79 = vld [vmem:[%s0 + $0xe0] sm:$0xf]
  %v80 = vld [vmem:[%s0 + $0xe4] sm:$0xf]
  %v81 = vld [vmem:[%s0 + $0xe8] sm:$0xf]
  %v82 = vld [vmem:[%s0 + $0xec] sm:$0xf]
  %v83 = vld [vmem:[%s0 + $0xf0] sm:$0xf]
  %v84 = vld [vmem:[%s0 + $0xf4] sm:$0xf]
  %v85 = vld [vmem:[%s0 + $0xf8] sm:$0xf]
  %v86 = vld [vmem:[%s0 + $0xfc] sm:$0xf]
  %v87 = vunpack.c.l.bf16 %v23
  %v88 = vunpack.c.l.bf16 %v24
  %v89 = vunpack.c.l.bf16 %v25
  %v90 = vunpack.c.l.bf16 %v26
  %v91 = vunpack.c.l.bf16 %v27
  %v92 = vunpack.c.l.bf16 %v28
  %v93 = vunpack.c.l.bf16 %v29
  %v94 = vunpack.c.l.bf16 %v30
  %v95 = vunpack.c.l.bf16 %v31
  %v96 = vunpack.c.l.bf16 %v32
  %v97 = vunpack.c.l.bf16 %v33
  %v98 = vunpack.c.l.bf16 %v34
  %v99 = vunpack.c.l.bf16 %v35
  %v100 = vunpack.c.l.bf16 %v36
  %v101 = vunpack.c.l.bf16 %v37
  %v102 = vunpack.c.l.bf16 %v38
  %v103 = vunpack.c.l.bf16 %v39
  %v104 = vunpack.c.l.bf16 %v40
  %v105 = vunpack.c.l.bf16 %v41
  %v106 = vunpack.c.l.bf16 %v42
  %v107 = vunpack.c.l.bf16 %v43
  %v108 = vunpack.c.l.bf16 %v44
  %v109 = vunpack.c.l.bf16 %v45
  %v110 = vunpack.c.l.bf16 %v46
  %v111 = vunpack.c.l.bf16 %v47
  %v112 = vunpack.c.l.bf16 %v48
  %v113 = vunpack.c.l.bf16 %v49
  %v114 = vunpack.c.l.bf16 %v50
  %v115 = vunpack.c.l.bf16 %v51
  %v116 = vunpack.c.l.bf16 %v52
  %v117 = vunpack.c.l.bf16 %v53
  %v118 = vunpack.c.l.bf16 %v54
  %v119 = vunpack.c.l.bf16 %v55
  %v120 = vunpack.c.l.bf16 %v56
  %v121 = vunpack.c.l.bf16 %v57
  %v122 = vunpack.c.l.bf16 %v58
  %v123 = vunpack.c.l.bf16 %v59
  %v124 = vunpack.c.l.bf16 %v60
  %v125 = vunpack.c.l.bf16 %v61
  %v126 = vunpack.c.l.bf16 %v62
  %v127 = vunpack.c.l.bf16 %v63
  %v128 = vunpack.c.l.bf16 %v64
  %v129 = vunpack.c.l.bf16 %v65
  %v130 = vunpack.c.l.bf16 %v66
  %v131 = vunpack.c.l.bf16 %v67
  %v132 = vunpack.c.l.bf16 %v68
  %v133 = vunpack.c.l.bf16 %v69
  %v134 = vunpack.c.l.bf16 %v70
  %v135 = vunpack.c.l.bf16 %v71
  %v136 = vunpack.c.l.bf16 %v72
  %v137 = vunpack.c.l.bf16 %v73
  %v138 = vunpack.c.l.bf16 %v74
  %v139 = vunpack.c.l.bf16 %v75
  %v140 = vunpack.c.l.bf16 %v76
  %v141 = vunpack.c.l.bf16 %v77
  %v142 = vunpack.c.l.bf16 %v78
  %v143 = vunpack.c.l.bf16 %v79
  %v144 = vunpack.c.l.bf16 %v80
  %v145 = vunpack.c.l.bf16 %v81
  %v146 = vunpack.c.l.bf16 %v82
  %v147 = vunpack.c.l.bf16 %v83
  %v148 = vunpack.c.l.bf16 %v84
  %v149 = vunpack.c.l.bf16 %v85
  %v150 = vunpack.c.l.bf16 %v86
  %v151 = vld [vmem:[#allocation2] sm:$0x1]
  %vm152 = vcmask 130048
  %v153 = vsel %vm152, %v87, 0.0
  %v154 = vsel %vm152, %v88, 0.0
  %v155 = vadd.f32 %v153, %v154
  %v156 = vsel %vm152, %v89, 0.0
  %v157 = vadd.f32 %v155, %v156
  %v158 = vsel %vm152, %v90, 0.0
  %v159 = vadd.f32 %v157, %v158
  %v160 = vsel %vm152, %v91, 0.0
  %v161 = vadd.f32 %v159, %v160
  %v162 = vsel %vm152, %v92, 0.0
  %v163 = vadd.f32 %v161, %v162
  %v164 = vsel %vm152, %v93, 0.0
  %v165 = vadd.f32 %v163, %v164
  %v166 = vsel %vm152, %v94, 0.0
  %v167 = vadd.f32 %v165, %v166
  %v168 = vsel %vm152, %v95, 0.0
  %v169 = vadd.f32 %v167, %v168
  %v170 = vsel %vm152, %v96, 0.0
  %v171 = vadd.f32 %v169, %v170
  %v172 = vsel %vm152, %v97, 0.0
  %v173 = vadd.f32 %v171, %v172
  %v174 = vsel %vm152, %v98, 0.0
  %v175 = vadd.f32 %v173, %v174
  %v176 = vsel %vm152, %v99, 0.0
  %v177 = vadd.f32 %v175, %v176
  %v178 = vsel %vm152, %v100, 0.0
  %v179 = vadd.f32 %v177, %v178
  %v180 = vsel %vm152, %v101, 0.0
  %v181 = vadd.f32 %v179, %v180
  %v182 = vsel %vm152, %v102, 0.0
  %v183 = vadd.f32 %v181, %v182
  %v184 = vsel %vm152, %v103, 0.0
  %v185 = vadd.f32 %v183, %v184
  %v186 = vsel %vm152, %v104, 0.0
  %v187 = vadd.f32 %v185, %v186
  %v188 = vsel %vm152, %v105, 0.0
  %v189 = vadd.f32 %v187, %v188
  %v190 = vsel %vm152, %v106, 0.0
  %v191 = vadd.f32 %v189, %v190
  %v192 = vsel %vm152, %v107, 0.0
  %v193 = vadd.f32 %v191, %v192
  %v194 = vsel %vm152, %v108, 0.0
  %v195 = vadd.f32 %v193, %v194
  %v196 = vsel %vm152, %v109, 0.0
  %v197 = vadd.f32 %v195, %v196
  %v198 = vsel %vm152, %v110, 0.0
  %v199 = vadd.f32 %v197, %v198
  %v200 = vsel %vm152, %v111, 0.0
  %v201 = vadd.f32 %v199, %v200
  %v202 = vsel %vm152, %v112, 0.0
  %v203 = vadd.f32 %v201, %v202
  %v204 = vsel %vm152, %v113, 0.0
  %v205 = vadd.f32 %v203, %v204
  %v206 = vsel %vm152, %v114, 0.0
  %v207 = vadd.f32 %v205, %v206
  %v208 = vsel %vm152, %v115, 0.0
  %v209 = vadd.f32 %v207, %v208
  %v210 = vsel %vm152, %v116, 0.0
  %v211 = vadd.f32 %v209, %v210
  %v212 = vsel %vm152, %v117, 0.0
  %v213 = vadd.f32 %v211, %v212
  %v214 = vsel %vm152, %v118, 0.0
  %v215 = vadd.f32 %v213, %v214
  %v216 = vsel %vm152, %v119, 0.0
  %v217 = vadd.f32 %v215, %v216
  %v218 = vsel %vm152, %v120, 0.0
  %v219 = vadd.f32 %v217, %v218
  %v220 = vsel %vm152, %v121, 0.0
  %v221 = vadd.f32 %v219, %v220
  %v222 = vsel %vm152, %v122, 0.0
  %v223 = vadd.f32 %v221, %v222
  %v224 = vsel %vm152, %v123, 0.0
  %v225 = vadd.f32 %v223, %v224
  %v226 = vsel %vm152, %v124, 0.0
  %v227 = vadd.f32 %v225, %v226
  %v228 = vsel %vm152, %v125, 0.0
  %v229 = vadd.f32 %v227, %v228
  %v230 = vsel %vm152, %v126, 0.0
  %v231 = vadd.f32 %v229, %v230
  %v232 = vsel %vm152, %v127, 0.0
  %v233 = vadd.f32 %v231, %v232
  %v234 = vsel %vm152, %v128, 0.0
  %v235 = vadd.f32 %v233, %v234
  %v236 = vsel %vm152, %v129, 0.0
  %v237 = vadd.f32 %v235, %v236
  %v238 = vsel %vm152, %v130, 0.0
  %v239 = vadd.f32 %v237, %v238
  %v240 = vsel %vm152, %v131, 0.0
  %v241 = vadd.f32 %v239, %v240
  %v242 = vsel %vm152, %v132, 0.0
  %v243 = vadd.f32 %v241, %v242
  %v244 = vsel %vm152, %v133, 0.0
  %v245 = vadd.f32 %v243, %v244
  %v246 = vsel %vm152, %v134, 0.0
  %v247 = vadd.f32 %v245, %v246
  %v248 = vsel %vm152, %v135, 0.0
  %v249 = vadd.f32 %v247, %v248
  %v250 = vsel %vm152, %v136, 0.0
  %v251 = vadd.f32 %v249, %v250
  %v252 = vsel %vm152, %v137, 0.0
  %v253 = vadd.f32 %v251, %v252
  %v254 = vsel %vm152, %v138, 0.0
  %v255 = vadd.f32 %v253, %v254
  %v256 = vsel %vm152, %v139, 0.0
  %v257 = vadd.f32 %v255, %v256
  %v258 = vsel %vm152, %v140, 0.0
  %v259 = vadd.f32 %v257, %v258
  %v260 = vsel %vm152, %v141, 0.0
  %v261 = vadd.f32 %v259, %v260
  %v262 = vsel %vm152, %v142, 0.0
  %v263 = vadd.f32 %v261, %v262
  %v264 = vsel %vm152, %v143, 0.0
  %v265 = vadd.f32 %v263, %v264
  %v266 = vsel %vm152, %v144, 0.0
  %v267 = vadd.f32 %v265, %v266
  %v268 = vsel %vm152, %v145, 0.0
  %v269 = vadd.f32 %v267, %v268
  %v270 = vsel %vm152, %v146, 0.0
  %v271 = vadd.f32 %v269, %v270
  %v272 = vsel %vm152, %v147, 0.0
  %v273 = vadd.f32 %v271, %v272
  %v274 = vsel %vm152, %v148, 0.0
  %v275 = vadd.f32 %v273, %v274
  %v276 = vsel %vm152, %v149, 0.0
  %v277 = vadd.f32 %v275, %v276
  %v278 = vsel %vm152, %v150, 0.0
  %v279 = vadd.f32 %v277, %v278
  %v280 = vrot.slane %v279, 4
  %v281 = vadd.f32 %v279, %v280
  %v282 = vrot.slane %v281, 2
  %v283 = vadd.f32 %v281, %v282
  %v284 = vrot.slane %v283, 1
  %v285 = vadd.f32 %v283, %v284
  %v286 = vadd.f32 %v151, %v285
  %vm287 = vcmask 122880
  %288 = vst.msk [vmem:[#allocation2] sm:$0x1] %vm287, %v286
  %v289 = vld [vmem:[#allocation3] sm:$0x1]
  %v290 = vmul.f32 %v87, %v87
  %v291 = vmul.f32 %v88, %v88
  %v292 = vmul.f32 %v89, %v89
  %v293 = vmul.f32 %v90, %v90
  %v294 = vmul.f32 %v91, %v91
  %v295 = vmul.f32 %v92, %v92
  %v296 = vmul.f32 %v93, %v93
  %v297 = vmul.f32 %v94, %v94
  %v298 = vmul.f32 %v95, %v95
  %v299 = vmul.f32 %v96, %v96
  %v300 = vmul.f32 %v97, %v97
  %v301 = vmul.f32 %v98, %v98
  %v302 = vmul.f32 %v99, %v99
  %v303 = vmul.f32 %v100, %v100
  %v304 = vmul.f32 %v101, %v101
  %v305 = vmul.f32 %v102, %v102
  %v306 = vmul.f32 %v103, %v103
  %v307 = vmul.f32 %v104, %v104
  %v308 = vmul.f32 %v105, %v105
  %v309 = vmul.f32 %v106, %v106
  %v310 = vmul.f32 %v107, %v107
  %v311 = vmul.f32 %v108, %v108
  %v312 = vmul.f32 %v109, %v109
  %v313 = vmul.f32 %v110, %v110
  %v314 = vmul.f32 %v111, %v111
  %v315 = vmul.f32 %v112, %v112
  %v316 = vmul.f32 %v113, %v113
  %v317 = vmul.f32 %v114, %v114
  %v318 = vmul.f32 %v115, %v115
  %v319 = vmul.f32 %v116, %v116
  %v320 = vmul.f32 %v117, %v117
  %v321 = vmul.f32 %v118, %v118
  %v322 = vmul.f32 %v119, %v119
  %v323 = vmul.f32 %v120, %v120
  %v324 = vmul.f32 %v121, %v121
  %v325 = vmul.f32 %v122, %v122
  %v326 = vmul.f32 %v123, %v123
  %v327 = vmul.f32 %v124, %v124
  %v328 = vmul.f32 %v125, %v125
  %v329 = vmul.f32 %v126, %v126
  %v330 = vmul.f32 %v127, %v127
  %v331 = vmul.f32 %v128, %v128
  %v332 = vmul.f32 %v129, %v129
  %v333 = vmul.f32 %v130, %v130
  %v334 = vmul.f32 %v131, %v131
  %v335 = vmul.f32 %v132, %v132
  %v336 = vmul.f32 %v133, %v133
  %v337 = vmul.f32 %v134, %v134
  %v338 = vmul.f32 %v135, %v135
  %v339 = vmul.f32 %v136, %v136
  %v340 = vmul.f32 %v137, %v137
  %v341 = vmul.f32 %v138, %v138
  %v342 = vmul.f32 %v139, %v139
  %v343 = vmul.f32 %v140, %v140
  %v344 = vmul.f32 %v141, %v141
  %v345 = vmul.f32 %v142, %v142
  %v346 = vmul.f32 %v143, %v143
  %v347 = vmul.f32 %v144, %v144
  %v348 = vmul.f32 %v145, %v145
  %v349 = vmul.f32 %v146, %v146
  %v350 = vmul.f32 %v147, %v147
  %v351 = vmul.f32 %v148, %v148
  %v352 = vmul.f32 %v149, %v149
  %v353 = vmul.f32 %v150, %v150
  %v354 = vsel %vm152, %v290, 0.0
  %v355 = vsel %vm152, %v291, 0.0
  %v356 = vadd.f32 %v354, %v355
  %v357 = vsel %vm152, %v292, 0.0
  %v358 = vadd.f32 %v356, %v357
  %v359 = vsel %vm152, %v293, 0.0
  %v360 = vadd.f32 %v358, %v359
  %v361 = vsel %vm152, %v294, 0.0
  %v362 = vadd.f32 %v360, %v361
  %v363 = vsel %vm152, %v295, 0.0
  %v364 = vadd.f32 %v362, %v363
  %v365 = vsel %vm152, %v296, 0.0
  %v366 = vadd.f32 %v364, %v365
  %v367 = vsel %vm152, %v297, 0.0
  %v368 = vadd.f32 %v366, %v367
  %v369 = vsel %vm152, %v298, 0.0
  %v370 = vadd.f32 %v368, %v369
  %v371 = vsel %vm152, %v299, 0.0
  %v372 = vadd.f32 %v370, %v371
  %v373 = vsel %vm152, %v300, 0.0
  %v374 = vadd.f32 %v372, %v373
  %v375 = vsel %vm152, %v301, 0.0
  %v376 = vadd.f32 %v374, %v375
  %v377 = vsel %vm152, %v302, 0.0
  %v378 = vadd.f32 %v376, %v377
  %v379 = vsel %vm152, %v303, 0.0
  %v380 = vadd.f32 %v378, %v379
  %v381 = vsel %vm152, %v304, 0.0
  %v382 = vadd.f32 %v380, %v381
  %v383 = vsel %vm152, %v305, 0.0
  %v384 = vadd.f32 %v382, %v383
  %v385 = vsel %vm152, %v306, 0.0
  %v386 = vadd.f32 %v384, %v385
  %v387 = vsel %vm152, %v307, 0.0
  %v388 = vadd.f32 %v386, %v387
  %v389 = vsel %vm152, %v308, 0.0
  %v390 = vadd.f32 %v388, %v389
  %v391 = vsel %vm152, %v309, 0.0
  %v392 = vadd.f32 %v390, %v391
  %v393 = vsel %vm152, %v310, 0.0
  %v394 = vadd.f32 %v392, %v393
  %v395 = vsel %vm152, %v311, 0.0
  %v396 = vadd.f32 %v394, %v395
  %v397 = vsel %vm152, %v312, 0.0
  %v398 = vadd.f32 %v396, %v397
  %v399 = vsel %vm152, %v313, 0.0
  %v400 = vadd.f32 %v398, %v399
  %v401 = vsel %vm152, %v314, 0.0
  %v402 = vadd.f32 %v400, %v401
  %v403 = vsel %vm152, %v315, 0.0
  %v404 = vadd.f32 %v402, %v403
  %v405 = vsel %vm152, %v316, 0.0
  %v406 = vadd.f32 %v404, %v405
  %v407 = vsel %vm152, %v317, 0.0
  %v408 = vadd.f32 %v406, %v407
  %v409 = vsel %vm152, %v318, 0.0
  %v410 = vadd.f32 %v408, %v409
  %v411 = vsel %vm152, %v319, 0.0
  %v412 = vadd.f32 %v410, %v411
  %v413 = vsel %vm152, %v320, 0.0
  %v414 = vadd.f32 %v412, %v413
  %v415 = vsel %vm152, %v321, 0.0
  %v416 = vadd.f32 %v414, %v415
  %v417 = vsel %vm152, %v322, 0.0
  %v418 = vadd.f32 %v416, %v417
  %v419 = vsel %vm152, %v323, 0.0
  %v420 = vadd.f32 %v418, %v419
  %v421 = vsel %vm152, %v324, 0.0
  %v422 = vadd.f32 %v420, %v421
  %v423 = vsel %vm152, %v325, 0.0
  %v424 = vadd.f32 %v422, %v423
  %v425 = vsel %vm152, %v326, 0.0
  %v426 = vadd.f32 %v424, %v425
  %v427 = vsel %vm152, %v327, 0.0
  %v428 = vadd.f32 %v426, %v427
  %v429 = vsel %vm152, %v328, 0.0
  %v430 = vadd.f32 %v428, %v429
  %v431 = vsel %vm152, %v329, 0.0
  %v432 = vadd.f32 %v430, %v431
  %v433 = vsel %vm152, %v330, 0.0
  %v434 = vadd.f32 %v432, %v433
  %v435 = vsel %vm152, %v331, 0.0
  %v436 = vadd.f32 %v434, %v435
  %v437 = vsel %vm152, %v332, 0.0
  %v438 = vadd.f32 %v436, %v437
  %v439 = vsel %vm152, %v333, 0.0
  %v440 = vadd.f32 %v438, %v439
  %v441 = vsel %vm152, %v334, 0.0
  %v442 = vadd.f32 %v440, %v441
  %v443 = vsel %vm152, %v335, 0.0
  %v444 = vadd.f32 %v442, %v443
  %v445 = vsel %vm152, %v336, 0.0
  %v446 = vadd.f32 %v444, %v445
  %v447 = vsel %vm152, %v337, 0.0
  %v448 = vadd.f32 %v446, %v447
  %v449 = vsel %vm152, %v338, 0.0
  %v450 = vadd.f32 %v448, %v449
  %v451 = vsel %vm152, %v339, 0.0
  %v452 = vadd.f32 %v450, %v451
  %v453 = vsel %vm152, %v340, 0.0
  %v454 = vadd.f32 %v452, %v453
  %v455 = vsel %vm152, %v341, 0.0
  %v456 = vadd.f32 %v454, %v455
  %v457 = vsel %vm152, %v342, 0.0
  %v458 = vadd.f32 %v456, %v457
  %v459 = vsel %vm152, %v343, 0.0
  %v460 = vadd.f32 %v458, %v459
  %v461 = vsel %vm152, %v344, 0.0
  %v462 = vadd.f32 %v460, %v461
  %v463 = vsel %vm152, %v345, 0.0
  %v464 = vadd.f32 %v462, %v463
  %v465 = vsel %vm152, %v346, 0.0
  %v466 = vadd.f32 %v464, %v465
  %v467 = vsel %vm152, %v347, 0.0
  %v468 = vadd.f32 %v466, %v467
  %v469 = vsel %vm152, %v348, 0.0
  %v470 = vadd.f32 %v468, %v469
  %v471 = vsel %vm152, %v349, 0.0
  %v472 = vadd.f32 %v470, %v471
  %v473 = vsel %vm152, %v350, 0.0
  %v474 = vadd.f32 %v472, %v473
  %v475 = vsel %vm152, %v351, 0.0
  %v476 = vadd.f32 %v474, %v475
  %v477 = vsel %vm152, %v352, 0.0
  %v478 = vadd.f32 %v476, %v477
  %v479 = vsel %vm152, %v353, 0.0
  %v480 = vadd.f32 %v478, %v479
  %v481 = vrot.slane %v480, 4
  %v482 = vadd.f32 %v480, %v481
  %v483 = vrot.slane %v482, 2
  %v484 = vadd.f32 %v482, %v483
  %v485 = vrot.slane %v484, 1
  %v486 = vadd.f32 %v484, %v485
  %v487 = vadd.f32 %v289, %v486
  %488 = vst.msk [vmem:[#allocation3] sm:$0x1] %vm287, %v487
  // Predicated region
  $region18: #{densenet_forward.31} parent=0 // pred_check
    %p489 = pneg %p16
  $region19: #{densenet_forward.31} parent=0 // pred_check_branch
    %491 = sbr.rel (%p489) target = $region21
  $region20: #{densenet_forward.31} parent=0 // pred_region
    %v492 = vld [vmem:[#allocation2] sm:$0x1]
    %v493 = vmul.f32 %v492, 0.001953125
    %v494 = vld [vmem:[#allocation3] sm:$0x1]
    %v495 = vmul.f32 %v494, 0.001953125
    %v496 = vmul.f32 %v493, %v493
    %v497 = vsub.f32 %v495, %v496
    %v498 = vmax.f32 %v497, 0.0
    %v499 = vadd.f32 %v498, 1e-05
    %v500 = vrsqrt.pop %v499
    %v501 = vld [vmem:[%s1] sm:$0x1]
    %v502 = vmul.f32 %v501, %v500
    %503 = vst.msk [vmem:[%s3] sm:$0x1] %vm287, %v502
    %v504 = vld [vmem:[%s2] sm:$0x1]
    %v505 = vmul.f32 %v493, %v502
    %v506 = vsub.f32 %v504, %v505
    %507 = vst.msk [vmem:[%s4] sm:$0x1] %vm287, %v506
  $region21: #{densenet_forward.31} parent=0 // pred_fallthru
    _
  // Predicated region
  $region22: #{densenet_forward.31} parent=0 // pred_check
    _
  $region23: #{densenet_forward.31} parent=0 // pred_check_branch
    %509 = sbr.rel (0) target = $region25
  $region24: #{densenet_forward.31} parent=0 // pred_region
    _
  $region25: #{densenet_forward.31} parent=0 // pred_fallthru
    _
  // Predicated region
  $region26: #{densenet_forward.31} parent=0 // pred_check
    _
  $region27: #{densenet_forward.31} parent=0 // pred_check_branch
    %511 = sbr.rel (0) target = $region29
  $region28: #{densenet_forward.31} parent=0 // pred_region
    _
  $region29: #{densenet_forward.31} parent=0 // pred_fallthru
    _
  // Predicated region
  $region30: #{densenet_forward.31} parent=0 // pred_check
    _
  $region31: #{densenet_forward.31} parent=0 // pred_check_branch
    %513 = sbr.rel (0) target = $region33
  $region32: #{densenet_forward.31} parent=0 // pred_region
    _
  $region33: #{densenet_forward.31} parent=0 // pred_fallthru
    _
  // Predicated region
  $region34: #{densenet_forward.31} parent=0 // pred_check
    _
  $region35: #{densenet_forward.31} parent=0 // pred_check_branch
    %515 = sbr.rel (0) target = $region37
  $region36: #{densenet_forward.31} parent=0 // pred_region
    _
  $region37: #{densenet_forward.31} parent=0 // pred_fallthru
    _

// kernel: densenet_forward.32
$region0: #{densenet_forward.32}
  #allocation0 [shape = 'u32[]', space=smem, size = 0x4, offset = 0x4, fixed_abs, tag = 'smem constant byte address 0x4 - core index']
  #allocation1 [shape = 'u32[144,128]{1,0:T(1,128)}', space=vmem, size = 0x12000, scoped, tag = 'internal scratch']
  %s0 = inlined_call_operand.vmem [shape: bf16[512,16], index: 0, kind: input, shape index: {}]
  %s1 = inlined_call_operand.vmem [shape: f32[1,16], index: 1, kind: input, shape index: {}]
  %s2 = inlined_call_operand.vmem [shape: f32[1,16], index: 2, kind: input, shape index: {}]
  %s3 = inlined_call_operand.vmem [shape: bf16[512,16], index: 3, kind: output, shape index: {}]
  %s4 = sld [smem:[#allocation0]]
  $region22: #{densenet_forward.32} parent=0
    _
  %s6 = ssub.s32 1, %s4
  %s7 = scalar_select 0, %s6, %s4
  // Predicated region
  $region2: #{densenet_forward.32} parent=0 // pred_check
    _
  $region3: #{densenet_forward.32} parent=0 // pred_check_branch
    %9 = sbr.rel (0) target = $region5
  $region4: #{densenet_forward.32} parent=0 // pred_region
    _
  $region5: #{densenet_forward.32} parent=0 // pred_fallthru
    _
  // Predicated region
  $region6: #{densenet_forward.32} parent=0 // pred_check
    _
  $region7: #{densenet_forward.32} parent=0 // pred_check_branch
    %11 = sbr.rel (0) target = $region9
  $region8: #{densenet_forward.32} parent=0 // pred_region
    _
  $region9: #{densenet_forward.32} parent=0 // pred_fallthru
    _
  // Predicated region
  $region10: #{densenet_forward.32} parent=0 // pred_check
    _
  $region11: #{densenet_forward.32} parent=0 // pred_check_branch
    %13 = sbr.rel (0) target = $region13
  $region12: #{densenet_forward.32} parent=0 // pred_region
    _
  $region13: #{densenet_forward.32} parent=0 // pred_fallthru
    _
  %v14 = vld [vmem:[%s0] sm:$0xf]
  %v15 = vld [vmem:[%s0 + $0x4] sm:$0xf]
  %v16 = vld [vmem:[%s0 + $0x8] sm:$0xf]
  %v17 = vld [vmem:[%s0 + $0xc] sm:$0xf]
  %v18 = vld [vmem:[%s0 + $0x10] sm:$0xf]
  %v19 = vld [vmem:[%s0 + $0x14] sm:$0xf]
  %v20 = vld [vmem:[%s0 + $0x18] sm:$0xf]
  %v21 = vld [vmem:[%s0 + $0x1c] sm:$0xf]
  %v22 = vld [vmem:[%s0 + $0x20] sm:$0xf]
  %v23 = vld [vmem:[%s0 + $0x24] sm:$0xf]
  %v24 = vld [vmem:[%s0 + $0x28] sm:$0xf]
  %v25 = vld [vmem:[%s0 + $0x2c] sm:$0xf]
  %v26 = vld [vmem:[%s0 + $0x30] sm:$0xf]
  %v27 = vld [vmem:[%s0 + $0x34] sm:$0xf]
  %v28 = vld [vmem:[%s0 + $0x38] sm:$0xf]
  %v29 = vld [vmem:[%s0 + $0x3c] sm:$0xf]
  %v30 = vld [vmem:[%s0 + $0x40] sm:$0xf]
  %v31 = vld [vmem:[%s0 + $0x44] sm:$0xf]
  %v32 = vld [vmem:[%s0 + $0x48] sm:$0xf]
  %v33 = vld [vmem:[%s0 + $0x4c] sm:$0xf]
  %v34 = vld [vmem:[%s0 + $0x50] sm:$0xf]
  %v35 = vld [vmem:[%s0 + $0x54] sm:$0xf]
  %v36 = vld [vmem:[%s0 + $0x58] sm:$0xf]
  %v37 = vld [vmem:[%s0 + $0x5c] sm:$0xf]
  %v38 = vld [vmem:[%s0 + $0x60] sm:$0xf]
  %v39 = vld [vmem:[%s0 + $0x64] sm:$0xf]
  %v40 = vld [vmem:[%s0 + $0x68] sm:$0xf]
  %v41 = vld [vmem:[%s0 + $0x6c] sm:$0xf]
  %v42 = vld [vmem:[%s0 + $0x70] sm:$0xf]
  %v43 = vld [vmem:[%s0 + $0x74] sm:$0xf]
  %v44 = vld [vmem:[%s0 + $0x78] sm:$0xf]
  %v45 = vld [vmem:[%s0 + $0x7c] sm:$0xf]
  %v46 = vld [vmem:[%s0 + $0x80] sm:$0xf]
  %v47 = vld [vmem:[%s0 + $0x84] sm:$0xf]
  %v48 = vld [vmem:[%s0 + $0x88] sm:$0xf]
  %v49 = vld [vmem:[%s0 + $0x8c] sm:$0xf]
  %v50 = vld [vmem:[%s0 + $0x90] sm:$0xf]
  %v51 = vld [vmem:[%s0 + $0x94] sm:$0xf]
  %v52 = vld [vmem:[%s0 + $0x98] sm:$0xf]
  %v53 = vld [vmem:[%s0 + $0x9c] sm:$0xf]
  %v54 = vld [vmem:[%s0 + $0xa0] sm:$0xf]
  %v55 = vld [vmem:[%s0 + $0xa4] sm:$0xf]
  %v56 = vld [vmem:[%s0 + $0xa8] sm:$0xf]
  %v57 = vld [vmem:[%s0 + $0xac] sm:$0xf]
  %v58 = vld [vmem:[%s0 + $0xb0] sm:$0xf]
  %v59 = vld [vmem:[%s0 + $0xb4] sm:$0xf]
  %v60 = vld [vmem:[%s0 + $0xb8] sm:$0xf]
  %v61 = vld [vmem:[%s0 + $0xbc] sm:$0xf]
  %v62 = vld [vmem:[%s0 + $0xc0] sm:$0xf]
  %v63 = vld [vmem:[%s0 + $0xc4] sm:$0xf]
  %v64 = vld [vmem:[%s0 + $0xc8] sm:$0xf]
  %v65 = vld [vmem:[%s0 + $0xcc] sm:$0xf]
  %v66 = vld [vmem:[%s0 + $0xd0] sm:$0xf]
  %v67 = vld [vmem:[%s0 + $0xd4] sm:$0xf]
  %v68 = vld [vmem:[%s0 + $0xd8] sm:$0xf]
  %v69 = vld [vmem:[%s0 + $0xdc] sm:$0xf]
  %v70 = vld [vmem:[%s0 + $0xe0] sm:$0xf]
  %v71 = vld [vmem:[%s0 + $0xe4] sm:$0xf]
  %v72 = vld [vmem:[%s0 + $0xe8] sm:$0xf]
  %v73 = vld [vmem:[%s0 + $0xec] sm:$0xf]
  %v74 = vld [vmem:[%s0 + $0xf0] sm:$0xf]
  %v75 = vld [vmem:[%s0 + $0xf4] sm:$0xf]
  %v76 = vld [vmem:[%s0 + $0xf8] sm:$0xf]
  %v77 = vld [vmem:[%s0 + $0xfc] sm:$0xf]
  %v78 = vunpack.c.l.bf16 %v14
  %v79 = vunpack.c.l.bf16 %v15
  %v80 = vunpack.c.l.bf16 %v16
  %v81 = vunpack.c.l.bf16 %v17
  %v82 = vunpack.c.l.bf16 %v18
  %v83 = vunpack.c.l.bf16 %v19
  %v84 = vunpack.c.l.bf16 %v20
  %v85 = vunpack.c.l.bf16 %v21
  %v86 = vunpack.c.l.bf16 %v22
  %v87 = vunpack.c.l.bf16 %v23
  %v88 = vunpack.c.l.bf16 %v24
  %v89 = vunpack.c.l.bf16 %v25
  %v90 = vunpack.c.l.bf16 %v26
  %v91 = vunpack.c.l.bf16 %v27
  %v92 = vunpack.c.l.bf16 %v28
  %v93 = vunpack.c.l.bf16 %v29
  %v94 = vunpack.c.l.bf16 %v30
  %v95 = vunpack.c.l.bf16 %v31
  %v96 = vunpack.c.l.bf16 %v32
  %v97 = vunpack.c.l.bf16 %v33
  %v98 = vunpack.c.l.bf16 %v34
  %v99 = vunpack.c.l.bf16 %v35
  %v100 = vunpack.c.l.bf16 %v36
  %v101 = vunpack.c.l.bf16 %v37
  %v102 = vunpack.c.l.bf16 %v38
  %v103 = vunpack.c.l.bf16 %v39
  %v104 = vunpack.c.l.bf16 %v40
  %v105 = vunpack.c.l.bf16 %v41
  %v106 = vunpack.c.l.bf16 %v42
  %v107 = vunpack.c.l.bf16 %v43
  %v108 = vunpack.c.l.bf16 %v44
  %v109 = vunpack.c.l.bf16 %v45
  %v110 = vunpack.c.l.bf16 %v46
  %v111 = vunpack.c.l.bf16 %v47
  %v112 = vunpack.c.l.bf16 %v48
  %v113 = vunpack.c.l.bf16 %v49
  %v114 = vunpack.c.l.bf16 %v50
  %v115 = vunpack.c.l.bf16 %v51
  %v116 = vunpack.c.l.bf16 %v52
  %v117 = vunpack.c.l.bf16 %v53
  %v118 = vunpack.c.l.bf16 %v54
  %v119 = vunpack.c.l.bf16 %v55
  %v120 = vunpack.c.l.bf16 %v56
  %v121 = vunpack.c.l.bf16 %v57
  %v122 = vunpack.c.l.bf16 %v58
  %v123 = vunpack.c.l.bf16 %v59
  %v124 = vunpack.c.l.bf16 %v60
  %v125 = vunpack.c.l.bf16 %v61
  %v126 = vunpack.c.l.bf16 %v62
  %v127 = vunpack.c.l.bf16 %v63
  %v128 = vunpack.c.l.bf16 %v64
  %v129 = vunpack.c.l.bf16 %v65
  %v130 = vunpack.c.l.bf16 %v66
  %v131 = vunpack.c.l.bf16 %v67
  %v132 = vunpack.c.l.bf16 %v68
  %v133 = vunpack.c.l.bf16 %v69
  %v134 = vunpack.c.l.bf16 %v70
  %v135 = vunpack.c.l.bf16 %v71
  %v136 = vunpack.c.l.bf16 %v72
  %v137 = vunpack.c.l.bf16 %v73
  %v138 = vunpack.c.l.bf16 %v74
  %v139 = vunpack.c.l.bf16 %v75
  %v140 = vunpack.c.l.bf16 %v76
  %v141 = vunpack.c.l.bf16 %v77
  %v142 = vld [vmem:[%s1] sm:$0x1]
  %v144 = vlaneseq
  %v145 = vshrl.u32 %v144, 7
  %v146 = vsub.s32 0, %v145
  %v147 = vrot.slane %v142, %v146
  %v149 = vmul.f32 %v78, %v147
  %v150 = vmul.f32 %v79, %v147
  %v151 = vmul.f32 %v80, %v147
  %v152 = vmul.f32 %v81, %v147
  %v153 = vmul.f32 %v82, %v147
  %v154 = vmul.f32 %v83, %v147
  %v155 = vmul.f32 %v84, %v147
  %v156 = vmul.f32 %v85, %v147
  %v157 = vmul.f32 %v86, %v147
  %v158 = vmul.f32 %v87, %v147
  %v159 = vmul.f32 %v88, %v147
  %v160 = vmul.f32 %v89, %v147
  %v161 = vmul.f32 %v90, %v147
  %v162 = vmul.f32 %v91, %v147
  %v163 = vmul.f32 %v92, %v147
  %v164 = vmul.f32 %v93, %v147
  %v165 = vmul.f32 %v94, %v147
  %v166 = vmul.f32 %v95, %v147
  %v167 = vmul.f32 %v96, %v147
  %v168 = vmul.f32 %v97, %v147
  %v169 = vmul.f32 %v98, %v147
  %v170 = vmul.f32 %v99, %v147
  %v171 = vmul.f32 %v100, %v147
  %v172 = vmul.f32 %v101, %v147
  %v173 = vmul.f32 %v102, %v147
  %v174 = vmul.f32 %v103, %v147
  %v175 = vmul.f32 %v104, %v147
  %v176 = vmul.f32 %v105, %v147
  %v177 = vmul.f32 %v106, %v147
  %v178 = vmul.f32 %v107, %v147
  %v179 = vmul.f32 %v108, %v147
  %v180 = vmul.f32 %v109, %v147
  %v181 = vmul.f32 %v110, %v147
  %v182 = vmul.f32 %v111, %v147
  %v183 = vmul.f32 %v112, %v147
  %v184 = vmul.f32 %v113, %v147
  %v185 = vmul.f32 %v114, %v147
  %v186 = vmul.f32 %v115, %v147
  %v187 = vmul.f32 %v116, %v147
  %v188 = vmul.f32 %v117, %v147
  %v189 = vmul.f32 %v118, %v147
  %v190 = vmul.f32 %v119, %v147
  %v191 = vmul.f32 %v120, %v147
  %v192 = vmul.f32 %v121, %v147
  %v193 = vmul.f32 %v122, %v147
  %v194 = vmul.f32 %v123, %v147
  %v195 = vmul.f32 %v124, %v147
  %v196 = vmul.f32 %v125, %v147
  %v197 = vmul.f32 %v126, %v147
  %v198 = vmul.f32 %v127, %v147
  %v199 = vmul.f32 %v128, %v147
  %v200 = vmul.f32 %v129, %v147
  %v201 = vmul.f32 %v130, %v147
  %v202 = vmul.f32 %v131, %v147
  %v203 = vmul.f32 %v132, %v147
  %v204 = vmul.f32 %v133, %v147
  %v205 = vmul.f32 %v134, %v147
  %v206 = vmul.f32 %v135, %v147
  %v207 = vmul.f32 %v136, %v147
  %v208 = vmul.f32 %v137, %v147
  %v209 = vmul.f32 %v138, %v147
  %v210 = vmul.f32 %v139, %v147
  %v211 = vmul.f32 %v140, %v147
  %v212 = vmul.f32 %v141, %v147
  %v213 = vld [vmem:[%s2] sm:$0x1]
  %v215 = vlaneseq
  %v216 = vshrl.u32 %v215, 7
  %v217 = vsub.s32 0, %v216
  %v218 = vrot.slane %v213, %v217
  %v220 = vadd.f32 %v149, %v218
  %v221 = vadd.f32 %v150, %v218
  %v222 = vadd.f32 %v151, %v218
  %v223 = vadd.f32 %v152, %v218
  %v224 = vadd.f32 %v153, %v218
  %v225 = vadd.f32 %v154, %v218
  %v226 = vadd.f32 %v155, %v218
  %v227 = vadd.f32 %v156, %v218
  %v228 = vadd.f32 %v157, %v218
  %v229 = vadd.f32 %v158, %v218
  %v230 = vadd.f32 %v159, %v218
  %v231 = vadd.f32 %v160, %v218
  %v232 = vadd.f32 %v161, %v218
  %v233 = vadd.f32 %v162, %v218
  %v234 = vadd.f32 %v163, %v218
  %v235 = vadd.f32 %v164, %v218
  %v236 = vadd.f32 %v165, %v218
  %v237 = vadd.f32 %v166, %v218
  %v238 = vadd.f32 %v167, %v218
  %v239 = vadd.f32 %v168, %v218
  %v240 = vadd.f32 %v169, %v218
  %v241 = vadd.f32 %v170, %v218
  %v242 = vadd.f32 %v171, %v218
  %v243 = vadd.f32 %v172, %v218
  %v244 = vadd.f32 %v173, %v218
  %v245 = vadd.f32 %v174, %v218
  %v246 = vadd.f32 %v175, %v218
  %v247 = vadd.f32 %v176, %v218
  %v248 = vadd.f32 %v177, %v218
  %v249 = vadd.f32 %v178, %v218
  %v250 = vadd.f32 %v179, %v218
  %v251 = vadd.f32 %v180, %v218
  %v252 = vadd.f32 %v181, %v218
  %v253 = vadd.f32 %v182, %v218
  %v254 = vadd.f32 %v183, %v218
  %v255 = vadd.f32 %v184, %v218
  %v256 = vadd.f32 %v185, %v218
  %v257 = vadd.f32 %v186, %v218
  %v258 = vadd.f32 %v187, %v218
  %v259 = vadd.f32 %v188, %v218
  %v260 = vadd.f32 %v189, %v218
  %v261 = vadd.f32 %v190, %v218
  %v262 = vadd.f32 %v191, %v218
  %v263 = vadd.f32 %v192, %v218
  %v264 = vadd.f32 %v193, %v218
  %v265 = vadd.f32 %v194, %v218
  %v266 = vadd.f32 %v195, %v218
  %v267 = vadd.f32 %v196, %v218
  %v268 = vadd.f32 %v197, %v218
  %v269 = vadd.f32 %v198, %v218
  %v270 = vadd.f32 %v199, %v218
  %v271 = vadd.f32 %v200, %v218
  %v272 = vadd.f32 %v201, %v218
  %v273 = vadd.f32 %v202, %v218
  %v274 = vadd.f32 %v203, %v218
  %v275 = vadd.f32 %v204, %v218
  %v276 = vadd.f32 %v205, %v218
  %v277 = vadd.f32 %v206, %v218
  %v278 = vadd.f32 %v207, %v218
  %v279 = vadd.f32 %v208, %v218
  %v280 = vadd.f32 %v209, %v218
  %v281 = vadd.f32 %v210, %v218
  %v282 = vadd.f32 %v211, %v218
  %v283 = vadd.f32 %v212, %v218
  %v284 = vmax.f32 %v220, 0.0
  %v285 = vmax.f32 %v221, 0.0
  %v286 = vmax.f32 %v222, 0.0
  %v287 = vmax.f32 %v223, 0.0
  %v288 = vmax.f32 %v224, 0.0
  %v289 = vmax.f32 %v225, 0.0
  %v290 = vmax.f32 %v226, 0.0
  %v291 = vmax.f32 %v227, 0.0
  %v292 = vmax.f32 %v228, 0.0
  %v293 = vmax.f32 %v229, 0.0
  %v294 = vmax.f32 %v230, 0.0
  %v295 = vmax.f32 %v231, 0.0
  %v296 = vmax.f32 %v232, 0.0
  %v297 = vmax.f32 %v233, 0.0
  %v298 = vmax.f32 %v234, 0.0
  %v299 = vmax.f32 %v235, 0.0
  %v300 = vmax.f32 %v236, 0.0
  %v301 = vmax.f32 %v237, 0.0
  %v302 = vmax.f32 %v238, 0.0
  %v303 = vmax.f32 %v239, 0.0
  %v304 = vmax.f32 %v240, 0.0
  %v305 = vmax.f32 %v241, 0.0
  %v306 = vmax.f32 %v242, 0.0
  %v307 = vmax.f32 %v243, 0.0
  %v308 = vmax.f32 %v244, 0.0
  %v309 = vmax.f32 %v245, 0.0
  %v310 = vmax.f32 %v246, 0.0
  %v311 = vmax.f32 %v247, 0.0
  %v312 = vmax.f32 %v248, 0.0
  %v313 = vmax.f32 %v249, 0.0
  %v314 = vmax.f32 %v250, 0.0
  %v315 = vmax.f32 %v251, 0.0
  %v316 = vmax.f32 %v252, 0.0
  %v317 = vmax.f32 %v253, 0.0
  %v318 = vmax.f32 %v254, 0.0
  %v319 = vmax.f32 %v255, 0.0
  %v320 = vmax.f32 %v256, 0.0
  %v321 = vmax.f32 %v257, 0.0
  %v322 = vmax.f32 %v258, 0.0
  %v323 = vmax.f32 %v259, 0.0
  %v324 = vmax.f32 %v260, 0.0
  %v325 = vmax.f32 %v261, 0.0
  %v326 = vmax.f32 %v262, 0.0
  %v327 = vmax.f32 %v263, 0.0
  %v328 = vmax.f32 %v264, 0.0
  %v329 = vmax.f32 %v265, 0.0
  %v330 = vmax.f32 %v266, 0.0
  %v331 = vmax.f32 %v267, 0.0
  %v332 = vmax.f32 %v268, 0.0
  %v333 = vmax.f32 %v269, 0.0
  %v334 = vmax.f32 %v270, 0.0
  %v335 = vmax.f32 %v271, 0.0
  %v336 = vmax.f32 %v272, 0.0
  %v337 = vmax.f32 %v273, 0.0
  %v338 = vmax.f32 %v274, 0.0
  %v339 = vmax.f32 %v275, 0.0
  %v340 = vmax.f32 %v276, 0.0
  %v341 = vmax.f32 %v277, 0.0
  %v342 = vmax.f32 %v278, 0.0
  %v343 = vmax.f32 %v279, 0.0
  %v344 = vmax.f32 %v280, 0.0
  %v345 = vmax.f32 %v281, 0.0
  %v346 = vmax.f32 %v282, 0.0
  %v347 = vmax.f32 %v283, 0.0
  %v348 = vpack.c.bf16 %v285, %v284
  %v349 = vpack.c.bf16 %v287, %v286
  %v350 = vpack.c.bf16 %v289, %v288
  %v351 = vpack.c.bf16 %v291, %v290
  %v352 = vpack.c.bf16 %v293, %v292
  %v353 = vpack.c.bf16 %v295, %v294
  %v354 = vpack.c.bf16 %v297, %v296
  %v355 = vpack.c.bf16 %v299, %v298
  %v356 = vpack.c.bf16 %v301, %v300
  %v357 = vpack.c.bf16 %v303, %v302
  %v358 = vpack.c.bf16 %v305, %v304
  %v359 = vpack.c.bf16 %v307, %v306
  %v360 = vpack.c.bf16 %v309, %v308
  %v361 = vpack.c.bf16 %v311, %v310
  %v362 = vpack.c.bf16 %v313, %v312
  %v363 = vpack.c.bf16 %v315, %v314
  %v364 = vpack.c.bf16 %v317, %v316
  %v365 = vpack.c.bf16 %v319, %v318
  %v366 = vpack.c.bf16 %v321, %v320
  %v367 = vpack.c.bf16 %v323, %v322
  %v368 = vpack.c.bf16 %v325, %v324
  %v369 = vpack.c.bf16 %v327, %v326
  %v370 = vpack.c.bf16 %v329, %v328
  %v371 = vpack.c.bf16 %v331, %v330
  %v372 = vpack.c.bf16 %v333, %v332
  %v373 = vpack.c.bf16 %v335, %v334
  %v374 = vpack.c.bf16 %v337, %v336
  %v375 = vpack.c.bf16 %v339, %v338
  %v376 = vpack.c.bf16 %v341, %v340
  %v377 = vpack.c.bf16 %v343, %v342
  %v378 = vpack.c.bf16 %v345, %v344
  %v379 = vpack.c.bf16 %v347, %v346
  %v412 = vunpack.c.l.b16 %v348
  %v413 = vunpack.c.h.b16 %v348
  %v414 = vunpack.c.l.b16 %v349
  %v415 = vunpack.c.h.b16 %v349
  %v416 = vunpack.c.l.b16 %v350
  %v417 = vunpack.c.h.b16 %v350
  %v418 = vunpack.c.l.b16 %v351
  %v419 = vunpack.c.h.b16 %v351
  %v420 = vunpack.c.l.b16 %v352
  %v421 = vunpack.c.h.b16 %v352
  %v422 = vunpack.c.l.b16 %v353
  %v423 = vunpack.c.h.b16 %v353
  %v424 = vunpack.c.l.b16 %v354
  %v425 = vunpack.c.h.b16 %v354
  %v426 = vunpack.c.l.b16 %v355
  %v427 = vunpack.c.h.b16 %v355
  %v428 = vunpack.c.l.b16 %v356
  %v429 = vunpack.c.h.b16 %v356
  %v430 = vunpack.c.l.b16 %v357
  %v431 = vunpack.c.h.b16 %v357
  %v432 = vunpack.c.l.b16 %v358
  %v433 = vunpack.c.h.b16 %v358
  %v434 = vunpack.c.l.b16 %v359
  %v435 = vunpack.c.h.b16 %v359
  %v436 = vunpack.c.l.b16 %v360
  %v437 = vunpack.c.h.b16 %v360
  %v438 = vunpack.c.l.b16 %v361
  %v439 = vunpack.c.h.b16 %v361
  %v440 = vunpack.c.l.b16 %v362
  %v441 = vunpack.c.h.b16 %v362
  %v442 = vunpack.c.l.b16 %v363
  %v443 = vunpack.c.h.b16 %v363
  %v444 = vunpack.c.l.b16 %v364
  %v445 = vunpack.c.h.b16 %v364
  %v446 = vunpack.c.l.b16 %v365
  %v447 = vunpack.c.h.b16 %v365
  %v448 = vunpack.c.l.b16 %v366
  %v449 = vunpack.c.h.b16 %v366
  %v450 = vunpack.c.l.b16 %v367
  %v451 = vunpack.c.h.b16 %v367
  %v452 = vunpack.c.l.b16 %v368
  %v453 = vunpack.c.h.b16 %v368
  %v454 = vunpack.c.l.b16 %v369
  %v455 = vunpack.c.h.b16 %v369
  %v456 = vunpack.c.l.b16 %v370
  %v457 = vunpack.c.h.b16 %v370
  %v458 = vunpack.c.l.b16 %v371
  %v459 = vunpack.c.h.b16 %v371
  %v460 = vunpack.c.l.b16 %v372
  %v461 = vunpack.c.h.b16 %v372
  %v462 = vunpack.c.l.b16 %v373
  %v463 = vunpack.c.h.b16 %v373
  %v464 = vunpack.c.l.b16 %v374
  %v465 = vunpack.c.h.b16 %v374
  %v466 = vunpack.c.l.b16 %v375
  %v467 = vunpack.c.h.b16 %v375
  %v468 = vunpack.c.l.b16 %v376
  %v469 = vunpack.c.h.b16 %v376
  %v470 = vunpack.c.l.b16 %v377
  %v471 = vunpack.c.h.b16 %v377
  %v472 = vunpack.c.l.b16 %v378
  %v473 = vunpack.c.h.b16 %v378
  %v474 = vunpack.c.l.b16 %v379
  %v475 = vunpack.c.h.b16 %v379
  %v476 = vpack.c.b16 %v412, %v412
  %v477 = vpack.c.b16 %v413, %v413
  %v478 = vpack.c.b16 %v414, %v414
  %v479 = vpack.c.b16 %v415, %v415
  %v480 = vpack.c.b16 %v416, %v416
  %v481 = vpack.c.b16 %v417, %v417
  %v482 = vpack.c.b16 %v418, %v418
  %v483 = vpack.c.b16 %v419, %v419
  %v484 = vpack.c.b16 %v420, %v420
  %v485 = vpack.c.b16 %v421, %v421
  %v486 = vpack.c.b16 %v422, %v422
  %v487 = vpack.c.b16 %v423, %v423
  %v488 = vpack.c.b16 %v424, %v424
  %v489 = vpack.c.b16 %v425, %v425
  %v490 = vpack.c.b16 %v426, %v426
  %v491 = vpack.c.b16 %v427, %v427
  %v492 = vpack.c.b16 %v428, %v428
  %v493 = vpack.c.b16 %v429, %v429
  %v494 = vpack.c.b16 %v430, %v430
  %v495 = vpack.c.b16 %v431, %v431
  %v496 = vpack.c.b16 %v432, %v432
  %v497 = vpack.c.b16 %v433, %v433
  %v498 = vpack.c.b16 %v434, %v434
  %v499 = vpack.c.b16 %v435, %v435
  %v500 = vpack.c.b16 %v436, %v436
  %v501 = vpack.c.b16 %v437, %v437
  %v502 = vpack.c.b16 %v438, %v438
  %v503 = vpack.c.b16 %v439, %v439
  %v504 = vpack.c.b16 %v440, %v440
  %v505 = vpack.c.b16 %v441, %v441
  %v506 = vpack.c.b16 %v442, %v442
  %v507 = vpack.c.b16 %v443, %v443
  %v508 = vpack.c.b16 %v444, %v444
  %v509 = vpack.c.b16 %v445, %v445
  %v510 = vpack.c.b16 %v446, %v446
  %v511 = vpack.c.b16 %v447, %v447
  %v512 = vpack.c.b16 %v448, %v448
  %v513 = vpack.c.b16 %v449, %v449
  %v514 = vpack.c.b16 %v450, %v450
  %v515 = vpack.c.b16 %v451, %v451
  %v516 = vpack.c.b16 %v452, %v452
  %v517 = vpack.c.b16 %v453, %v453
  %v518 = vpack.c.b16 %v454, %v454
  %v519 = vpack.c.b16 %v455, %v455
  %v520 = vpack.c.b16 %v456, %v456
  %v521 = vpack.c.b16 %v457, %v457
  %v522 = vpack.c.b16 %v458, %v458
  %v523 = vpack.c.b16 %v459, %v459
  %v524 = vpack.c.b16 %v460, %v460
  %v525 = vpack.c.b16 %v461, %v461
  %v526 = vpack.c.b16 %v462, %v462
  %v527 = vpack.c.b16 %v463, %v463
  %v528 = vpack.c.b16 %v464, %v464
  %v529 = vpack.c.b16 %v465, %v465
  %v530 = vpack.c.b16 %v466, %v466
  %v531 = vpack.c.b16 %v467, %v467
  %v532 = vpack.c.b16 %v468, %v468
  %v533 = vpack.c.b16 %v469, %v469
  %v534 = vpack.c.b16 %v470, %v470
  %v535 = vpack.c.b16 %v471, %v471
  %v536 = vpack.c.b16 %v472, %v472
  %v537 = vpack.c.b16 %v473, %v473
  %v538 = vpack.c.b16 %v474, %v474
  %v539 = vpack.c.b16 %v475, %v475
  %vm604 = vcmask 125952
  %605 = vst.msk [vmem:[%s3] sm:$0xf] %vm604, %v476
  %606 = vst.msk [vmem:[%s3 + $0x4] sm:$0xf] %vm604, %v477
  %607 = vst.msk [vmem:[%s3 + $0x8] sm:$0xf] %vm604, %v478
  %608 = vst.msk [vmem:[%s3 + $0xc] sm:$0xf] %vm604, %v479
  %609 = vst.msk [vmem:[%s3 + $0x10] sm:$0xf] %vm604, %v480
  %610 = vst.msk [vmem:[%s3 + $0x14] sm:$0xf] %vm604, %v481
  %611 = vst.msk [vmem:[%s3 + $0x18] sm:$0xf] %vm604, %v482
  %612 = vst.msk [vmem:[%s3 + $0x1c] sm:$0xf] %vm604, %v483
  %613 = vst.msk [vmem:[%s3 + $0x20] sm:$0xf] %vm604, %v484
  %614 = vst.msk [vmem:[%s3 + $0x24] sm:$0xf] %vm604, %v485
  %615 = vst.msk [vmem:[%s3 + $0x28] sm:$0xf] %vm604, %v486
  %616 = vst.msk [vmem:[%s3 + $0x2c] sm:$0xf] %vm604, %v487
  %617 = vst.msk [vmem:[%s3 + $0x30] sm:$0xf] %vm604, %v488
  %618 = vst.msk [vmem:[%s3 + $0x34] sm:$0xf] %vm604, %v489
  %619 = vst.msk [vmem:[%s3 + $0x38] sm:$0xf] %vm604, %v490
  %620 = vst.msk [vmem:[%s3 + $0x3c] sm:$0xf] %vm604, %v491
  %621 = vst.msk [vmem:[%s3 + $0x40] sm:$0xf] %vm604, %v492
  %622 = vst.msk [vmem:[%s3 + $0x44] sm:$0xf] %vm604, %v493
  %623 = vst.msk [vmem:[%s3 + $0x48] sm:$0xf] %vm604, %v494
  %624 = vst.msk [vmem:[%s3 + $0x4c] sm:$0xf] %vm604, %v495
  %625 = vst.msk [vmem:[%s3 + $0x50] sm:$0xf] %vm604, %v496
  %626 = vst.msk [vmem:[%s3 + $0x54] sm:$0xf] %vm604, %v497
  %627 = vst.msk [vmem:[%s3 + $0x58] sm:$0xf] %vm604, %v498
  %628 = vst.msk [vmem:[%s3 + $0x5c] sm:$0xf] %vm604, %v499
  %629 = vst.msk [vmem:[%s3 + $0x60] sm:$0xf] %vm604, %v500
  %630 = vst.msk [vmem:[%s3 + $0x64] sm:$0xf] %vm604, %v501
  %631 = vst.msk [vmem:[%s3 + $0x68] sm:$0xf] %vm604, %v502
  %632 = vst.msk [vmem:[%s3 + $0x6c] sm:$0xf] %vm604, %v503
  %633 = vst.msk [vmem:[%s3 + $0x70] sm:$0xf] %vm604, %v504
  %634 = vst.msk [vmem:[%s3 + $0x74] sm:$0xf] %vm604, %v505
  %635 = vst.msk [vmem:[%s3 + $0x78] sm:$0xf] %vm604, %v506
  %636 = vst.msk [vmem:[%s3 + $0x7c] sm:$0xf] %vm604, %v507
  %637 = vst.msk [vmem:[%s3 + $0x80] sm:$0xf] %vm604, %v508
  %638 = vst.msk [vmem:[%s3 + $0x84] sm:$0xf] %vm604, %v509
  %639 = vst.msk [vmem:[%s3 + $0x88] sm:$0xf] %vm604, %v510
  %640 = vst.msk [vmem:[%s3 + $0x8c] sm:$0xf] %vm604, %v511
  %641 = vst.msk [vmem:[%s3 + $0x90] sm:$0xf] %vm604, %v512
  %642 = vst.msk [vmem:[%s3 + $0x94] sm:$0xf] %vm604, %v513
  %643 = vst.msk [vmem:[%s3 + $0x98] sm:$0xf] %vm604, %v514
  %644 = vst.msk [vmem:[%s3 + $0x9c] sm:$0xf] %vm604, %v515
  %645 = vst.msk [vmem:[%s3 + $0xa0] sm:$0xf] %vm604, %v516
  %646 = vst.msk [vmem:[%s3 + $0xa4] sm:$0xf] %vm604, %v517
  %647 = vst.msk [vmem:[%s3 + $0xa8] sm:$0xf] %vm604, %v518
  %648 = vst.msk [vmem:[%s3 + $0xac] sm:$0xf] %vm604, %v519
  %649 = vst.msk [vmem:[%s3 + $0xb0] sm:$0xf] %vm604, %v520
  %650 = vst.msk [vmem:[%s3 + $0xb4] sm:$0xf] %vm604, %v521
  %651 = vst.msk [vmem:[%s3 + $0xb8] sm:$0xf] %vm604, %v522
  %652 = vst.msk [vmem:[%s3 + $0xbc] sm:$0xf] %vm604, %v523
  %653 = vst.msk [vmem:[%s3 + $0xc0] sm:$0xf] %vm604, %v524
  %654 = vst.msk [vmem:[%s3 + $0xc4] sm:$0xf] %vm604, %v525
  %655 = vst.msk [vmem:[%s3 + $0xc8] sm:$0xf] %vm604, %v526
  %656 = vst.msk [vmem:[%s3 + $0xcc] sm:$0xf] %vm604, %v527
  %657 = vst.msk [vmem:[%s3 + $0xd0] sm:$0xf] %vm604, %v528
  %658 = vst.msk [vmem:[%s3 + $0xd4] sm:$0xf] %vm604, %v529
  %659 = vst.msk [vmem:[%s3 + $0xd8] sm:$0xf] %vm604, %v530
  %660 = vst.msk [vmem:[%s3 + $0xdc] sm:$0xf] %vm604, %v531
  %661 = vst.msk [vmem:[%s3 + $0xe0] sm:$0xf] %vm604, %v532
  %662 = vst.msk [vmem:[%s3 + $0xe4] sm:$0xf] %vm604, %v533
  %663 = vst.msk [vmem:[%s3 + $0xe8] sm:$0xf] %vm604, %v534
  %664 = vst.msk [vmem:[%s3 + $0xec] sm:$0xf] %vm604, %v535
  %665 = vst.msk [vmem:[%s3 + $0xf0] sm:$0xf] %vm604, %v536
  %666 = vst.msk [vmem:[%s3 + $0xf4] sm:$0xf] %vm604, %v537
  %667 = vst.msk [vmem:[%s3 + $0xf8] sm:$0xf] %vm604, %v538
  %668 = vst.msk [vmem:[%s3 + $0xfc] sm:$0xf] %vm604, %v539
  // Predicated region
  $region14: #{densenet_forward.32} parent=0 // pred_check
    _
  $region15: #{densenet_forward.32} parent=0 // pred_check_branch
    %670 = sbr.rel (0) target = $region17
  $region16: #{densenet_forward.32} parent=0 // pred_region
    _
  $region17: #{densenet_forward.32} parent=0 // pred_fallthru
    _
  // Predicated region
  $region18: #{densenet_forward.32} parent=0 // pred_check
    _
  $region19: #{densenet_forward.32} parent=0 // pred_check_branch
    %672 = sbr.rel (0) target = $region21
  $region20: #{densenet_forward.32} parent=0 // pred_region
    _
  $region21: #{densenet_forward.32} parent=0 // pred_fallthru
    _

// kernel: densenet_forward.30
$region0: #{densenet_forward.30}
  #allocation0 [shape = 'u32[]', space=smem, size = 0x4, offset = 0x4, fixed_abs, tag = 'smem constant byte address 0x4 - core index']
  #allocation1 [shape = 'u32[144,128]{1,0:T(1,128)}', space=vmem, size = 0x12000, scoped, tag = 'internal scratch']
  #allocation2 [shape = 'f32[256,128]{1,0:T(8,128)}', space=vmem, size = 0x20000, scoped, tag = 'scratch operand']
  %s0 = inlined_call_operand.vmem [shape: bf16[512,147], index: 0, kind: input, shape index: {}]
  %s1 = inlined_call_operand.vmem [shape: bf16[147,128], index: 1, kind: input, shape index: {}]
  %s2 = inlined_call_operand.vmem [shape: f32[1,147], index: 2, kind: input, shape index: {}, may-alias: {2,3}]
  %s3 = inlined_call_operand.vmem [shape: f32[1,147], index: 3, kind: input, shape index: {}, may-alias: {2,3}]
  %s4 = inlined_call_operand.vmem [shape: f32[1,128], index: 4, kind: input, shape index: {}]
  %s5 = inlined_call_operand.vmem [shape: bf16[512,128], index: 5, kind: output, shape index: {}]
  %s6 = sld [smem:[#allocation0]]
  $region61: #{densenet_forward.30} parent=0
    _
  %s8 = ssub.s32 1, %s6
  %s9 = scalar_select 0, %s8, %s6
  loop: start=0, step=1, limit=4
  $region2: #{densenet_forward.30} parent=0 // loop_pre_header
    _
  $region3: #{densenet_forward.30} parent=0 // loop_header
    %s11 = sphi 0, %s15
    %p12 = scmp.ge.s32.totalorder %s11, 4
    %s18 = sphi 0, %s37
    %s19 = sphi 0, %s33
    %s20 = sphi 0, %s29
    %s21 = sphi 0, %s18
    %s22 = sphi 0, %s19
    %s23 = sphi 0, %s20
    %s24 = sphi 0, %s21
    %s25 = sphi 0, %s22
    %s26 = sphi 0, %s23
    %s42 = sphi 0, %s44
    %s45 = sphi 0, %s42
    %s46 = sphi 0, %s45
    %s62 = sphi 0, %s46
    %s70 = sphi 0, %s72
    %s73 = sphi 0, %s70
    %s74 = sphi 0, %s73
    %s90 = sphi 0, %s74
    %s96 = sphi 0, %s98
    %s99 = sphi 0, %s96
    %s100 = sphi 0, %s99
    %s116 = sphi 0, %s100
    %s122 = sphi 0, %s124
    %s125 = sphi 0, %s122
    %s126 = sphi 0, %s125
    %s142 = sphi 0, %s126
    %s148 = sphi 0, %s150
    %s151 = sphi 0, %s148
    %s152 = sphi 0, %s151
    %s168 = sphi 0, %s152
    %s176 = sphi 0, %s178
    %s179 = sphi 0, %s176
    %s180 = sphi 0, %s179
    %s196 = sphi 0, %s180
  $region4: #{densenet_forward.30} parent=0 // loop_header_branch
    %14 = sbr.rel (%p12) target = $region8
  $region5: #{densenet_forward.30} parent=0 // loop_body
    %s16 = ssub.s32 %s11, 1
    %s17 = ssub.s32 %s11, 2
    %s27 = sadd.s32 1, %s20
    %p28 = scmp.ge.s32.totalorder %s27, 1
    %s29 = scalar_select %p28, 0, %s27
    %s30 = sadd.s32 1, %s19
    %s31 = scalar_select %p28, %s30, %s19
    %p32 = scmp.ge.s32.totalorder %s31, 1
    %s33 = scalar_select %p32, 0, %s31
    %s34 = sadd.s32 1, %s18
    %s35 = scalar_select %p32, %s34, %s18
    %p36 = scmp.ge.s32.totalorder %s35, 2
    %s37 = scalar_select %p36, 0, %s35
    %s38 = ssub.s32 %s18, %s37
    %s39 = ssub.s32 %s20, %s29
    %s40 = sor.u32 %s38, %s39
    %p41 = scmp.eq.s32.totalorder %s40, 0
    %s43 = sadd.s32 %s42, 1
    %s44 = scalar_select %p41, %s42, %s43
    %p47 = pneg %p41
    %p48 = scmp.eq.s32.totalorder %s11, 1
    %p49 = por %p47, %p48
    %p50 = scmp.ne.s32.totalorder %s42, %s45
    %p51 = scmp.eq.s32.totalorder %s11, 0
    %p52 = por %p50, %p51
    %p53 = scmp.ne.s32.totalorder %s42, %s45
    %p54 = scmp.eq.s32.totalorder %s16, 1
    %p55 = por %p53, %p54
    %p56 = scmp.ne.s32.totalorder %s45, %s46
    %p57 = scmp.eq.s32.totalorder %s16, 0
    %p58 = por %p56, %p57
    %p59 = scmp.ne.s32.totalorder %s45, %s46
    %p60 = scmp.eq.s32.totalorder %s17, 1
    %p61 = por %p59, %p60
    %p63 = scmp.ne.s32.totalorder %s46, %s62
    %p64 = scmp.eq.s32.totalorder %s17, 0
    %p65 = por %p63, %p64
    %s66 = ssub.s32 %s20, %s29
    %s67 = ssub.s32 %s19, %s33
    %s68 = sor.u32 %s66, %s67
    %p69 = scmp.eq.s32.totalorder %s68, 0
    %s71 = sadd.s32 %s70, 1
    %s72 = scalar_select %p69, %s70, %s71
    %p75 = pneg %p69
    %p76 = scmp.eq.s32.totalorder %s11, 1
    %p77 = por %p75, %p76
    %p78 = scmp.ne.s32.totalorder %s70, %s73
    %p79 = scmp.eq.s32.totalorder %s11, 0
    %p80 = por %p78, %p79
    %p81 = scmp.ne.s32.totalorder %s70, %s73
    %p82 = scmp.eq.s32.totalorder %s16, 1
    %p83 = por %p81, %p82
    %p84 = scmp.ne.s32.totalorder %s73, %s74
    %p85 = scmp.eq.s32.totalorder %s16, 0
    %p86 = por %p84, %p85
    %p87 = scmp.ne.s32.totalorder %s73, %s74
    %p88 = scmp.eq.s32.totalorder %s17, 1
    %p89 = por %p87, %p88
    %p91 = scmp.ne.s32.totalorder %s74, %s90
    %p92 = scmp.eq.s32.totalorder %s17, 0
    %p93 = por %p91, %p92
    %s94 = ssub.s32 %s20, %s29
    %p95 = scmp.eq.s32.totalorder %s94, 0
    %s97 = sadd.s32 %s96, 1
    %s98 = scalar_select %p95, %s96, %s97
    %p101 = pneg %p95
    %p102 = scmp.eq.s32.totalorder %s11, 1
    %p103 = por %p101, %p102
    %p104 = scmp.ne.s32.totalorder %s96, %s99
    %p105 = scmp.eq.s32.totalorder %s11, 0
    %p106 = por %p104, %p105
    %p107 = scmp.ne.s32.totalorder %s96, %s99
    %p108 = scmp.eq.s32.totalorder %s16, 1
    %p109 = por %p107, %p108
    %p110 = scmp.ne.s32.totalorder %s99, %s100
    %p111 = scmp.eq.s32.totalorder %s16, 0
    %p112 = por %p110, %p111
    %p113 = scmp.ne.s32.totalorder %s99, %s100
    %p114 = scmp.eq.s32.totalorder %s17, 1
    %p115 = por %p113, %p114
    %p117 = scmp.ne.s32.totalorder %s100, %s116
    %p118 = scmp.eq.s32.totalorder %s17, 0
    %p119 = por %p117, %p118
    %s120 = ssub.s32 %s20, %s29
    %p121 = scmp.eq.s32.totalorder %s120, 0
    %s123 = sadd.s32 %s122, 1
    %s124 = scalar_select %p121, %s122, %s123
    %p127 = pneg %p121
    %p128 = scmp.eq.s32.totalorder %s11, 1
    %p129 = por %p127, %p128
    %p130 = scmp.ne.s32.totalorder %s122, %s125
    %p131 = scmp.eq.s32.totalorder %s11, 0
    %p132 = por %p130, %p131
    %p133 = scmp.ne.s32.totalorder %s122, %s125
    %p134 = scmp.eq.s32.totalorder %s16, 1
    %p135 = por %p133, %p134
    %p136 = scmp.ne.s32.totalorder %s125, %s126
    %p137 = scmp.eq.s32.totalorder %s16, 0
    %p138 = por %p136, %p137
    %p139 = scmp.ne.s32.totalorder %s125, %s126
    %p140 = scmp.eq.s32.totalorder %s17, 1
    %p141 = por %p139, %p140
    %p143 = scmp.ne.s32.totalorder %s126, %s142
    %p144 = scmp.eq.s32.totalorder %s17, 0
    %p145 = por %p143, %p144
    %s146 = ssub.s32 %s19, %s33
    %p147 = scmp.eq.s32.totalorder %s146, 0
    %s149 = sadd.s32 %s148, 1
    %s150 = scalar_select %p147, %s148, %s149
    %p153 = pneg %p147
    %p154 = scmp.eq.s32.totalorder %s11, 1
    %p155 = por %p153, %p154
    %p156 = scmp.ne.s32.totalorder %s148, %s151
    %p157 = scmp.eq.s32.totalorder %s11, 0
    %p158 = por %p156, %p157
    %p159 = scmp.ne.s32.totalorder %s148, %s151
    %p160 = scmp.eq.s32.totalorder %s16, 1
    %p161 = por %p159, %p160
    %p162 = scmp.ne.s32.totalorder %s151, %s152
    %p163 = scmp.eq.s32.totalorder %s16, 0
    %p164 = por %p162, %p163
    %p165 = scmp.ne.s32.totalorder %s151, %s152
    %p166 = scmp.eq.s32.totalorder %s17, 1
    %p167 = por %p165, %p166
    %p169 = scmp.ne.s32.totalorder %s152, %s168
    %p170 = scmp.eq.s32.totalorder %s17, 0
    %p171 = por %p169, %p170
    %s172 = ssub.s32 %s18, %s37
    %s173 = ssub.s32 %s19, %s33
    %s174 = sor.u32 %s172, %s173
    %p175 = scmp.eq.s32.totalorder %s174, 0
    %s177 = sadd.s32 %s176, 1
    %s178 = scalar_select %p175, %s176, %s177
    %p181 = pneg %p175
    %p182 = scmp.eq.s32.totalorder %s11, 1
    %p183 = por %p181, %p182
    %p184 = scmp.ne.s32.totalorder %s176, %s179
    %p185 = scmp.eq.s32.totalorder %s11, 0
    %p186 = por %p184, %p185
    %p187 = scmp.ne.s32.totalorder %s176, %s179
    %p188 = scmp.eq.s32.totalorder %s16, 1
    %p189 = por %p187, %p188
    %p190 = scmp.ne.s32.totalorder %s179, %s180
    %p191 = scmp.eq.s32.totalorder %s16, 0
    %p192 = por %p190, %p191
    %p193 = scmp.ne.s32.totalorder %s179, %s180
    %p194 = scmp.eq.s32.totalorder %s17, 1
    %p195 = por %p193, %p194
    %p197 = scmp.ne.s32.totalorder %s180, %s196
    %p198 = scmp.eq.s32.totalorder %s17, 0
    %p199 = por %p197, %p198
    %p200 = scmp.le.s32.totalorder 1, %s11
    %p201 = scmp.lt.s32.totalorder %s11, 3
    %p202 = pnand %p200, %p201
    %p203 = pneg %p202
    // Predicated region
    $region9: #{densenet_forward.30} parent=5 // pred_check
      _
    $region10: #{densenet_forward.30} parent=5 // pred_check_branch
      %205 = sbr.rel (%p202) target = $region12
    $region11: #{densenet_forward.30} parent=5 // pred_region
      %s206 = ssub.s32 %s11, 1
      // Predicated region
      $region13: #{densenet_forward.30} parent=11 // pred_check
        %p207 = pneg %p86
      $region14: #{densenet_forward.30} parent=11 // pred_check_branch
        %209 = sbr.rel (%p207) target = $region16
      $region15: #{densenet_forward.30} parent=11 // pred_region
        %s210 = smul.u32 19, %s23
        %p211 = scmp.lt.s32.totalorder %s210, 18
        %s212 = scalar_select %p211, %s210, 18
        %p213 = scmp.lt.s32.totalorder %s22, 0
        %s214 = scalar_select %p213, %s22, 0
        %s215 = sadd.s32 %s214, %s212
        %s216 = smul.addr %s215, 4
        %s217 = scalar_lea.vmem %s1, %s216
        %s218 = smul.u32 19, %s23
      $region16: #{densenet_forward.30} parent=11 // pred_fallthru
        _
      // Predicated region
      $region17: #{densenet_forward.30} parent=11 // pred_check
        %p219 = pneg %p112
      $region18: #{densenet_forward.30} parent=11 // pred_check_branch
        %221 = sbr.rel (%p219) target = $region20
      $region19: #{densenet_forward.30} parent=11 // pred_region
        %s222 = smul.u32 2, %s23
        %p223 = scmp.lt.s32.totalorder %s222, 1
        %s224 = scalar_select %p223, %s222, 1
        %s225 = scalar_lea.vmem %s2, %s224
        %s226 = smul.u32 2, %s23
      $region20: #{densenet_forward.30} parent=11 // pred_fallthru
        _
      // Predicated region
      $region21: #{densenet_forward.30} parent=11 // pred_check
        %p227 = pneg %p138
      $region22: #{densenet_forward.30} parent=11 // pred_check_branch
        %229 = sbr.rel (%p227) target = $region24
      $region23: #{densenet_forward.30} parent=11 // pred_region
        %s230 = smul.u32 2, %s23
        %p231 = scmp.lt.s32.totalorder %s230, 1
        %s232 = scalar_select %p231, %s230, 1
        %s233 = scalar_lea.vmem %s3, %s232
        %s234 = smul.u32 2, %s23
      $region24: #{densenet_forward.30} parent=11 // pred_fallthru
        _
      // Predicated region
      $region25: #{densenet_forward.30} parent=11 // pred_check
        %p235 = pneg %p164
      $region26: #{densenet_forward.30} parent=11 // pred_check_branch
        %237 = sbr.rel (%p235) target = $region28
      $region27: #{densenet_forward.30} parent=11 // pred_region
        %p238 = scmp.lt.s32.totalorder %s22, 0
        %s239 = scalar_select %p238, %s22, 0
        %s240 = scalar_lea.vmem %s4, %s239
      $region28: #{densenet_forward.30} parent=11 // pred_fallthru
        _
    $region12: #{densenet_forward.30} parent=5 // pred_fallthru
      _
    %p241 = scmp.lt.s32.totalorder %s11, 2
    // Predicated region
    $region29: #{densenet_forward.30} parent=5 // pred_check
      %p242 = pneg %p241
    $region30: #{densenet_forward.30} parent=5 // pred_check_branch
      %244 = sbr.rel (%p242) target = $region32
    $region31: #{densenet_forward.30} parent=5 // pred_region
      // Predicated region
      $region33: #{densenet_forward.30} parent=31 // pred_check
        %p245 = pneg %p52
      $region34: #{densenet_forward.30} parent=31 // pred_check_branch
        %247 = sbr.rel (%p245) target = $region36
      $region35: #{densenet_forward.30} parent=31 // pred_region
        %s248 = smul.u32 32, %s18
        %s249 = smul.u32 2, %s20
        %p250 = scmp.lt.s32.totalorder %s248, 63
        %s251 = scalar_select %p250, %s248, 63
        %p252 = scmp.lt.s32.totalorder %s249, 1
        %s253 = scalar_select %p252, %s249, 1
        %s254 = smul.addr %s251, 2
        %s255 = sadd.s32 %s253, %s254
        %s256 = smul.addr %s255, 4
        %s257 = scalar_lea.vmem %s0, %s256
        %s258 = smul.u32 32, %s18
        %s259 = smul.u32 2, %s20
      $region36: #{densenet_forward.30} parent=31 // pred_fallthru
        _
    $region32: #{densenet_forward.30} parent=5 // pred_fallthru
      _
    %p260 = scmp.le.s32.totalorder 1, %s11
    %p261 = scmp.lt.s32.totalorder %s11, 3
    %p262 = pnand %p260, %p261
    %p263 = pneg %p262
    // Predicated region
    $region37: #{densenet_forward.30} parent=5 // pred_check
      _
    $region38: #{densenet_forward.30} parent=5 // pred_check_branch
      %265 = sbr.rel (%p262) target = $region40
    $region39: #{densenet_forward.30} parent=5 // pred_region
      %s266 = ssub.s32 %s11, 1
      %s267 = smul.u32 32, %s21
      %s268 = smul.u32 2, %s23
      %p269 = scmp.lt.s32.totalorder %s267, 63
      %s270 = scalar_select %p269, %s267, 63
      %p271 = scmp.lt.s32.totalorder %s268, 1
      %s272 = scalar_select %p271, %s268, 1
      %s273 = smul.addr %s270, 2
      %s274 = sadd.s32 %s272, %s273
      %s275 = smul.addr %s274, 4
      %s276 = scalar_lea.vmem %s0, %s275
      %p277 = pneg %p58
      %p278 = pneg %p55
      %s279 = smul.u32 19, %s23
      %p280 = scmp.lt.s32.totalorder %s279, 18
      %s281 = scalar_select %p280, %s279, 18
      %p282 = scmp.lt.s32.totalorder %s22, 0
      %s283 = scalar_select %p282, %s22, 0
      %s284 = sadd.s32 %s283, %s281
      %s285 = smul.addr %s284, 4
      %s286 = scalar_lea.vmem %s1, %s285
      %p287 = pneg %p86
      %p288 = pneg %p83
      %s289 = smul.u32 2, %s23
      %p290 = scmp.lt.s32.totalorder %s289, 1
      %s291 = scalar_select %p290, %s289, 1
      %s292 = scalar_lea.vmem %s2, %s291
      %p293 = pneg %p112
      %p294 = pneg %p109
      %s295 = smul.u32 2, %s23
      %p296 = scmp.lt.s32.totalorder %s295, 1
      %s297 = scalar_select %p296, %s295, 1
      %s298 = scalar_lea.vmem %s3, %s297
      %p299 = pneg %p138
      %p300 = pneg %p135
      %p301 = scmp.lt.s32.totalorder %s22, 0
      %s302 = scalar_select %p301, %s22, 0
      %s303 = scalar_lea.vmem %s4, %s302
      %p304 = pneg %p164
      %p305 = pneg %p161
      %p306 = pneg %p192
      %p307 = pneg %p189
      %s308 = smul.u32 32, %s21
      %p309 = scmp.lt.s32.totalorder %s308, 63
      %s310 = scalar_select %p309, %s308, 63
      %p311 = scmp.lt.s32.totalorder %s22, 0
      %s312 = scalar_select %p311, %s22, 0
      %s313 = sadd.s32 %s312, %s310
      %s314 = smul.addr %s313, 4
      %s315 = scalar_lea.vmem %s5, %s314
      %s316 = smul.u32 32, %s21
      %s317 = smul.u32 2, %s23
      %p318 = scmp.lt.s32.totalorder %s316, 63
      %s319 = scalar_select %p318, %s316, 63
      %p320 = scmp.lt.s32.totalorder %s317, 1
      %s321 = scalar_select %p320, %s317, 1
      %s322 = smul.addr %s319, 2
      %s323 = sadd.s32 %s321, %s322
      %s324 = smul.addr %s323, 4
      %s325 = scalar_lea.vmem %s0, %s324
      %s326 = smul.u32 32, %s21
      %s327 = smul.u32 2, %s23
      %s328 = smul.u32 19, %s23
      %p329 = scmp.lt.s32.totalorder %s328, 18
      %s330 = scalar_select %p329, %s328, 18
      %p331 = scmp.lt.s32.totalorder %s22, 0
      %s332 = scalar_select %p331, %s22, 0
      %s333 = sadd.s32 %s332, %s330
      %s334 = smul.addr %s333, 4
      %s335 = scalar_lea.vmem %s1, %s334
      %s336 = smul.u32 19, %s23
      %s337 = smul.u32 2, %s23
      %p338 = scmp.lt.s32.totalorder %s337, 1
      %s339 = scalar_select %p338, %s337, 1
      %s340 = scalar_lea.vmem %s2, %s339
      %s341 = smul.u32 2, %s23
      %s342 = smul.u32 2, %s23
      %p343 = scmp.lt.s32.totalorder %s342, 1
      %s344 = scalar_select %p343, %s342, 1
      %s345 = scalar_lea.vmem %s3, %s344
      %s346 = smul.u32 2, %s23
      %p347 = scmp.lt.s32.totalorder %s22, 0
      %s348 = scalar_select %p347, %s22, 0
      %s349 = scalar_lea.vmem %s4, %s348
      %s350 = smul.u32 32, %s21
      %p351 = scmp.lt.s32.totalorder %s350, 63
      %s352 = scalar_select %p351, %s350, 63
      %p353 = scmp.lt.s32.totalorder %s22, 0
      %s354 = scalar_select %p353, %s22, 0
      %s355 = sadd.s32 %s354, %s352
      %s356 = smul.addr %s355, 4
      %s357 = scalar_lea.vmem %s5, %s356
      %s358 = smul.u32 32, %s21
      %p360 = scmp.eq.s32.totalorder %s23, 0
      // Predicated region
      $region41: #{densenet_forward.30} parent=39 // pred_check
        %p361 = pneg %p360
      $region42: #{densenet_forward.30} parent=39 // pred_check_branch
        %363 = sbr.rel (%p361) target = $region44
      $region43: #{densenet_forward.30} parent=39 // pred_region
        %364 = vst [vmem:[#allocation2] sm:$0xff] 0.0
        %365 = vst [vmem:[#allocation2 + $0x8] sm:$0xff] 0.0
        %366 = vst [vmem:[#allocation2 + $0x10] sm:$0xff] 0.0
        %367 = vst [vmem:[#allocation2 + $0x18] sm:$0xff] 0.0
        %368 = vst [vmem:[#allocation2 + $0x20] sm:$0xff] 0.0
        %369 = vst [vmem:[#allocation2 + $0x28] sm:$0xff] 0.0
        %370 = vst [vmem:[#allocation2 + $0x30] sm:$0xff] 0.0
        %371 = vst [vmem:[#allocation2 + $0x38] sm:$0xff] 0.0
        %372 = vst [vmem:[#allocation2 + $0x40] sm:$0xff] 0.0
        %373 = vst [vmem:[#allocation2 + $0x48] sm:$0xff] 0.0
        %374 = vst [vmem:[#allocation2 + $0x50] sm:$0xff] 0.0
        %375 = vst [vmem:[#allocation2 + $0x58] sm:$0xff] 0.0
        %376 = vst [vmem:[#allocation2 + $0x60] sm:$0xff] 0.0
        %377 = vst [vmem:[#allocation2 + $0x68] sm:$0xff] 0.0
        %378 = vst [vmem:[#allocation2 + $0x70] sm:$0xff] 0.0
        %379 = vst [vmem:[#allocation2 + $0x78] sm:$0xff] 0.0
        %380 = vst [vmem:[#allocation2 + $0x80] sm:$0xff] 0.0
        %381 = vst [vmem:[#allocation2 + $0x88] sm:$0xff] 0.0
        %382 = vst [vmem:[#allocation2 + $0x90] sm:$0xff] 0.0
        %383 = vst [vmem:[#allocation2 + $0x98] sm:$0xff] 0.0
        %384 = vst [vmem:[#allocation2 + $0xa0] sm:$0xff] 0.0
        %385 = vst [vmem:[#allocation2 + $0xa8] sm:$0xff] 0.0
        %386 = vst [vmem:[#allocation2 + $0xb0] sm:$0xff] 0.0
        %387 = vst [vmem:[#allocation2 + $0xb8] sm:$0xff] 0.0
        %388 = vst [vmem:[#allocation2 + $0xc0] sm:$0xff] 0.0
        %389 = vst [vmem:[#allocation2 + $0xc8] sm:$0xff] 0.0
        %390 = vst [vmem:[#allocation2 + $0xd0] sm:$0xff] 0.0
        %391 = vst [vmem:[#allocation2 + $0xd8] sm:$0xff] 0.0
        %392 = vst [vmem:[#allocation2 + $0xe0] sm:$0xff] 0.0
        %393 = vst [vmem:[#allocation2 + $0xe8] sm:$0xff] 0.0
        %394 = vst [vmem:[#allocation2 + $0xf0] sm:$0xff] 0.0
        %395 = vst [vmem:[#allocation2 + $0xf8] sm:$0xff] 0.0
      $region44: #{densenet_forward.30} parent=39 // pred_fallthru
        _
      %v396 = vld [vmem:[%s325] sm:$0xff]
      %v397 = vld [vmem:[%s325 + $0x8] sm:$0xff]
      %v398 = vld [vmem:[%s325 + $0x10] sm:$0xff]
      %v399 = vld [vmem:[%s325 + $0x18] sm:$0xff]
      %v400 = vld [vmem:[%s325 + $0x20] sm:$0xff]
      %v401 = vld [vmem:[%s325 + $0x28] sm:$0xff]
      %v402 = vld [vmem:[%s325 + $0x30] sm:$0xff]
      %v403 = vld [vmem:[%s325 + $0x38] sm:$0xff]
      %v404 = vld [vmem:[%s325 + $0x40] sm:$0xff]
      %v405 = vld [vmem:[%s325 + $0x48] sm:$0xff]
      %v406 = vld [vmem:[%s325 + $0x50] sm:$0xff]
      %v407 = vld [vmem:[%s325 + $0x58] sm:$0xff]
      %v408 = vld [vmem:[%s325 + $0x60] sm:$0xff]
      %v409 = vld [vmem:[%s325 + $0x68] sm:$0xff]
      %v410 = vld [vmem:[%s325 + $0x70] sm:$0xff]
      %v411 = vld [vmem:[%s325 + $0x78] sm:$0xff]
      %v412 = vld [vmem:[%s325 + $0x80] sm:$0xff]
      %v413 = vld [vmem:[%s325 + $0x88] sm:$0xff]
      %v414 = vld [vmem:[%s325 + $0x90] sm:$0xff]
      %v415 = vld [vmem:[%s325 + $0x98] sm:$0xff]
      %v416 = vld [vmem:[%s325 + $0xa0] sm:$0xff]
      %v417 = vld [vmem:[%s325 + $0xa8] sm:$0xff]
      %v418 = vld [vmem:[%s325 + $0xb0] sm:$0xff]
      %v419 = vld [vmem:[%s325 + $0xb8] sm:$0xff]
      %v420 = vld [vmem:[%s325 + $0xc0] sm:$0xff]
      %v421 = vld [vmem:[%s325 + $0xc8] sm:$0xff]
      %v422 = vld [vmem:[%s325 + $0xd0] sm:$0xff]
      %v423 = vld [vmem:[%s325 + $0xd8] sm:$0xff]
      %v424 = vld [vmem:[%s325 + $0xe0] sm:$0xff]
      %v425 = vld [vmem:[%s325 + $0xe8] sm:$0xff]
      %v426 = vld [vmem:[%s325 + $0xf0] sm:$0xff]
      %v427 = vld [vmem:[%s325 + $0xf8] sm:$0xff]
      %v428 = vld [vmem:[#allocation2] sm:$0xff]
      %v429 = vld [vmem:[#allocation2 + $0x8] sm:$0xff]
      %v430 = vld [vmem:[#allocation2 + $0x10] sm:$0xff]
      %v431 = vld [vmem:[#allocation2 + $0x18] sm:$0xff]
      %v432 = vld [vmem:[#allocation2 + $0x20] sm:$0xff]
      %v433 = vld [vmem:[#allocation2 + $0x28] sm:$0xff]
      %v434 = vld [vmem:[#allocation2 + $0x30] sm:$0xff]
      %v435 = vld [vmem:[#allocation2 + $0x38] sm:$0xff]
      %v436 = vld [vmem:[#allocation2 + $0x40] sm:$0xff]
      %v437 = vld [vmem:[#allocation2 + $0x48] sm:$0xff]
      %v438 = vld [vmem:[#allocation2 + $0x50] sm:$0xff]
      %v439 = vld [vmem:[#allocation2 + $0x58] sm:$0xff]
      %v440 = vld [vmem:[#allocation2 + $0x60] sm:$0xff]
      %v441 = vld [vmem:[#allocation2 + $0x68] sm:$0xff]
      %v442 = vld [vmem:[#allocation2 + $0x70] sm:$0xff]
      %v443 = vld [vmem:[#allocation2 + $0x78] sm:$0xff]
      %v444 = vld [vmem:[#allocation2 + $0x80] sm:$0xff]
      %v445 = vld [vmem:[#allocation2 + $0x88] sm:$0xff]
      %v446 = vld [vmem:[#allocation2 + $0x90] sm:$0xff]
      %v447 = vld [vmem:[#allocation2 + $0x98] sm:$0xff]
      %v448 = vld [vmem:[#allocation2 + $0xa0] sm:$0xff]
      %v449 = vld [vmem:[#allocation2 + $0xa8] sm:$0xff]
      %v450 = vld [vmem:[#allocation2 + $0xb0] sm:$0xff]
      %v451 = vld [vmem:[#allocation2 + $0xb8] sm:$0xff]
      %v452 = vld [vmem:[#allocation2 + $0xc0] sm:$0xff]
      %v453 = vld [vmem:[#allocation2 + $0xc8] sm:$0xff]
      %v454 = vld [vmem:[#allocation2 + $0xd0] sm:$0xff]
      %v455 = vld [vmem:[#allocation2 + $0xd8] sm:$0xff]
      %v456 = vld [vmem:[#allocation2 + $0xe0] sm:$0xff]
      %v457 = vld [vmem:[#allocation2 + $0xe8] sm:$0xff]
      %v458 = vld [vmem:[#allocation2 + $0xf0] sm:$0xff]
      %v459 = vld [vmem:[#allocation2 + $0xf8] sm:$0xff]
      %v460 = vld [vmem:[%s335] sm:$0xf]
      %v461 = vld [vmem:[%s335 + $0x4] sm:$0xf]
      %v462 = vld [vmem:[%s335 + $0x8] sm:$0xf]
      %v463 = vld [vmem:[%s335 + $0xc] sm:$0xf]
      %v464 = vld [vmem:[%s335 + $0x10] sm:$0xf]
      %v465 = vld [vmem:[%s335 + $0x14] sm:$0xf]
      %v466 = vld [vmem:[%s335 + $0x18] sm:$0xf]
      %v467 = vld [vmem:[%s335 + $0x1c] sm:$0xf]
      %v468 = vld [vmem:[%s335 + $0x20] sm:$0xf]
      %v469 = vld [vmem:[%s335 + $0x24] sm:$0xf]
      %v470 = vld [vmem:[%s335 + $0x28] sm:$0xf]
      %v471 = vld [vmem:[%s335 + $0x2c] sm:$0xf]
      %v472 = vld [vmem:[%s335 + $0x30] sm:$0xf]
      %v473 = vld [vmem:[%s335 + $0x34] sm:$0xf]
      %v474 = vld [vmem:[%s335 + $0x38] sm:$0xf]
      %v475 = vld [vmem:[%s335 + $0x3c] sm:$0xf]
      %v476 = vld [vmem:[%s335 + $0x40] sm:$0xf]
      %v477 = vld [vmem:[%s335 + $0x44] sm:$0xf]
      %v478 = vld [vmem:[%s335 + $0x48] sm:$0x3]
      %v511 = vunpack.c.l.b16 %v396
      %v512 = vunpack.c.h.b16 %v396
      %v513 = vunpack.c.l.b16 %v397
      %v514 = vunpack.c.h.b16 %v397
      %v515 = vunpack.c.l.b16 %v398
      %v516 = vunpack.c.h.b16 %v398
      %v517 = vunpack.c.l.b16 %v399
      %v518 = vunpack.c.h.b16 %v399
      %v519 = vunpack.c.l.b16 %v400
      %v520 = vunpack.c.h.b16 %v400
      %v521 = vunpack.c.l.b16 %v401
      %v522 = vunpack.c.h.b16 %v401
      %v523 = vunpack.c.l.b16 %v402
      %v524 = vunpack.c.h.b16 %v402
      %v525 = vunpack.c.l.b16 %v403
      %v526 = vunpack.c.h.b16 %v403
      %v527 = vunpack.c.l.b16 %v404
      %v528 = vunpack.c.h.b16 %v404
      %v529 = vunpack.c.l.b16 %v405
      %v530 = vunpack.c.h.b16 %v405
      %v531 = vunpack.c.l.b16 %v406
      %v532 = vunpack.c.h.b16 %v406
      %v533 = vunpack.c.l.b16 %v407
      %v534 = vunpack.c.h.b16 %v407
      %v535 = vunpack.c.l.b16 %v408
      %v536 = vunpack.c.h.b16 %v408
      %v537 = vunpack.c.l.b16 %v409
      %v538 = vunpack.c.h.b16 %v409
      %v539 = vunpack.c.l.b16 %v410
      %v540 = vunpack.c.h.b16 %v410
      %v541 = vunpack.c.l.b16 %v411
      %v542 = vunpack.c.h.b16 %v411
      %v543 = vunpack.c.l.b16 %v412
      %v544 = vunpack.c.h.b16 %v412
      %v545 = vunpack.c.l.b16 %v413
      %v546 = vunpack.c.h.b16 %v413
      %v547 = vunpack.c.l.b16 %v414
      %v548 = vunpack.c.h.b16 %v414
      %v549 = vunpack.c.l.b16 %v415
      %v550 = vunpack.c.h.b16 %v415
      %v551 = vunpack.c.l.b16 %v416
      %v552 = vunpack.c.h.b16 %v416
      %v553 = vunpack.c.l.b16 %v417
      %v554 = vunpack.c.h.b16 %v417
      %v555 = vunpack.c.l.b16 %v418
      %v556 = vunpack.c.h.b16 %v418
      %v557 = vunpack.c.l.b16 %v419
      %v558 = vunpack.c.h.b16 %v419
      %v559 = vunpack.c.l.b16 %v420
      %v560 = vunpack.c.h.b16 %v420
      %v561 = vunpack.c.l.b16 %v421
      %v562 = vunpack.c.h.b16 %v421
      %v563 = vunpack.c.l.b16 %v422
      %v564 = vunpack.c.h.b16 %v422
      %v565 = vunpack.c.l.b16 %v423
      %v566 = vunpack.c.h.b16 %v423
      %v567 = vunpack.c.l.b16 %v424
      %v568 = vunpack.c.h.b16 %v424
      %v569 = vunpack.c.l.b16 %v425
      %v570 = vunpack.c.h.b16 %v425
      %v571 = vunpack.c.l.b16 %v426
      %v572 = vunpack.c.h.b16 %v426
      %v573 = vunpack.c.l.b16 %v427
      %v574 = vunpack.c.h.b16 %v427
      %v575 = vpack.c.b16 %v513, %v511
      %v576 = vpack.c.b16 %v514, %v512
      %v577 = vpack.c.b16 %v517, %v515
      %v578 = vpack.c.b16 %v518, %v516
      %v579 = vpack.c.b16 %v521, %v519
      %v580 = vpack.c.b16 %v522, %v520
      %v581 = vpack.c.b16 %v525, %v523
      %v582 = vpack.c.b16 %v526, %v524
      %v583 = vpack.c.b16 %v529, %v527
      %v584 = vpack.c.b16 %v530, %v528
      %v585 = vpack.c.b16 %v533, %v531
      %v586 = vpack.c.b16 %v534, %v532
      %v587 = vpack.c.b16 %v537, %v535
      %v588 = vpack.c.b16 %v538, %v536
      %v589 = vpack.c.b16 %v541, %v539
      %v590 = vpack.c.b16 %v542, %v540
      %v591 = vpack.c.b16 %v545, %v543
      %v592 = vpack.c.b16 %v546, %v544
      %v593 = vpack.c.b16 %v549, %v547
      %v594 = vpack.c.b16 %v550, %v548
      %v595 = vpack.c.b16 %v553, %v551
      %v596 = vpack.c.b16 %v554, %v552
      %v597 = vpack.c.b16 %v557, %v555
      %v598 = vpack.c.b16 %v558, %v556
      %v599 = vpack.c.b16 %v561, %v559
      %v600 = vpack.c.b16 %v562, %v560
      %v601 = vpack.c.b16 %v565, %v563
      %v602 = vpack.c.b16 %v566, %v564
      %v603 = vpack.c.b16 %v569, %v567
      %v604 = vpack.c.b16 %v570, %v568
      %v605 = vpack.c.b16 %v573, %v571
      %v606 = vpack.c.b16 %v574, %v572
      %v642 = vunpack.c.l.b16 %v460
      %v643 = vunpack.c.l.b16 %v461
      %v644 = vunpack.c.l.b16 %v462
      %v645 = vunpack.c.l.b16 %v463
      %v646 = vunpack.c.l.b16 %v464
      %v647 = vunpack.c.l.b16 %v465
      %v648 = vunpack.c.l.b16 %v466
      %v649 = vunpack.c.l.b16 %v467
      %v650 = vunpack.c.l.b16 %v468
      %v651 = vunpack.c.l.b16 %v469
      %v652 = vunpack.c.l.b16 %v470
      %v653 = vunpack.c.l.b16 %v471
      %v654 = vunpack.c.l.b16 %v472
      %v655 = vunpack.c.l.b16 %v473
      %v656 = vunpack.c.l.b16 %v474
      %v657 = vunpack.c.l.b16 %v475
      %v658 = vunpack.c.l.b16 %v476
      %v659 = vunpack.c.l.b16 %v477
      %v660 = vunpack.c.l.b16 %v478
      %v661 = vpack.c.b16 %v643, %v642
      %v662 = vpack.c.b16 %v645, %v644
      %v663 = vpack.c.b16 %v647, %v646
      %v664 = vpack.c.b16 %v649, %v648
      %v665 = vpack.c.b16 %v651, %v650
      %v666 = vpack.c.b16 %v653, %v652
      %v667 = vpack.c.b16 %v655, %v654
      %v668 = vpack.c.b16 %v657, %v656
      %v669 = vpack.c.b16 %v659, %v658
      %v670 = vpack.c.b16 %v660, %v660
      %vm680 = vcmask 154624
      %v682 = vsel %vm680, %v576, 0
      %v685 = vsel %vm680, %v578, 0
      %v688 = vsel %vm680, %v580, 0
      %v691 = vsel %vm680, %v582, 0
      %v694 = vsel %vm680, %v584, 0
      %v697 = vsel %vm680, %v586, 0
      %v700 = vsel %vm680, %v588, 0
      %v703 = vsel %vm680, %v590, 0
      %v706 = vsel %vm680, %v592, 0
      %v709 = vsel %vm680, %v594, 0
      %v712 = vsel %vm680, %v596, 0
      %v715 = vsel %vm680, %v598, 0
      %v718 = vsel %vm680, %v600, 0
      %v721 = vsel %vm680, %v602, 0
      %v724 = vsel %vm680, %v604, 0
      %v727 = vsel %vm680, %v606, 0
      %vm729 = vcmask 1040384
      %vm730 = vcmask 1041408
      %v731 = vsel %vm729, 4294967295, 65535
      %v732 = vsel %vm730, %v731, 0
      %v734 = vand.u32 %v670, %v732
      %736 = vmatprep.subr.bf16.mxu0 0
      %737 = vmatpush1.bf16.msra.mxu0 %v661
      %738 = vmatprep.subr.bf16.mxu0 0
      %739 = vmatpush1.bf16.msra.mxu0 %v662
      %740 = vmatprep.subr.bf16.mxu0 0
      %741 = vmatpush1.bf16.msra.mxu0 %v663
      %742 = vmatprep.subr.bf16.mxu0 0
      %743 = vmatpush1.bf16.msra.mxu0 %v664
      %744 = vmatprep.subr.bf16.mxu0 0
      %745 = vmatpush1.bf16.msra.mxu0 %v665
      %746 = vmatprep.subr.bf16.mxu0 0
      %747 = vmatpush1.bf16.msra.mxu0 %v666
      %748 = vmatprep.subr.bf16.mxu0 0
      %749 = vmatpush1.bf16.msra.mxu0 %v667
      %750 = vmatprep.subr.bf16.mxu0 0
      %751 = vmatpush1.bf16.msra.mxu0 %v668
      %752 = vmatprep.subr.bf16.mxu0 0
      %753 = vmatpush1.bf16.msra.mxu0 %v669
      %754 = vmatprep.subr.bf16.mxu0 0
      %755 = vmatpush1.bf16.msra.mxu0 %v734
      %756 = vmatprep.subr.bf16.mxu0 0
      %757 = vmatpush1.bf16.msra.mxu0 0
      %758 = vmatprep.subr.bf16.mxu0 0
      %759 = vmatpush1.bf16.msra.mxu0 0
      %760 = vmatprep.subr.bf16.mxu0 0
      %761 = vmatpush1.bf16.msra.mxu0 0
      %762 = vmatprep.subr.bf16.mxu0 0
      %763 = vmatpush1.bf16.msra.mxu0 0
      %764 = vmatprep.subr.bf16.mxu0 0
      %765 = vmatpush1.bf16.msra.mxu0 0
      %766 = vmatprep.subr.bf16.mxu0 0
      %767 = vmatpush1.bf16.msra.mxu0 0
      %768 = vmatprep.mubr.bf16.mxu0 %v682
      %769 = vmatmul.mubr.bf16.gmra.mrb[0].mxu0 %v575
      %v770 = vpop.f32.mrb[0].mxu0
      %v771 = vadd.f32 0.0, %v770
      %v772 = vpop.f32.mrb[0].mxu0
      %v773 = vpop.f32.mrb[0].mxu0
      %v774 = vadd.f32 0.0, %v773
      %v775 = vpop.f32.mrb[0].mxu0
      %776 = vmatprep.mubr.bf16.mxu0 %v685
      %777 = vmatmul.mubr.bf16.gmra.mrb[0].mxu0 %v577
      %v778 = vpop.f32.mrb[0].mxu0
      %v779 = vadd.f32 0.0, %v778
      %v780 = vpop.f32.mrb[0].mxu0
      %v781 = vpop.f32.mrb[0].mxu0
      %v782 = vadd.f32 0.0, %v781
      %v783 = vpop.f32.mrb[0].mxu0
      %784 = vmatprep.mubr.bf16.mxu0 %v688
      %785 = vmatmul.mubr.bf16.gmra.mrb[0].mxu0 %v579
      %v786 = vpop.f32.mrb[0].mxu0
      %v787 = vadd.f32 0.0, %v786
      %v788 = vpop.f32.mrb[0].mxu0
      %v789 = vpop.f32.mrb[0].mxu0
      %v790 = vadd.f32 0.0, %v789
      %v791 = vpop.f32.mrb[0].mxu0
      %792 = vmatprep.mubr.bf16.mxu0 %v691
      %793 = vmatmul.mubr.bf16.gmra.mrb[0].mxu0 %v581
      %v794 = vpop.f32.mrb[0].mxu0
      %v795 = vadd.f32 0.0, %v794
      %v796 = vpop.f32.mrb[0].mxu0
      %v797 = vpop.f32.mrb[0].mxu0
      %v798 = vadd.f32 0.0, %v797
      %v799 = vpop.f32.mrb[0].mxu0
      %800 = vmatprep.mubr.bf16.mxu0 %v694
      %801 = vmatmul.mubr.bf16.gmra.mrb[0].mxu0 %v583
      %v802 = vpop.f32.mrb[0].mxu0
      %v803 = vadd.f32 0.0, %v802
      %v804 = vpop.f32.mrb[0].mxu0
      %v805 = vpop.f32.mrb[0].mxu0
      %v806 = vadd.f32 0.0, %v805
      %v807 = vpop.f32.mrb[0].mxu0
      %808 = vmatprep.mubr.bf16.mxu0 %v697
      %809 = vmatmul.mubr.bf16.gmra.mrb[0].mxu0 %v585
      %v810 = vpop.f32.mrb[0].mxu0
      %v811 = vadd.f32 0.0, %v810
      %v812 = vpop.f32.mrb[0].mxu0
      %v813 = vpop.f32.mrb[0].mxu0
      %v814 = vadd.f32 0.0, %v813
      %v815 = vpop.f32.mrb[0].mxu0
      %816 = vmatprep.mubr.bf16.mxu0 %v700
      %817 = vmatmul.mubr.bf16.gmra.mrb[0].mxu0 %v587
      %v818 = vpop.f32.mrb[0].mxu0
      %v819 = vadd.f32 0.0, %v818
      %v820 = vpop.f32.mrb[0].mxu0
      %v821 = vpop.f32.mrb[0].mxu0
      %v822 = vadd.f32 0.0, %v821
      %v823 = vpop.f32.mrb[0].mxu0
      %824 = vmatprep.mubr.bf16.mxu0 %v703
      %825 = vmatmul.mubr.bf16.gmra.mrb[0].mxu0 %v589
      %v826 = vpop.f32.mrb[0].mxu0
      %v827 = vadd.f32 0.0, %v826
      %v828 = vpop.f32.mrb[0].mxu0
      %v829 = vpop.f32.mrb[0].mxu0
      %v830 = vadd.f32 0.0, %v829
      %v831 = vpop.f32.mrb[0].mxu0
      %832 = vmatprep.mubr.bf16.mxu0 %v706
      %833 = vmatmul.mubr.bf16.gmra.mrb[0].mxu0 %v591
      %v834 = vpop.f32.mrb[0].mxu0
      %v835 = vadd.f32 0.0, %v834
      %v836 = vpop.f32.mrb[0].mxu0
      %v837 = vpop.f32.mrb[0].mxu0
      %v838 = vadd.f32 0.0, %v837
      %v839 = vpop.f32.mrb[0].mxu0
      %840 = vmatprep.mubr.bf16.mxu0 %v709
      %841 = vmatmul.mubr.bf16.gmra.mrb[0].mxu0 %v593
      %v842 = vpop.f32.mrb[0].mxu0
      %v843 = vadd.f32 0.0, %v842
      %v844 = vpop.f32.mrb[0].mxu0
      %v845 = vpop.f32.mrb[0].mxu0
      %v846 = vadd.f32 0.0, %v845
      %v847 = vpop.f32.mrb[0].mxu0
      %848 = vmatprep.mubr.bf16.mxu0 %v712
      %849 = vmatmul.mubr.bf16.gmra.mrb[0].mxu0 %v595
      %v850 = vpop.f32.mrb[0].mxu0
      %v851 = vadd.f32 0.0, %v850
      %v852 = vpop.f32.mrb[0].mxu0
      %v853 = vpop.f32.mrb[0].mxu0
      %v854 = vadd.f32 0.0, %v853
      %v855 = vpop.f32.mrb[0].mxu0
      %856 = vmatprep.mubr.bf16.mxu0 %v715
      %857 = vmatmul.mubr.bf16.gmra.mrb[0].mxu0 %v597
      %v858 = vpop.f32.mrb[0].mxu0
      %v859 = vadd.f32 0.0, %v858
      %v860 = vpop.f32.mrb[0].mxu0
      %v861 = vpop.f32.mrb[0].mxu0
      %v862 = vadd.f32 0.0, %v861
      %v863 = vpop.f32.mrb[0].mxu0
      %864 = vmatprep.mubr.bf16.mxu0 %v718
      %865 = vmatmul.mubr.bf16.gmra.mrb[0].mxu0 %v599
      %v866 = vpop.f32.mrb[0].mxu0
      %v867 = vadd.f32 0.0, %v866
      %v868 = vpop.f32.mrb[0].mxu0
      %v869 = vpop.f32.mrb[0].mxu0
      %v870 = vadd.f32 0.0, %v869
      %v871 = vpop.f32.mrb[0].mxu0
      %872 = vmatprep.mubr.bf16.mxu0 %v721
      %873 = vmatmul.mubr.bf16.gmra.mrb[0].mxu0 %v601
      %v874 = vpop.f32.mrb[0].mxu0
      %v875 = vadd.f32 0.0, %v874
      %v876 = vpop.f32.mrb[0].mxu0
      %v877 = vpop.f32.mrb[0].mxu0
      %v878 = vadd.f32 0.0, %v877
      %v879 = vpop.f32.mrb[0].mxu0
      %880 = vmatprep.mubr.bf16.mxu0 %v724
      %881 = vmatmul.mubr.bf16.gmra.mrb[0].mxu0 %v603
      %v882 = vpop.f32.mrb[0].mxu0
      %v883 = vadd.f32 0.0, %v882
      %v884 = vpop.f32.mrb[0].mxu0
      %v885 = vpop.f32.mrb[0].mxu0
      %v886 = vadd.f32 0.0, %v885
      %v887 = vpop.f32.mrb[0].mxu0
      %888 = vmatprep.mubr.bf16.mxu0 %v727
      %889 = vmatmul.mubr.bf16.gmra.mrb[0].mxu0 %v605
      %v890 = vpop.f32.mrb[0].mxu0
      %v891 = vadd.f32 0.0, %v890
      %v892 = vpop.f32.mrb[0].mxu0
      %v893 = vpop.f32.mrb[0].mxu0
      %v894 = vadd.f32 0.0, %v893
      %v895 = vpop.f32.mrb[0].mxu0
      %896 = vdwg.mxu0
      %v897 = vadd.f32 %v428, %v771
      %v898 = vadd.f32 %v429, %v774
      %v899 = vadd.f32 %v430, %v779
      %v900 = vadd.f32 %v431, %v782
      %v901 = vadd.f32 %v432, %v787
      %v902 = vadd.f32 %v433, %v790
      %v903 = vadd.f32 %v434, %v795
      %v904 = vadd.f32 %v435, %v798
      %v905 = vadd.f32 %v436, %v803
      %v906 = vadd.f32 %v437, %v806
      %v907 = vadd.f32 %v438, %v811
      %v908 = vadd.f32 %v439, %v814
      %v909 = vadd.f32 %v440, %v819
      %v910 = vadd.f32 %v441, %v822
      %v911 = vadd.f32 %v442, %v827
      %v912 = vadd.f32 %v443, %v830
      %v913 = vadd.f32 %v444, %v835
      %v914 = vadd.f32 %v445, %v838
      %v915 = vadd.f32 %v446, %v843
      %v916 = vadd.f32 %v447, %v846
      %v917 = vadd.f32 %v448, %v851
      %v918 = vadd.f32 %v449, %v854
      %v919 = vadd.f32 %v450, %v859
      %v920 = vadd.f32 %v451, %v862
      %v921 = vadd.f32 %v452, %v867
      %v922 = vadd.f32 %v453, %v870
      %v923 = vadd.f32 %v454, %v875
      %v924 = vadd.f32 %v455, %v878
      %v925 = vadd.f32 %v456, %v883
      %v926 = vadd.f32 %v457, %v886
      %v927 = vadd.f32 %v458, %v891
      %v928 = vadd.f32 %v459, %v894
      %929 = vst [vmem:[#allocation2] sm:$0xff] %v897
      %930 = vst [vmem:[#allocation2 + $0x8] sm:$0xff] %v898
      %931 = vst [vmem:[#allocation2 + $0x10] sm:$0xff] %v899
      %932 = vst [vmem:[#allocation2 + $0x18] sm:$0xff] %v900
      %933 = vst [vmem:[#allocation2 + $0x20] sm:$0xff] %v901
      %934 = vst [vmem:[#allocation2 + $0x28] sm:$0xff] %v902
      %935 = vst [vmem:[#allocation2 + $0x30] sm:$0xff] %v903
      %936 = vst [vmem:[#allocation2 + $0x38] sm:$0xff] %v904
      %937 = vst [vmem:[#allocation2 + $0x40] sm:$0xff] %v905
      %938 = vst [vmem:[#allocation2 + $0x48] sm:$0xff] %v906
      %939 = vst [vmem:[#allocation2 + $0x50] sm:$0xff] %v907
      %940 = vst [vmem:[#allocation2 + $0x58] sm:$0xff] %v908
      %941 = vst [vmem:[#allocation2 + $0x60] sm:$0xff] %v909
      %942 = vst [vmem:[#allocation2 + $0x68] sm:$0xff] %v910
      %943 = vst [vmem:[#allocation2 + $0x70] sm:$0xff] %v911
      %944 = vst [vmem:[#allocation2 + $0x78] sm:$0xff] %v912
      %945 = vst [vmem:[#allocation2 + $0x80] sm:$0xff] %v913
      %946 = vst [vmem:[#allocation2 + $0x88] sm:$0xff] %v914
      %947 = vst [vmem:[#allocation2 + $0x90] sm:$0xff] %v915
      %948 = vst [vmem:[#allocation2 + $0x98] sm:$0xff] %v916
      %949 = vst [vmem:[#allocation2 + $0xa0] sm:$0xff] %v917
      %950 = vst [vmem:[#allocation2 + $0xa8] sm:$0xff] %v918
      %951 = vst [vmem:[#allocation2 + $0xb0] sm:$0xff] %v919
      %952 = vst [vmem:[#allocation2 + $0xb8] sm:$0xff] %v920
      %953 = vst [vmem:[#allocation2 + $0xc0] sm:$0xff] %v921
      %954 = vst [vmem:[#allocation2 + $0xc8] sm:$0xff] %v922
      %955 = vst [vmem:[#allocation2 + $0xd0] sm:$0xff] %v923
      %956 = vst [vmem:[#allocation2 + $0xd8] sm:$0xff] %v924
      %957 = vst [vmem:[#allocation2 + $0xe0] sm:$0xff] %v925
      %958 = vst [vmem:[#allocation2 + $0xe8] sm:$0xff] %v926
      %959 = vst [vmem:[#allocation2 + $0xf0] sm:$0xff] %v927
      %960 = vst [vmem:[#allocation2 + $0xf8] sm:$0xff] %v928
      // Predicated region
      $region45: #{densenet_forward.30} parent=39 // pred_check
        %p961 = pneg %p360
      $region46: #{densenet_forward.30} parent=39 // pred_check_branch
        %963 = sbr.rel (%p961) target = $region48
      $region47: #{densenet_forward.30} parent=39 // pred_region
        %v964 = vld [vmem:[#allocation2] sm:$0xff]
        %v965 = vld [vmem:[#allocation2 + $0x8] sm:$0xff]
        %v966 = vld [vmem:[#allocation2 + $0x10] sm:$0xff]
        %v967 = vld [vmem:[#allocation2 + $0x18] sm:$0xff]
        %v968 = vld [vmem:[#allocation2 + $0x20] sm:$0xff]
        %v969 = vld [vmem:[#allocation2 + $0x28] sm:$0xff]
        %v970 = vld [vmem:[#allocation2 + $0x30] sm:$0xff]
        %v971 = vld [vmem:[#allocation2 + $0x38] sm:$0xff]
        %v972 = vld [vmem:[#allocation2 + $0x40] sm:$0xff]
        %v973 = vld [vmem:[#allocation2 + $0x48] sm:$0xff]
        %v974 = vld [vmem:[#allocation2 + $0x50] sm:$0xff]
        %v975 = vld [vmem:[#allocation2 + $0x58] sm:$0xff]
        %v976 = vld [vmem:[#allocation2 + $0x60] sm:$0xff]
        %v977 = vld [vmem:[#allocation2 + $0x68] sm:$0xff]
        %v978 = vld [vmem:[#allocation2 + $0x70] sm:$0xff]
        %v979 = vld [vmem:[#allocation2 + $0x78] sm:$0xff]
        %v980 = vld [vmem:[#allocation2 + $0x80] sm:$0xff]
        %v981 = vld [vmem:[#allocation2 + $0x88] sm:$0xff]
        %v982 = vld [vmem:[#allocation2 + $0x90] sm:$0xff]
        %v983 = vld [vmem:[#allocation2 + $0x98] sm:$0xff]
        %v984 = vld [vmem:[#allocation2 + $0xa0] sm:$0xff]
        %v985 = vld [vmem:[#allocation2 + $0xa8] sm:$0xff]
        %v986 = vld [vmem:[#allocation2 + $0xb0] sm:$0xff]
        %v987 = vld [vmem:[#allocation2 + $0xb8] sm:$0xff]
        %v988 = vld [vmem:[#allocation2 + $0xc0] sm:$0xff]
        %v989 = vld [vmem:[#allocation2 + $0xc8] sm:$0xff]
        %v990 = vld [vmem:[#allocation2 + $0xd0] sm:$0xff]
        %v991 = vld [vmem:[#allocation2 + $0xd8] sm:$0xff]
        %v992 = vld [vmem:[#allocation2 + $0xe0] sm:$0xff]
        %v993 = vld [vmem:[#allocation2 + $0xe8] sm:$0xff]
        %v994 = vld [vmem:[#allocation2 + $0xf0] sm:$0xff]
        %v995 = vld [vmem:[#allocation2 + $0xf8] sm:$0xff]
        %v996 = vld [vmem:[%s349] sm:$0x1]
        %v998 = vlaneseq
        %v999 = vshrl.u32 %v998, 7
        %v1000 = vsub.s32 0, %v999
        %v1001 = vrot.slane %v996, %v1000
        %v1003 = vadd.f32 %v964, %v1001
        %v1004 = vadd.f32 %v965, %v1001
        %v1005 = vadd.f32 %v966, %v1001
        %v1006 = vadd.f32 %v967, %v1001
        %v1007 = vadd.f32 %v968, %v1001
        %v1008 = vadd.f32 %v969, %v1001
        %v1009 = vadd.f32 %v970, %v1001
        %v1010 = vadd.f32 %v971, %v1001
        %v1011 = vadd.f32 %v972, %v1001
        %v1012 = vadd.f32 %v973, %v1001
        %v1013 = vadd.f32 %v974, %v1001
        %v1014 = vadd.f32 %v975, %v1001
        %v1015 = vadd.f32 %v976, %v1001
        %v1016 = vadd.f32 %v977, %v1001
        %v1017 = vadd.f32 %v978, %v1001
        %v1018 = vadd.f32 %v979, %v1001
        %v1019 = vadd.f32 %v980, %v1001
        %v1020 = vadd.f32 %v981, %v1001
        %v1021 = vadd.f32 %v982, %v1001
        %v1022 = vadd.f32 %v983, %v1001
        %v1023 = vadd.f32 %v984, %v1001
        %v1024 = vadd.f32 %v985, %v1001
        %v1025 = vadd.f32 %v986, %v1001
        %v1026 = vadd.f32 %v987, %v1001
        %v1027 = vadd.f32 %v988, %v1001
        %v1028 = vadd.f32 %v989, %v1001
        %v1029 = vadd.f32 %v990, %v1001
        %v1030 = vadd.f32 %v991, %v1001
        %v1031 = vadd.f32 %v992, %v1001
        %v1032 = vadd.f32 %v993, %v1001
        %v1033 = vadd.f32 %v994, %v1001
        %v1034 = vadd.f32 %v995, %v1001
        %v1035 = vpack.c.bf16 %v1004, %v1003
        %v1036 = vpack.c.bf16 %v1006, %v1005
        %v1037 = vpack.c.bf16 %v1008, %v1007
        %v1038 = vpack.c.bf16 %v1010, %v1009
        %v1039 = vpack.c.bf16 %v1012, %v1011
        %v1040 = vpack.c.bf16 %v1014, %v1013
        %v1041 = vpack.c.bf16 %v1016, %v1015
        %v1042 = vpack.c.bf16 %v1018, %v1017
        %v1043 = vpack.c.bf16 %v1020, %v1019
        %v1044 = vpack.c.bf16 %v1022, %v1021
        %v1045 = vpack.c.bf16 %v1024, %v1023
        %v1046 = vpack.c.bf16 %v1026, %v1025
        %v1047 = vpack.c.bf16 %v1028, %v1027
        %v1048 = vpack.c.bf16 %v1030, %v1029
        %v1049 = vpack.c.bf16 %v1032, %v1031
        %v1050 = vpack.c.bf16 %v1034, %v1033
        %v1067 = vunpack.c.l.b16 %v1035
        %v1068 = vunpack.c.h.b16 %v1035
        %v1069 = vunpack.c.l.b16 %v1036
        %v1070 = vunpack.c.h.b16 %v1036
        %v1071 = vunpack.c.l.b16 %v1037
        %v1072 = vunpack.c.h.b16 %v1037
        %v1073 = vunpack.c.l.b16 %v1038
        %v1074 = vunpack.c.h.b16 %v1038
        %v1075 = vunpack.c.l.b16 %v1039
        %v1076 = vunpack.c.h.b16 %v1039
        %v1077 = vunpack.c.l.b16 %v1040
        %v1078 = vunpack.c.h.b16 %v1040
        %v1079 = vunpack.c.l.b16 %v1041
        %v1080 = vunpack.c.h.b16 %v1041
        %v1081 = vunpack.c.l.b16 %v1042
        %v1082 = vunpack.c.h.b16 %v1042
        %v1083 = vunpack.c.l.b16 %v1043
        %v1084 = vunpack.c.h.b16 %v1043
        %v1085 = vunpack.c.l.b16 %v1044
        %v1086 = vunpack.c.h.b16 %v1044
        %v1087 = vunpack.c.l.b16 %v1045
        %v1088 = vunpack.c.h.b16 %v1045
        %v1089 = vunpack.c.l.b16 %v1046
        %v1090 = vunpack.c.h.b16 %v1046
        %v1091 = vunpack.c.l.b16 %v1047
        %v1092 = vunpack.c.h.b16 %v1047
        %v1093 = vunpack.c.l.b16 %v1048
        %v1094 = vunpack.c.h.b16 %v1048
        %v1095 = vunpack.c.l.b16 %v1049
        %v1096 = vunpack.c.h.b16 %v1049
        %v1097 = vunpack.c.l.b16 %v1050
        %v1098 = vunpack.c.h.b16 %v1050
        %v1099 = vpack.c.b16 %v1067, %v1067
        %v1100 = vpack.c.b16 %v1068, %v1068
        %v1101 = vpack.c.b16 %v1069, %v1069
        %v1102 = vpack.c.b16 %v1070, %v1070
        %v1103 = vpack.c.b16 %v1071, %v1071
        %v1104 = vpack.c.b16 %v1072, %v1072
        %v1105 = vpack.c.b16 %v1073, %v1073
        %v1106 = vpack.c.b16 %v1074, %v1074
        %v1107 = vpack.c.b16 %v1075, %v1075
        %v1108 = vpack.c.b16 %v1076, %v1076
        %v1109 = vpack.c.b16 %v1077, %v1077
        %v1110 = vpack.c.b16 %v1078, %v1078
        %v1111 = vpack.c.b16 %v1079, %v1079
        %v1112 = vpack.c.b16 %v1080, %v1080
        %v1113 = vpack.c.b16 %v1081, %v1081
        %v1114 = vpack.c.b16 %v1082, %v1082
        %v1115 = vpack.c.b16 %v1083, %v1083
        %v1116 = vpack.c.b16 %v1084, %v1084
        %v1117 = vpack.c.b16 %v1085, %v1085
        %v1118 = vpack.c.b16 %v1086, %v1086
        %v1119 = vpack.c.b16 %v1087, %v1087
        %v1120 = vpack.c.b16 %v1088, %v1088
        %v1121 = vpack.c.b16 %v1089, %v1089
        %v1122 = vpack.c.b16 %v1090, %v1090
        %v1123 = vpack.c.b16 %v1091, %v1091
        %v1124 = vpack.c.b16 %v1092, %v1092
        %v1125 = vpack.c.b16 %v1093, %v1093
        %v1126 = vpack.c.b16 %v1094, %v1094
        %v1127 = vpack.c.b16 %v1095, %v1095
        %v1128 = vpack.c.b16 %v1096, %v1096
        %v1129 = vpack.c.b16 %v1097, %v1097
        %v1130 = vpack.c.b16 %v1098, %v1098
        %1163 = vst [vmem:[%s357] sm:$0xf] %v1099
        %1164 = vst [vmem:[%s357 + $0x4] sm:$0xf] %v1100
        %1165 = vst [vmem:[%s357 + $0x8] sm:$0xf] %v1101
        %1166 = vst [vmem:[%s357 + $0xc] sm:$0xf] %v1102
        %1167 = vst [vmem:[%s357 + $0x10] sm:$0xf] %v1103
        %1168 = vst [vmem:[%s357 + $0x14] sm:$0xf] %v1104
        %1169 = vst [vmem:[%s357 + $0x18] sm:$0xf] %v1105
        %1170 = vst [vmem:[%s357 + $0x1c] sm:$0xf] %v1106
        %1171 = vst [vmem:[%s357 + $0x20] sm:$0xf] %v1107
        %1172 = vst [vmem:[%s357 + $0x24] sm:$0xf] %v1108
        %1173 = vst [vmem:[%s357 + $0x28] sm:$0xf] %v1109
        %1174 = vst [vmem:[%s357 + $0x2c] sm:$0xf] %v1110
        %1175 = vst [vmem:[%s357 + $0x30] sm:$0xf] %v1111
        %1176 = vst [vmem:[%s357 + $0x34] sm:$0xf] %v1112
        %1177 = vst [vmem:[%s357 + $0x38] sm:$0xf] %v1113
        %1178 = vst [vmem:[%s357 + $0x3c] sm:$0xf] %v1114
        %1179 = vst [vmem:[%s357 + $0x40] sm:$0xf] %v1115
        %1180 = vst [vmem:[%s357 + $0x44] sm:$0xf] %v1116
        %1181 = vst [vmem:[%s357 + $0x48] sm:$0xf] %v1117
        %1182 = vst [vmem:[%s357 + $0x4c] sm:$0xf] %v1118
        %1183 = vst [vmem:[%s357 + $0x50] sm:$0xf] %v1119
        %1184 = vst [vmem:[%s357 + $0x54] sm:$0xf] %v1120
        %1185 = vst [vmem:[%s357 + $0x58] sm:$0xf] %v1121
        %1186 = vst [vmem:[%s357 + $0x5c] sm:$0xf] %v1122
        %1187 = vst [vmem:[%s357 + $0x60] sm:$0xf] %v1123
        %1188 = vst [vmem:[%s357 + $0x64] sm:$0xf] %v1124
        %1189 = vst [vmem:[%s357 + $0x68] sm:$0xf] %v1125
        %1190 = vst [vmem:[%s357 + $0x6c] sm:$0xf] %v1126
        %1191 = vst [vmem:[%s357 + $0x70] sm:$0xf] %v1127
        %1192 = vst [vmem:[%s357 + $0x74] sm:$0xf] %v1128
        %1193 = vst [vmem:[%s357 + $0x78] sm:$0xf] %v1129
        %1194 = vst [vmem:[%s357 + $0x7c] sm:$0xf] %v1130
      $region48: #{densenet_forward.30} parent=39 // pred_fallthru
        _
      %s1195 = smul.u32 32, %s21
      %p1196 = scmp.lt.s32.totalorder %s1195, 63
      %s1197 = scalar_select %p1196, %s1195, 63
      %p1198 = scmp.lt.s32.totalorder %s22, 0
      %s1199 = scalar_select %p1198, %s22, 0
      %s1200 = sadd.s32 %s1199, %s1197
      %s1201 = smul.addr %s1200, 4
      %s1202 = scalar_lea.vmem %s5, %s1201
      // Predicated region
      $region49: #{densenet_forward.30} parent=39 // pred_check
        %p1203 = pneg %p189
      $region50: #{densenet_forward.30} parent=39 // pred_check_branch
        %1205 = sbr.rel (%p1203) target = $region52
      $region51: #{densenet_forward.30} parent=39 // pred_region
        %s1206 = smul.u32 32, %s21
      $region52: #{densenet_forward.30} parent=39 // pred_fallthru
        _
    $region40: #{densenet_forward.30} parent=5 // pred_fallthru
      _
    %p1207 = scmp.le.s32.totalorder 2, %s11
    // Predicated region
    $region53: #{densenet_forward.30} parent=5 // pred_check
      %p1208 = pneg %p1207
    $region54: #{densenet_forward.30} parent=5 // pred_check_branch
      %1210 = sbr.rel (%p1208) target = $region56
    $region55: #{densenet_forward.30} parent=5 // pred_region
      %s1211 = ssub.s32 %s11, 2
      // Predicated region
      $region57: #{densenet_forward.30} parent=55 // pred_check
        %p1212 = pneg %p195
      $region58: #{densenet_forward.30} parent=55 // pred_check_branch
        %1214 = sbr.rel (%p1212) target = $region60
      $region59: #{densenet_forward.30} parent=55 // pred_region
        %s1215 = smul.u32 32, %s24
        %p1216 = scmp.lt.s32.totalorder %s1215, 63
        %s1217 = scalar_select %p1216, %s1215, 63
        %p1218 = scmp.lt.s32.totalorder %s25, 0
        %s1219 = scalar_select %p1218, %s25, 0
        %s1220 = sadd.s32 %s1219, %s1217
        %s1221 = smul.addr %s1220, 4
        %s1222 = scalar_lea.vmem %s5, %s1221
      $region60: #{densenet_forward.30} parent=55 // pred_fallthru
        _
    $region56: #{densenet_forward.30} parent=5 // pred_fallthru
      _
  $region6: #{densenet_forward.30} parent=0 // loop_footer
    %s15 = sadd.s32 1, %s11
  $region7: #{densenet_forward.30} parent=0 // loop_footer_branch
    %10 = sbr.rel target = $region3
  $region8: #{densenet_forward.30} parent=0 // loop_exit
    _

// kernel: densenet_forward.34
$region0: #{densenet_forward.34}
  #allocation0 [shape = 'u32[]', space=smem, size = 0x4, offset = 0x4, fixed_abs, tag = 'smem constant byte address 0x4 - core index']
  #allocation1 [shape = 'u32[144,128]{1,0:T(1,128)}', space=vmem, size = 0x12000, scoped, tag = 'internal scratch']
  #allocation2 [shape = 'f32[1,16]{1,0:T(1,128)}', space=vmem, size = 0x200, scoped, tag = 'scratch operand']
  #allocation3 [shape = 'f32[1,16]{1,0:T(1,128)}', space=vmem, size = 0x200, scoped, tag = 'scratch operand']
  %s0 = inlined_call_operand.vmem [shape: bf16[128,16], index: 0, kind: input, shape index: {}]
  %s1 = inlined_call_operand.vmem [shape: f32[1,16], index: 1, kind: input, shape index: {}]
  %s2 = inlined_call_operand.vmem [shape: f32[1,16], index: 2, kind: input, shape index: {}]
  %s3 = inlined_call_operand.vmem [shape: f32[1,16], index: 3, kind: output, shape index: {0}]
  %s4 = inlined_call_operand.vmem [shape: f32[1,16], index: 4, kind: output, shape index: {1}]
  %5 = xla_tuple %s3, %s4
  %s6 = sld [smem:[#allocation0]]
  $region38: #{densenet_forward.34} parent=0
    _
  %s8 = ssub.s32 1, %s6
  %s9 = scalar_select 0, %s8, %s6
  // Predicated region
  $region2: #{densenet_forward.34} parent=0 // pred_check
    _
  $region3: #{densenet_forward.34} parent=0 // pred_check_branch
    %11 = sbr.rel (0) target = $region5
  $region4: #{densenet_forward.34} parent=0 // pred_region
    _
  $region5: #{densenet_forward.34} parent=0 // pred_fallthru
    _
  // Predicated region
  $region6: #{densenet_forward.34} parent=0 // pred_check
    _
  $region7: #{densenet_forward.34} parent=0 // pred_check_branch
    %13 = sbr.rel (0) target = $region9
  $region8: #{densenet_forward.34} parent=0 // pred_region
    _
  $region9: #{densenet_forward.34} parent=0 // pred_fallthru
    _
  // Predicated region
  $region10: #{densenet_forward.34} parent=0 // pred_check
    _
  $region11: #{densenet_forward.34} parent=0 // pred_check_branch
    %15 = sbr.rel (0) target = $region13
  $region12: #{densenet_forward.34} parent=0 // pred_region
    _
  $region13: #{densenet_forward.34} parent=0 // pred_fallthru
    _
  %p16 = scmp.eq.s32.totalorder 0, 0
  // Predicated region
  $region14: #{densenet_forward.34} parent=0 // pred_check
    %p17 = pneg %p16
  $region15: #{densenet_forward.34} parent=0 // pred_check_branch
    %19 = sbr.rel (%p17) target = $region17
  $region16: #{densenet_forward.34} parent=0 // pred_region
    %vm20 = vcmask 122880
    %21 = vst.msk [vmem:[#allocation2] sm:$0x1] %vm20, 0.0
    %22 = vst.msk [vmem:[#allocation3] sm:$0x1] %vm20, 0.0
  $region17: #{densenet_forward.34} parent=0 // pred_fallthru
    _
  %v23 = vld [vmem:[%s0] sm:$0xf]
  %v24 = vld [vmem:[%s0 + $0x4] sm:$0xf]
  %v25 = vld [vmem:[%s0 + $0x8] sm:$0xf]
  %v26 = vld [vmem:[%s0 + $0xc] sm:$0xf]
  %v27 = vld [vmem:[%s0 + $0x10] sm:$0xf]
  %v28 = vld [vmem:[%s0 + $0x14] sm:$0xf]
  %v29 = vld [vmem:[%s0 + $0x18] sm:$0xf]
  %v30 = vld [vmem:[%s0 + $0x1c] sm:$0xf]
  %v31 = vld [vmem:[%s0 + $0x20] sm:$0xf]
  %v32 = vld [vmem:[%s0 + $0x24] sm:$0xf]
  %v33 = vld [vmem:[%s0 + $0x28] sm:$0xf]
  %v34 = vld [vmem:[%s0 + $0x2c] sm:$0xf]
  %v35 = vld [vmem:[%s0 + $0x30] sm:$0xf]
  %v36 = vld [vmem:[%s0 + $0x34] sm:$0xf]
  %v37 = vld [vmem:[%s0 + $0x38] sm:$0xf]
  %v38 = vld [vmem:[%s0 + $0x3c] sm:$0xf]
  %v39 = vunpack.c.l.bf16 %v23
  %v40 = vunpack.c.l.bf16 %v24
  %v41 = vunpack.c.l.bf16 %v25
  %v42 = vunpack.c.l.bf16 %v26
  %v43 = vunpack.c.l.bf16 %v27
  %v44 = vunpack.c.l.bf16 %v28
  %v45 = vunpack.c.l.bf16 %v29
  %v46 = vunpack.c.l.bf16 %v30
  %v47 = vunpack.c.l.bf16 %v31
  %v48 = vunpack.c.l.bf16 %v32
  %v49 = vunpack.c.l.bf16 %v33
  %v50 = vunpack.c.l.bf16 %v34
  %v51 = vunpack.c.l.bf16 %v35
  %v52 = vunpack.c.l.bf16 %v36
  %v53 = vunpack.c.l.bf16 %v37
  %v54 = vunpack.c.l.bf16 %v38
  %v55 = vld [vmem:[#allocation2] sm:$0x1]
  %vm56 = vcmask 130048
  %v57 = vsel %vm56, %v39, 0.0
  %v58 = vsel %vm56, %v40, 0.0
  %v59 = vadd.f32 %v57, %v58
  %v60 = vsel %vm56, %v41, 0.0
  %v61 = vadd.f32 %v59, %v60
  %v62 = vsel %vm56, %v42, 0.0
  %v63 = vadd.f32 %v61, %v62
  %v64 = vsel %vm56, %v43, 0.0
  %v65 = vadd.f32 %v63, %v64
  %v66 = vsel %vm56, %v44, 0.0
  %v67 = vadd.f32 %v65, %v66
  %v68 = vsel %vm56, %v45, 0.0
  %v69 = vadd.f32 %v67, %v68
  %v70 = vsel %vm56, %v46, 0.0
  %v71 = vadd.f32 %v69, %v70
  %v72 = vsel %vm56, %v47, 0.0
  %v73 = vadd.f32 %v71, %v72
  %v74 = vsel %vm56, %v48, 0.0
  %v75 = vadd.f32 %v73, %v74
  %v76 = vsel %vm56, %v49, 0.0
  %v77 = vadd.f32 %v75, %v76
  %v78 = vsel %vm56, %v50, 0.0
  %v79 = vadd.f32 %v77, %v78
  %v80 = vsel %vm56, %v51, 0.0
  %v81 = vadd.f32 %v79, %v80
  %v82 = vsel %vm56, %v52, 0.0
  %v83 = vadd.f32 %v81, %v82
  %v84 = vsel %vm56, %v53, 0.0
  %v85 = vadd.f32 %v83, %v84
  %v86 = vsel %vm56, %v54, 0.0
  %v87 = vadd.f32 %v85, %v86
  %v88 = vrot.slane %v87, 4
  %v89 = vadd.f32 %v87, %v88
  %v90 = vrot.slane %v89, 2
  %v91 = vadd.f32 %v89, %v90
  %v92 = vrot.slane %v91, 1
  %v93 = vadd.f32 %v91, %v92
  %v94 = vadd.f32 %v55, %v93
  %vm95 = vcmask 122880
  %96 = vst.msk [vmem:[#allocation2] sm:$0x1] %vm95, %v94
  %v97 = vld [vmem:[#allocation3] sm:$0x1]
  %v98 = vmul.f32 %v39, %v39
  %v99 = vmul.f32 %v40, %v40
  %v100 = vmul.f32 %v41, %v41
  %v101 = vmul.f32 %v42, %v42
  %v102 = vmul.f32 %v43, %v43
  %v103 = vmul.f32 %v44, %v44
  %v104 = vmul.f32 %v45, %v45
  %v105 = vmul.f32 %v46, %v46
  %v106 = vmul.f32 %v47, %v47
  %v107 = vmul.f32 %v48, %v48
  %v108 = vmul.f32 %v49, %v49
  %v109 = vmul.f32 %v50, %v50
  %v110 = vmul.f32 %v51, %v51
  %v111 = vmul.f32 %v52, %v52
  %v112 = vmul.f32 %v53, %v53
  %v113 = vmul.f32 %v54, %v54
  %v114 = vsel %vm56, %v98, 0.0
  %v115 = vsel %vm56, %v99, 0.0
  %v116 = vadd.f32 %v114, %v115
  %v117 = vsel %vm56, %v100, 0.0
  %v118 = vadd.f32 %v116, %v117
  %v119 = vsel %vm56, %v101, 0.0
  %v120 = vadd.f32 %v118, %v119
  %v121 = vsel %vm56, %v102, 0.0
  %v122 = vadd.f32 %v120, %v121
  %v123 = vsel %vm56, %v103, 0.0
  %v124 = vadd.f32 %v122, %v123
  %v125 = vsel %vm56, %v104, 0.0
  %v126 = vadd.f32 %v124, %v125
  %v127 = vsel %vm56, %v105, 0.0
  %v128 = vadd.f32 %v126, %v127
  %v129 = vsel %vm56, %v106, 0.0
  %v130 = vadd.f32 %v128, %v129
  %v131 = vsel %vm56, %v107, 0.0
  %v132 = vadd.f32 %v130, %v131
  %v133 = vsel %vm56, %v108, 0.0
  %v134 = vadd.f32 %v132, %v133
  %v135 = vsel %vm56, %v109, 0.0
  %v136 = vadd.f32 %v134, %v135
  %v137 = vsel %vm56, %v110, 0.0
  %v138 = vadd.f32 %v136, %v137
  %v139 = vsel %vm56, %v111, 0.0
  %v140 = vadd.f32 %v138, %v139
  %v141 = vsel %vm56, %v112, 0.0
  %v142 = vadd.f32 %v140, %v141
  %v143 = vsel %vm56, %v113, 0.0
  %v144 = vadd.f32 %v142, %v143
  %v145 = vrot.slane %v144, 4
  %v146 = vadd.f32 %v144, %v145
  %v147 = vrot.slane %v146, 2
  %v148 = vadd.f32 %v146, %v147
  %v149 = vrot.slane %v148, 1
  %v150 = vadd.f32 %v148, %v149
  %v151 = vadd.f32 %v97, %v150
  %152 = vst.msk [vmem:[#allocation3] sm:$0x1] %vm95, %v151
  // Predicated region
  $region18: #{densenet_forward.34} parent=0 // pred_check
    %p153 = pneg %p16
  $region19: #{densenet_forward.34} parent=0 // pred_check_branch
    %155 = sbr.rel (%p153) target = $region21
  $region20: #{densenet_forward.34} parent=0 // pred_region
    %v156 = vld [vmem:[#allocation2] sm:$0x1]
    %v157 = vmul.f32 %v156, 0.0078125
    %v158 = vld [vmem:[#allocation3] sm:$0x1]
    %v159 = vmul.f32 %v158, 0.0078125
    %v160 = vmul.f32 %v157, %v157
    %v161 = vsub.f32 %v159, %v160
    %v162 = vmax.f32 %v161, 0.0
    %v163 = vadd.f32 %v162, 1e-05
    %v164 = vrsqrt.pop %v163
    %v165 = vld [vmem:[%s1] sm:$0x1]
    %v166 = vmul.f32 %v165, %v164
    %167 = vst.msk [vmem:[%s3] sm:$0x1] %vm95, %v166
    %v168 = vld [vmem:[%s2] sm:$0x1]
    %v169 = vmul.f32 %v157, %v166
    %v170 = vsub.f32 %v168, %v169
    %171 = vst.msk [vmem:[%s4] sm:$0x1] %vm95, %v170
  $region21: #{densenet_forward.34} parent=0 // pred_fallthru
    _
  // Predicated region
  $region22: #{densenet_forward.34} parent=0 // pred_check
    _
  $region23: #{densenet_forward.34} parent=0 // pred_check_branch
    %173 = sbr.rel (0) target = $region25
  $region24: #{densenet_forward.34} parent=0 // pred_region
    _
  $region25: #{densenet_forward.34} parent=0 // pred_fallthru
    _
  // Predicated region
  $region26: #{densenet_forward.34} parent=0 // pred_check
    _
  $region27: #{densenet_forward.34} parent=0 // pred_check_branch
    %175 = sbr.rel (0) target = $region29
  $region28: #{densenet_forward.34} parent=0 // pred_region
    _
  $region29: #{densenet_forward.34} parent=0 // pred_fallthru
    _
  // Predicated region
  $region30: #{densenet_forward.34} parent=0 // pred_check
    _
  $region31: #{densenet_forward.34} parent=0 // pred_check_branch
    %177 = sbr.rel (0) target = $region33
  $region32: #{densenet_forward.34} parent=0 // pred_region
    _
  $region33: #{densenet_forward.34} parent=0 // pred_fallthru
    _
  // Predicated region
  $region34: #{densenet_forward.34} parent=0 // pred_check
    _
  $region35: #{densenet_forward.34} parent=0 // pred_check_branch
    %179 = sbr.rel (0) target = $region37
  $region36: #{densenet_forward.34} parent=0 // pred_region
    _
  $region37: #{densenet_forward.34} parent=0 // pred_fallthru
    _

// kernel: densenet_forward.35
$region0: #{densenet_forward.35}
  #allocation0 [shape = 'u32[]', space=smem, size = 0x4, offset = 0x4, fixed_abs, tag = 'smem constant byte address 0x4 - core index']
  #allocation1 [shape = 'u32[144,128]{1,0:T(1,128)}', space=vmem, size = 0x12000, scoped, tag = 'internal scratch']
  #allocation2 [shape = 'f32[128,128]{1,0:T(8,128)}', space=vmem, size = 0x10000, scoped, tag = 'scratch operand']
  %s0 = inlined_call_operand.vmem [shape: bf16[128,16], index: 0, kind: input, shape index: {}]
  %s1 = inlined_call_operand.vmem [shape: bf16[16,128], index: 1, kind: input, shape index: {}]
  %s2 = inlined_call_operand.vmem [shape: f32[1,16], index: 2, kind: input, shape index: {}]
  %s3 = inlined_call_operand.vmem [shape: f32[1,16], index: 3, kind: input, shape index: {}]
  %s4 = inlined_call_operand.vmem [shape: f32[1,128], index: 4, kind: input, shape index: {}]
  %s5 = inlined_call_operand.vmem [shape: bf16[128,128], index: 5, kind: output, shape index: {}]
  %s6 = sld [smem:[#allocation0]]
  $region38: #{densenet_forward.35} parent=0
    _
  %s8 = ssub.s32 1, %s6
  %s9 = scalar_select 0, %s8, %s6
  // Predicated region
  $region2: #{densenet_forward.35} parent=0 // pred_check
    _
  $region3: #{densenet_forward.35} parent=0 // pred_check_branch
    %11 = sbr.rel (0) target = $region5
  $region4: #{densenet_forward.35} parent=0 // pred_region
    _
  $region5: #{densenet_forward.35} parent=0 // pred_fallthru
    _
  // Predicated region
  $region6: #{densenet_forward.35} parent=0 // pred_check
    _
  $region7: #{densenet_forward.35} parent=0 // pred_check_branch
    %13 = sbr.rel (0) target = $region9
  $region8: #{densenet_forward.35} parent=0 // pred_region
    _
  $region9: #{densenet_forward.35} parent=0 // pred_fallthru
    _
  // Predicated region
  $region10: #{densenet_forward.35} parent=0 // pred_check
    _
  $region11: #{densenet_forward.35} parent=0 // pred_check_branch
    %15 = sbr.rel (0) target = $region13
  $region12: #{densenet_forward.35} parent=0 // pred_region
    _
  $region13: #{densenet_forward.35} parent=0 // pred_fallthru
    _
  // Predicated region
  $region14: #{densenet_forward.35} parent=0 // pred_check
    _
  $region15: #{densenet_forward.35} parent=0 // pred_check_branch
    %17 = sbr.rel (0) target = $region17
  $region16: #{densenet_forward.35} parent=0 // pred_region
    _
  $region17: #{densenet_forward.35} parent=0 // pred_fallthru
    _
  // Predicated region
  $region18: #{densenet_forward.35} parent=0 // pred_check
    _
  $region19: #{densenet_forward.35} parent=0 // pred_check_branch
    %19 = sbr.rel (0) target = $region21
  $region20: #{densenet_forward.35} parent=0 // pred_region
    _
  $region21: #{densenet_forward.35} parent=0 // pred_fallthru
    _
  %p21 = scmp.eq.s32.totalorder 0, 0
  // Predicated region
  $region22: #{densenet_forward.35} parent=0 // pred_check
    %p22 = pneg %p21
  $region23: #{densenet_forward.35} parent=0 // pred_check_branch
    %24 = sbr.rel (%p22) target = $region25
  $region24: #{densenet_forward.35} parent=0 // pred_region
    %25 = vst [vmem:[#allocation2] sm:$0xff] 0.0
    %26 = vst [vmem:[#allocation2 + $0x8] sm:$0xff] 0.0
    %27 = vst [vmem:[#allocation2 + $0x10] sm:$0xff] 0.0
    %28 = vst [vmem:[#allocation2 + $0x18] sm:$0xff] 0.0
    %29 = vst [vmem:[#allocation2 + $0x20] sm:$0xff] 0.0
    %30 = vst [vmem:[#allocation2 + $0x28] sm:$0xff] 0.0
    %31 = vst [vmem:[#allocation2 + $0x30] sm:$0xff] 0.0
    %32 = vst [vmem:[#allocation2 + $0x38] sm:$0xff] 0.0
    %33 = vst [vmem:[#allocation2 + $0x40] sm:$0xff] 0.0
    %34 = vst [vmem:[#allocation2 + $0x48] sm:$0xff] 0.0
    %35 = vst [vmem:[#allocation2 + $0x50] sm:$0xff] 0.0
    %36 = vst [vmem:[#allocation2 + $0x58] sm:$0xff] 0.0
    %37 = vst [vmem:[#allocation2 + $0x60] sm:$0xff] 0.0
    %38 = vst [vmem:[#allocation2 + $0x68] sm:$0xff] 0.0
    %39 = vst [vmem:[#allocation2 + $0x70] sm:$0xff] 0.0
    %40 = vst [vmem:[#allocation2 + $0x78] sm:$0xff] 0.0
  $region25: #{densenet_forward.35} parent=0 // pred_fallthru
    _
  %v41 = vld [vmem:[%s0] sm:$0xf]
  %v42 = vld [vmem:[%s0 + $0x4] sm:$0xf]
  %v43 = vld [vmem:[%s0 + $0x8] sm:$0xf]
  %v44 = vld [vmem:[%s0 + $0xc] sm:$0xf]
  %v45 = vld [vmem:[%s0 + $0x10] sm:$0xf]
  %v46 = vld [vmem:[%s0 + $0x14] sm:$0xf]
  %v47 = vld [vmem:[%s0 + $0x18] sm:$0xf]
  %v48 = vld [vmem:[%s0 + $0x1c] sm:$0xf]
  %v49 = vld [vmem:[%s0 + $0x20] sm:$0xf]
  %v50 = vld [vmem:[%s0 + $0x24] sm:$0xf]
  %v51 = vld [vmem:[%s0 + $0x28] sm:$0xf]
  %v52 = vld [vmem:[%s0 + $0x2c] sm:$0xf]
  %v53 = vld [vmem:[%s0 + $0x30] sm:$0xf]
  %v54 = vld [vmem:[%s0 + $0x34] sm:$0xf]
  %v55 = vld [vmem:[%s0 + $0x38] sm:$0xf]
  %v56 = vld [vmem:[%s0 + $0x3c] sm:$0xf]
  %v57 = vunpack.c.l.bf16 %v41
  %v58 = vunpack.c.l.bf16 %v42
  %v59 = vunpack.c.l.bf16 %v43
  %v60 = vunpack.c.l.bf16 %v44
  %v61 = vunpack.c.l.bf16 %v45
  %v62 = vunpack.c.l.bf16 %v46
  %v63 = vunpack.c.l.bf16 %v47
  %v64 = vunpack.c.l.bf16 %v48
  %v65 = vunpack.c.l.bf16 %v49
  %v66 = vunpack.c.l.bf16 %v50
  %v67 = vunpack.c.l.bf16 %v51
  %v68 = vunpack.c.l.bf16 %v52
  %v69 = vunpack.c.l.bf16 %v53
  %v70 = vunpack.c.l.bf16 %v54
  %v71 = vunpack.c.l.bf16 %v55
  %v72 = vunpack.c.l.bf16 %v56
  %v73 = vld [vmem:[%s2] sm:$0x1]
  %v75 = vlaneseq
  %v76 = vshrl.u32 %v75, 7
  %v77 = vsub.s32 0, %v76
  %v78 = vrot.slane %v73, %v77
  %v80 = vmul.f32 %v57, %v78
  %v81 = vmul.f32 %v58, %v78
  %v82 = vmul.f32 %v59, %v78
  %v83 = vmul.f32 %v60, %v78
  %v84 = vmul.f32 %v61, %v78
  %v85 = vmul.f32 %v62, %v78
  %v86 = vmul.f32 %v63, %v78
  %v87 = vmul.f32 %v64, %v78
  %v88 = vmul.f32 %v65, %v78
  %v89 = vmul.f32 %v66, %v78
  %v90 = vmul.f32 %v67, %v78
  %v91 = vmul.f32 %v68, %v78
  %v92 = vmul.f32 %v69, %v78
  %v93 = vmul.f32 %v70, %v78
  %v94 = vmul.f32 %v71, %v78
  %v95 = vmul.f32 %v72, %v78
  %v96 = vld [vmem:[%s3] sm:$0x1]
  %v98 = vlaneseq
  %v99 = vshrl.u32 %v98, 7
  %v100 = vsub.s32 0, %v99
  %v101 = vrot.slane %v96, %v100
  %v103 = vadd.f32 %v80, %v101
  %v104 = vadd.f32 %v81, %v101
  %v105 = vadd.f32 %v82, %v101
  %v106 = vadd.f32 %v83, %v101
  %v107 = vadd.f32 %v84, %v101
  %v108 = vadd.f32 %v85, %v101
  %v109 = vadd.f32 %v86, %v101
  %v110 = vadd.f32 %v87, %v101
  %v111 = vadd.f32 %v88, %v101
  %v112 = vadd.f32 %v89, %v101
  %v113 = vadd.f32 %v90, %v101
  %v114 = vadd.f32 %v91, %v101
  %v115 = vadd.f32 %v92, %v101
  %v116 = vadd.f32 %v93, %v101
  %v117 = vadd.f32 %v94, %v101
  %v118 = vadd.f32 %v95, %v101
  %v119 = vmax.f32 %v103, 0.0
  %v120 = vmax.f32 %v104, 0.0
  %v121 = vmax.f32 %v105, 0.0
  %v122 = vmax.f32 %v106, 0.0
  %v123 = vmax.f32 %v107, 0.0
  %v124 = vmax.f32 %v108, 0.0
  %v125 = vmax.f32 %v109, 0.0
  %v126 = vmax.f32 %v110, 0.0
  %v127 = vmax.f32 %v111, 0.0
  %v128 = vmax.f32 %v112, 0.0
  %v129 = vmax.f32 %v113, 0.0
  %v130 = vmax.f32 %v114, 0.0
  %v131 = vmax.f32 %v115, 0.0
  %v132 = vmax.f32 %v116, 0.0
  %v133 = vmax.f32 %v117, 0.0
  %v134 = vmax.f32 %v118, 0.0
  %v135 = vpack.c.bf16 %v120, %v119
  %v136 = vpack.c.bf16 %v122, %v121
  %v137 = vpack.c.bf16 %v124, %v123
  %v138 = vpack.c.bf16 %v126, %v125
  %v139 = vpack.c.bf16 %v128, %v127
  %v140 = vpack.c.bf16 %v130, %v129
  %v141 = vpack.c.bf16 %v132, %v131
  %v142 = vpack.c.bf16 %v134, %v133
  %v143 = vld [vmem:[#allocation2] sm:$0xff]
  %v144 = vld [vmem:[#allocation2 + $0x8] sm:$0xff]
  %v145 = vld [vmem:[#allocation2 + $0x10] sm:$0xff]
  %v146 = vld [vmem:[#allocation2 + $0x18] sm:$0xff]
  %v147 = vld [vmem:[#allocation2 + $0x20] sm:$0xff]
  %v148 = vld [vmem:[#allocation2 + $0x28] sm:$0xff]
  %v149 = vld [vmem:[#allocation2 + $0x30] sm:$0xff]
  %v150 = vld [vmem:[#allocation2 + $0x38] sm:$0xff]
  %v151 = vld [vmem:[#allocation2 + $0x40] sm:$0xff]
  %v152 = vld [vmem:[#allocation2 + $0x48] sm:$0xff]
  %v153 = vld [vmem:[#allocation2 + $0x50] sm:$0xff]
  %v154 = vld [vmem:[#allocation2 + $0x58] sm:$0xff]
  %v155 = vld [vmem:[#allocation2 + $0x60] sm:$0xff]
  %v156 = vld [vmem:[#allocation2 + $0x68] sm:$0xff]
  %v157 = vld [vmem:[#allocation2 + $0x70] sm:$0xff]
  %v158 = vld [vmem:[#allocation2 + $0x78] sm:$0xff]
  %v159 = vld [vmem:[%s1] sm:$0xf]
  %v160 = vld [vmem:[%s1 + $0x4] sm:$0xf]
  %v163 = vunpack.c.l.b16 %v159
  %v164 = vunpack.c.l.b16 %v160
  %v165 = vpack.c.b16 %v164, %v163
  %vm167 = vcmask 130048
  %v169 = vsel %vm167, %v135, 0
  %v172 = vsel %vm167, %v136, 0
  %v175 = vsel %vm167, %v137, 0
  %v178 = vsel %vm167, %v138, 0
  %v181 = vsel %vm167, %v139, 0
  %v184 = vsel %vm167, %v140, 0
  %v187 = vsel %vm167, %v141, 0
  %v190 = vsel %vm167, %v142, 0
  %192 = vmatprep.subr.bf16.mxu0 0
  %193 = vmatpush1.bf16.msra.mxu0 %v165
  %194 = vmatprep.subr.bf16.mxu0 0
  %195 = vmatpush1.bf16.msra.mxu0 0
  %196 = vmatprep.subr.bf16.mxu0 0
  %197 = vmatpush1.bf16.msra.mxu0 0
  %198 = vmatprep.subr.bf16.mxu0 0
  %199 = vmatpush1.bf16.msra.mxu0 0
  %200 = vmatprep.subr.bf16.mxu0 0
  %201 = vmatpush1.bf16.msra.mxu0 0
  %202 = vmatprep.subr.bf16.mxu0 0
  %203 = vmatpush1.bf16.msra.mxu0 0
  %204 = vmatprep.subr.bf16.mxu0 0
  %205 = vmatpush1.bf16.msra.mxu0 0
  %206 = vmatprep.subr.bf16.mxu0 0
  %207 = vmatpush1.bf16.msra.mxu0 0
  %208 = vmatprep.subr.bf16.mxu0 0
  %209 = vmatpush1.bf16.msra.mxu0 0
  %210 = vmatprep.subr.bf16.mxu0 0
  %211 = vmatpush1.bf16.msra.mxu0 0
  %212 = vmatprep.subr.bf16.mxu0 0
  %213 = vmatpush1.bf16.msra.mxu0 0
  %214 = vmatprep.subr.bf16.mxu0 0
  %215 = vmatpush1.bf16.msra.mxu0 0
  %216 = vmatprep.subr.bf16.mxu0 0
  %217 = vmatpush1.bf16.msra.mxu0 0
  %218 = vmatprep.subr.bf16.mxu0 0
  %219 = vmatpush1.bf16.msra.mxu0 0
  %220 = vmatprep.subr.bf16.mxu0 0
  %221 = vmatpush1.bf16.msra.mxu0 0
  %222 = vmatprep.subr.bf16.mxu0 0
  %223 = vmatpush1.bf16.msra.mxu0 0
  %224 = vmatprep.mubr.bf16.mxu0 0
  %225 = vmatmul.mubr.bf16.gmra.mrb[0].mxu0 %v169
  %v226 = vpop.f32.mrb[0].mxu0
  %v227 = vadd.f32 0.0, %v226
  %v228 = vpop.f32.mrb[0].mxu0
  %v229 = vpop.f32.mrb[0].mxu0
  %v230 = vadd.f32 0.0, %v229
  %v231 = vpop.f32.mrb[0].mxu0
  %232 = vmatprep.mubr.bf16.mxu0 0
  %233 = vmatmul.mubr.bf16.gmra.mrb[0].mxu0 %v172
  %v234 = vpop.f32.mrb[0].mxu0
  %v235 = vadd.f32 0.0, %v234
  %v236 = vpop.f32.mrb[0].mxu0
  %v237 = vpop.f32.mrb[0].mxu0
  %v238 = vadd.f32 0.0, %v237
  %v239 = vpop.f32.mrb[0].mxu0
  %240 = vmatprep.mubr.bf16.mxu0 0
  %241 = vmatmul.mubr.bf16.gmra.mrb[0].mxu0 %v175
  %v242 = vpop.f32.mrb[0].mxu0
  %v243 = vadd.f32 0.0, %v242
  %v244 = vpop.f32.mrb[0].mxu0
  %v245 = vpop.f32.mrb[0].mxu0
  %v246 = vadd.f32 0.0, %v245
  %v247 = vpop.f32.mrb[0].mxu0
  %248 = vmatprep.mubr.bf16.mxu0 0
  %249 = vmatmul.mubr.bf16.gmra.mrb[0].mxu0 %v178
  %v250 = vpop.f32.mrb[0].mxu0
  %v251 = vadd.f32 0.0, %v250
  %v252 = vpop.f32.mrb[0].mxu0
  %v253 = vpop.f32.mrb[0].mxu0
  %v254 = vadd.f32 0.0, %v253
  %v255 = vpop.f32.mrb[0].mxu0
  %256 = vmatprep.mubr.bf16.mxu0 0
  %257 = vmatmul.mubr.bf16.gmra.mrb[0].mxu0 %v181
  %v258 = vpop.f32.mrb[0].mxu0
  %v259 = vadd.f32 0.0, %v258
  %v260 = vpop.f32.mrb[0].mxu0
  %v261 = vpop.f32.mrb[0].mxu0
  %v262 = vadd.f32 0.0, %v261
  %v263 = vpop.f32.mrb[0].mxu0
  %264 = vmatprep.mubr.bf16.mxu0 0
  %265 = vmatmul.mubr.bf16.gmra.mrb[0].mxu0 %v184
  %v266 = vpop.f32.mrb[0].mxu0
  %v267 = vadd.f32 0.0, %v266
  %v268 = vpop.f32.mrb[0].mxu0
  %v269 = vpop.f32.mrb[0].mxu0
  %v270 = vadd.f32 0.0, %v269
  %v271 = vpop.f32.mrb[0].mxu0
  %272 = vmatprep.mubr.bf16.mxu0 0
  %273 = vmatmul.mubr.bf16.gmra.mrb[0].mxu0 %v187
  %v274 = vpop.f32.mrb[0].mxu0
  %v275 = vadd.f32 0.0, %v274
  %v276 = vpop.f32.mrb[0].mxu0
  %v277 = vpop.f32.mrb[0].mxu0
  %v278 = vadd.f32 0.0, %v277
  %v279 = vpop.f32.mrb[0].mxu0
  %280 = vmatprep.mubr.bf16.mxu0 0
  %281 = vmatmul.mubr.bf16.gmra.mrb[0].mxu0 %v190
  %v282 = vpop.f32.mrb[0].mxu0
  %v283 = vadd.f32 0.0, %v282
  %v284 = vpop.f32.mrb[0].mxu0
  %v285 = vpop.f32.mrb[0].mxu0
  %v286 = vadd.f32 0.0, %v285
  %v287 = vpop.f32.mrb[0].mxu0
  %288 = vdwg.mxu0
  %v289 = vadd.f32 %v143, %v227
  %v290 = vadd.f32 %v144, %v230
  %v291 = vadd.f32 %v145, %v235
  %v292 = vadd.f32 %v146, %v238
  %v293 = vadd.f32 %v147, %v243
  %v294 = vadd.f32 %v148, %v246
  %v295 = vadd.f32 %v149, %v251
  %v296 = vadd.f32 %v150, %v254
  %v297 = vadd.f32 %v151, %v259
  %v298 = vadd.f32 %v152, %v262
  %v299 = vadd.f32 %v153, %v267
  %v300 = vadd.f32 %v154, %v270
  %v301 = vadd.f32 %v155, %v275
  %v302 = vadd.f32 %v156, %v278
  %v303 = vadd.f32 %v157, %v283
  %v304 = vadd.f32 %v158, %v286
  %305 = vst [vmem:[#allocation2] sm:$0xff] %v289
  %306 = vst [vmem:[#allocation2 + $0x8] sm:$0xff] %v290
  %307 = vst [vmem:[#allocation2 + $0x10] sm:$0xff] %v291
  %308 = vst [vmem:[#allocation2 + $0x18] sm:$0xff] %v292
  %309 = vst [vmem:[#allocation2 + $0x20] sm:$0xff] %v293
  %310 = vst [vmem:[#allocation2 + $0x28] sm:$0xff] %v294
  %311 = vst [vmem:[#allocation2 + $0x30] sm:$0xff] %v295
  %312 = vst [vmem:[#allocation2 + $0x38] sm:$0xff] %v296
  %313 = vst [vmem:[#allocation2 + $0x40] sm:$0xff] %v297
  %314 = vst [vmem:[#allocation2 + $0x48] sm:$0xff] %v298
  %315 = vst [vmem:[#allocation2 + $0x50] sm:$0xff] %v299
  %316 = vst [vmem:[#allocation2 + $0x58] sm:$0xff] %v300
  %317 = vst [vmem:[#allocation2 + $0x60] sm:$0xff] %v301
  %318 = vst [vmem:[#allocation2 + $0x68] sm:$0xff] %v302
  %319 = vst [vmem:[#allocation2 + $0x70] sm:$0xff] %v303
  %320 = vst [vmem:[#allocation2 + $0x78] sm:$0xff] %v304
  // Predicated region
  $region26: #{densenet_forward.35} parent=0 // pred_check
    %p321 = pneg %p21
  $region27: #{densenet_forward.35} parent=0 // pred_check_branch
    %323 = sbr.rel (%p321) target = $region29
  $region28: #{densenet_forward.35} parent=0 // pred_region
    %v324 = vld [vmem:[#allocation2] sm:$0xff]
    %v325 = vld [vmem:[#allocation2 + $0x8] sm:$0xff]
    %v326 = vld [vmem:[#allocation2 + $0x10] sm:$0xff]
    %v327 = vld [vmem:[#allocation2 + $0x18] sm:$0xff]
    %v328 = vld [vmem:[#allocation2 + $0x20] sm:$0xff]
    %v329 = vld [vmem:[#allocation2 + $0x28] sm:$0xff]
    %v330 = vld [vmem:[#allocation2 + $0x30] sm:$0xff]
    %v331 = vld [vmem:[#allocation2 + $0x38] sm:$0xff]
    %v332 = vld [vmem:[#allocation2 + $0x40] sm:$0xff]
    %v333 = vld [vmem:[#allocation2 + $0x48] sm:$0xff]
    %v334 = vld [vmem:[#allocation2 + $0x50] sm:$0xff]
    %v335 = vld [vmem:[#allocation2 + $0x58] sm:$0xff]
    %v336 = vld [vmem:[#allocation2 + $0x60] sm:$0xff]
    %v337 = vld [vmem:[#allocation2 + $0x68] sm:$0xff]
    %v338 = vld [vmem:[#allocation2 + $0x70] sm:$0xff]
    %v339 = vld [vmem:[#allocation2 + $0x78] sm:$0xff]
    %v340 = vld [vmem:[%s4] sm:$0x1]
    %v342 = vlaneseq
    %v343 = vshrl.u32 %v342, 7
    %v344 = vsub.s32 0, %v343
    %v345 = vrot.slane %v340, %v344
    %v347 = vadd.f32 %v324, %v345
    %v348 = vadd.f32 %v325, %v345
    %v349 = vadd.f32 %v326, %v345
    %v350 = vadd.f32 %v327, %v345
    %v351 = vadd.f32 %v328, %v345
    %v352 = vadd.f32 %v329, %v345
    %v353 = vadd.f32 %v330, %v345
    %v354 = vadd.f32 %v331, %v345
    %v355 = vadd.f32 %v332, %v345
    %v356 = vadd.f32 %v333, %v345
    %v357 = vadd.f32 %v334, %v345
    %v358 = vadd.f32 %v335, %v345
    %v359 = vadd.f32 %v336, %v345
    %v360 = vadd.f32 %v337, %v345
    %v361 = vadd.f32 %v338, %v345
    %v362 = vadd.f32 %v339, %v345
    %v363 = vpack.c.bf16 %v348, %v347
    %v364 = vpack.c.bf16 %v350, %v349
    %v365 = vpack.c.bf16 %v352, %v351
    %v366 = vpack.c.bf16 %v354, %v353
    %v367 = vpack.c.bf16 %v356, %v355
    %v368 = vpack.c.bf16 %v358, %v357
    %v369 = vpack.c.bf16 %v360, %v359
    %v370 = vpack.c.bf16 %v362, %v361
    %v379 = vunpack.c.l.b16 %v363
    %v380 = vunpack.c.h.b16 %v363
    %v381 = vunpack.c.l.b16 %v364
    %v382 = vunpack.c.h.b16 %v364
    %v383 = vunpack.c.l.b16 %v365
    %v384 = vunpack.c.h.b16 %v365
    %v385 = vunpack.c.l.b16 %v366
    %v386 = vunpack.c.h.b16 %v366
    %v387 = vunpack.c.l.b16 %v367
    %v388 = vunpack.c.h.b16 %v367
    %v389 = vunpack.c.l.b16 %v368
    %v390 = vunpack.c.h.b16 %v368
    %v391 = vunpack.c.l.b16 %v369
    %v392 = vunpack.c.h.b16 %v369
    %v393 = vunpack.c.l.b16 %v370
    %v394 = vunpack.c.h.b16 %v370
    %v395 = vpack.c.b16 %v379, %v379
    %v396 = vpack.c.b16 %v380, %v380
    %v397 = vpack.c.b16 %v381, %v381
    %v398 = vpack.c.b16 %v382, %v382
    %v399 = vpack.c.b16 %v383, %v383
    %v400 = vpack.c.b16 %v384, %v384
    %v401 = vpack.c.b16 %v385, %v385
    %v402 = vpack.c.b16 %v386, %v386
    %v403 = vpack.c.b16 %v387, %v387
    %v404 = vpack.c.b16 %v388, %v388
    %v405 = vpack.c.b16 %v389, %v389
    %v406 = vpack.c.b16 %v390, %v390
    %v407 = vpack.c.b16 %v391, %v391
    %v408 = vpack.c.b16 %v392, %v392
    %v409 = vpack.c.b16 %v393, %v393
    %v410 = vpack.c.b16 %v394, %v394
    %427 = vst [vmem:[%s5] sm:$0xf] %v395
    %428 = vst [vmem:[%s5 + $0x4] sm:$0xf] %v396
    %429 = vst [vmem:[%s5 + $0x8] sm:$0xf] %v397
    %430 = vst [vmem:[%s5 + $0xc] sm:$0xf] %v398
    %431 = vst [vmem:[%s5 + $0x10] sm:$0xf] %v399
    %432 = vst [vmem:[%s5 + $0x14] sm:$0xf] %v400
    %433 = vst [vmem:[%s5 + $0x18] sm:$0xf] %v401
    %434 = vst [vmem:[%s5 + $0x1c] sm:$0xf] %v402
    %435 = vst [vmem:[%s5 + $0x20] sm:$0xf] %v403
    %436 = vst [vmem:[%s5 + $0x24] sm:$0xf] %v404
    %437 = vst [vmem:[%s5 + $0x28] sm:$0xf] %v405
    %438 = vst [vmem:[%s5 + $0x2c] sm:$0xf] %v406
    %439 = vst [vmem:[%s5 + $0x30] sm:$0xf] %v407
    %440 = vst [vmem:[%s5 + $0x34] sm:$0xf] %v408
    %441 = vst [vmem:[%s5 + $0x38] sm:$0xf] %v409
    %442 = vst [vmem:[%s5 + $0x3c] sm:$0xf] %v410
  $region29: #{densenet_forward.35} parent=0 // pred_fallthru
    _
  // Predicated region
  $region30: #{densenet_forward.35} parent=0 // pred_check
    _
  $region31: #{densenet_forward.35} parent=0 // pred_check_branch
    %444 = sbr.rel (0) target = $region33
  $region32: #{densenet_forward.35} parent=0 // pred_region
    _
  $region33: #{densenet_forward.35} parent=0 // pred_fallthru
    _
  // Predicated region
  $region34: #{densenet_forward.35} parent=0 // pred_check
    _
  $region35: #{densenet_forward.35} parent=0 // pred_check_branch
    %446 = sbr.rel (0) target = $region37
  $region36: #{densenet_forward.35} parent=0 // pred_region
    _
  $region37: #{densenet_forward.35} parent=0 // pred_fallthru
    _

// kernel: densenet_forward.33
$region0: #{densenet_forward.33}
  #allocation0 [shape = 'u32[]', space=smem, size = 0x4, offset = 0x4, fixed_abs, tag = 'smem constant byte address 0x4 - core index']
  #allocation1 [shape = 'u32[144,128]{1,0:T(1,128)}', space=vmem, size = 0x12000, scoped, tag = 'internal scratch']
  %s0 = inlined_call_operand.vmem [shape: bf16[9,128,16], index: 0, kind: input, shape index: {}]
  %s1 = inlined_call_operand.vmem [shape: bf16[128,16], index: 1, kind: output, shape index: {}]
  %s2 = sld [smem:[#allocation0]]
  $region14: #{densenet_forward.33} parent=0
    _
  %s4 = ssub.s32 1, %s2
  %s5 = scalar_select 0, %s4, %s2
  // Predicated region
  $region2: #{densenet_forward.33} parent=0 // pred_check
    _
  $region3: #{densenet_forward.33} parent=0 // pred_check_branch
    %7 = sbr.rel (0) target = $region5
  $region4: #{densenet_forward.33} parent=0 // pred_region
    _
  $region5: #{densenet_forward.33} parent=0 // pred_fallthru
    _
  %v8 = vld [vmem:[%s0] sm:$0xf]
  %v9 = vld [vmem:[%s0 + $0x4] sm:$0xf]
  %v10 = vld [vmem:[%s0 + $0x8] sm:$0xf]
  %v11 = vld [vmem:[%s0 + $0xc] sm:$0xf]
  %v12 = vld [vmem:[%s0 + $0x10] sm:$0xf]
  %v13 = vld [vmem:[%s0 + $0x14] sm:$0xf]
  %v14 = vld [vmem:[%s0 + $0x18] sm:$0xf]
  %v15 = vld [vmem:[%s0 + $0x1c] sm:$0xf]
  %v16 = vld [vmem:[%s0 + $0x20] sm:$0xf]
  %v17 = vld [vmem:[%s0 + $0x24] sm:$0xf]
  %v18 = vld [vmem:[%s0 + $0x28] sm:$0xf]
  %v19 = vld [vmem:[%s0 + $0x2c] sm:$0xf]
  %v20 = vld [vmem:[%s0 + $0x30] sm:$0xf]
  %v21 = vld [vmem:[%s0 + $0x34] sm:$0xf]
  %v22 = vld [vmem:[%s0 + $0x38] sm:$0xf]
  %v23 = vld [vmem:[%s0 + $0x3c] sm:$0xf]
  %v24 = vld [vmem:[%s0 + $0x40] sm:$0xf]
  %v25 = vld [vmem:[%s0 + $0x44] sm:$0xf]
  %v26 = vld [vmem:[%s0 + $0x48] sm:$0xf]
  %v27 = vld [vmem:[%s0 + $0x4c] sm:$0xf]
  %v28 = vld [vmem:[%s0 + $0x50] sm:$0xf]
  %v29 = vld [vmem:[%s0 + $0x54] sm:$0xf]
  %v30 = vld [vmem:[%s0 + $0x58] sm:$0xf]
  %v31 = vld [vmem:[%s0 + $0x5c] sm:$0xf]
  %v32 = vld [vmem:[%s0 + $0x60] sm:$0xf]
  %v33 = vld [vmem:[%s0 + $0x64] sm:$0xf]
  %v34 = vld [vmem:[%s0 + $0x68] sm:$0xf]
  %v35 = vld [vmem:[%s0 + $0x6c] sm:$0xf]
  %v36 = vld [vmem:[%s0 + $0x70] sm:$0xf]
  %v37 = vld [vmem:[%s0 + $0x74] sm:$0xf]
  %v38 = vld [vmem:[%s0 + $0x78] sm:$0xf]
  %v39 = vld [vmem:[%s0 + $0x7c] sm:$0xf]
  %v40 = vld [vmem:[%s0 + $0x80] sm:$0xf]
  %v41 = vld [vmem:[%s0 + $0x84] sm:$0xf]
  %v42 = vld [vmem:[%s0 + $0x88] sm:$0xf]
  %v43 = vld [vmem:[%s0 + $0x8c] sm:$0xf]
  %v44 = vld [vmem:[%s0 + $0x90] sm:$0xf]
  %v45 = vld [vmem:[%s0 + $0x94] sm:$0xf]
  %v46 = vld [vmem:[%s0 + $0x98] sm:$0xf]
  %v47 = vld [vmem:[%s0 + $0x9c] sm:$0xf]
  %v48 = vld [vmem:[%s0 + $0xa0] sm:$0xf]
  %v49 = vld [vmem:[%s0 + $0xa4] sm:$0xf]
  %v50 = vld [vmem:[%s0 + $0xa8] sm:$0xf]
  %v51 = vld [vmem:[%s0 + $0xac] sm:$0xf]
  %v52 = vld [vmem:[%s0 + $0xb0] sm:$0xf]
  %v53 = vld [vmem:[%s0 + $0xb4] sm:$0xf]
  %v54 = vld [vmem:[%s0 + $0xb8] sm:$0xf]
  %v55 = vld [vmem:[%s0 + $0xbc] sm:$0xf]
  %v56 = vld [vmem:[%s0 + $0xc0] sm:$0xf]
  %v57 = vld [vmem:[%s0 + $0xc4] sm:$0xf]
  %v58 = vld [vmem:[%s0 + $0xc8] sm:$0xf]
  %v59 = vld [vmem:[%s0 + $0xcc] sm:$0xf]
  %v60 = vld [vmem:[%s0 + $0xd0] sm:$0xf]
  %v61 = vld [vmem:[%s0 + $0xd4] sm:$0xf]
  %v62 = vld [vmem:[%s0 + $0xd8] sm:$0xf]
  %v63 = vld [vmem:[%s0 + $0xdc] sm:$0xf]
  %v64 = vld [vmem:[%s0 + $0xe0] sm:$0xf]
  %v65 = vld [vmem:[%s0 + $0xe4] sm:$0xf]
  %v66 = vld [vmem:[%s0 + $0xe8] sm:$0xf]
  %v67 = vld [vmem:[%s0 + $0xec] sm:$0xf]
  %v68 = vld [vmem:[%s0 + $0xf0] sm:$0xf]
  %v69 = vld [vmem:[%s0 + $0xf4] sm:$0xf]
  %v70 = vld [vmem:[%s0 + $0xf8] sm:$0xf]
  %v71 = vld [vmem:[%s0 + $0xfc] sm:$0xf]
  %v72 = vld [vmem:[%s0 + $0x100] sm:$0xf]
  %v73 = vld [vmem:[%s0 + $0x104] sm:$0xf]
  %v74 = vld [vmem:[%s0 + $0x108] sm:$0xf]
  %v75 = vld [vmem:[%s0 + $0x10c] sm:$0xf]
  %v76 = vld [vmem:[%s0 + $0x110] sm:$0xf]
  %v77 = vld [vmem:[%s0 + $0x114] sm:$0xf]
  %v78 = vld [vmem:[%s0 + $0x118] sm:$0xf]
  %v79 = vld [vmem:[%s0 + $0x11c] sm:$0xf]
  %v80 = vld [vmem:[%s0 + $0x120] sm:$0xf]
  %v81 = vld [vmem:[%s0 + $0x124] sm:$0xf]
  %v82 = vld [vmem:[%s0 + $0x128] sm:$0xf]
  %v83 = vld [vmem:[%s0 + $0x12c] sm:$0xf]
  %v84 = vld [vmem:[%s0 + $0x130] sm:$0xf]
  %v85 = vld [vmem:[%s0 + $0x134] sm:$0xf]
  %v86 = vld [vmem:[%s0 + $0x138] sm:$0xf]
  %v87 = vld [vmem:[%s0 + $0x13c] sm:$0xf]
  %v88 = vld [vmem:[%s0 + $0x140] sm:$0xf]
  %v89 = vld [vmem:[%s0 + $0x144] sm:$0xf]
  %v90 = vld [vmem:[%s0 + $0x148] sm:$0xf]
  %v91 = vld [vmem:[%s0 + $0x14c] sm:$0xf]
  %v92 = vld [vmem:[%s0 + $0x150] sm:$0xf]
  %v93 = vld [vmem:[%s0 + $0x154] sm:$0xf]
  %v94 = vld [vmem:[%s0 + $0x158] sm:$0xf]
  %v95 = vld [vmem:[%s0 + $0x15c] sm:$0xf]
  %v96 = vld [vmem:[%s0 + $0x160] sm:$0xf]
  %v97 = vld [vmem:[%s0 + $0x164] sm:$0xf]
  %v98 = vld [vmem:[%s0 + $0x168] sm:$0xf]
  %v99 = vld [vmem:[%s0 + $0x16c] sm:$0xf]
  %v100 = vld [vmem:[%s0 + $0x170] sm:$0xf]
  %v101 = vld [vmem:[%s0 + $0x174] sm:$0xf]
  %v102 = vld [vmem:[%s0 + $0x178] sm:$0xf]
  %v103 = vld [vmem:[%s0 + $0x17c] sm:$0xf]
  %v104 = vld [vmem:[%s0 + $0x180] sm:$0xf]
  %v105 = vld [vmem:[%s0 + $0x184] sm:$0xf]
  %v106 = vld [vmem:[%s0 + $0x188] sm:$0xf]
  %v107 = vld [vmem:[%s0 + $0x18c] sm:$0xf]
  %v108 = vld [vmem:[%s0 + $0x190] sm:$0xf]
  %v109 = vld [vmem:[%s0 + $0x194] sm:$0xf]
  %v110 = vld [vmem:[%s0 + $0x198] sm:$0xf]
  %v111 = vld [vmem:[%s0 + $0x19c] sm:$0xf]
  %v112 = vld [vmem:[%s0 + $0x1a0] sm:$0xf]
  %v113 = vld [vmem:[%s0 + $0x1a4] sm:$0xf]
  %v114 = vld [vmem:[%s0 + $0x1a8] sm:$0xf]
  %v115 = vld [vmem:[%s0 + $0x1ac] sm:$0xf]
  %v116 = vld [vmem:[%s0 + $0x1b0] sm:$0xf]
  %v117 = vld [vmem:[%s0 + $0x1b4] sm:$0xf]
  %v118 = vld [vmem:[%s0 + $0x1b8] sm:$0xf]
  %v119 = vld [vmem:[%s0 + $0x1bc] sm:$0xf]
  %v120 = vld [vmem:[%s0 + $0x1c0] sm:$0xf]
  %v121 = vld [vmem:[%s0 + $0x1c4] sm:$0xf]
  %v122 = vld [vmem:[%s0 + $0x1c8] sm:$0xf]
  %v123 = vld [vmem:[%s0 + $0x1cc] sm:$0xf]
  %v124 = vld [vmem:[%s0 + $0x1d0] sm:$0xf]
  %v125 = vld [vmem:[%s0 + $0x1d4] sm:$0xf]
  %v126 = vld [vmem:[%s0 + $0x1d8] sm:$0xf]
  %v127 = vld [vmem:[%s0 + $0x1dc] sm:$0xf]
  %v128 = vld [vmem:[%s0 + $0x1e0] sm:$0xf]
  %v129 = vld [vmem:[%s0 + $0x1e4] sm:$0xf]
  %v130 = vld [vmem:[%s0 + $0x1e8] sm:$0xf]
  %v131 = vld [vmem:[%s0 + $0x1ec] sm:$0xf]
  %v132 = vld [vmem:[%s0 + $0x1f0] sm:$0xf]
  %v133 = vld [vmem:[%s0 + $0x1f4] sm:$0xf]
  %v134 = vld [vmem:[%s0 + $0x1f8] sm:$0xf]
  %v135 = vld [vmem:[%s0 + $0x1fc] sm:$0xf]
  %v136 = vld [vmem:[%s0 + $0x200] sm:$0xf]
  %v137 = vld [vmem:[%s0 + $0x204] sm:$0xf]
  %v138 = vld [vmem:[%s0 + $0x208] sm:$0xf]
  %v139 = vld [vmem:[%s0 + $0x20c] sm:$0xf]
  %v140 = vld [vmem:[%s0 + $0x210] sm:$0xf]
  %v141 = vld [vmem:[%s0 + $0x214] sm:$0xf]
  %v142 = vld [vmem:[%s0 + $0x218] sm:$0xf]
  %v143 = vld [vmem:[%s0 + $0x21c] sm:$0xf]
  %v144 = vld [vmem:[%s0 + $0x220] sm:$0xf]
  %v145 = vld [vmem:[%s0 + $0x224] sm:$0xf]
  %v146 = vld [vmem:[%s0 + $0x228] sm:$0xf]
  %v147 = vld [vmem:[%s0 + $0x22c] sm:$0xf]
  %v148 = vld [vmem:[%s0 + $0x230] sm:$0xf]
  %v149 = vld [vmem:[%s0 + $0x234] sm:$0xf]
  %v150 = vld [vmem:[%s0 + $0x238] sm:$0xf]
  %v151 = vld [vmem:[%s0 + $0x23c] sm:$0xf]
  %v152 = vunpack.c.l.bf16 %v8
  %v153 = vunpack.c.l.bf16 %v9
  %v154 = vunpack.c.l.bf16 %v10
  %v155 = vunpack.c.l.bf16 %v11
  %v156 = vunpack.c.l.bf16 %v12
  %v157 = vunpack.c.l.bf16 %v13
  %v158 = vunpack.c.l.bf16 %v14
  %v159 = vunpack.c.l.bf16 %v15
  %v160 = vunpack.c.l.bf16 %v16
  %v161 = vunpack.c.l.bf16 %v17
  %v162 = vunpack.c.l.bf16 %v18
  %v163 = vunpack.c.l.bf16 %v19
  %v164 = vunpack.c.l.bf16 %v20
  %v165 = vunpack.c.l.bf16 %v21
  %v166 = vunpack.c.l.bf16 %v22
  %v167 = vunpack.c.l.bf16 %v23
  %v168 = vunpack.c.l.bf16 %v24
  %v169 = vunpack.c.l.bf16 %v25
  %v170 = vunpack.c.l.bf16 %v26
  %v171 = vunpack.c.l.bf16 %v27
  %v172 = vunpack.c.l.bf16 %v28
  %v173 = vunpack.c.l.bf16 %v29
  %v174 = vunpack.c.l.bf16 %v30
  %v175 = vunpack.c.l.bf16 %v31
  %v176 = vunpack.c.l.bf16 %v32
  %v177 = vunpack.c.l.bf16 %v33
  %v178 = vunpack.c.l.bf16 %v34
  %v179 = vunpack.c.l.bf16 %v35
  %v180 = vunpack.c.l.bf16 %v36
  %v181 = vunpack.c.l.bf16 %v37
  %v182 = vunpack.c.l.bf16 %v38
  %v183 = vunpack.c.l.bf16 %v39
  %v184 = vunpack.c.l.bf16 %v40
  %v185 = vunpack.c.l.bf16 %v41
  %v186 = vunpack.c.l.bf16 %v42
  %v187 = vunpack.c.l.bf16 %v43
  %v188 = vunpack.c.l.bf16 %v44
  %v189 = vunpack.c.l.bf16 %v45
  %v190 = vunpack.c.l.bf16 %v46
  %v191 = vunpack.c.l.bf16 %v47
  %v192 = vunpack.c.l.bf16 %v48
  %v193 = vunpack.c.l.bf16 %v49
  %v194 = vunpack.c.l.bf16 %v50
  %v195 = vunpack.c.l.bf16 %v51
  %v196 = vunpack.c.l.bf16 %v52
  %v197 = vunpack.c.l.bf16 %v53
  %v198 = vunpack.c.l.bf16 %v54
  %v199 = vunpack.c.l.bf16 %v55
  %v200 = vunpack.c.l.bf16 %v56
  %v201 = vunpack.c.l.bf16 %v57
  %v202 = vunpack.c.l.bf16 %v58
  %v203 = vunpack.c.l.bf16 %v59
  %v204 = vunpack.c.l.bf16 %v60
  %v205 = vunpack.c.l.bf16 %v61
  %v206 = vunpack.c.l.bf16 %v62
  %v207 = vunpack.c.l.bf16 %v63
  %v208 = vunpack.c.l.bf16 %v64
  %v209 = vunpack.c.l.bf16 %v65
  %v210 = vunpack.c.l.bf16 %v66
  %v211 = vunpack.c.l.bf16 %v67
  %v212 = vunpack.c.l.bf16 %v68
  %v213 = vunpack.c.l.bf16 %v69
  %v214 = vunpack.c.l.bf16 %v70
  %v215 = vunpack.c.l.bf16 %v71
  %v216 = vunpack.c.l.bf16 %v72
  %v217 = vunpack.c.l.bf16 %v73
  %v218 = vunpack.c.l.bf16 %v74
  %v219 = vunpack.c.l.bf16 %v75
  %v220 = vunpack.c.l.bf16 %v76
  %v221 = vunpack.c.l.bf16 %v77
  %v222 = vunpack.c.l.bf16 %v78
  %v223 = vunpack.c.l.bf16 %v79
  %v224 = vunpack.c.l.bf16 %v80
  %v225 = vunpack.c.l.bf16 %v81
  %v226 = vunpack.c.l.bf16 %v82
  %v227 = vunpack.c.l.bf16 %v83
  %v228 = vunpack.c.l.bf16 %v84
  %v229 = vunpack.c.l.bf16 %v85
  %v230 = vunpack.c.l.bf16 %v86
  %v231 = vunpack.c.l.bf16 %v87
  %v232 = vunpack.c.l.bf16 %v88
  %v233 = vunpack.c.l.bf16 %v89
  %v234 = vunpack.c.l.bf16 %v90
  %v235 = vunpack.c.l.bf16 %v91
  %v236 = vunpack.c.l.bf16 %v92
  %v237 = vunpack.c.l.bf16 %v93
  %v238 = vunpack.c.l.bf16 %v94
  %v239 = vunpack.c.l.bf16 %v95
  %v240 = vunpack.c.l.bf16 %v96
  %v241 = vunpack.c.l.bf16 %v97
  %v242 = vunpack.c.l.bf16 %v98
  %v243 = vunpack.c.l.bf16 %v99
  %v244 = vunpack.c.l.bf16 %v100
  %v245 = vunpack.c.l.bf16 %v101
  %v246 = vunpack.c.l.bf16 %v102
  %v247 = vunpack.c.l.bf16 %v103
  %v248 = vunpack.c.l.bf16 %v104
  %v249 = vunpack.c.l.bf16 %v105
  %v250 = vunpack.c.l.bf16 %v106
  %v251 = vunpack.c.l.bf16 %v107
  %v252 = vunpack.c.l.bf16 %v108
  %v253 = vunpack.c.l.bf16 %v109
  %v254 = vunpack.c.l.bf16 %v110
  %v255 = vunpack.c.l.bf16 %v111
  %v256 = vunpack.c.l.bf16 %v112
  %v257 = vunpack.c.l.bf16 %v113
  %v258 = vunpack.c.l.bf16 %v114
  %v259 = vunpack.c.l.bf16 %v115
  %v260 = vunpack.c.l.bf16 %v116
  %v261 = vunpack.c.l.bf16 %v117
  %v262 = vunpack.c.l.bf16 %v118
  %v263 = vunpack.c.l.bf16 %v119
  %v264 = vunpack.c.l.bf16 %v120
  %v265 = vunpack.c.l.bf16 %v121
  %v266 = vunpack.c.l.bf16 %v122
  %v267 = vunpack.c.l.bf16 %v123
  %v268 = vunpack.c.l.bf16 %v124
  %v269 = vunpack.c.l.bf16 %v125
  %v270 = vunpack.c.l.bf16 %v126
  %v271 = vunpack.c.l.bf16 %v127
  %v272 = vunpack.c.l.bf16 %v128
  %v273 = vunpack.c.l.bf16 %v129
  %v274 = vunpack.c.l.bf16 %v130
  %v275 = vunpack.c.l.bf16 %v131
  %v276 = vunpack.c.l.bf16 %v132
  %v277 = vunpack.c.l.bf16 %v133
  %v278 = vunpack.c.l.bf16 %v134
  %v279 = vunpack.c.l.bf16 %v135
  %v280 = vunpack.c.l.bf16 %v136
  %v281 = vunpack.c.l.bf16 %v137
  %v282 = vunpack.c.l.bf16 %v138
  %v283 = vunpack.c.l.bf16 %v139
  %v284 = vunpack.c.l.bf16 %v140
  %v285 = vunpack.c.l.bf16 %v141
  %v286 = vunpack.c.l.bf16 %v142
  %v287 = vunpack.c.l.bf16 %v143
  %v288 = vunpack.c.l.bf16 %v144
  %v289 = vunpack.c.l.bf16 %v145
  %v290 = vunpack.c.l.bf16 %v146
  %v291 = vunpack.c.l.bf16 %v147
  %v292 = vunpack.c.l.bf16 %v148
  %v293 = vunpack.c.l.bf16 %v149
  %v294 = vunpack.c.l.bf16 %v150
  %v295 = vunpack.c.l.bf16 %v151
  %vm296 = vcmask 130048
  %v297 = vsel %vm296, %v152, -inf
  %v298 = vsel %vm296, %v168, -inf
  %v299 = vmax.f32 %v297, %v298
  %v300 = vsel %vm296, %v184, -inf
  %v301 = vmax.f32 %v299, %v300
  %v302 = vsel %vm296, %v200, -inf
  %v303 = vmax.f32 %v301, %v302
  %v304 = vsel %vm296, %v216, -inf
  %v305 = vmax.f32 %v303, %v304
  %v306 = vsel %vm296, %v232, -inf
  %v307 = vmax.f32 %v305, %v306
  %v308 = vsel %vm296, %v248, -inf
  %v309 = vmax.f32 %v307, %v308
  %v310 = vsel %vm296, %v264, -inf
  %v311 = vmax.f32 %v309, %v310
  %v312 = vsel %vm296, %v280, -inf
  %v313 = vmax.f32 %v311, %v312
  %v314 = vsel %vm296, %v153, -inf
  %v315 = vsel %vm296, %v169, -inf
  %v316 = vmax.f32 %v314, %v315
  %v317 = vsel %vm296, %v185, -inf
  %v318 = vmax.f32 %v316, %v317
  %v319 = vsel %vm296, %v201, -inf
  %v320 = vmax.f32 %v318, %v319
  %v321 = vsel %vm296, %v217, -inf
  %v322 = vmax.f32 %v320, %v321
  %v323 = vsel %vm296, %v233, -inf
  %v324 = vmax.f32 %v322, %v323
  %v325 = vsel %vm296, %v249, -inf
  %v326 = vmax.f32 %v324, %v325
  %v327 = vsel %vm296, %v265, -inf
  %v328 = vmax.f32 %v326, %v327
  %v329 = vsel %vm296, %v281, -inf
  %v330 = vmax.f32 %v328, %v329
  %v331 = vsel %vm296, %v154, -inf
  %v332 = vsel %vm296, %v170, -inf
  %v333 = vmax.f32 %v331, %v332
  %v334 = vsel %vm296, %v186, -inf
  %v335 = vmax.f32 %v333, %v334
  %v336 = vsel %vm296, %v202, -inf
  %v337 = vmax.f32 %v335, %v336
  %v338 = vsel %vm296, %v218, -inf
  %v339 = vmax.f32 %v337, %v338
  %v340 = vsel %vm296, %v234, -inf
  %v341 = vmax.f32 %v339, %v340
  %v342 = vsel %vm296, %v250, -inf
  %v343 = vmax.f32 %v341, %v342
  %v344 = vsel %vm296, %v266, -inf
  %v345 = vmax.f32 %v343, %v344
  %v346 = vsel %vm296, %v282, -inf
  %v347 = vmax.f32 %v345, %v346
  %v348 = vsel %vm296, %v155, -inf
  %v349 = vsel %vm296, %v171, -inf
  %v350 = vmax.f32 %v348, %v349
  %v351 = vsel %vm296, %v187, -inf
  %v352 = vmax.f32 %v350, %v351
  %v353 = vsel %vm296, %v203, -inf
  %v354 = vmax.f32 %v352, %v353
  %v355 = vsel %vm296, %v219, -inf
  %v356 = vmax.f32 %v354, %v355
  %v357 = vsel %vm296, %v235, -inf
  %v358 = vmax.f32 %v356, %v357
  %v359 = vsel %vm296, %v251, -inf
  %v360 = vmax.f32 %v358, %v359
  %v361 = vsel %vm296, %v267, -inf
  %v362 = vmax.f32 %v360, %v361
  %v363 = vsel %vm296, %v283, -inf
  %v364 = vmax.f32 %v362, %v363
  %v365 = vsel %vm296, %v156, -inf
  %v366 = vsel %vm296, %v172, -inf
  %v367 = vmax.f32 %v365, %v366
  %v368 = vsel %vm296, %v188, -inf
  %v369 = vmax.f32 %v367, %v368
  %v370 = vsel %vm296, %v204, -inf
  %v371 = vmax.f32 %v369, %v370
  %v372 = vsel %vm296, %v220, -inf
  %v373 = vmax.f32 %v371, %v372
  %v374 = vsel %vm296, %v236, -inf
  %v375 = vmax.f32 %v373, %v374
  %v376 = vsel %vm296, %v252, -inf
  %v377 = vmax.f32 %v375, %v376
  %v378 = vsel %vm296, %v268, -inf
  %v379 = vmax.f32 %v377, %v378
  %v380 = vsel %vm296, %v284, -inf
  %v381 = vmax.f32 %v379, %v380
  %v382 = vsel %vm296, %v157, -inf
  %v383 = vsel %vm296, %v173, -inf
  %v384 = vmax.f32 %v382, %v383
  %v385 = vsel %vm296, %v189, -inf
  %v386 = vmax.f32 %v384, %v385
  %v387 = vsel %vm296, %v205, -inf
  %v388 = vmax.f32 %v386, %v387
  %v389 = vsel %vm296, %v221, -inf
  %v390 = vmax.f32 %v388, %v389
  %v391 = vsel %vm296, %v237, -inf
  %v392 = vmax.f32 %v390, %v391
  %v393 = vsel %vm296, %v253, -inf
  %v394 = vmax.f32 %v392, %v393
  %v395 = vsel %vm296, %v269, -inf
  %v396 = vmax.f32 %v394, %v395
  %v397 = vsel %vm296, %v285, -inf
  %v398 = vmax.f32 %v396, %v397
  %v399 = vsel %vm296, %v158, -inf
  %v400 = vsel %vm296, %v174, -inf
  %v401 = vmax.f32 %v399, %v400
  %v402 = vsel %vm296, %v190, -inf
  %v403 = vmax.f32 %v401, %v402
  %v404 = vsel %vm296, %v206, -inf
  %v405 = vmax.f32 %v403, %v404
  %v406 = vsel %vm296, %v222, -inf
  %v407 = vmax.f32 %v405, %v406
  %v408 = vsel %vm296, %v238, -inf
  %v409 = vmax.f32 %v407, %v408
  %v410 = vsel %vm296, %v254, -inf
  %v411 = vmax.f32 %v409, %v410
  %v412 = vsel %vm296, %v270, -inf
  %v413 = vmax.f32 %v411, %v412
  %v414 = vsel %vm296, %v286, -inf
  %v415 = vmax.f32 %v413, %v414
  %v416 = vsel %vm296, %v159, -inf
  %v417 = vsel %vm296, %v175, -inf
  %v418 = vmax.f32 %v416, %v417
  %v419 = vsel %vm296, %v191, -inf
  %v420 = vmax.f32 %v418, %v419
  %v421 = vsel %vm296, %v207, -inf
  %v422 = vmax.f32 %v420, %v421
  %v423 = vsel %vm296, %v223, -inf
  %v424 = vmax.f32 %v422, %v423
  %v425 = vsel %vm296, %v239, -inf
  %v426 = vmax.f32 %v424, %v425
  %v427 = vsel %vm296, %v255, -inf
  %v428 = vmax.f32 %v426, %v427
  %v429 = vsel %vm296, %v271, -inf
  %v430 = vmax.f32 %v428, %v429
  %v431 = vsel %vm296, %v287, -inf
  %v432 = vmax.f32 %v430, %v431
  %v433 = vsel %vm296, %v160, -inf
  %v434 = vsel %vm296, %v176, -inf
  %v435 = vmax.f32 %v433, %v434
  %v436 = vsel %vm296, %v192, -inf
  %v437 = vmax.f32 %v435, %v436
  %v438 = vsel %vm296, %v208, -inf
  %v439 = vmax.f32 %v437, %v438
  %v440 = vsel %vm296, %v224, -inf
  %v441 = vmax.f32 %v439, %v440
  %v442 = vsel %vm296, %v240, -inf
  %v443 = vmax.f32 %v441, %v442
  %v444 = vsel %vm296, %v256, -inf
  %v445 = vmax.f32 %v443, %v444
  %v446 = vsel %vm296, %v272, -inf
  %v447 = vmax.f32 %v445, %v446
  %v448 = vsel %vm296, %v288, -inf
  %v449 = vmax.f32 %v447, %v448
  %v450 = vsel %vm296, %v161, -inf
  %v451 = vsel %vm296, %v177, -inf
  %v452 = vmax.f32 %v450, %v451
  %v453 = vsel %vm296, %v193, -inf
  %v454 = vmax.f32 %v452, %v453
  %v455 = vsel %vm296, %v209, -inf
  %v456 = vmax.f32 %v454, %v455
  %v457 = vsel %vm296, %v225, -inf
  %v458 = vmax.f32 %v456, %v457
  %v459 = vsel %vm296, %v241, -inf
  %v460 = vmax.f32 %v458, %v459
  %v461 = vsel %vm296, %v257, -inf
  %v462 = vmax.f32 %v460, %v461
  %v463 = vsel %vm296, %v273, -inf
  %v464 = vmax.f32 %v462, %v463
  %v465 = vsel %vm296, %v289, -inf
  %v466 = vmax.f32 %v464, %v465
  %v467 = vsel %vm296, %v162, -inf
  %v468 = vsel %vm296, %v178, -inf
  %v469 = vmax.f32 %v467, %v468
  %v470 = vsel %vm296, %v194, -inf
  %v471 = vmax.f32 %v469, %v470
  %v472 = vsel %vm296, %v210, -inf
  %v473 = vmax.f32 %v471, %v472
  %v474 = vsel %vm296, %v226, -inf
  %v475 = vmax.f32 %v473, %v474
  %v476 = vsel %vm296, %v242, -inf
  %v477 = vmax.f32 %v475, %v476
  %v478 = vsel %vm296, %v258, -inf
  %v479 = vmax.f32 %v477, %v478
  %v480 = vsel %vm296, %v274, -inf
  %v481 = vmax.f32 %v479, %v480
  %v482 = vsel %vm296, %v290, -inf
  %v483 = vmax.f32 %v481, %v482
  %v484 = vsel %vm296, %v163, -inf
  %v485 = vsel %vm296, %v179, -inf
  %v486 = vmax.f32 %v484, %v485
  %v487 = vsel %vm296, %v195, -inf
  %v488 = vmax.f32 %v486, %v487
  %v489 = vsel %vm296, %v211, -inf
  %v490 = vmax.f32 %v488, %v489
  %v491 = vsel %vm296, %v227, -inf
  %v492 = vmax.f32 %v490, %v491
  %v493 = vsel %vm296, %v243, -inf
  %v494 = vmax.f32 %v492, %v493
  %v495 = vsel %vm296, %v259, -inf
  %v496 = vmax.f32 %v494, %v495
  %v497 = vsel %vm296, %v275, -inf
  %v498 = vmax.f32 %v496, %v497
  %v499 = vsel %vm296, %v291, -inf
  %v500 = vmax.f32 %v498, %v499
  %v501 = vsel %vm296, %v164, -inf
  %v502 = vsel %vm296, %v180, -inf
  %v503 = vmax.f32 %v501, %v502
  %v504 = vsel %vm296, %v196, -inf
  %v505 = vmax.f32 %v503, %v504
  %v506 = vsel %vm296, %v212, -inf
  %v507 = vmax.f32 %v505, %v506
  %v508 = vsel %vm296, %v228, -inf
  %v509 = vmax.f32 %v507, %v508
  %v510 = vsel %vm296, %v244, -inf
  %v511 = vmax.f32 %v509, %v510
  %v512 = vsel %vm296, %v260, -inf
  %v513 = vmax.f32 %v511, %v512
  %v514 = vsel %vm296, %v276, -inf
  %v515 = vmax.f32 %v513, %v514
  %v516 = vsel %vm296, %v292, -inf
  %v517 = vmax.f32 %v515, %v516
  %v518 = vsel %vm296, %v165, -inf
  %v519 = vsel %vm296, %v181, -inf
  %v520 = vmax.f32 %v518, %v519
  %v521 = vsel %vm296, %v197, -inf
  %v522 = vmax.f32 %v520, %v521
  %v523 = vsel %vm296, %v213, -inf
  %v524 = vmax.f32 %v522, %v523
  %v525 = vsel %vm296, %v229, -inf
  %v526 = vmax.f32 %v524, %v525
  %v527 = vsel %vm296, %v245, -inf
  %v528 = vmax.f32 %v526, %v527
  %v529 = vsel %vm296, %v261, -inf
  %v530 = vmax.f32 %v528, %v529
  %v531 = vsel %vm296, %v277, -inf
  %v532 = vmax.f32 %v530, %v531
  %v533 = vsel %vm296, %v293, -inf
  %v534 = vmax.f32 %v532, %v533
  %v535 = vsel %vm296, %v166, -inf
  %v536 = vsel %vm296, %v182, -inf
  %v537 = vmax.f32 %v535, %v536
  %v538 = vsel %vm296, %v198, -inf
  %v539 = vmax.f32 %v537, %v538
  %v540 = vsel %vm296, %v214, -inf
  %v541 = vmax.f32 %v539, %v540
  %v542 = vsel %vm296, %v230, -inf
  %v543 = vmax.f32 %v541, %v542
  %v544 = vsel %vm296, %v246, -inf
  %v545 = vmax.f32 %v543, %v544
  %v546 = vsel %vm296, %v262, -inf
  %v547 = vmax.f32 %v545, %v546
  %v548 = vsel %vm296, %v278, -inf
  %v549 = vmax.f32 %v547, %v548
  %v550 = vsel %vm296, %v294, -inf
  %v551 = vmax.f32 %v549, %v550
  %v552 = vsel %vm296, %v167, -inf
  %v553 = vsel %vm296, %v183, -inf
  %v554 = vmax.f32 %v552, %v553
  %v555 = vsel %vm296, %v199, -inf
  %v556 = vmax.f32 %v554, %v555
  %v557 = vsel %vm296, %v215, -inf
  %v558 = vmax.f32 %v556, %v557
  %v559 = vsel %vm296, %v231, -inf
  %v560 = vmax.f32 %v558, %v559
  %v561 = vsel %vm296, %v247, -inf
  %v562 = vmax.f32 %v560, %v561
  %v563 = vsel %vm296, %v263, -inf
  %v564 = vmax.f32 %v562, %v563
  %v565 = vsel %vm296, %v279, -inf
  %v566 = vmax.f32 %v564, %v565
  %v567 = vsel %vm296, %v295, -inf
  %v568 = vmax.f32 %v566, %v567
  %v569 = vpack.c.bf16 %v330, %v313
  %v570 = vpack.c.bf16 %v364, %v347
  %v571 = vpack.c.bf16 %v398, %v381
  %v572 = vpack.c.bf16 %v432, %v415
  %v573 = vpack.c.bf16 %v466, %v449
  %v574 = vpack.c.bf16 %v500, %v483
  %v575 = vpack.c.bf16 %v534, %v517
  %v576 = vpack.c.bf16 %v568, %v551
  %v585 = vunpack.c.l.b16 %v569
  %v586 = vunpack.c.h.b16 %v569
  %v587 = vunpack.c.l.b16 %v570
  %v588 = vunpack.c.h.b16 %v570
  %v589 = vunpack.c.l.b16 %v571
  %v590 = vunpack.c.h.b16 %v571
  %v591 = vunpack.c.l.b16 %v572
  %v592 = vunpack.c.h.b16 %v572
  %v593 = vunpack.c.l.b16 %v573
  %v594 = vunpack.c.h.b16 %v573
  %v595 = vunpack.c.l.b16 %v574
  %v596 = vunpack.c.h.b16 %v574
  %v597 = vunpack.c.l.b16 %v575
  %v598 = vunpack.c.h.b16 %v575
  %v599 = vunpack.c.l.b16 %v576
  %v600 = vunpack.c.h.b16 %v576
  %v601 = vpack.c.b16 %v585, %v585
  %v602 = vpack.c.b16 %v586, %v586
  %v603 = vpack.c.b16 %v587, %v587
  %v604 = vpack.c.b16 %v588, %v588
  %v605 = vpack.c.b16 %v589, %v589
  %v606 = vpack.c.b16 %v590, %v590
  %v607 = vpack.c.b16 %v591, %v591
  %v608 = vpack.c.b16 %v592, %v592
  %v609 = vpack.c.b16 %v593, %v593
  %v610 = vpack.c.b16 %v594, %v594
  %v611 = vpack.c.b16 %v595, %v595
  %v612 = vpack.c.b16 %v596, %v596
  %v613 = vpack.c.b16 %v597, %v597
  %v614 = vpack.c.b16 %v598, %v598
  %v615 = vpack.c.b16 %v599, %v599
  %v616 = vpack.c.b16 %v600, %v600
  %vm633 = vcmask 125952
  %634 = vst.msk [vmem:[%s1] sm:$0xf] %vm633, %v601
  %635 = vst.msk [vmem:[%s1 + $0x4] sm:$0xf] %vm633, %v602
  %636 = vst.msk [vmem:[%s1 + $0x8] sm:$0xf] %vm633, %v603
  %637 = vst.msk [vmem:[%s1 + $0xc] sm:$0xf] %vm633, %v604
  %638 = vst.msk [vmem:[%s1 + $0x10] sm:$0xf] %vm633, %v605
  %639 = vst.msk [vmem:[%s1 + $0x14] sm:$0xf] %vm633, %v606
  %640 = vst.msk [vmem:[%s1 + $0x18] sm:$0xf] %vm633, %v607
  %641 = vst.msk [vmem:[%s1 + $0x1c] sm:$0xf] %vm633, %v608
  %642 = vst.msk [vmem:[%s1 + $0x20] sm:$0xf] %vm633, %v609
  %643 = vst.msk [vmem:[%s1 + $0x24] sm:$0xf] %vm633, %v610
  %644 = vst.msk [vmem:[%s1 + $0x28] sm:$0xf] %vm633, %v611
  %645 = vst.msk [vmem:[%s1 + $0x2c] sm:$0xf] %vm633, %v612
  %646 = vst.msk [vmem:[%s1 + $0x30] sm:$0xf] %vm633, %v613
  %647 = vst.msk [vmem:[%s1 + $0x34] sm:$0xf] %vm633, %v614
  %648 = vst.msk [vmem:[%s1 + $0x38] sm:$0xf] %vm633, %v615
  %649 = vst.msk [vmem:[%s1 + $0x3c] sm:$0xf] %vm633, %v616
  // Predicated region
  $region6: #{densenet_forward.33} parent=0 // pred_check
    _
  $region7: #{densenet_forward.33} parent=0 // pred_check_branch
    %651 = sbr.rel (0) target = $region9
  $region8: #{densenet_forward.33} parent=0 // pred_region
    _
  $region9: #{densenet_forward.33} parent=0 // pred_fallthru
    _
  // Predicated region
  $region10: #{densenet_forward.33} parent=0 // pred_check
    _
  $region11: #{densenet_forward.33} parent=0 // pred_check_branch
    %653 = sbr.rel (0) target = $region13
  $region12: #{densenet_forward.33} parent=0 // pred_region
    _
  $region13: #{densenet_forward.33} parent=0 // pred_fallthru
    _

// kernel: densenet_forward.37
$region0: #{densenet_forward.37}
  #allocation0 [shape = 'u32[]', space=smem, size = 0x4, offset = 0x4, fixed_abs, tag = 'smem constant byte address 0x4 - core index']
  #allocation1 [shape = 'u32[144,128]{1,0:T(1,128)}', space=vmem, size = 0x12000, scoped, tag = 'internal scratch']
  %s0 = inlined_call_operand.vmem [shape: bf16[128,16], index: 0, kind: input, shape index: {}]
  %s1 = inlined_call_operand.vmem [shape: f32[1,16], index: 1, kind: input, shape index: {}]
  %s2 = inlined_call_operand.vmem [shape: f32[1,16], index: 2, kind: input, shape index: {}]
  %s3 = inlined_call_operand.vmem [shape: bf16[128,16], index: 3, kind: output, shape index: {}]
  %s4 = sld [smem:[#allocation0]]
  $region22: #{densenet_forward.37} parent=0
    _
  %s6 = ssub.s32 1, %s4
  %s7 = scalar_select 0, %s6, %s4
  // Predicated region
  $region2: #{densenet_forward.37} parent=0 // pred_check
    _
  $region3: #{densenet_forward.37} parent=0 // pred_check_branch
    %9 = sbr.rel (0) target = $region5
  $region4: #{densenet_forward.37} parent=0 // pred_region
    _
  $region5: #{densenet_forward.37} parent=0 // pred_fallthru
    _
  // Predicated region
  $region6: #{densenet_forward.37} parent=0 // pred_check
    _
  $region7: #{densenet_forward.37} parent=0 // pred_check_branch
    %11 = sbr.rel (0) target = $region9
  $region8: #{densenet_forward.37} parent=0 // pred_region
    _
  $region9: #{densenet_forward.37} parent=0 // pred_fallthru
    _
  // Predicated region
  $region10: #{densenet_forward.37} parent=0 // pred_check
    _
  $region11: #{densenet_forward.37} parent=0 // pred_check_branch
    %13 = sbr.rel (0) target = $region13
  $region12: #{densenet_forward.37} parent=0 // pred_region
    _
  $region13: #{densenet_forward.37} parent=0 // pred_fallthru
    _
  %v14 = vld [vmem:[%s0] sm:$0xf]
  %v15 = vld [vmem:[%s0 + $0x4] sm:$0xf]
  %v16 = vld [vmem:[%s0 + $0x8] sm:$0xf]
  %v17 = vld [vmem:[%s0 + $0xc] sm:$0xf]
  %v18 = vld [vmem:[%s0 + $0x10] sm:$0xf]
  %v19 = vld [vmem:[%s0 + $0x14] sm:$0xf]
  %v20 = vld [vmem:[%s0 + $0x18] sm:$0xf]
  %v21 = vld [vmem:[%s0 + $0x1c] sm:$0xf]
  %v22 = vld [vmem:[%s0 + $0x20] sm:$0xf]
  %v23 = vld [vmem:[%s0 + $0x24] sm:$0xf]
  %v24 = vld [vmem:[%s0 + $0x28] sm:$0xf]
  %v25 = vld [vmem:[%s0 + $0x2c] sm:$0xf]
  %v26 = vld [vmem:[%s0 + $0x30] sm:$0xf]
  %v27 = vld [vmem:[%s0 + $0x34] sm:$0xf]
  %v28 = vld [vmem:[%s0 + $0x38] sm:$0xf]
  %v29 = vld [vmem:[%s0 + $0x3c] sm:$0xf]
  %v30 = vunpack.c.l.bf16 %v14
  %v31 = vunpack.c.l.bf16 %v15
  %v32 = vunpack.c.l.bf16 %v16
  %v33 = vunpack.c.l.bf16 %v17
  %v34 = vunpack.c.l.bf16 %v18
  %v35 = vunpack.c.l.bf16 %v19
  %v36 = vunpack.c.l.bf16 %v20
  %v37 = vunpack.c.l.bf16 %v21
  %v38 = vunpack.c.l.bf16 %v22
  %v39 = vunpack.c.l.bf16 %v23
  %v40 = vunpack.c.l.bf16 %v24
  %v41 = vunpack.c.l.bf16 %v25
  %v42 = vunpack.c.l.bf16 %v26
  %v43 = vunpack.c.l.bf16 %v27
  %v44 = vunpack.c.l.bf16 %v28
  %v45 = vunpack.c.l.bf16 %v29
  %v46 = vld [vmem:[%s1] sm:$0x1]
  %v48 = vlaneseq
  %v49 = vshrl.u32 %v48, 7
  %v50 = vsub.s32 0, %v49
  %v51 = vrot.slane %v46, %v50
  %v53 = vmul.f32 %v30, %v51
  %v54 = vmul.f32 %v31, %v51
  %v55 = vmul.f32 %v32, %v51
  %v56 = vmul.f32 %v33, %v51
  %v57 = vmul.f32 %v34, %v51
  %v58 = vmul.f32 %v35, %v51
  %v59 = vmul.f32 %v36, %v51
  %v60 = vmul.f32 %v37, %v51
  %v61 = vmul.f32 %v38, %v51
  %v62 = vmul.f32 %v39, %v51
  %v63 = vmul.f32 %v40, %v51
  %v64 = vmul.f32 %v41, %v51
  %v65 = vmul.f32 %v42, %v51
  %v66 = vmul.f32 %v43, %v51
  %v67 = vmul.f32 %v44, %v51
  %v68 = vmul.f32 %v45, %v51
  %v69 = vld [vmem:[%s2] sm:$0x1]
  %v71 = vlaneseq
  %v72 = vshrl.u32 %v71, 7
  %v73 = vsub.s32 0, %v72
  %v74 = vrot.slane %v69, %v73
  %v76 = vadd.f32 %v53, %v74
  %v77 = vadd.f32 %v54, %v74
  %v78 = vadd.f32 %v55, %v74
  %v79 = vadd.f32 %v56, %v74
  %v80 = vadd.f32 %v57, %v74
  %v81 = vadd.f32 %v58, %v74
  %v82 = vadd.f32 %v59, %v74
  %v83 = vadd.f32 %v60, %v74
  %v84 = vadd.f32 %v61, %v74
  %v85 = vadd.f32 %v62, %v74
  %v86 = vadd.f32 %v63, %v74
  %v87 = vadd.f32 %v64, %v74
  %v88 = vadd.f32 %v65, %v74
  %v89 = vadd.f32 %v66, %v74
  %v90 = vadd.f32 %v67, %v74
  %v91 = vadd.f32 %v68, %v74
  %v92 = vmax.f32 %v76, 0.0
  %v93 = vmax.f32 %v77, 0.0
  %v94 = vmax.f32 %v78, 0.0
  %v95 = vmax.f32 %v79, 0.0
  %v96 = vmax.f32 %v80, 0.0
  %v97 = vmax.f32 %v81, 0.0
  %v98 = vmax.f32 %v82, 0.0
  %v99 = vmax.f32 %v83, 0.0
  %v100 = vmax.f32 %v84, 0.0
  %v101 = vmax.f32 %v85, 0.0
  %v102 = vmax.f32 %v86, 0.0
  %v103 = vmax.f32 %v87, 0.0
  %v104 = vmax.f32 %v88, 0.0
  %v105 = vmax.f32 %v89, 0.0
  %v106 = vmax.f32 %v90, 0.0
  %v107 = vmax.f32 %v91, 0.0
  %v108 = vpack.c.bf16 %v93, %v92
  %v109 = vpack.c.bf16 %v95, %v94
  %v110 = vpack.c.bf16 %v97, %v96
  %v111 = vpack.c.bf16 %v99, %v98
  %v112 = vpack.c.bf16 %v101, %v100
  %v113 = vpack.c.bf16 %v103, %v102
  %v114 = vpack.c.bf16 %v105, %v104
  %v115 = vpack.c.bf16 %v107, %v106
  %v124 = vunpack.c.l.b16 %v108
  %v125 = vunpack.c.h.b16 %v108
  %v126 = vunpack.c.l.b16 %v109
  %v127 = vunpack.c.h.b16 %v109
  %v128 = vunpack.c.l.b16 %v110
  %v129 = vunpack.c.h.b16 %v110
  %v130 = vunpack.c.l.b16 %v111
  %v131 = vunpack.c.h.b16 %v111
  %v132 = vunpack.c.l.b16 %v112
  %v133 = vunpack.c.h.b16 %v112
  %v134 = vunpack.c.l.b16 %v113
  %v135 = vunpack.c.h.b16 %v113
  %v136 = vunpack.c.l.b16 %v114
  %v137 = vunpack.c.h.b16 %v114
  %v138 = vunpack.c.l.b16 %v115
  %v139 = vunpack.c.h.b16 %v115
  %v140 = vpack.c.b16 %v124, %v124
  %v141 = vpack.c.b16 %v125, %v125
  %v142 = vpack.c.b16 %v126, %v126
  %v143 = vpack.c.b16 %v127, %v127
  %v144 = vpack.c.b16 %v128, %v128
  %v145 = vpack.c.b16 %v129, %v129
  %v146 = vpack.c.b16 %v130, %v130
  %v147 = vpack.c.b16 %v131, %v131
  %v148 = vpack.c.b16 %v132, %v132
  %v149 = vpack.c.b16 %v133, %v133
  %v150 = vpack.c.b16 %v134, %v134
  %v151 = vpack.c.b16 %v135, %v135
  %v152 = vpack.c.b16 %v136, %v136
  %v153 = vpack.c.b16 %v137, %v137
  %v154 = vpack.c.b16 %v138, %v138
  %v155 = vpack.c.b16 %v139, %v139
  %vm172 = vcmask 125952
  %173 = vst.msk [vmem:[%s3] sm:$0xf] %vm172, %v140
  %174 = vst.msk [vmem:[%s3 + $0x4] sm:$0xf] %vm172, %v141
  %175 = vst.msk [vmem:[%s3 + $0x8] sm:$0xf] %vm172, %v142
  %176 = vst.msk [vmem:[%s3 + $0xc] sm:$0xf] %vm172, %v143
  %177 = vst.msk [vmem:[%s3 + $0x10] sm:$0xf] %vm172, %v144
  %178 = vst.msk [vmem:[%s3 + $0x14] sm:$0xf] %vm172, %v145
  %179 = vst.msk [vmem:[%s3 + $0x18] sm:$0xf] %vm172, %v146
  %180 = vst.msk [vmem:[%s3 + $0x1c] sm:$0xf] %vm172, %v147
  %181 = vst.msk [vmem:[%s3 + $0x20] sm:$0xf] %vm172, %v148
  %182 = vst.msk [vmem:[%s3 + $0x24] sm:$0xf] %vm172, %v149
  %183 = vst.msk [vmem:[%s3 + $0x28] sm:$0xf] %vm172, %v150
  %184 = vst.msk [vmem:[%s3 + $0x2c] sm:$0xf] %vm172, %v151
  %185 = vst.msk [vmem:[%s3 + $0x30] sm:$0xf] %vm172, %v152
  %186 = vst.msk [vmem:[%s3 + $0x34] sm:$0xf] %vm172, %v153
  %187 = vst.msk [vmem:[%s3 + $0x38] sm:$0xf] %vm172, %v154
  %188 = vst.msk [vmem:[%s3 + $0x3c] sm:$0xf] %vm172, %v155
  // Predicated region
  $region14: #{densenet_forward.37} parent=0 // pred_check
    _
  $region15: #{densenet_forward.37} parent=0 // pred_check_branch
    %190 = sbr.rel (0) target = $region17
  $region16: #{densenet_forward.37} parent=0 // pred_region
    _
  $region17: #{densenet_forward.37} parent=0 // pred_fallthru
    _
  // Predicated region
  $region18: #{densenet_forward.37} parent=0 // pred_check
    _
  $region19: #{densenet_forward.37} parent=0 // pred_check_branch
    %192 = sbr.rel (0) target = $region21
  $region20: #{densenet_forward.37} parent=0 // pred_region
    _
  $region21: #{densenet_forward.37} parent=0 // pred_fallthru
    _

// kernel: densenet_forward.38
$region0: #{densenet_forward.38}
  #allocation0 [shape = 'u32[]', space=smem, size = 0x4, offset = 0x4, fixed_abs, tag = 'smem constant byte address 0x4 - core index']
  #allocation1 [shape = 'u32[144,128]{1,0:T(1,128)}', space=vmem, size = 0x12000, scoped, tag = 'internal scratch']
  #allocation2 [shape = 'f32[128,128]{1,0:T(8,128)}', space=vmem, size = 0x10000, scoped, tag = 'scratch operand']
  %s0 = inlined_call_operand.vmem [shape: bf16[128,144], index: 0, kind: input, shape index: {}]
  %s1 = inlined_call_operand.vmem [shape: bf16[144,128], index: 1, kind: input, shape index: {}]
  %s2 = inlined_call_operand.vmem [shape: f32[1,144], index: 2, kind: input, shape index: {}, may-alias: {2,3}]
  %s3 = inlined_call_operand.vmem [shape: f32[1,144], index: 3, kind: input, shape index: {}, may-alias: {2,3}]
  %s4 = inlined_call_operand.vmem [shape: f32[1,128], index: 4, kind: input, shape index: {}]
  %s5 = inlined_call_operand.vmem [shape: bf16[128,128], index: 5, kind: output, shape index: {}]
  %s6 = sld [smem:[#allocation0]]
  $region38: #{densenet_forward.38} parent=0
    _
  %s8 = ssub.s32 1, %s6
  %s9 = scalar_select 0, %s8, %s6
  // Predicated region
  $region2: #{densenet_forward.38} parent=0 // pred_check
    _
  $region3: #{densenet_forward.38} parent=0 // pred_check_branch
    %11 = sbr.rel (0) target = $region5
  $region4: #{densenet_forward.38} parent=0 // pred_region
    _
  $region5: #{densenet_forward.38} parent=0 // pred_fallthru
    _
  // Predicated region
  $region6: #{densenet_forward.38} parent=0 // pred_check
    _
  $region7: #{densenet_forward.38} parent=0 // pred_check_branch
    %13 = sbr.rel (0) target = $region9
  $region8: #{densenet_forward.38} parent=0 // pred_region
    _
  $region9: #{densenet_forward.38} parent=0 // pred_fallthru
    _
  // Predicated region
  $region10: #{densenet_forward.38} parent=0 // pred_check
    _
  $region11: #{densenet_forward.38} parent=0 // pred_check_branch
    %15 = sbr.rel (0) target = $region13
  $region12: #{densenet_forward.38} parent=0 // pred_region
    _
  $region13: #{densenet_forward.38} parent=0 // pred_fallthru
    _
  // Predicated region
  $region14: #{densenet_forward.38} parent=0 // pred_check
    _
  $region15: #{densenet_forward.38} parent=0 // pred_check_branch
    %17 = sbr.rel (0) target = $region17
  $region16: #{densenet_forward.38} parent=0 // pred_region
    _
  $region17: #{densenet_forward.38} parent=0 // pred_fallthru
    _
  // Predicated region
  $region18: #{densenet_forward.38} parent=0 // pred_check
    _
  $region19: #{densenet_forward.38} parent=0 // pred_check_branch
    %19 = sbr.rel (0) target = $region21
  $region20: #{densenet_forward.38} parent=0 // pred_region
    _
  $region21: #{densenet_forward.38} parent=0 // pred_fallthru
    _
  %p21 = scmp.eq.s32.totalorder 0, 0
  // Predicated region
  $region22: #{densenet_forward.38} parent=0 // pred_check
    %p22 = pneg %p21
  $region23: #{densenet_forward.38} parent=0 // pred_check_branch
    %24 = sbr.rel (%p22) target = $region25
  $region24: #{densenet_forward.38} parent=0 // pred_region
    %25 = vst [vmem:[#allocation2] sm:$0xff] 0.0
    %26 = vst [vmem:[#allocation2 + $0x8] sm:$0xff] 0.0
    %27 = vst [vmem:[#allocation2 + $0x10] sm:$0xff] 0.0
    %28 = vst [vmem:[#allocation2 + $0x18] sm:$0xff] 0.0
    %29 = vst [vmem:[#allocation2 + $0x20] sm:$0xff] 0.0
    %30 = vst [vmem:[#allocation2 + $0x28] sm:$0xff] 0.0
    %31 = vst [vmem:[#allocation2 + $0x30] sm:$0xff] 0.0
    %32 = vst [vmem:[#allocation2 + $0x38] sm:$0xff] 0.0
    %33 = vst [vmem:[#allocation2 + $0x40] sm:$0xff] 0.0
    %34 = vst [vmem:[#allocation2 + $0x48] sm:$0xff] 0.0
    %35 = vst [vmem:[#allocation2 + $0x50] sm:$0xff] 0.0
    %36 = vst [vmem:[#allocation2 + $0x58] sm:$0xff] 0.0
    %37 = vst [vmem:[#allocation2 + $0x60] sm:$0xff] 0.0
    %38 = vst [vmem:[#allocation2 + $0x68] sm:$0xff] 0.0
    %39 = vst [vmem:[#allocation2 + $0x70] sm:$0xff] 0.0
    %40 = vst [vmem:[#allocation2 + $0x78] sm:$0xff] 0.0
  $region25: #{densenet_forward.38} parent=0 // pred_fallthru
    _
  %v41 = vld [vmem:[%s0] sm:$0xff]
  %v42 = vld [vmem:[%s0 + $0x8] sm:$0xff]
  %v43 = vld [vmem:[%s0 + $0x10] sm:$0xff]
  %v44 = vld [vmem:[%s0 + $0x18] sm:$0xff]
  %v45 = vld [vmem:[%s0 + $0x20] sm:$0xff]
  %v46 = vld [vmem:[%s0 + $0x28] sm:$0xff]
  %v47 = vld [vmem:[%s0 + $0x30] sm:$0xff]
  %v48 = vld [vmem:[%s0 + $0x38] sm:$0xff]
  %v49 = vld [vmem:[%s0 + $0x40] sm:$0xff]
  %v50 = vld [vmem:[%s0 + $0x48] sm:$0xff]
  %v51 = vld [vmem:[%s0 + $0x50] sm:$0xff]
  %v52 = vld [vmem:[%s0 + $0x58] sm:$0xff]
  %v53 = vld [vmem:[%s0 + $0x60] sm:$0xff]
  %v54 = vld [vmem:[%s0 + $0x68] sm:$0xff]
  %v55 = vld [vmem:[%s0 + $0x70] sm:$0xff]
  %v56 = vld [vmem:[%s0 + $0x78] sm:$0xff]
  %v57 = vld [vmem:[#allocation2] sm:$0xff]
  %v58 = vld [vmem:[#allocation2 + $0x8] sm:$0xff]
  %v59 = vld [vmem:[#allocation2 + $0x10] sm:$0xff]
  %v60 = vld [vmem:[#allocation2 + $0x18] sm:$0xff]
  %v61 = vld [vmem:[#allocation2 + $0x20] sm:$0xff]
  %v62 = vld [vmem:[#allocation2 + $0x28] sm:$0xff]
  %v63 = vld [vmem:[#allocation2 + $0x30] sm:$0xff]
  %v64 = vld [vmem:[#allocation2 + $0x38] sm:$0xff]
  %v65 = vld [vmem:[#allocation2 + $0x40] sm:$0xff]
  %v66 = vld [vmem:[#allocation2 + $0x48] sm:$0xff]
  %v67 = vld [vmem:[#allocation2 + $0x50] sm:$0xff]
  %v68 = vld [vmem:[#allocation2 + $0x58] sm:$0xff]
  %v69 = vld [vmem:[#allocation2 + $0x60] sm:$0xff]
  %v70 = vld [vmem:[#allocation2 + $0x68] sm:$0xff]
  %v71 = vld [vmem:[#allocation2 + $0x70] sm:$0xff]
  %v72 = vld [vmem:[#allocation2 + $0x78] sm:$0xff]
  %v73 = vld [vmem:[%s1] sm:$0xf]
  %v74 = vld [vmem:[%s1 + $0x4] sm:$0xf]
  %v75 = vld [vmem:[%s1 + $0x8] sm:$0xf]
  %v76 = vld [vmem:[%s1 + $0xc] sm:$0xf]
  %v77 = vld [vmem:[%s1 + $0x10] sm:$0xf]
  %v78 = vld [vmem:[%s1 + $0x14] sm:$0xf]
  %v79 = vld [vmem:[%s1 + $0x18] sm:$0xf]
  %v80 = vld [vmem:[%s1 + $0x1c] sm:$0xf]
  %v81 = vld [vmem:[%s1 + $0x20] sm:$0xf]
  %v82 = vld [vmem:[%s1 + $0x24] sm:$0xf]
  %v83 = vld [vmem:[%s1 + $0x28] sm:$0xf]
  %v84 = vld [vmem:[%s1 + $0x2c] sm:$0xf]
  %v85 = vld [vmem:[%s1 + $0x30] sm:$0xf]
  %v86 = vld [vmem:[%s1 + $0x34] sm:$0xf]
  %v87 = vld [vmem:[%s1 + $0x38] sm:$0xf]
  %v88 = vld [vmem:[%s1 + $0x3c] sm:$0xf]
  %v89 = vld [vmem:[%s1 + $0x40] sm:$0xf]
  %v90 = vld [vmem:[%s1 + $0x44] sm:$0xf]
  %v107 = vunpack.c.l.b16 %v41
  %v108 = vunpack.c.h.b16 %v41
  %v109 = vunpack.c.l.b16 %v42
  %v110 = vunpack.c.h.b16 %v42
  %v111 = vunpack.c.l.b16 %v43
  %v112 = vunpack.c.h.b16 %v43
  %v113 = vunpack.c.l.b16 %v44
  %v114 = vunpack.c.h.b16 %v44
  %v115 = vunpack.c.l.b16 %v45
  %v116 = vunpack.c.h.b16 %v45
  %v117 = vunpack.c.l.b16 %v46
  %v118 = vunpack.c.h.b16 %v46
  %v119 = vunpack.c.l.b16 %v47
  %v120 = vunpack.c.h.b16 %v47
  %v121 = vunpack.c.l.b16 %v48
  %v122 = vunpack.c.h.b16 %v48
  %v123 = vunpack.c.l.b16 %v49
  %v124 = vunpack.c.h.b16 %v49
  %v125 = vunpack.c.l.b16 %v50
  %v126 = vunpack.c.h.b16 %v50
  %v127 = vunpack.c.l.b16 %v51
  %v128 = vunpack.c.h.b16 %v51
  %v129 = vunpack.c.l.b16 %v52
  %v130 = vunpack.c.h.b16 %v52
  %v131 = vunpack.c.l.b16 %v53
  %v132 = vunpack.c.h.b16 %v53
  %v133 = vunpack.c.l.b16 %v54
  %v134 = vunpack.c.h.b16 %v54
  %v135 = vunpack.c.l.b16 %v55
  %v136 = vunpack.c.h.b16 %v55
  %v137 = vunpack.c.l.b16 %v56
  %v138 = vunpack.c.h.b16 %v56
  %v139 = vpack.c.b16 %v109, %v107
  %v140 = vpack.c.b16 %v110, %v108
  %v141 = vpack.c.b16 %v113, %v111
  %v142 = vpack.c.b16 %v114, %v112
  %v143 = vpack.c.b16 %v117, %v115
  %v144 = vpack.c.b16 %v118, %v116
  %v145 = vpack.c.b16 %v121, %v119
  %v146 = vpack.c.b16 %v122, %v120
  %v147 = vpack.c.b16 %v125, %v123
  %v148 = vpack.c.b16 %v126, %v124
  %v149 = vpack.c.b16 %v129, %v127
  %v150 = vpack.c.b16 %v130, %v128
  %v151 = vpack.c.b16 %v133, %v131
  %v152 = vpack.c.b16 %v134, %v132
  %v153 = vpack.c.b16 %v137, %v135
  %v154 = vpack.c.b16 %v138, %v136
  %v181 = vunpack.c.l.b16 %v73
  %v182 = vunpack.c.l.b16 %v74
  %v183 = vunpack.c.l.b16 %v75
  %v184 = vunpack.c.l.b16 %v76
  %v185 = vunpack.c.l.b16 %v77
  %v186 = vunpack.c.l.b16 %v78
  %v187 = vunpack.c.l.b16 %v79
  %v188 = vunpack.c.l.b16 %v80
  %v189 = vunpack.c.l.b16 %v81
  %v190 = vunpack.c.l.b16 %v82
  %v191 = vunpack.c.l.b16 %v83
  %v192 = vunpack.c.l.b16 %v84
  %v193 = vunpack.c.l.b16 %v85
  %v194 = vunpack.c.l.b16 %v86
  %v195 = vunpack.c.l.b16 %v87
  %v196 = vunpack.c.l.b16 %v88
  %v197 = vunpack.c.l.b16 %v89
  %v198 = vunpack.c.l.b16 %v90
  %v199 = vpack.c.b16 %v182, %v181
  %v200 = vpack.c.b16 %v184, %v183
  %v201 = vpack.c.b16 %v186, %v185
  %v202 = vpack.c.b16 %v188, %v187
  %v203 = vpack.c.b16 %v190, %v189
  %v204 = vpack.c.b16 %v192, %v191
  %v205 = vpack.c.b16 %v194, %v193
  %v206 = vpack.c.b16 %v196, %v195
  %v207 = vpack.c.b16 %v198, %v197
  %vm217 = vcmask 130048
  %v219 = vsel %vm217, %v140, 0
  %v222 = vsel %vm217, %v142, 0
  %v225 = vsel %vm217, %v144, 0
  %v228 = vsel %vm217, %v146, 0
  %v231 = vsel %vm217, %v148, 0
  %v234 = vsel %vm217, %v150, 0
  %v237 = vsel %vm217, %v152, 0
  %v240 = vsel %vm217, %v154, 0
  %242 = vmatprep.subr.bf16.mxu0 0
  %243 = vmatpush1.bf16.msra.mxu0 %v199
  %244 = vmatprep.subr.bf16.mxu0 0
  %245 = vmatpush1.bf16.msra.mxu0 %v200
  %246 = vmatprep.subr.bf16.mxu0 0
  %247 = vmatpush1.bf16.msra.mxu0 %v201
  %248 = vmatprep.subr.bf16.mxu0 0
  %249 = vmatpush1.bf16.msra.mxu0 %v202
  %250 = vmatprep.subr.bf16.mxu0 0
  %251 = vmatpush1.bf16.msra.mxu0 %v203
  %252 = vmatprep.subr.bf16.mxu0 0
  %253 = vmatpush1.bf16.msra.mxu0 %v204
  %254 = vmatprep.subr.bf16.mxu0 0
  %255 = vmatpush1.bf16.msra.mxu0 %v205
  %256 = vmatprep.subr.bf16.mxu0 0
  %257 = vmatpush1.bf16.msra.mxu0 %v206
  %258 = vmatprep.subr.bf16.mxu0 0
  %259 = vmatpush1.bf16.msra.mxu0 %v207
  %260 = vmatprep.subr.bf16.mxu0 0
  %261 = vmatpush1.bf16.msra.mxu0 0
  %262 = vmatprep.subr.bf16.mxu0 0
  %263 = vmatpush1.bf16.msra.mxu0 0
  %264 = vmatprep.subr.bf16.mxu0 0
  %265 = vmatpush1.bf16.msra.mxu0 0
  %266 = vmatprep.subr.bf16.mxu0 0
  %267 = vmatpush1.bf16.msra.mxu0 0
  %268 = vmatprep.subr.bf16.mxu0 0
  %269 = vmatpush1.bf16.msra.mxu0 0
  %270 = vmatprep.subr.bf16.mxu0 0
  %271 = vmatpush1.bf16.msra.mxu0 0
  %272 = vmatprep.subr.bf16.mxu0 0
  %273 = vmatpush1.bf16.msra.mxu0 0
  %274 = vmatprep.mubr.bf16.mxu0 %v219
  %275 = vmatmul.mubr.bf16.gmra.mrb[0].mxu0 %v139
  %v276 = vpop.f32.mrb[0].mxu0
  %v277 = vadd.f32 0.0, %v276
  %v278 = vpop.f32.mrb[0].mxu0
  %v279 = vpop.f32.mrb[0].mxu0
  %v280 = vadd.f32 0.0, %v279
  %v281 = vpop.f32.mrb[0].mxu0
  %282 = vmatprep.mubr.bf16.mxu0 %v222
  %283 = vmatmul.mubr.bf16.gmra.mrb[0].mxu0 %v141
  %v284 = vpop.f32.mrb[0].mxu0
  %v285 = vadd.f32 0.0, %v284
  %v286 = vpop.f32.mrb[0].mxu0
  %v287 = vpop.f32.mrb[0].mxu0
  %v288 = vadd.f32 0.0, %v287
  %v289 = vpop.f32.mrb[0].mxu0
  %290 = vmatprep.mubr.bf16.mxu0 %v225
  %291 = vmatmul.mubr.bf16.gmra.mrb[0].mxu0 %v143
  %v292 = vpop.f32.mrb[0].mxu0
  %v293 = vadd.f32 0.0, %v292
  %v294 = vpop.f32.mrb[0].mxu0
  %v295 = vpop.f32.mrb[0].mxu0
  %v296 = vadd.f32 0.0, %v295
  %v297 = vpop.f32.mrb[0].mxu0
  %298 = vmatprep.mubr.bf16.mxu0 %v228
  %299 = vmatmul.mubr.bf16.gmra.mrb[0].mxu0 %v145
  %v300 = vpop.f32.mrb[0].mxu0
  %v301 = vadd.f32 0.0, %v300
  %v302 = vpop.f32.mrb[0].mxu0
  %v303 = vpop.f32.mrb[0].mxu0
  %v304 = vadd.f32 0.0, %v303
  %v305 = vpop.f32.mrb[0].mxu0
  %306 = vmatprep.mubr.bf16.mxu0 %v231
  %307 = vmatmul.mubr.bf16.gmra.mrb[0].mxu0 %v147
  %v308 = vpop.f32.mrb[0].mxu0
  %v309 = vadd.f32 0.0, %v308
  %v310 = vpop.f32.mrb[0].mxu0
  %v311 = vpop.f32.mrb[0].mxu0
  %v312 = vadd.f32 0.0, %v311
  %v313 = vpop.f32.mrb[0].mxu0
  %314 = vmatprep.mubr.bf16.mxu0 %v234
  %315 = vmatmul.mubr.bf16.gmra.mrb[0].mxu0 %v149
  %v316 = vpop.f32.mrb[0].mxu0
  %v317 = vadd.f32 0.0, %v316
  %v318 = vpop.f32.mrb[0].mxu0
  %v319 = vpop.f32.mrb[0].mxu0
  %v320 = vadd.f32 0.0, %v319
  %v321 = vpop.f32.mrb[0].mxu0
  %322 = vmatprep.mubr.bf16.mxu0 %v237
  %323 = vmatmul.mubr.bf16.gmra.mrb[0].mxu0 %v151
  %v324 = vpop.f32.mrb[0].mxu0
  %v325 = vadd.f32 0.0, %v324
  %v326 = vpop.f32.mrb[0].mxu0
  %v327 = vpop.f32.mrb[0].mxu0
  %v328 = vadd.f32 0.0, %v327
  %v329 = vpop.f32.mrb[0].mxu0
  %330 = vmatprep.mubr.bf16.mxu0 %v240
  %331 = vmatmul.mubr.bf16.gmra.mrb[0].mxu0 %v153
  %v332 = vpop.f32.mrb[0].mxu0
  %v333 = vadd.f32 0.0, %v332
  %v334 = vpop.f32.mrb[0].mxu0
  %v335 = vpop.f32.mrb[0].mxu0
  %v336 = vadd.f32 0.0, %v335
  %v337 = vpop.f32.mrb[0].mxu0
  %338 = vdwg.mxu0
  %v339 = vadd.f32 %v57, %v277
  %v340 = vadd.f32 %v58, %v280
  %v341 = vadd.f32 %v59, %v285
  %v342 = vadd.f32 %v60, %v288
  %v343 = vadd.f32 %v61, %v293
  %v344 = vadd.f32 %v62, %v296
  %v345 = vadd.f32 %v63, %v301
  %v346 = vadd.f32 %v64, %v304
  %v347 = vadd.f32 %v65, %v309
  %v348 = vadd.f32 %v66, %v312
  %v349 = vadd.f32 %v67, %v317
  %v350 = vadd.f32 %v68, %v320
  %v351 = vadd.f32 %v69, %v325
  %v352 = vadd.f32 %v70, %v328
  %v353 = vadd.f32 %v71, %v333
  %v354 = vadd.f32 %v72, %v336
  %355 = vst [vmem:[#allocation2] sm:$0xff] %v339
  %356 = vst [vmem:[#allocation2 + $0x8] sm:$0xff] %v340
  %357 = vst [vmem:[#allocation2 + $0x10] sm:$0xff] %v341
  %358 = vst [vmem:[#allocation2 + $0x18] sm:$0xff] %v342
  %359 = vst [vmem:[#allocation2 + $0x20] sm:$0xff] %v343
  %360 = vst [vmem:[#allocation2 + $0x28] sm:$0xff] %v344
  %361 = vst [vmem:[#allocation2 + $0x30] sm:$0xff] %v345
  %362 = vst [vmem:[#allocation2 + $0x38] sm:$0xff] %v346
  %363 = vst [vmem:[#allocation2 + $0x40] sm:$0xff] %v347
  %364 = vst [vmem:[#allocation2 + $0x48] sm:$0xff] %v348
  %365 = vst [vmem:[#allocation2 + $0x50] sm:$0xff] %v349
  %366 = vst [vmem:[#allocation2 + $0x58] sm:$0xff] %v350
  %367 = vst [vmem:[#allocation2 + $0x60] sm:$0xff] %v351
  %368 = vst [vmem:[#allocation2 + $0x68] sm:$0xff] %v352
  %369 = vst [vmem:[#allocation2 + $0x70] sm:$0xff] %v353
  %370 = vst [vmem:[#allocation2 + $0x78] sm:$0xff] %v354
  // Predicated region
  $region26: #{densenet_forward.38} parent=0 // pred_check
    %p371 = pneg %p21
  $region27: #{densenet_forward.38} parent=0 // pred_check_branch
    %373 = sbr.rel (%p371) target = $region29
  $region28: #{densenet_forward.38} parent=0 // pred_region
    %v374 = vld [vmem:[#allocation2] sm:$0xff]
    %v375 = vld [vmem:[#allocation2 + $0x8] sm:$0xff]
    %v376 = vld [vmem:[#allocation2 + $0x10] sm:$0xff]
    %v377 = vld [vmem:[#allocation2 + $0x18] sm:$0xff]
    %v378 = vld [vmem:[#allocation2 + $0x20] sm:$0xff]
    %v379 = vld [vmem:[#allocation2 + $0x28] sm:$0xff]
    %v380 = vld [vmem:[#allocation2 + $0x30] sm:$0xff]
    %v381 = vld [vmem:[#allocation2 + $0x38] sm:$0xff]
    %v382 = vld [vmem:[#allocation2 + $0x40] sm:$0xff]
    %v383 = vld [vmem:[#allocation2 + $0x48] sm:$0xff]
    %v384 = vld [vmem:[#allocation2 + $0x50] sm:$0xff]
    %v385 = vld [vmem:[#allocation2 + $0x58] sm:$0xff]
    %v386 = vld [vmem:[#allocation2 + $0x60] sm:$0xff]
    %v387 = vld [vmem:[#allocation2 + $0x68] sm:$0xff]
    %v388 = vld [vmem:[#allocation2 + $0x70] sm:$0xff]
    %v389 = vld [vmem:[#allocation2 + $0x78] sm:$0xff]
    %v390 = vld [vmem:[%s4] sm:$0x1]
    %v392 = vlaneseq
    %v393 = vshrl.u32 %v392, 7
    %v394 = vsub.s32 0, %v393
    %v395 = vrot.slane %v390, %v394
    %v397 = vadd.f32 %v374, %v395
    %v398 = vadd.f32 %v375, %v395
    %v399 = vadd.f32 %v376, %v395
    %v400 = vadd.f32 %v377, %v395
    %v401 = vadd.f32 %v378, %v395
    %v402 = vadd.f32 %v379, %v395
    %v403 = vadd.f32 %v380, %v395
    %v404 = vadd.f32 %v381, %v395
    %v405 = vadd.f32 %v382, %v395
    %v406 = vadd.f32 %v383, %v395
    %v407 = vadd.f32 %v384, %v395
    %v408 = vadd.f32 %v385, %v395
    %v409 = vadd.f32 %v386, %v395
    %v410 = vadd.f32 %v387, %v395
    %v411 = vadd.f32 %v388, %v395
    %v412 = vadd.f32 %v389, %v395
    %v413 = vpack.c.bf16 %v398, %v397
    %v414 = vpack.c.bf16 %v400, %v399
    %v415 = vpack.c.bf16 %v402, %v401
    %v416 = vpack.c.bf16 %v404, %v403
    %v417 = vpack.c.bf16 %v406, %v405
    %v418 = vpack.c.bf16 %v408, %v407
    %v419 = vpack.c.bf16 %v410, %v409
    %v420 = vpack.c.bf16 %v412, %v411
    %v429 = vunpack.c.l.b16 %v413
    %v430 = vunpack.c.h.b16 %v413
    %v431 = vunpack.c.l.b16 %v414
    %v432 = vunpack.c.h.b16 %v414
    %v433 = vunpack.c.l.b16 %v415
    %v434 = vunpack.c.h.b16 %v415
    %v435 = vunpack.c.l.b16 %v416
    %v436 = vunpack.c.h.b16 %v416
    %v437 = vunpack.c.l.b16 %v417
    %v438 = vunpack.c.h.b16 %v417
    %v439 = vunpack.c.l.b16 %v418
    %v440 = vunpack.c.h.b16 %v418
    %v441 = vunpack.c.l.b16 %v419
    %v442 = vunpack.c.h.b16 %v419
    %v443 = vunpack.c.l.b16 %v420
    %v444 = vunpack.c.h.b16 %v420
    %v445 = vpack.c.b16 %v429, %v429
    %v446 = vpack.c.b16 %v430, %v430
    %v447 = vpack.c.b16 %v431, %v431
    %v448 = vpack.c.b16 %v432, %v432
    %v449 = vpack.c.b16 %v433, %v433
    %v450 = vpack.c.b16 %v434, %v434
    %v451 = vpack.c.b16 %v435, %v435
    %v452 = vpack.c.b16 %v436, %v436
    %v453 = vpack.c.b16 %v437, %v437
    %v454 = vpack.c.b16 %v438, %v438
    %v455 = vpack.c.b16 %v439, %v439
    %v456 = vpack.c.b16 %v440, %v440
    %v457 = vpack.c.b16 %v441, %v441
    %v458 = vpack.c.b16 %v442, %v442
    %v459 = vpack.c.b16 %v443, %v443
    %v460 = vpack.c.b16 %v444, %v444
    %477 = vst [vmem:[%s5] sm:$0xf] %v445
    %478 = vst [vmem:[%s5 + $0x4] sm:$0xf] %v446
    %479 = vst [vmem:[%s5 + $0x8] sm:$0xf] %v447
    %480 = vst [vmem:[%s5 + $0xc] sm:$0xf] %v448
    %481 = vst [vmem:[%s5 + $0x10] sm:$0xf] %v449
    %482 = vst [vmem:[%s5 + $0x14] sm:$0xf] %v450
    %483 = vst [vmem:[%s5 + $0x18] sm:$0xf] %v451
    %484 = vst [vmem:[%s5 + $0x1c] sm:$0xf] %v452
    %485 = vst [vmem:[%s5 + $0x20] sm:$0xf] %v453
    %486 = vst [vmem:[%s5 + $0x24] sm:$0xf] %v454
    %487 = vst [vmem:[%s5 + $0x28] sm:$0xf] %v455
    %488 = vst [vmem:[%s5 + $0x2c] sm:$0xf] %v456
    %489 = vst [vmem:[%s5 + $0x30] sm:$0xf] %v457
    %490 = vst [vmem:[%s5 + $0x34] sm:$0xf] %v458
    %491 = vst [vmem:[%s5 + $0x38] sm:$0xf] %v459
    %492 = vst [vmem:[%s5 + $0x3c] sm:$0xf] %v460
  $region29: #{densenet_forward.38} parent=0 // pred_fallthru
    _
  // Predicated region
  $region30: #{densenet_forward.38} parent=0 // pred_check
    _
  $region31: #{densenet_forward.38} parent=0 // pred_check_branch
    %494 = sbr.rel (0) target = $region33
  $region32: #{densenet_forward.38} parent=0 // pred_region
    _
  $region33: #{densenet_forward.38} parent=0 // pred_fallthru
    _
  // Predicated region
  $region34: #{densenet_forward.38} parent=0 // pred_check
    _
  $region35: #{densenet_forward.38} parent=0 // pred_check_branch
    %496 = sbr.rel (0) target = $region37
  $region36: #{densenet_forward.38} parent=0 // pred_region
    _
  $region37: #{densenet_forward.38} parent=0 // pred_fallthru
    _

// kernel: densenet_forward.39
$region0: #{densenet_forward.39}
  #allocation0 [shape = 'u32[]', space=smem, size = 0x4, offset = 0x4, fixed_abs, tag = 'smem constant byte address 0x4 - core index']
  #allocation1 [shape = 'u32[144,128]{1,0:T(1,128)}', space=vmem, size = 0x12000, scoped, tag = 'internal scratch']
  #allocation2 [shape = 'f32[1,24]{1,0:T(1,128)}', space=vmem, size = 0x200, scoped, tag = 'scratch operand']
  #allocation3 [shape = 'f32[1,24]{1,0:T(1,128)}', space=vmem, size = 0x200, scoped, tag = 'scratch operand']
  %s0 = inlined_call_operand.vmem [shape: bf16[128,24], index: 0, kind: input, shape index: {}]
  %s1 = inlined_call_operand.vmem [shape: f32[1,24], index: 1, kind: input, shape index: {}]
  %s2 = inlined_call_operand.vmem [shape: f32[1,24], index: 2, kind: input, shape index: {}]
  %s3 = inlined_call_operand.vmem [shape: f32[1,24], index: 3, kind: output, shape index: {0}]
  %s4 = inlined_call_operand.vmem [shape: f32[1,24], index: 4, kind: output, shape index: {1}]
  %5 = xla_tuple %s3, %s4
  %s6 = sld [smem:[#allocation0]]
  $region38: #{densenet_forward.39} parent=0
    _
  %s8 = ssub.s32 1, %s6
  %s9 = scalar_select 0, %s8, %s6
  // Predicated region
  $region2: #{densenet_forward.39} parent=0 // pred_check
    _
  $region3: #{densenet_forward.39} parent=0 // pred_check_branch
    %11 = sbr.rel (0) target = $region5
  $region4: #{densenet_forward.39} parent=0 // pred_region
    _
  $region5: #{densenet_forward.39} parent=0 // pred_fallthru
    _
  // Predicated region
  $region6: #{densenet_forward.39} parent=0 // pred_check
    _
  $region7: #{densenet_forward.39} parent=0 // pred_check_branch
    %13 = sbr.rel (0) target = $region9
  $region8: #{densenet_forward.39} parent=0 // pred_region
    _
  $region9: #{densenet_forward.39} parent=0 // pred_fallthru
    _
  // Predicated region
  $region10: #{densenet_forward.39} parent=0 // pred_check
    _
  $region11: #{densenet_forward.39} parent=0 // pred_check_branch
    %15 = sbr.rel (0) target = $region13
  $region12: #{densenet_forward.39} parent=0 // pred_region
    _
  $region13: #{densenet_forward.39} parent=0 // pred_fallthru
    _
  %p16 = scmp.eq.s32.totalorder 0, 0
  // Predicated region
  $region14: #{densenet_forward.39} parent=0 // pred_check
    %p17 = pneg %p16
  $region15: #{densenet_forward.39} parent=0 // pred_check_branch
    %19 = sbr.rel (%p17) target = $region17
  $region16: #{densenet_forward.39} parent=0 // pred_region
    %vm20 = vcmask 188416
    %21 = vst.msk [vmem:[#allocation2] sm:$0x1] %vm20, 0.0
    %22 = vst.msk [vmem:[#allocation3] sm:$0x1] %vm20, 0.0
  $region17: #{densenet_forward.39} parent=0 // pred_fallthru
    _
  %v23 = vld [vmem:[%s0] sm:$0xf]
  %v24 = vld [vmem:[%s0 + $0x4] sm:$0xf]
  %v25 = vld [vmem:[%s0 + $0x8] sm:$0xf]
  %v26 = vld [vmem:[%s0 + $0xc] sm:$0xf]
  %v27 = vld [vmem:[%s0 + $0x10] sm:$0xf]
  %v28 = vld [vmem:[%s0 + $0x14] sm:$0xf]
  %v29 = vld [vmem:[%s0 + $0x18] sm:$0xf]
  %v30 = vld [vmem:[%s0 + $0x1c] sm:$0xf]
  %v31 = vld [vmem:[%s0 + $0x20] sm:$0xf]
  %v32 = vld [vmem:[%s0 + $0x24] sm:$0xf]
  %v33 = vld [vmem:[%s0 + $0x28] sm:$0xf]
  %v34 = vld [vmem:[%s0 + $0x2c] sm:$0xf]
  %v35 = vld [vmem:[%s0 + $0x30] sm:$0xf]
  %v36 = vld [vmem:[%s0 + $0x34] sm:$0xf]
  %v37 = vld [vmem:[%s0 + $0x38] sm:$0xf]
  %v38 = vld [vmem:[%s0 + $0x3c] sm:$0xf]
  %v39 = vunpack.c.l.bf16 %v23
  %v40 = vunpack.c.l.bf16 %v24
  %v41 = vunpack.c.l.bf16 %v25
  %v42 = vunpack.c.l.bf16 %v26
  %v43 = vunpack.c.l.bf16 %v27
  %v44 = vunpack.c.l.bf16 %v28
  %v45 = vunpack.c.l.bf16 %v29
  %v46 = vunpack.c.l.bf16 %v30
  %v47 = vunpack.c.l.bf16 %v31
  %v48 = vunpack.c.l.bf16 %v32
  %v49 = vunpack.c.l.bf16 %v33
  %v50 = vunpack.c.l.bf16 %v34
  %v51 = vunpack.c.l.bf16 %v35
  %v52 = vunpack.c.l.bf16 %v36
  %v53 = vunpack.c.l.bf16 %v37
  %v54 = vunpack.c.l.bf16 %v38
  %v55 = vld [vmem:[#allocation2] sm:$0x1]
  %vm56 = vcmask 195584
  %v57 = vsel %vm56, %v39, 0.0
  %v58 = vsel %vm56, %v40, 0.0
  %v59 = vadd.f32 %v57, %v58
  %v60 = vsel %vm56, %v41, 0.0
  %v61 = vadd.f32 %v59, %v60
  %v62 = vsel %vm56, %v42, 0.0
  %v63 = vadd.f32 %v61, %v62
  %v64 = vsel %vm56, %v43, 0.0
  %v65 = vadd.f32 %v63, %v64
  %v66 = vsel %vm56, %v44, 0.0
  %v67 = vadd.f32 %v65, %v66
  %v68 = vsel %vm56, %v45, 0.0
  %v69 = vadd.f32 %v67, %v68
  %v70 = vsel %vm56, %v46, 0.0
  %v71 = vadd.f32 %v69, %v70
  %v72 = vsel %vm56, %v47, 0.0
  %v73 = vadd.f32 %v71, %v72
  %v74 = vsel %vm56, %v48, 0.0
  %v75 = vadd.f32 %v73, %v74
  %v76 = vsel %vm56, %v49, 0.0
  %v77 = vadd.f32 %v75, %v76
  %v78 = vsel %vm56, %v50, 0.0
  %v79 = vadd.f32 %v77, %v78
  %v80 = vsel %vm56, %v51, 0.0
  %v81 = vadd.f32 %v79, %v80
  %v82 = vsel %vm56, %v52, 0.0
  %v83 = vadd.f32 %v81, %v82
  %v84 = vsel %vm56, %v53, 0.0
  %v85 = vadd.f32 %v83, %v84
  %v86 = vsel %vm56, %v54, 0.0
  %v87 = vadd.f32 %v85, %v86
  %v88 = vrot.slane %v87, 4
  %v89 = vadd.f32 %v87, %v88
  %v90 = vrot.slane %v89, 2
  %v91 = vadd.f32 %v89, %v90
  %v92 = vrot.slane %v91, 1
  %v93 = vadd.f32 %v91, %v92
  %v94 = vadd.f32 %v55, %v93
  %vm95 = vcmask 188416
  %96 = vst.msk [vmem:[#allocation2] sm:$0x1] %vm95, %v94
  %v97 = vld [vmem:[#allocation3] sm:$0x1]
  %v98 = vmul.f32 %v39, %v39
  %v99 = vmul.f32 %v40, %v40
  %v100 = vmul.f32 %v41, %v41
  %v101 = vmul.f32 %v42, %v42
  %v102 = vmul.f32 %v43, %v43
  %v103 = vmul.f32 %v44, %v44
  %v104 = vmul.f32 %v45, %v45
  %v105 = vmul.f32 %v46, %v46
  %v106 = vmul.f32 %v47, %v47
  %v107 = vmul.f32 %v48, %v48
  %v108 = vmul.f32 %v49, %v49
  %v109 = vmul.f32 %v50, %v50
  %v110 = vmul.f32 %v51, %v51
  %v111 = vmul.f32 %v52, %v52
  %v112 = vmul.f32 %v53, %v53
  %v113 = vmul.f32 %v54, %v54
  %v114 = vsel %vm56, %v98, 0.0
  %v115 = vsel %vm56, %v99, 0.0
  %v116 = vadd.f32 %v114, %v115
  %v117 = vsel %vm56, %v100, 0.0
  %v118 = vadd.f32 %v116, %v117
  %v119 = vsel %vm56, %v101, 0.0
  %v120 = vadd.f32 %v118, %v119
  %v121 = vsel %vm56, %v102, 0.0
  %v122 = vadd.f32 %v120, %v121
  %v123 = vsel %vm56, %v103, 0.0
  %v124 = vadd.f32 %v122, %v123
  %v125 = vsel %vm56, %v104, 0.0
  %v126 = vadd.f32 %v124, %v125
  %v127 = vsel %vm56, %v105, 0.0
  %v128 = vadd.f32 %v126, %v127
  %v129 = vsel %vm56, %v106, 0.0
  %v130 = vadd.f32 %v128, %v129
  %v131 = vsel %vm56, %v107, 0.0
  %v132 = vadd.f32 %v130, %v131
  %v133 = vsel %vm56, %v108, 0.0
  %v134 = vadd.f32 %v132, %v133
  %v135 = vsel %vm56, %v109, 0.0
  %v136 = vadd.f32 %v134, %v135
  %v137 = vsel %vm56, %v110, 0.0
  %v138 = vadd.f32 %v136, %v137
  %v139 = vsel %vm56, %v111, 0.0
  %v140 = vadd.f32 %v138, %v139
  %v141 = vsel %vm56, %v112, 0.0
  %v142 = vadd.f32 %v140, %v141
  %v143 = vsel %vm56, %v113, 0.0
  %v144 = vadd.f32 %v142, %v143
  %v145 = vrot.slane %v144, 4
  %v146 = vadd.f32 %v144, %v145
  %v147 = vrot.slane %v146, 2
  %v148 = vadd.f32 %v146, %v147
  %v149 = vrot.slane %v148, 1
  %v150 = vadd.f32 %v148, %v149
  %v151 = vadd.f32 %v97, %v150
  %152 = vst.msk [vmem:[#allocation3] sm:$0x1] %vm95, %v151
  // Predicated region
  $region18: #{densenet_forward.39} parent=0 // pred_check
    %p153 = pneg %p16
  $region19: #{densenet_forward.39} parent=0 // pred_check_branch
    %155 = sbr.rel (%p153) target = $region21
  $region20: #{densenet_forward.39} parent=0 // pred_region
    %v156 = vld [vmem:[#allocation2] sm:$0x1]
    %v157 = vmul.f32 %v156, 0.0078125
    %v158 = vld [vmem:[#allocation3] sm:$0x1]
    %v159 = vmul.f32 %v158, 0.0078125
    %v160 = vmul.f32 %v157, %v157
    %v161 = vsub.f32 %v159, %v160
    %v162 = vmax.f32 %v161, 0.0
    %v163 = vadd.f32 %v162, 1e-05
    %v164 = vrsqrt.pop %v163
    %v165 = vld [vmem:[%s1] sm:$0x1]
    %v166 = vmul.f32 %v165, %v164
    %167 = vst.msk [vmem:[%s3] sm:$0x1] %vm95, %v166
    %v168 = vld [vmem:[%s2] sm:$0x1]
    %v169 = vmul.f32 %v157, %v166
    %v170 = vsub.f32 %v168, %v169
    %171 = vst.msk [vmem:[%s4] sm:$0x1] %vm95, %v170
  $region21: #{densenet_forward.39} parent=0 // pred_fallthru
    _
  // Predicated region
  $region22: #{densenet_forward.39} parent=0 // pred_check
    _
  $region23: #{densenet_forward.39} parent=0 // pred_check_branch
    %173 = sbr.rel (0) target = $region25
  $region24: #{densenet_forward.39} parent=0 // pred_region
    _
  $region25: #{densenet_forward.39} parent=0 // pred_fallthru
    _
  // Predicated region
  $region26: #{densenet_forward.39} parent=0 // pred_check
    _
  $region27: #{densenet_forward.39} parent=0 // pred_check_branch
    %175 = sbr.rel (0) target = $region29
  $region28: #{densenet_forward.39} parent=0 // pred_region
    _
  $region29: #{densenet_forward.39} parent=0 // pred_fallthru
    _
  // Predicated region
  $region30: #{densenet_forward.39} parent=0 // pred_check
    _
  $region31: #{densenet_forward.39} parent=0 // pred_check_branch
    %177 = sbr.rel (0) target = $region33
  $region32: #{densenet_forward.39} parent=0 // pred_region
    _
  $region33: #{densenet_forward.39} parent=0 // pred_fallthru
    _
  // Predicated region
  $region34: #{densenet_forward.39} parent=0 // pred_check
    _
  $region35: #{densenet_forward.39} parent=0 // pred_check_branch
    %179 = sbr.rel (0) target = $region37
  $region36: #{densenet_forward.39} parent=0 // pred_region
    _
  $region37: #{densenet_forward.39} parent=0 // pred_fallthru
    _

// kernel: densenet_forward.40
$region0: #{densenet_forward.40}
  #allocation0 [shape = 'u32[]', space=smem, size = 0x4, offset = 0x4, fixed_abs, tag = 'smem constant byte address 0x4 - core index']
  #allocation1 [shape = 'u32[144,128]{1,0:T(1,128)}', space=vmem, size = 0x12000, scoped, tag = 'internal scratch']
  #allocation2 [shape = 'f32[128,128]{1,0:T(8,128)}', space=vmem, size = 0x10000, scoped, tag = 'scratch operand']
  %s0 = inlined_call_operand.vmem [shape: bf16[128,24], index: 0, kind: input, shape index: {}]
  %s1 = inlined_call_operand.vmem [shape: bf16[24,128], index: 1, kind: input, shape index: {}]
  %s2 = inlined_call_operand.vmem [shape: f32[1,24], index: 2, kind: input, shape index: {}]
  %s3 = inlined_call_operand.vmem [shape: f32[1,24], index: 3, kind: input, shape index: {}]
  %s4 = inlined_call_operand.vmem [shape: f32[1,128], index: 4, kind: input, shape index: {}]
  %s5 = inlined_call_operand.vmem [shape: bf16[128,128], index: 5, kind: output, shape index: {}]
  %s6 = sld [smem:[#allocation0]]
  $region38: #{densenet_forward.40} parent=0
    _
  %s8 = ssub.s32 1, %s6
  %s9 = scalar_select 0, %s8, %s6
  // Predicated region
  $region2: #{densenet_forward.40} parent=0 // pred_check
    _
  $region3: #{densenet_forward.40} parent=0 // pred_check_branch
    %11 = sbr.rel (0) target = $region5
  $region4: #{densenet_forward.40} parent=0 // pred_region
    _
  $region5: #{densenet_forward.40} parent=0 // pred_fallthru
    _
  // Predicated region
  $region6: #{densenet_forward.40} parent=0 // pred_check
    _
  $region7: #{densenet_forward.40} parent=0 // pred_check_branch
    %13 = sbr.rel (0) target = $region9
  $region8: #{densenet_forward.40} parent=0 // pred_region
    _
  $region9: #{densenet_forward.40} parent=0 // pred_fallthru
    _
  // Predicated region
  $region10: #{densenet_forward.40} parent=0 // pred_check
    _
  $region11: #{densenet_forward.40} parent=0 // pred_check_branch
    %15 = sbr.rel (0) target = $region13
  $region12: #{densenet_forward.40} parent=0 // pred_region
    _
  $region13: #{densenet_forward.40} parent=0 // pred_fallthru
    _
  // Predicated region
  $region14: #{densenet_forward.40} parent=0 // pred_check
    _
  $region15: #{densenet_forward.40} parent=0 // pred_check_branch
    %17 = sbr.rel (0) target = $region17
  $region16: #{densenet_forward.40} parent=0 // pred_region
    _
  $region17: #{densenet_forward.40} parent=0 // pred_fallthru
    _
  // Predicated region
  $region18: #{densenet_forward.40} parent=0 // pred_check
    _
  $region19: #{densenet_forward.40} parent=0 // pred_check_branch
    %19 = sbr.rel (0) target = $region21
  $region20: #{densenet_forward.40} parent=0 // pred_region
    _
  $region21: #{densenet_forward.40} parent=0 // pred_fallthru
    _
  %p21 = scmp.eq.s32.totalorder 0, 0
  // Predicated region
  $region22: #{densenet_forward.40} parent=0 // pred_check
    %p22 = pneg %p21
  $region23: #{densenet_forward.40} parent=0 // pred_check_branch
    %24 = sbr.rel (%p22) target = $region25
  $region24: #{densenet_forward.40} parent=0 // pred_region
    %25 = vst [vmem:[#allocation2] sm:$0xff] 0.0
    %26 = vst [vmem:[#allocation2 + $0x8] sm:$0xff] 0.0
    %27 = vst [vmem:[#allocation2 + $0x10] sm:$0xff] 0.0
    %28 = vst [vmem:[#allocation2 + $0x18] sm:$0xff] 0.0
    %29 = vst [vmem:[#allocation2 + $0x20] sm:$0xff] 0.0
    %30 = vst [vmem:[#allocation2 + $0x28] sm:$0xff] 0.0
    %31 = vst [vmem:[#allocation2 + $0x30] sm:$0xff] 0.0
    %32 = vst [vmem:[#allocation2 + $0x38] sm:$0xff] 0.0
    %33 = vst [vmem:[#allocation2 + $0x40] sm:$0xff] 0.0
    %34 = vst [vmem:[#allocation2 + $0x48] sm:$0xff] 0.0
    %35 = vst [vmem:[#allocation2 + $0x50] sm:$0xff] 0.0
    %36 = vst [vmem:[#allocation2 + $0x58] sm:$0xff] 0.0
    %37 = vst [vmem:[#allocation2 + $0x60] sm:$0xff] 0.0
    %38 = vst [vmem:[#allocation2 + $0x68] sm:$0xff] 0.0
    %39 = vst [vmem:[#allocation2 + $0x70] sm:$0xff] 0.0
    %40 = vst [vmem:[#allocation2 + $0x78] sm:$0xff] 0.0
  $region25: #{densenet_forward.40} parent=0 // pred_fallthru
    _
  %v41 = vld [vmem:[%s0] sm:$0xf]
  %v42 = vld [vmem:[%s0 + $0x4] sm:$0xf]
  %v43 = vld [vmem:[%s0 + $0x8] sm:$0xf]
  %v44 = vld [vmem:[%s0 + $0xc] sm:$0xf]
  %v45 = vld [vmem:[%s0 + $0x10] sm:$0xf]
  %v46 = vld [vmem:[%s0 + $0x14] sm:$0xf]
  %v47 = vld [vmem:[%s0 + $0x18] sm:$0xf]
  %v48 = vld [vmem:[%s0 + $0x1c] sm:$0xf]
  %v49 = vld [vmem:[%s0 + $0x20] sm:$0xf]
  %v50 = vld [vmem:[%s0 + $0x24] sm:$0xf]
  %v51 = vld [vmem:[%s0 + $0x28] sm:$0xf]
  %v52 = vld [vmem:[%s0 + $0x2c] sm:$0xf]
  %v53 = vld [vmem:[%s0 + $0x30] sm:$0xf]
  %v54 = vld [vmem:[%s0 + $0x34] sm:$0xf]
  %v55 = vld [vmem:[%s0 + $0x38] sm:$0xf]
  %v56 = vld [vmem:[%s0 + $0x3c] sm:$0xf]
  %v57 = vunpack.c.l.bf16 %v41
  %v58 = vunpack.c.l.bf16 %v42
  %v59 = vunpack.c.l.bf16 %v43
  %v60 = vunpack.c.l.bf16 %v44
  %v61 = vunpack.c.l.bf16 %v45
  %v62 = vunpack.c.l.bf16 %v46
  %v63 = vunpack.c.l.bf16 %v47
  %v64 = vunpack.c.l.bf16 %v48
  %v65 = vunpack.c.l.bf16 %v49
  %v66 = vunpack.c.l.bf16 %v50
  %v67 = vunpack.c.l.bf16 %v51
  %v68 = vunpack.c.l.bf16 %v52
  %v69 = vunpack.c.l.bf16 %v53
  %v70 = vunpack.c.l.bf16 %v54
  %v71 = vunpack.c.l.bf16 %v55
  %v72 = vunpack.c.l.bf16 %v56
  %v73 = vld [vmem:[%s2] sm:$0x1]
  %v75 = vlaneseq
  %v76 = vshrl.u32 %v75, 7
  %v77 = vsub.s32 0, %v76
  %v78 = vrot.slane %v73, %v77
  %v80 = vmul.f32 %v57, %v78
  %v81 = vmul.f32 %v58, %v78
  %v82 = vmul.f32 %v59, %v78
  %v83 = vmul.f32 %v60, %v78
  %v84 = vmul.f32 %v61, %v78
  %v85 = vmul.f32 %v62, %v78
  %v86 = vmul.f32 %v63, %v78
  %v87 = vmul.f32 %v64, %v78
  %v88 = vmul.f32 %v65, %v78
  %v89 = vmul.f32 %v66, %v78
  %v90 = vmul.f32 %v67, %v78
  %v91 = vmul.f32 %v68, %v78
  %v92 = vmul.f32 %v69, %v78
  %v93 = vmul.f32 %v70, %v78
  %v94 = vmul.f32 %v71, %v78
  %v95 = vmul.f32 %v72, %v78
  %v96 = vld [vmem:[%s3] sm:$0x1]
  %v98 = vlaneseq
  %v99 = vshrl.u32 %v98, 7
  %v100 = vsub.s32 0, %v99
  %v101 = vrot.slane %v96, %v100
  %v103 = vadd.f32 %v80, %v101
  %v104 = vadd.f32 %v81, %v101
  %v105 = vadd.f32 %v82, %v101
  %v106 = vadd.f32 %v83, %v101
  %v107 = vadd.f32 %v84, %v101
  %v108 = vadd.f32 %v85, %v101
  %v109 = vadd.f32 %v86, %v101
  %v110 = vadd.f32 %v87, %v101
  %v111 = vadd.f32 %v88, %v101
  %v112 = vadd.f32 %v89, %v101
  %v113 = vadd.f32 %v90, %v101
  %v114 = vadd.f32 %v91, %v101
  %v115 = vadd.f32 %v92, %v101
  %v116 = vadd.f32 %v93, %v101
  %v117 = vadd.f32 %v94, %v101
  %v118 = vadd.f32 %v95, %v101
  %v119 = vmax.f32 %v103, 0.0
  %v120 = vmax.f32 %v104, 0.0
  %v121 = vmax.f32 %v105, 0.0
  %v122 = vmax.f32 %v106, 0.0
  %v123 = vmax.f32 %v107, 0.0
  %v124 = vmax.f32 %v108, 0.0
  %v125 = vmax.f32 %v109, 0.0
  %v126 = vmax.f32 %v110, 0.0
  %v127 = vmax.f32 %v111, 0.0
  %v128 = vmax.f32 %v112, 0.0
  %v129 = vmax.f32 %v113, 0.0
  %v130 = vmax.f32 %v114, 0.0
  %v131 = vmax.f32 %v115, 0.0
  %v132 = vmax.f32 %v116, 0.0
  %v133 = vmax.f32 %v117, 0.0
  %v134 = vmax.f32 %v118, 0.0
  %v135 = vpack.c.bf16 %v120, %v119
  %v136 = vpack.c.bf16 %v122, %v121
  %v137 = vpack.c.bf16 %v124, %v123
  %v138 = vpack.c.bf16 %v126, %v125
  %v139 = vpack.c.bf16 %v128, %v127
  %v140 = vpack.c.bf16 %v130, %v129
  %v141 = vpack.c.bf16 %v132, %v131
  %v142 = vpack.c.bf16 %v134, %v133
  %v143 = vld [vmem:[#allocation2] sm:$0xff]
  %v144 = vld [vmem:[#allocation2 + $0x8] sm:$0xff]
  %v145 = vld [vmem:[#allocation2 + $0x10] sm:$0xff]
  %v146 = vld [vmem:[#allocation2 + $0x18] sm:$0xff]
  %v147 = vld [vmem:[#allocation2 + $0x20] sm:$0xff]
  %v148 = vld [vmem:[#allocation2 + $0x28] sm:$0xff]
  %v149 = vld [vmem:[#allocation2 + $0x30] sm:$0xff]
  %v150 = vld [vmem:[#allocation2 + $0x38] sm:$0xff]
  %v151 = vld [vmem:[#allocation2 + $0x40] sm:$0xff]
  %v152 = vld [vmem:[#allocation2 + $0x48] sm:$0xff]
  %v153 = vld [vmem:[#allocation2 + $0x50] sm:$0xff]
  %v154 = vld [vmem:[#allocation2 + $0x58] sm:$0xff]
  %v155 = vld [vmem:[#allocation2 + $0x60] sm:$0xff]
  %v156 = vld [vmem:[#allocation2 + $0x68] sm:$0xff]
  %v157 = vld [vmem:[#allocation2 + $0x70] sm:$0xff]
  %v158 = vld [vmem:[#allocation2 + $0x78] sm:$0xff]
  %v159 = vld [vmem:[%s1] sm:$0xf]
  %v160 = vld [vmem:[%s1 + $0x4] sm:$0xf]
  %v161 = vld [vmem:[%s1 + $0x8] sm:$0xf]
  %v165 = vunpack.c.l.b16 %v159
  %v166 = vunpack.c.l.b16 %v160
  %v167 = vunpack.c.l.b16 %v161
  %v168 = vpack.c.b16 %v166, %v165
  %v169 = vpack.c.b16 %v167, %v167
  %vm171 = vcmask 195584
  %v173 = vsel %vm171, %v135, 0
  %v176 = vsel %vm171, %v136, 0
  %v179 = vsel %vm171, %v137, 0
  %v182 = vsel %vm171, %v138, 0
  %v185 = vsel %vm171, %v139, 0
  %v188 = vsel %vm171, %v140, 0
  %v191 = vsel %vm171, %v141, 0
  %v194 = vsel %vm171, %v142, 0
  %vm196 = vcmask 1043456
  %v198 = vsel %vm196, %v169, 0
  %200 = vmatprep.subr.bf16.mxu0 0
  %201 = vmatpush1.bf16.msra.mxu0 %v168
  %202 = vmatprep.subr.bf16.mxu0 0
  %203 = vmatpush1.bf16.msra.mxu0 %v198
  %204 = vmatprep.subr.bf16.mxu0 0
  %205 = vmatpush1.bf16.msra.mxu0 0
  %206 = vmatprep.subr.bf16.mxu0 0
  %207 = vmatpush1.bf16.msra.mxu0 0
  %208 = vmatprep.subr.bf16.mxu0 0
  %209 = vmatpush1.bf16.msra.mxu0 0
  %210 = vmatprep.subr.bf16.mxu0 0
  %211 = vmatpush1.bf16.msra.mxu0 0
  %212 = vmatprep.subr.bf16.mxu0 0
  %213 = vmatpush1.bf16.msra.mxu0 0
  %214 = vmatprep.subr.bf16.mxu0 0
  %215 = vmatpush1.bf16.msra.mxu0 0
  %216 = vmatprep.subr.bf16.mxu0 0
  %217 = vmatpush1.bf16.msra.mxu0 0
  %218 = vmatprep.subr.bf16.mxu0 0
  %219 = vmatpush1.bf16.msra.mxu0 0
  %220 = vmatprep.subr.bf16.mxu0 0
  %221 = vmatpush1.bf16.msra.mxu0 0
  %222 = vmatprep.subr.bf16.mxu0 0
  %223 = vmatpush1.bf16.msra.mxu0 0
  %224 = vmatprep.subr.bf16.mxu0 0
  %225 = vmatpush1.bf16.msra.mxu0 0
  %226 = vmatprep.subr.bf16.mxu0 0
  %227 = vmatpush1.bf16.msra.mxu0 0
  %228 = vmatprep.subr.bf16.mxu0 0
  %229 = vmatpush1.bf16.msra.mxu0 0
  %230 = vmatprep.subr.bf16.mxu0 0
  %231 = vmatpush1.bf16.msra.mxu0 0
  %232 = vmatprep.mubr.bf16.mxu0 0
  %233 = vmatmul.mubr.bf16.gmra.mrb[0].mxu0 %v173
  %v234 = vpop.f32.mrb[0].mxu0
  %v235 = vadd.f32 0.0, %v234
  %v236 = vpop.f32.mrb[0].mxu0
  %v237 = vpop.f32.mrb[0].mxu0
  %v238 = vadd.f32 0.0, %v237
  %v239 = vpop.f32.mrb[0].mxu0
  %240 = vmatprep.mubr.bf16.mxu0 0
  %241 = vmatmul.mubr.bf16.gmra.mrb[0].mxu0 %v176
  %v242 = vpop.f32.mrb[0].mxu0
  %v243 = vadd.f32 0.0, %v242
  %v244 = vpop.f32.mrb[0].mxu0
  %v245 = vpop.f32.mrb[0].mxu0
  %v246 = vadd.f32 0.0, %v245
  %v247 = vpop.f32.mrb[0].mxu0
  %248 = vmatprep.mubr.bf16.mxu0 0
  %249 = vmatmul.mubr.bf16.gmra.mrb[0].mxu0 %v179
  %v250 = vpop.f32.mrb[0].mxu0
  %v251 = vadd.f32 0.0, %v250
  %v252 = vpop.f32.mrb[0].mxu0
  %v253 = vpop.f32.mrb[0].mxu0
  %v254 = vadd.f32 0.0, %v253
  %v255 = vpop.f32.mrb[0].mxu0
  %256 = vmatprep.mubr.bf16.mxu0 0
  %257 = vmatmul.mubr.bf16.gmra.mrb[0].mxu0 %v182
  %v258 = vpop.f32.mrb[0].mxu0
  %v259 = vadd.f32 0.0, %v258
  %v260 = vpop.f32.mrb[0].mxu0
  %v261 = vpop.f32.mrb[0].mxu0
  %v262 = vadd.f32 0.0, %v261
  %v263 = vpop.f32.mrb[0].mxu0
  %264 = vmatprep.mubr.bf16.mxu0 0
  %265 = vmatmul.mubr.bf16.gmra.mrb[0].mxu0 %v185
  %v266 = vpop.f32.mrb[0].mxu0
  %v267 = vadd.f32 0.0, %v266
  %v268 = vpop.f32.mrb[0].mxu0
  %v269 = vpop.f32.mrb[0].mxu0
  %v270 = vadd.f32 0.0, %v269
  %v271 = vpop.f32.mrb[0].mxu0
  %272 = vmatprep.mubr.bf16.mxu0 0
  %273 = vmatmul.mubr.bf16.gmra.mrb[0].mxu0 %v188
  %v274 = vpop.f32.mrb[0].mxu0
  %v275 = vadd.f32 0.0, %v274
  %v276 = vpop.f32.mrb[0].mxu0
  %v277 = vpop.f32.mrb[0].mxu0
  %v278 = vadd.f32 0.0, %v277
  %v279 = vpop.f32.mrb[0].mxu0
  %280 = vmatprep.mubr.bf16.mxu0 0
  %281 = vmatmul.mubr.bf16.gmra.mrb[0].mxu0 %v191
  %v282 = vpop.f32.mrb[0].mxu0
  %v283 = vadd.f32 0.0, %v282
  %v284 = vpop.f32.mrb[0].mxu0
  %v285 = vpop.f32.mrb[0].mxu0
  %v286 = vadd.f32 0.0, %v285
  %v287 = vpop.f32.mrb[0].mxu0
  %288 = vmatprep.mubr.bf16.mxu0 0
  %289 = vmatmul.mubr.bf16.gmra.mrb[0].mxu0 %v194
  %v290 = vpop.f32.mrb[0].mxu0
  %v291 = vadd.f32 0.0, %v290
  %v292 = vpop.f32.mrb[0].mxu0
  %v293 = vpop.f32.mrb[0].mxu0
  %v294 = vadd.f32 0.0, %v293
  %v295 = vpop.f32.mrb[0].mxu0
  %296 = vdwg.mxu0
  %v297 = vadd.f32 %v143, %v235
  %v298 = vadd.f32 %v144, %v238
  %v299 = vadd.f32 %v145, %v243
  %v300 = vadd.f32 %v146, %v246
  %v301 = vadd.f32 %v147, %v251
  %v302 = vadd.f32 %v148, %v254
  %v303 = vadd.f32 %v149, %v259
  %v304 = vadd.f32 %v150, %v262
  %v305 = vadd.f32 %v151, %v267
  %v306 = vadd.f32 %v152, %v270
  %v307 = vadd.f32 %v153, %v275
  %v308 = vadd.f32 %v154, %v278
  %v309 = vadd.f32 %v155, %v283
  %v310 = vadd.f32 %v156, %v286
  %v311 = vadd.f32 %v157, %v291
  %v312 = vadd.f32 %v158, %v294
  %313 = vst [vmem:[#allocation2] sm:$0xff] %v297
  %314 = vst [vmem:[#allocation2 + $0x8] sm:$0xff] %v298
  %315 = vst [vmem:[#allocation2 + $0x10] sm:$0xff] %v299
  %316 = vst [vmem:[#allocation2 + $0x18] sm:$0xff] %v300
  %317 = vst [vmem:[#allocation2 + $0x20] sm:$0xff] %v301
  %318 = vst [vmem:[#allocation2 + $0x28] sm:$0xff] %v302
  %319 = vst [vmem:[#allocation2 + $0x30] sm:$0xff] %v303
  %320 = vst [vmem:[#allocation2 + $0x38] sm:$0xff] %v304
  %321 = vst [vmem:[#allocation2 + $0x40] sm:$0xff] %v305
  %322 = vst [vmem:[#allocation2 + $0x48] sm:$0xff] %v306
  %323 = vst [vmem:[#allocation2 + $0x50] sm:$0xff] %v307
  %324 = vst [vmem:[#allocation2 + $0x58] sm:$0xff] %v308
  %325 = vst [vmem:[#allocation2 + $0x60] sm:$0xff] %v309
  %326 = vst [vmem:[#allocation2 + $0x68] sm:$0xff] %v310
  %327 = vst [vmem:[#allocation2 + $0x70] sm:$0xff] %v311
  %328 = vst [vmem:[#allocation2 + $0x78] sm:$0xff] %v312
  // Predicated region
  $region26: #{densenet_forward.40} parent=0 // pred_check
    %p329 = pneg %p21
  $region27: #{densenet_forward.40} parent=0 // pred_check_branch
    %331 = sbr.rel (%p329) target = $region29
  $region28: #{densenet_forward.40} parent=0 // pred_region
    %v332 = vld [vmem:[#allocation2] sm:$0xff]
    %v333 = vld [vmem:[#allocation2 + $0x8] sm:$0xff]
    %v334 = vld [vmem:[#allocation2 + $0x10] sm:$0xff]
    %v335 = vld [vmem:[#allocation2 + $0x18] sm:$0xff]
    %v336 = vld [vmem:[#allocation2 + $0x20] sm:$0xff]
    %v337 = vld [vmem:[#allocation2 + $0x28] sm:$0xff]
    %v338 = vld [vmem:[#allocation2 + $0x30] sm:$0xff]
    %v339 = vld [vmem:[#allocation2 + $0x38] sm:$0xff]
    %v340 = vld [vmem:[#allocation2 + $0x40] sm:$0xff]
    %v341 = vld [vmem:[#allocation2 + $0x48] sm:$0xff]
    %v342 = vld [vmem:[#allocation2 + $0x50] sm:$0xff]
    %v343 = vld [vmem:[#allocation2 + $0x58] sm:$0xff]
    %v344 = vld [vmem:[#allocation2 + $0x60] sm:$0xff]
    %v345 = vld [vmem:[#allocation2 + $0x68] sm:$0xff]
    %v346 = vld [vmem:[#allocation2 + $0x70] sm:$0xff]
    %v347 = vld [vmem:[#allocation2 + $0x78] sm:$0xff]
    %v348 = vld [vmem:[%s4] sm:$0x1]
    %v350 = vlaneseq
    %v351 = vshrl.u32 %v350, 7
    %v352 = vsub.s32 0, %v351
    %v353 = vrot.slane %v348, %v352
    %v355 = vadd.f32 %v332, %v353
    %v356 = vadd.f32 %v333, %v353
    %v357 = vadd.f32 %v334, %v353
    %v358 = vadd.f32 %v335, %v353
    %v359 = vadd.f32 %v336, %v353
    %v360 = vadd.f32 %v337, %v353
    %v361 = vadd.f32 %v338, %v353
    %v362 = vadd.f32 %v339, %v353
    %v363 = vadd.f32 %v340, %v353
    %v364 = vadd.f32 %v341, %v353
    %v365 = vadd.f32 %v342, %v353
    %v366 = vadd.f32 %v343, %v353
    %v367 = vadd.f32 %v344, %v353
    %v368 = vadd.f32 %v345, %v353
    %v369 = vadd.f32 %v346, %v353
    %v370 = vadd.f32 %v347, %v353
    %v371 = vpack.c.bf16 %v356, %v355
    %v372 = vpack.c.bf16 %v358, %v357
    %v373 = vpack.c.bf16 %v360, %v359
    %v374 = vpack.c.bf16 %v362, %v361
    %v375 = vpack.c.bf16 %v364, %v363
    %v376 = vpack.c.bf16 %v366, %v365
    %v377 = vpack.c.bf16 %v368, %v367
    %v378 = vpack.c.bf16 %v370, %v369
    %v387 = vunpack.c.l.b16 %v371
    %v388 = vunpack.c.h.b16 %v371
    %v389 = vunpack.c.l.b16 %v372
    %v390 = vunpack.c.h.b16 %v372
    %v391 = vunpack.c.l.b16 %v373
    %v392 = vunpack.c.h.b16 %v373
    %v393 = vunpack.c.l.b16 %v374
    %v394 = vunpack.c.h.b16 %v374
    %v395 = vunpack.c.l.b16 %v375
    %v396 = vunpack.c.h.b16 %v375
    %v397 = vunpack.c.l.b16 %v376
    %v398 = vunpack.c.h.b16 %v376
    %v399 = vunpack.c.l.b16 %v377
    %v400 = vunpack.c.h.b16 %v377
    %v401 = vunpack.c.l.b16 %v378
    %v402 = vunpack.c.h.b16 %v378
    %v403 = vpack.c.b16 %v387, %v387
    %v404 = vpack.c.b16 %v388, %v388
    %v405 = vpack.c.b16 %v389, %v389
    %v406 = vpack.c.b16 %v390, %v390
    %v407 = vpack.c.b16 %v391, %v391
    %v408 = vpack.c.b16 %v392, %v392
    %v409 = vpack.c.b16 %v393, %v393
    %v410 = vpack.c.b16 %v394, %v394
    %v411 = vpack.c.b16 %v395, %v395
    %v412 = vpack.c.b16 %v396, %v396
    %v413 = vpack.c.b16 %v397, %v397
    %v414 = vpack.c.b16 %v398, %v398
    %v415 = vpack.c.b16 %v399, %v399
    %v416 = vpack.c.b16 %v400, %v400
    %v417 = vpack.c.b16 %v401, %v401
    %v418 = vpack.c.b16 %v402, %v402
    %435 = vst [vmem:[%s5] sm:$0xf] %v403
    %436 = vst [vmem:[%s5 + $0x4] sm:$0xf] %v404
    %437 = vst [vmem:[%s5 + $0x8] sm:$0xf] %v405
    %438 = vst [vmem:[%s5 + $0xc] sm:$0xf] %v406
    %439 = vst [vmem:[%s5 + $0x10] sm:$0xf] %v407
    %440 = vst [vmem:[%s5 + $0x14] sm:$0xf] %v408
    %441 = vst [vmem:[%s5 + $0x18] sm:$0xf] %v409
    %442 = vst [vmem:[%s5 + $0x1c] sm:$0xf] %v410
    %443 = vst [vmem:[%s5 + $0x20] sm:$0xf] %v411
    %444 = vst [vmem:[%s5 + $0x24] sm:$0xf] %v412
    %445 = vst [vmem:[%s5 + $0x28] sm:$0xf] %v413
    %446 = vst [vmem:[%s5 + $0x2c] sm:$0xf] %v414
    %447 = vst [vmem:[%s5 + $0x30] sm:$0xf] %v415
    %448 = vst [vmem:[%s5 + $0x34] sm:$0xf] %v416
    %449 = vst [vmem:[%s5 + $0x38] sm:$0xf] %v417
    %450 = vst [vmem:[%s5 + $0x3c] sm:$0xf] %v418
  $region29: #{densenet_forward.40} parent=0 // pred_fallthru
    _
  // Predicated region
  $region30: #{densenet_forward.40} parent=0 // pred_check
    _
  $region31: #{densenet_forward.40} parent=0 // pred_check_branch
    %452 = sbr.rel (0) target = $region33
  $region32: #{densenet_forward.40} parent=0 // pred_region
    _
  $region33: #{densenet_forward.40} parent=0 // pred_fallthru
    _
  // Predicated region
  $region34: #{densenet_forward.40} parent=0 // pred_check
    _
  $region35: #{densenet_forward.40} parent=0 // pred_check_branch
    %454 = sbr.rel (0) target = $region37
  $region36: #{densenet_forward.40} parent=0 // pred_region
    _
  $region37: #{densenet_forward.40} parent=0 // pred_fallthru
    _

// kernel: densenet_forward.44
$region0: #{densenet_forward.44}
  #allocation0 [shape = 'u32[]', space=smem, size = 0x4, offset = 0x4, fixed_abs, tag = 'smem constant byte address 0x4 - core index']
  #allocation1 [shape = 'u32[144,128]{1,0:T(1,128)}', space=vmem, size = 0x12000, scoped, tag = 'internal scratch']
  #allocation2 [shape = 'f32[1,32]{1,0:T(1,128)}', space=vmem, size = 0x200, scoped, tag = 'scratch operand']
  #allocation3 [shape = 'f32[1,32]{1,0:T(1,128)}', space=vmem, size = 0x200, scoped, tag = 'scratch operand']
  %s0 = inlined_call_operand.vmem [shape: bf16[128,32], index: 0, kind: input, shape index: {}]
  %s1 = inlined_call_operand.vmem [shape: f32[1,32], index: 1, kind: input, shape index: {}]
  %s2 = inlined_call_operand.vmem [shape: f32[1,32], index: 2, kind: input, shape index: {}]
  %s3 = inlined_call_operand.vmem [shape: f32[1,32], index: 3, kind: output, shape index: {0}]
  %s4 = inlined_call_operand.vmem [shape: f32[1,32], index: 4, kind: output, shape index: {1}]
  %5 = xla_tuple %s3, %s4
  %s6 = sld [smem:[#allocation0]]
  $region38: #{densenet_forward.44} parent=0
    _
  %s8 = ssub.s32 1, %s6
  %s9 = scalar_select 0, %s8, %s6
  // Predicated region
  $region2: #{densenet_forward.44} parent=0 // pred_check
    _
  $region3: #{densenet_forward.44} parent=0 // pred_check_branch
    %11 = sbr.rel (0) target = $region5
  $region4: #{densenet_forward.44} parent=0 // pred_region
    _
  $region5: #{densenet_forward.44} parent=0 // pred_fallthru
    _
  // Predicated region
  $region6: #{densenet_forward.44} parent=0 // pred_check
    _
  $region7: #{densenet_forward.44} parent=0 // pred_check_branch
    %13 = sbr.rel (0) target = $region9
  $region8: #{densenet_forward.44} parent=0 // pred_region
    _
  $region9: #{densenet_forward.44} parent=0 // pred_fallthru
    _
  // Predicated region
  $region10: #{densenet_forward.44} parent=0 // pred_check
    _
  $region11: #{densenet_forward.44} parent=0 // pred_check_branch
    %15 = sbr.rel (0) target = $region13
  $region12: #{densenet_forward.44} parent=0 // pred_region
    _
  $region13: #{densenet_forward.44} parent=0 // pred_fallthru
    _
  %p16 = scmp.eq.s32.totalorder 0, 0
  // Predicated region
  $region14: #{densenet_forward.44} parent=0 // pred_check
    %p17 = pneg %p16
  $region15: #{densenet_forward.44} parent=0 // pred_check_branch
    %19 = sbr.rel (%p17) target = $region17
  $region16: #{densenet_forward.44} parent=0 // pred_region
    %vm20 = vcmask 253952
    %21 = vst.msk [vmem:[#allocation2] sm:$0x1] %vm20, 0.0
    %22 = vst.msk [vmem:[#allocation3] sm:$0x1] %vm20, 0.0
  $region17: #{densenet_forward.44} parent=0 // pred_fallthru
    _
  %v23 = vld [vmem:[%s0] sm:$0xf]
  %v24 = vld [vmem:[%s0 + $0x4] sm:$0xf]
  %v25 = vld [vmem:[%s0 + $0x8] sm:$0xf]
  %v26 = vld [vmem:[%s0 + $0xc] sm:$0xf]
  %v27 = vld [vmem:[%s0 + $0x10] sm:$0xf]
  %v28 = vld [vmem:[%s0 + $0x14] sm:$0xf]
  %v29 = vld [vmem:[%s0 + $0x18] sm:$0xf]
  %v30 = vld [vmem:[%s0 + $0x1c] sm:$0xf]
  %v31 = vld [vmem:[%s0 + $0x20] sm:$0xf]
  %v32 = vld [vmem:[%s0 + $0x24] sm:$0xf]
  %v33 = vld [vmem:[%s0 + $0x28] sm:$0xf]
  %v34 = vld [vmem:[%s0 + $0x2c] sm:$0xf]
  %v35 = vld [vmem:[%s0 + $0x30] sm:$0xf]
  %v36 = vld [vmem:[%s0 + $0x34] sm:$0xf]
  %v37 = vld [vmem:[%s0 + $0x38] sm:$0xf]
  %v38 = vld [vmem:[%s0 + $0x3c] sm:$0xf]
  %v39 = vunpack.c.l.bf16 %v23
  %v40 = vunpack.c.l.bf16 %v24
  %v41 = vunpack.c.l.bf16 %v25
  %v42 = vunpack.c.l.bf16 %v26
  %v43 = vunpack.c.l.bf16 %v27
  %v44 = vunpack.c.l.bf16 %v28
  %v45 = vunpack.c.l.bf16 %v29
  %v46 = vunpack.c.l.bf16 %v30
  %v47 = vunpack.c.l.bf16 %v31
  %v48 = vunpack.c.l.bf16 %v32
  %v49 = vunpack.c.l.bf16 %v33
  %v50 = vunpack.c.l.bf16 %v34
  %v51 = vunpack.c.l.bf16 %v35
  %v52 = vunpack.c.l.bf16 %v36
  %v53 = vunpack.c.l.bf16 %v37
  %v54 = vunpack.c.l.bf16 %v38
  %v55 = vld [vmem:[#allocation2] sm:$0x1]
  %vm56 = vcmask 261120
  %v57 = vsel %vm56, %v39, 0.0
  %v58 = vsel %vm56, %v40, 0.0
  %v59 = vadd.f32 %v57, %v58
  %v60 = vsel %vm56, %v41, 0.0
  %v61 = vadd.f32 %v59, %v60
  %v62 = vsel %vm56, %v42, 0.0
  %v63 = vadd.f32 %v61, %v62
  %v64 = vsel %vm56, %v43, 0.0
  %v65 = vadd.f32 %v63, %v64
  %v66 = vsel %vm56, %v44, 0.0
  %v67 = vadd.f32 %v65, %v66
  %v68 = vsel %vm56, %v45, 0.0
  %v69 = vadd.f32 %v67, %v68
  %v70 = vsel %vm56, %v46, 0.0
  %v71 = vadd.f32 %v69, %v70
  %v72 = vsel %vm56, %v47, 0.0
  %v73 = vadd.f32 %v71, %v72
  %v74 = vsel %vm56, %v48, 0.0
  %v75 = vadd.f32 %v73, %v74
  %v76 = vsel %vm56, %v49, 0.0
  %v77 = vadd.f32 %v75, %v76
  %v78 = vsel %vm56, %v50, 0.0
  %v79 = vadd.f32 %v77, %v78
  %v80 = vsel %vm56, %v51, 0.0
  %v81 = vadd.f32 %v79, %v80
  %v82 = vsel %vm56, %v52, 0.0
  %v83 = vadd.f32 %v81, %v82
  %v84 = vsel %vm56, %v53, 0.0
  %v85 = vadd.f32 %v83, %v84
  %v86 = vsel %vm56, %v54, 0.0
  %v87 = vadd.f32 %v85, %v86
  %v88 = vrot.slane %v87, 4
  %v89 = vadd.f32 %v87, %v88
  %v90 = vrot.slane %v89, 2
  %v91 = vadd.f32 %v89, %v90
  %v92 = vrot.slane %v91, 1
  %v93 = vadd.f32 %v91, %v92
  %v94 = vadd.f32 %v55, %v93
  %vm95 = vcmask 253952
  %96 = vst.msk [vmem:[#allocation2] sm:$0x1] %vm95, %v94
  %v97 = vld [vmem:[#allocation3] sm:$0x1]
  %v98 = vmul.f32 %v39, %v39
  %v99 = vmul.f32 %v40, %v40
  %v100 = vmul.f32 %v41, %v41
  %v101 = vmul.f32 %v42, %v42
  %v102 = vmul.f32 %v43, %v43
  %v103 = vmul.f32 %v44, %v44
  %v104 = vmul.f32 %v45, %v45
  %v105 = vmul.f32 %v46, %v46
  %v106 = vmul.f32 %v47, %v47
  %v107 = vmul.f32 %v48, %v48
  %v108 = vmul.f32 %v49, %v49
  %v109 = vmul.f32 %v50, %v50
  %v110 = vmul.f32 %v51, %v51
  %v111 = vmul.f32 %v52, %v52
  %v112 = vmul.f32 %v53, %v53
  %v113 = vmul.f32 %v54, %v54
  %v114 = vsel %vm56, %v98, 0.0
  %v115 = vsel %vm56, %v99, 0.0
  %v116 = vadd.f32 %v114, %v115
  %v117 = vsel %vm56, %v100, 0.0
  %v118 = vadd.f32 %v116, %v117
  %v119 = vsel %vm56, %v101, 0.0
  %v120 = vadd.f32 %v118, %v119
  %v121 = vsel %vm56, %v102, 0.0
  %v122 = vadd.f32 %v120, %v121
  %v123 = vsel %vm56, %v103, 0.0
  %v124 = vadd.f32 %v122, %v123
  %v125 = vsel %vm56, %v104, 0.0
  %v126 = vadd.f32 %v124, %v125
  %v127 = vsel %vm56, %v105, 0.0
  %v128 = vadd.f32 %v126, %v127
  %v129 = vsel %vm56, %v106, 0.0
  %v130 = vadd.f32 %v128, %v129
  %v131 = vsel %vm56, %v107, 0.0
  %v132 = vadd.f32 %v130, %v131
  %v133 = vsel %vm56, %v108, 0.0
  %v134 = vadd.f32 %v132, %v133
  %v135 = vsel %vm56, %v109, 0.0
  %v136 = vadd.f32 %v134, %v135
  %v137 = vsel %vm56, %v110, 0.0
  %v138 = vadd.f32 %v136, %v137
  %v139 = vsel %vm56, %v111, 0.0
  %v140 = vadd.f32 %v138, %v139
  %v141 = vsel %vm56, %v112, 0.0
  %v142 = vadd.f32 %v140, %v141
  %v143 = vsel %vm56, %v113, 0.0
  %v144 = vadd.f32 %v142, %v143
  %v145 = vrot.slane %v144, 4
  %v146 = vadd.f32 %v144, %v145
  %v147 = vrot.slane %v146, 2
  %v148 = vadd.f32 %v146, %v147
  %v149 = vrot.slane %v148, 1
  %v150 = vadd.f32 %v148, %v149
  %v151 = vadd.f32 %v97, %v150
  %152 = vst.msk [vmem:[#allocation3] sm:$0x1] %vm95, %v151
  // Predicated region
  $region18: #{densenet_forward.44} parent=0 // pred_check
    %p153 = pneg %p16
  $region19: #{densenet_forward.44} parent=0 // pred_check_branch
    %155 = sbr.rel (%p153) target = $region21
  $region20: #{densenet_forward.44} parent=0 // pred_region
    %v156 = vld [vmem:[#allocation2] sm:$0x1]
    %v157 = vmul.f32 %v156, 0.0078125
    %v158 = vld [vmem:[#allocation3] sm:$0x1]
    %v159 = vmul.f32 %v158, 0.0078125
    %v160 = vmul.f32 %v157, %v157
    %v161 = vsub.f32 %v159, %v160
    %v162 = vmax.f32 %v161, 0.0
    %v163 = vadd.f32 %v162, 1e-05
    %v164 = vrsqrt.pop %v163
    %v165 = vld [vmem:[%s1] sm:$0x1]
    %v166 = vmul.f32 %v165, %v164
    %167 = vst.msk [vmem:[%s3] sm:$0x1] %vm95, %v166
    %v168 = vld [vmem:[%s2] sm:$0x1]
    %v169 = vmul.f32 %v157, %v166
    %v170 = vsub.f32 %v168, %v169
    %171 = vst.msk [vmem:[%s4] sm:$0x1] %vm95, %v170
  $region21: #{densenet_forward.44} parent=0 // pred_fallthru
    _
  // Predicated region
  $region22: #{densenet_forward.44} parent=0 // pred_check
    _
  $region23: #{densenet_forward.44} parent=0 // pred_check_branch
    %173 = sbr.rel (0) target = $region25
  $region24: #{densenet_forward.44} parent=0 // pred_region
    _
  $region25: #{densenet_forward.44} parent=0 // pred_fallthru
    _
  // Predicated region
  $region26: #{densenet_forward.44} parent=0 // pred_check
    _
  $region27: #{densenet_forward.44} parent=0 // pred_check_branch
    %175 = sbr.rel (0) target = $region29
  $region28: #{densenet_forward.44} parent=0 // pred_region
    _
  $region29: #{densenet_forward.44} parent=0 // pred_fallthru
    _
  // Predicated region
  $region30: #{densenet_forward.44} parent=0 // pred_check
    _
  $region31: #{densenet_forward.44} parent=0 // pred_check_branch
    %177 = sbr.rel (0) target = $region33
  $region32: #{densenet_forward.44} parent=0 // pred_region
    _
  $region33: #{densenet_forward.44} parent=0 // pred_fallthru
    _
  // Predicated region
  $region34: #{densenet_forward.44} parent=0 // pred_check
    _
  $region35: #{densenet_forward.44} parent=0 // pred_check_branch
    %179 = sbr.rel (0) target = $region37
  $region36: #{densenet_forward.44} parent=0 // pred_region
    _
  $region37: #{densenet_forward.44} parent=0 // pred_fallthru
    _

// kernel: densenet_forward.45
$region0: #{densenet_forward.45}
  #allocation0 [shape = 'u32[]', space=smem, size = 0x4, offset = 0x4, fixed_abs, tag = 'smem constant byte address 0x4 - core index']
  #allocation1 [shape = 'u32[144,128]{1,0:T(1,128)}', space=vmem, size = 0x12000, scoped, tag = 'internal scratch']
  #allocation2 [shape = 'f32[128,128]{1,0:T(8,128)}', space=vmem, size = 0x10000, scoped, tag = 'scratch operand']
  %s0 = inlined_call_operand.vmem [shape: bf16[128,32], index: 0, kind: input, shape index: {}]
  %s1 = inlined_call_operand.vmem [shape: bf16[32,128], index: 1, kind: input, shape index: {}]
  %s2 = inlined_call_operand.vmem [shape: f32[1,32], index: 2, kind: input, shape index: {}]
  %s3 = inlined_call_operand.vmem [shape: f32[1,32], index: 3, kind: input, shape index: {}]
  %s4 = inlined_call_operand.vmem [shape: f32[1,128], index: 4, kind: input, shape index: {}]
  %s5 = inlined_call_operand.vmem [shape: bf16[128,128], index: 5, kind: output, shape index: {}]
  %s6 = sld [smem:[#allocation0]]
  $region38: #{densenet_forward.45} parent=0
    _
  %s8 = ssub.s32 1, %s6
  %s9 = scalar_select 0, %s8, %s6
  // Predicated region
  $region2: #{densenet_forward.45} parent=0 // pred_check
    _
  $region3: #{densenet_forward.45} parent=0 // pred_check_branch
    %11 = sbr.rel (0) target = $region5
  $region4: #{densenet_forward.45} parent=0 // pred_region
    _
  $region5: #{densenet_forward.45} parent=0 // pred_fallthru
    _
  // Predicated region
  $region6: #{densenet_forward.45} parent=0 // pred_check
    _
  $region7: #{densenet_forward.45} parent=0 // pred_check_branch
    %13 = sbr.rel (0) target = $region9
  $region8: #{densenet_forward.45} parent=0 // pred_region
    _
  $region9: #{densenet_forward.45} parent=0 // pred_fallthru
    _
  // Predicated region
  $region10: #{densenet_forward.45} parent=0 // pred_check
    _
  $region11: #{densenet_forward.45} parent=0 // pred_check_branch
    %15 = sbr.rel (0) target = $region13
  $region12: #{densenet_forward.45} parent=0 // pred_region
    _
  $region13: #{densenet_forward.45} parent=0 // pred_fallthru
    _
  // Predicated region
  $region14: #{densenet_forward.45} parent=0 // pred_check
    _
  $region15: #{densenet_forward.45} parent=0 // pred_check_branch
    %17 = sbr.rel (0) target = $region17
  $region16: #{densenet_forward.45} parent=0 // pred_region
    _
  $region17: #{densenet_forward.45} parent=0 // pred_fallthru
    _
  // Predicated region
  $region18: #{densenet_forward.45} parent=0 // pred_check
    _
  $region19: #{densenet_forward.45} parent=0 // pred_check_branch
    %19 = sbr.rel (0) target = $region21
  $region20: #{densenet_forward.45} parent=0 // pred_region
    _
  $region21: #{densenet_forward.45} parent=0 // pred_fallthru
    _
  %p21 = scmp.eq.s32.totalorder 0, 0
  // Predicated region
  $region22: #{densenet_forward.45} parent=0 // pred_check
    %p22 = pneg %p21
  $region23: #{densenet_forward.45} parent=0 // pred_check_branch
    %24 = sbr.rel (%p22) target = $region25
  $region24: #{densenet_forward.45} parent=0 // pred_region
    %25 = vst [vmem:[#allocation2] sm:$0xff] 0.0
    %26 = vst [vmem:[#allocation2 + $0x8] sm:$0xff] 0.0
    %27 = vst [vmem:[#allocation2 + $0x10] sm:$0xff] 0.0
    %28 = vst [vmem:[#allocation2 + $0x18] sm:$0xff] 0.0
    %29 = vst [vmem:[#allocation2 + $0x20] sm:$0xff] 0.0
    %30 = vst [vmem:[#allocation2 + $0x28] sm:$0xff] 0.0
    %31 = vst [vmem:[#allocation2 + $0x30] sm:$0xff] 0.0
    %32 = vst [vmem:[#allocation2 + $0x38] sm:$0xff] 0.0
    %33 = vst [vmem:[#allocation2 + $0x40] sm:$0xff] 0.0
    %34 = vst [vmem:[#allocation2 + $0x48] sm:$0xff] 0.0
    %35 = vst [vmem:[#allocation2 + $0x50] sm:$0xff] 0.0
    %36 = vst [vmem:[#allocation2 + $0x58] sm:$0xff] 0.0
    %37 = vst [vmem:[#allocation2 + $0x60] sm:$0xff] 0.0
    %38 = vst [vmem:[#allocation2 + $0x68] sm:$0xff] 0.0
    %39 = vst [vmem:[#allocation2 + $0x70] sm:$0xff] 0.0
    %40 = vst [vmem:[#allocation2 + $0x78] sm:$0xff] 0.0
  $region25: #{densenet_forward.45} parent=0 // pred_fallthru
    _
  %v41 = vld [vmem:[%s0] sm:$0xf]
  %v42 = vld [vmem:[%s0 + $0x4] sm:$0xf]
  %v43 = vld [vmem:[%s0 + $0x8] sm:$0xf]
  %v44 = vld [vmem:[%s0 + $0xc] sm:$0xf]
  %v45 = vld [vmem:[%s0 + $0x10] sm:$0xf]
  %v46 = vld [vmem:[%s0 + $0x14] sm:$0xf]
  %v47 = vld [vmem:[%s0 + $0x18] sm:$0xf]
  %v48 = vld [vmem:[%s0 + $0x1c] sm:$0xf]
  %v49 = vld [vmem:[%s0 + $0x20] sm:$0xf]
  %v50 = vld [vmem:[%s0 + $0x24] sm:$0xf]
  %v51 = vld [vmem:[%s0 + $0x28] sm:$0xf]
  %v52 = vld [vmem:[%s0 + $0x2c] sm:$0xf]
  %v53 = vld [vmem:[%s0 + $0x30] sm:$0xf]
  %v54 = vld [vmem:[%s0 + $0x34] sm:$0xf]
  %v55 = vld [vmem:[%s0 + $0x38] sm:$0xf]
  %v56 = vld [vmem:[%s0 + $0x3c] sm:$0xf]
  %v57 = vunpack.c.l.bf16 %v41
  %v58 = vunpack.c.l.bf16 %v42
  %v59 = vunpack.c.l.bf16 %v43
  %v60 = vunpack.c.l.bf16 %v44
  %v61 = vunpack.c.l.bf16 %v45
  %v62 = vunpack.c.l.bf16 %v46
  %v63 = vunpack.c.l.bf16 %v47
  %v64 = vunpack.c.l.bf16 %v48
  %v65 = vunpack.c.l.bf16 %v49
  %v66 = vunpack.c.l.bf16 %v50
  %v67 = vunpack.c.l.bf16 %v51
  %v68 = vunpack.c.l.bf16 %v52
  %v69 = vunpack.c.l.bf16 %v53
  %v70 = vunpack.c.l.bf16 %v54
  %v71 = vunpack.c.l.bf16 %v55
  %v72 = vunpack.c.l.bf16 %v56
  %v73 = vld [vmem:[%s2] sm:$0x1]
  %v75 = vlaneseq
  %v76 = vshrl.u32 %v75, 7
  %v77 = vsub.s32 0, %v76
  %v78 = vrot.slane %v73, %v77
  %v80 = vmul.f32 %v57, %v78
  %v81 = vmul.f32 %v58, %v78
  %v82 = vmul.f32 %v59, %v78
  %v83 = vmul.f32 %v60, %v78
  %v84 = vmul.f32 %v61, %v78
  %v85 = vmul.f32 %v62, %v78
  %v86 = vmul.f32 %v63, %v78
  %v87 = vmul.f32 %v64, %v78
  %v88 = vmul.f32 %v65, %v78
  %v89 = vmul.f32 %v66, %v78
  %v90 = vmul.f32 %v67, %v78
  %v91 = vmul.f32 %v68, %v78
  %v92 = vmul.f32 %v69, %v78
  %v93 = vmul.f32 %v70, %v78
  %v94 = vmul.f32 %v71, %v78
  %v95 = vmul.f32 %v72, %v78
  %v96 = vld [vmem:[%s3] sm:$0x1]
  %v98 = vlaneseq
  %v99 = vshrl.u32 %v98, 7
  %v100 = vsub.s32 0, %v99
  %v101 = vrot.slane %v96, %v100
  %v103 = vadd.f32 %v80, %v101
  %v104 = vadd.f32 %v81, %v101
  %v105 = vadd.f32 %v82, %v101
  %v106 = vadd.f32 %v83, %v101
  %v107 = vadd.f32 %v84, %v101
  %v108 = vadd.f32 %v85, %v101
  %v109 = vadd.f32 %v86, %v101
  %v110 = vadd.f32 %v87, %v101
  %v111 = vadd.f32 %v88, %v101
  %v112 = vadd.f32 %v89, %v101
  %v113 = vadd.f32 %v90, %v101
  %v114 = vadd.f32 %v91, %v101
  %v115 = vadd.f32 %v92, %v101
  %v116 = vadd.f32 %v93, %v101
  %v117 = vadd.f32 %v94, %v101
  %v118 = vadd.f32 %v95, %v101
  %v119 = vmax.f32 %v103, 0.0
  %v120 = vmax.f32 %v104, 0.0
  %v121 = vmax.f32 %v105, 0.0
  %v122 = vmax.f32 %v106, 0.0
  %v123 = vmax.f32 %v107, 0.0
  %v124 = vmax.f32 %v108, 0.0
  %v125 = vmax.f32 %v109, 0.0
  %v126 = vmax.f32 %v110, 0.0
  %v127 = vmax.f32 %v111, 0.0
  %v128 = vmax.f32 %v112, 0.0
  %v129 = vmax.f32 %v113, 0.0
  %v130 = vmax.f32 %v114, 0.0
  %v131 = vmax.f32 %v115, 0.0
  %v132 = vmax.f32 %v116, 0.0
  %v133 = vmax.f32 %v117, 0.0
  %v134 = vmax.f32 %v118, 0.0
  %v135 = vpack.c.bf16 %v120, %v119
  %v136 = vpack.c.bf16 %v122, %v121
  %v137 = vpack.c.bf16 %v124, %v123
  %v138 = vpack.c.bf16 %v126, %v125
  %v139 = vpack.c.bf16 %v128, %v127
  %v140 = vpack.c.bf16 %v130, %v129
  %v141 = vpack.c.bf16 %v132, %v131
  %v142 = vpack.c.bf16 %v134, %v133
  %v143 = vld [vmem:[#allocation2] sm:$0xff]
  %v144 = vld [vmem:[#allocation2 + $0x8] sm:$0xff]
  %v145 = vld [vmem:[#allocation2 + $0x10] sm:$0xff]
  %v146 = vld [vmem:[#allocation2 + $0x18] sm:$0xff]
  %v147 = vld [vmem:[#allocation2 + $0x20] sm:$0xff]
  %v148 = vld [vmem:[#allocation2 + $0x28] sm:$0xff]
  %v149 = vld [vmem:[#allocation2 + $0x30] sm:$0xff]
  %v150 = vld [vmem:[#allocation2 + $0x38] sm:$0xff]
  %v151 = vld [vmem:[#allocation2 + $0x40] sm:$0xff]
  %v152 = vld [vmem:[#allocation2 + $0x48] sm:$0xff]
  %v153 = vld [vmem:[#allocation2 + $0x50] sm:$0xff]
  %v154 = vld [vmem:[#allocation2 + $0x58] sm:$0xff]
  %v155 = vld [vmem:[#allocation2 + $0x60] sm:$0xff]
  %v156 = vld [vmem:[#allocation2 + $0x68] sm:$0xff]
  %v157 = vld [vmem:[#allocation2 + $0x70] sm:$0xff]
  %v158 = vld [vmem:[#allocation2 + $0x78] sm:$0xff]
  %v159 = vld [vmem:[%s1] sm:$0xf]
  %v160 = vld [vmem:[%s1 + $0x4] sm:$0xf]
  %v161 = vld [vmem:[%s1 + $0x8] sm:$0xf]
  %v162 = vld [vmem:[%s1 + $0xc] sm:$0xf]
  %v167 = vunpack.c.l.b16 %v159
  %v168 = vunpack.c.l.b16 %v160
  %v169 = vunpack.c.l.b16 %v161
  %v170 = vunpack.c.l.b16 %v162
  %v171 = vpack.c.b16 %v168, %v167
  %v172 = vpack.c.b16 %v170, %v169
  %vm175 = vcmask 261120
  %v177 = vsel %vm175, %v135, 0
  %v180 = vsel %vm175, %v136, 0
  %v183 = vsel %vm175, %v137, 0
  %v186 = vsel %vm175, %v138, 0
  %v189 = vsel %vm175, %v139, 0
  %v192 = vsel %vm175, %v140, 0
  %v195 = vsel %vm175, %v141, 0
  %v198 = vsel %vm175, %v142, 0
  %200 = vmatprep.subr.bf16.mxu0 0
  %201 = vmatpush1.bf16.msra.mxu0 %v171
  %202 = vmatprep.subr.bf16.mxu0 0
  %203 = vmatpush1.bf16.msra.mxu0 %v172
  %204 = vmatprep.subr.bf16.mxu0 0
  %205 = vmatpush1.bf16.msra.mxu0 0
  %206 = vmatprep.subr.bf16.mxu0 0
  %207 = vmatpush1.bf16.msra.mxu0 0
  %208 = vmatprep.subr.bf16.mxu0 0
  %209 = vmatpush1.bf16.msra.mxu0 0
  %210 = vmatprep.subr.bf16.mxu0 0
  %211 = vmatpush1.bf16.msra.mxu0 0
  %212 = vmatprep.subr.bf16.mxu0 0
  %213 = vmatpush1.bf16.msra.mxu0 0
  %214 = vmatprep.subr.bf16.mxu0 0
  %215 = vmatpush1.bf16.msra.mxu0 0
  %216 = vmatprep.subr.bf16.mxu0 0
  %217 = vmatpush1.bf16.msra.mxu0 0
  %218 = vmatprep.subr.bf16.mxu0 0
  %219 = vmatpush1.bf16.msra.mxu0 0
  %220 = vmatprep.subr.bf16.mxu0 0
  %221 = vmatpush1.bf16.msra.mxu0 0
  %222 = vmatprep.subr.bf16.mxu0 0
  %223 = vmatpush1.bf16.msra.mxu0 0
  %224 = vmatprep.subr.bf16.mxu0 0
  %225 = vmatpush1.bf16.msra.mxu0 0
  %226 = vmatprep.subr.bf16.mxu0 0
  %227 = vmatpush1.bf16.msra.mxu0 0
  %228 = vmatprep.subr.bf16.mxu0 0
  %229 = vmatpush1.bf16.msra.mxu0 0
  %230 = vmatprep.subr.bf16.mxu0 0
  %231 = vmatpush1.bf16.msra.mxu0 0
  %232 = vmatprep.mubr.bf16.mxu0 0
  %233 = vmatmul.mubr.bf16.gmra.mrb[0].mxu0 %v177
  %v234 = vpop.f32.mrb[0].mxu0
  %v235 = vadd.f32 0.0, %v234
  %v236 = vpop.f32.mrb[0].mxu0
  %v237 = vpop.f32.mrb[0].mxu0
  %v238 = vadd.f32 0.0, %v237
  %v239 = vpop.f32.mrb[0].mxu0
  %240 = vmatprep.mubr.bf16.mxu0 0
  %241 = vmatmul.mubr.bf16.gmra.mrb[0].mxu0 %v180
  %v242 = vpop.f32.mrb[0].mxu0
  %v243 = vadd.f32 0.0, %v242
  %v244 = vpop.f32.mrb[0].mxu0
  %v245 = vpop.f32.mrb[0].mxu0
  %v246 = vadd.f32 0.0, %v245
  %v247 = vpop.f32.mrb[0].mxu0
  %248 = vmatprep.mubr.bf16.mxu0 0
  %249 = vmatmul.mubr.bf16.gmra.mrb[0].mxu0 %v183
  %v250 = vpop.f32.mrb[0].mxu0
  %v251 = vadd.f32 0.0, %v250
  %v252 = vpop.f32.mrb[0].mxu0
  %v253 = vpop.f32.mrb[0].mxu0
  %v254 = vadd.f32 0.0, %v253
  %v255 = vpop.f32.mrb[0].mxu0
  %256 = vmatprep.mubr.bf16.mxu0 0
  %257 = vmatmul.mubr.bf16.gmra.mrb[0].mxu0 %v186
  %v258 = vpop.f32.mrb[0].mxu0
  %v259 = vadd.f32 0.0, %v258
  %v260 = vpop.f32.mrb[0].mxu0
  %v261 = vpop.f32.mrb[0].mxu0
  %v262 = vadd.f32 0.0, %v261
  %v263 = vpop.f32.mrb[0].mxu0
  %264 = vmatprep.mubr.bf16.mxu0 0
  %265 = vmatmul.mubr.bf16.gmra.mrb[0].mxu0 %v189
  %v266 = vpop.f32.mrb[0].mxu0
  %v267 = vadd.f32 0.0, %v266
  %v268 = vpop.f32.mrb[0].mxu0
  %v269 = vpop.f32.mrb[0].mxu0
  %v270 = vadd.f32 0.0, %v269
  %v271 = vpop.f32.mrb[0].mxu0
  %272 = vmatprep.mubr.bf16.mxu0 0
  %273 = vmatmul.mubr.bf16.gmra.mrb[0].mxu0 %v192
  %v274 = vpop.f32.mrb[0].mxu0
  %v275 = vadd.f32 0.0, %v274
  %v276 = vpop.f32.mrb[0].mxu0
  %v277 = vpop.f32.mrb[0].mxu0
  %v278 = vadd.f32 0.0, %v277
  %v279 = vpop.f32.mrb[0].mxu0
  %280 = vmatprep.mubr.bf16.mxu0 0
  %281 = vmatmul.mubr.bf16.gmra.mrb[0].mxu0 %v195
  %v282 = vpop.f32.mrb[0].mxu0
  %v283 = vadd.f32 0.0, %v282
  %v284 = vpop.f32.mrb[0].mxu0
  %v285 = vpop.f32.mrb[0].mxu0
  %v286 = vadd.f32 0.0, %v285
  %v287 = vpop.f32.mrb[0].mxu0
  %288 = vmatprep.mubr.bf16.mxu0 0
  %289 = vmatmul.mubr.bf16.gmra.mrb[0].mxu0 %v198
  %v290 = vpop.f32.mrb[0].mxu0
  %v291 = vadd.f32 0.0, %v290
  %v292 = vpop.f32.mrb[0].mxu0
  %v293 = vpop.f32.mrb[0].mxu0
  %v294 = vadd.f32 0.0, %v293
  %v295 = vpop.f32.mrb[0].mxu0
  %296 = vdwg.mxu0
  %v297 = vadd.f32 %v143, %v235
  %v298 = vadd.f32 %v144, %v238
  %v299 = vadd.f32 %v145, %v243
  %v300 = vadd.f32 %v146, %v246
  %v301 = vadd.f32 %v147, %v251
  %v302 = vadd.f32 %v148, %v254
  %v303 = vadd.f32 %v149, %v259
  %v304 = vadd.f32 %v150, %v262
  %v305 = vadd.f32 %v151, %v267
  %v306 = vadd.f32 %v152, %v270
  %v307 = vadd.f32 %v153, %v275
  %v308 = vadd.f32 %v154, %v278
  %v309 = vadd.f32 %v155, %v283
  %v310 = vadd.f32 %v156, %v286
  %v311 = vadd.f32 %v157, %v291
  %v312 = vadd.f32 %v158, %v294
  %313 = vst [vmem:[#allocation2] sm:$0xff] %v297
  %314 = vst [vmem:[#allocation2 + $0x8] sm:$0xff] %v298
  %315 = vst [vmem:[#allocation2 + $0x10] sm:$0xff] %v299
  %316 = vst [vmem:[#allocation2 + $0x18] sm:$0xff] %v300
  %317 = vst [vmem:[#allocation2 + $0x20] sm:$0xff] %v301
  %318 = vst [vmem:[#allocation2 + $0x28] sm:$0xff] %v302
  %319 = vst [vmem:[#allocation2 + $0x30] sm:$0xff] %v303
  %320 = vst [vmem:[#allocation2 + $0x38] sm:$0xff] %v304
  %321 = vst [vmem:[#allocation2 + $0x40] sm:$0xff] %v305
  %322 = vst [vmem:[#allocation2 + $0x48] sm:$0xff] %v306
  %323 = vst [vmem:[#allocation2 + $0x50] sm:$0xff] %v307
  %324 = vst [vmem:[#allocation2 + $0x58] sm:$0xff] %v308
  %325 = vst [vmem:[#allocation2 + $0x60] sm:$0xff] %v309
  %326 = vst [vmem:[#allocation2 + $0x68] sm:$0xff] %v310
  %327 = vst [vmem:[#allocation2 + $0x70] sm:$0xff] %v311
  %328 = vst [vmem:[#allocation2 + $0x78] sm:$0xff] %v312
  // Predicated region
  $region26: #{densenet_forward.45} parent=0 // pred_check
    %p329 = pneg %p21
  $region27: #{densenet_forward.45} parent=0 // pred_check_branch
    %331 = sbr.rel (%p329) target = $region29
  $region28: #{densenet_forward.45} parent=0 // pred_region
    %v332 = vld [vmem:[#allocation2] sm:$0xff]
    %v333 = vld [vmem:[#allocation2 + $0x8] sm:$0xff]
    %v334 = vld [vmem:[#allocation2 + $0x10] sm:$0xff]
    %v335 = vld [vmem:[#allocation2 + $0x18] sm:$0xff]
    %v336 = vld [vmem:[#allocation2 + $0x20] sm:$0xff]
    %v337 = vld [vmem:[#allocation2 + $0x28] sm:$0xff]
    %v338 = vld [vmem:[#allocation2 + $0x30] sm:$0xff]
    %v339 = vld [vmem:[#allocation2 + $0x38] sm:$0xff]
    %v340 = vld [vmem:[#allocation2 + $0x40] sm:$0xff]
    %v341 = vld [vmem:[#allocation2 + $0x48] sm:$0xff]
    %v342 = vld [vmem:[#allocation2 + $0x50] sm:$0xff]
    %v343 = vld [vmem:[#allocation2 + $0x58] sm:$0xff]
    %v344 = vld [vmem:[#allocation2 + $0x60] sm:$0xff]
    %v345 = vld [vmem:[#allocation2 + $0x68] sm:$0xff]
    %v346 = vld [vmem:[#allocation2 + $0x70] sm:$0xff]
    %v347 = vld [vmem:[#allocation2 + $0x78] sm:$0xff]
    %v348 = vld [vmem:[%s4] sm:$0x1]
    %v350 = vlaneseq
    %v351 = vshrl.u32 %v350, 7
    %v352 = vsub.s32 0, %v351
    %v353 = vrot.slane %v348, %v352
    %v355 = vadd.f32 %v332, %v353
    %v356 = vadd.f32 %v333, %v353
    %v357 = vadd.f32 %v334, %v353
    %v358 = vadd.f32 %v335, %v353
    %v359 = vadd.f32 %v336, %v353
    %v360 = vadd.f32 %v337, %v353
    %v361 = vadd.f32 %v338, %v353
    %v362 = vadd.f32 %v339, %v353
    %v363 = vadd.f32 %v340, %v353
    %v364 = vadd.f32 %v341, %v353
    %v365 = vadd.f32 %v342, %v353
    %v366 = vadd.f32 %v343, %v353
    %v367 = vadd.f32 %v344, %v353
    %v368 = vadd.f32 %v345, %v353
    %v369 = vadd.f32 %v346, %v353
    %v370 = vadd.f32 %v347, %v353
    %v371 = vpack.c.bf16 %v356, %v355
    %v372 = vpack.c.bf16 %v358, %v357
    %v373 = vpack.c.bf16 %v360, %v359
    %v374 = vpack.c.bf16 %v362, %v361
    %v375 = vpack.c.bf16 %v364, %v363
    %v376 = vpack.c.bf16 %v366, %v365
    %v377 = vpack.c.bf16 %v368, %v367
    %v378 = vpack.c.bf16 %v370, %v369
    %v387 = vunpack.c.l.b16 %v371
    %v388 = vunpack.c.h.b16 %v371
    %v389 = vunpack.c.l.b16 %v372
    %v390 = vunpack.c.h.b16 %v372
    %v391 = vunpack.c.l.b16 %v373
    %v392 = vunpack.c.h.b16 %v373
    %v393 = vunpack.c.l.b16 %v374
    %v394 = vunpack.c.h.b16 %v374
    %v395 = vunpack.c.l.b16 %v375
    %v396 = vunpack.c.h.b16 %v375
    %v397 = vunpack.c.l.b16 %v376
    %v398 = vunpack.c.h.b16 %v376
    %v399 = vunpack.c.l.b16 %v377
    %v400 = vunpack.c.h.b16 %v377
    %v401 = vunpack.c.l.b16 %v378
    %v402 = vunpack.c.h.b16 %v378
    %v403 = vpack.c.b16 %v387, %v387
    %v404 = vpack.c.b16 %v388, %v388
    %v405 = vpack.c.b16 %v389, %v389
    %v406 = vpack.c.b16 %v390, %v390
    %v407 = vpack.c.b16 %v391, %v391
    %v408 = vpack.c.b16 %v392, %v392
    %v409 = vpack.c.b16 %v393, %v393
    %v410 = vpack.c.b16 %v394, %v394
    %v411 = vpack.c.b16 %v395, %v395
    %v412 = vpack.c.b16 %v396, %v396
    %v413 = vpack.c.b16 %v397, %v397
    %v414 = vpack.c.b16 %v398, %v398
    %v415 = vpack.c.b16 %v399, %v399
    %v416 = vpack.c.b16 %v400, %v400
    %v417 = vpack.c.b16 %v401, %v401
    %v418 = vpack.c.b16 %v402, %v402
    %435 = vst [vmem:[%s5] sm:$0xf] %v403
    %436 = vst [vmem:[%s5 + $0x4] sm:$0xf] %v404
    %437 = vst [vmem:[%s5 + $0x8] sm:$0xf] %v405
    %438 = vst [vmem:[%s5 + $0xc] sm:$0xf] %v406
    %439 = vst [vmem:[%s5 + $0x10] sm:$0xf] %v407
    %440 = vst [vmem:[%s5 + $0x14] sm:$0xf] %v408
    %441 = vst [vmem:[%s5 + $0x18] sm:$0xf] %v409
    %442 = vst [vmem:[%s5 + $0x1c] sm:$0xf] %v410
    %443 = vst [vmem:[%s5 + $0x20] sm:$0xf] %v411
    %444 = vst [vmem:[%s5 + $0x24] sm:$0xf] %v412
    %445 = vst [vmem:[%s5 + $0x28] sm:$0xf] %v413
    %446 = vst [vmem:[%s5 + $0x2c] sm:$0xf] %v414
    %447 = vst [vmem:[%s5 + $0x30] sm:$0xf] %v415
    %448 = vst [vmem:[%s5 + $0x34] sm:$0xf] %v416
    %449 = vst [vmem:[%s5 + $0x38] sm:$0xf] %v417
    %450 = vst [vmem:[%s5 + $0x3c] sm:$0xf] %v418
  $region29: #{densenet_forward.45} parent=0 // pred_fallthru
    _
  // Predicated region
  $region30: #{densenet_forward.45} parent=0 // pred_check
    _
  $region31: #{densenet_forward.45} parent=0 // pred_check_branch
    %452 = sbr.rel (0) target = $region33
  $region32: #{densenet_forward.45} parent=0 // pred_region
    _
  $region33: #{densenet_forward.45} parent=0 // pred_fallthru
    _
  // Predicated region
  $region34: #{densenet_forward.45} parent=0 // pred_check
    _
  $region35: #{densenet_forward.45} parent=0 // pred_check_branch
    %454 = sbr.rel (0) target = $region37
  $region36: #{densenet_forward.45} parent=0 // pred_region
    _
  $region37: #{densenet_forward.45} parent=0 // pred_fallthru
    _

// kernel: densenet_forward.46
$region0: #{densenet_forward.46}
  #allocation0 [shape = 'u32[]', space=smem, size = 0x4, offset = 0x4, fixed_abs, tag = 'smem constant byte address 0x4 - core index']
  #allocation1 [shape = 'u32[144,128]{1,0:T(1,128)}', space=vmem, size = 0x12000, scoped, tag = 'internal scratch']
  %s0 = inlined_call_operand.vmem [shape: bf16[4,32,16], index: 0, kind: input, shape index: {}]
  %s1 = inlined_call_operand.vmem [shape: bf16[32,16], index: 1, kind: output, shape index: {}]
  %s2 = sld [smem:[#allocation0]]
  $region14: #{densenet_forward.46} parent=0
    _
  %s4 = ssub.s32 1, %s2
  %s5 = scalar_select 0, %s4, %s2
  // Predicated region
  $region2: #{densenet_forward.46} parent=0 // pred_check
    _
  $region3: #{densenet_forward.46} parent=0 // pred_check_branch
    %7 = sbr.rel (0) target = $region5
  $region4: #{densenet_forward.46} parent=0 // pred_region
    _
  $region5: #{densenet_forward.46} parent=0 // pred_fallthru
    _
  %v8 = vld [vmem:[%s0] sm:$0xf]
  %v9 = vld [vmem:[%s0 + $0x4] sm:$0xf]
  %v10 = vld [vmem:[%s0 + $0x8] sm:$0xf]
  %v11 = vld [vmem:[%s0 + $0xc] sm:$0xf]
  %v12 = vld [vmem:[%s0 + $0x10] sm:$0xf]
  %v13 = vld [vmem:[%s0 + $0x14] sm:$0xf]
  %v14 = vld [vmem:[%s0 + $0x18] sm:$0xf]
  %v15 = vld [vmem:[%s0 + $0x1c] sm:$0xf]
  %v16 = vld [vmem:[%s0 + $0x20] sm:$0xf]
  %v17 = vld [vmem:[%s0 + $0x24] sm:$0xf]
  %v18 = vld [vmem:[%s0 + $0x28] sm:$0xf]
  %v19 = vld [vmem:[%s0 + $0x2c] sm:$0xf]
  %v20 = vld [vmem:[%s0 + $0x30] sm:$0xf]
  %v21 = vld [vmem:[%s0 + $0x34] sm:$0xf]
  %v22 = vld [vmem:[%s0 + $0x38] sm:$0xf]
  %v23 = vld [vmem:[%s0 + $0x3c] sm:$0xf]
  %v24 = vunpack.c.l.bf16 %v8
  %v25 = vunpack.c.l.bf16 %v9
  %v26 = vunpack.c.l.bf16 %v10
  %v27 = vunpack.c.l.bf16 %v11
  %v28 = vunpack.c.l.bf16 %v12
  %v29 = vunpack.c.l.bf16 %v13
  %v30 = vunpack.c.l.bf16 %v14
  %v31 = vunpack.c.l.bf16 %v15
  %v32 = vunpack.c.l.bf16 %v16
  %v33 = vunpack.c.l.bf16 %v17
  %v34 = vunpack.c.l.bf16 %v18
  %v35 = vunpack.c.l.bf16 %v19
  %v36 = vunpack.c.l.bf16 %v20
  %v37 = vunpack.c.l.bf16 %v21
  %v38 = vunpack.c.l.bf16 %v22
  %v39 = vunpack.c.l.bf16 %v23
  %vm40 = vcmask 130048
  %v41 = vsel %vm40, %v24, 0.0
  %v42 = vsel %vm40, %v28, 0.0
  %v43 = vadd.f32 %v41, %v42
  %v44 = vsel %vm40, %v32, 0.0
  %v45 = vadd.f32 %v43, %v44
  %v46 = vsel %vm40, %v36, 0.0
  %v47 = vadd.f32 %v45, %v46
  %v48 = vsel %vm40, %v25, 0.0
  %v49 = vsel %vm40, %v29, 0.0
  %v50 = vadd.f32 %v48, %v49
  %v51 = vsel %vm40, %v33, 0.0
  %v52 = vadd.f32 %v50, %v51
  %v53 = vsel %vm40, %v37, 0.0
  %v54 = vadd.f32 %v52, %v53
  %v55 = vsel %vm40, %v26, 0.0
  %v56 = vsel %vm40, %v30, 0.0
  %v57 = vadd.f32 %v55, %v56
  %v58 = vsel %vm40, %v34, 0.0
  %v59 = vadd.f32 %v57, %v58
  %v60 = vsel %vm40, %v38, 0.0
  %v61 = vadd.f32 %v59, %v60
  %v62 = vsel %vm40, %v27, 0.0
  %v63 = vsel %vm40, %v31, 0.0
  %v64 = vadd.f32 %v62, %v63
  %v65 = vsel %vm40, %v35, 0.0
  %v66 = vadd.f32 %v64, %v65
  %v67 = vsel %vm40, %v39, 0.0
  %v68 = vadd.f32 %v66, %v67
  %v69 = vmul.f32 %v47, 0.25
  %v70 = vmul.f32 %v54, 0.25
  %v71 = vmul.f32 %v61, 0.25
  %v72 = vmul.f32 %v68, 0.25
  %v73 = vpack.c.bf16 %v70, %v69
  %v74 = vpack.c.bf16 %v72, %v71
  %v77 = vunpack.c.l.b16 %v73
  %v78 = vunpack.c.h.b16 %v73
  %v79 = vunpack.c.l.b16 %v74
  %v80 = vunpack.c.h.b16 %v74
  %v81 = vpack.c.b16 %v77, %v77
  %v82 = vpack.c.b16 %v78, %v78
  %v83 = vpack.c.b16 %v79, %v79
  %v84 = vpack.c.b16 %v80, %v80
  %vm89 = vcmask 125952
  %90 = vst.msk [vmem:[%s1] sm:$0xf] %vm89, %v81
  %91 = vst.msk [vmem:[%s1 + $0x4] sm:$0xf] %vm89, %v82
  %92 = vst.msk [vmem:[%s1 + $0x8] sm:$0xf] %vm89, %v83
  %93 = vst.msk [vmem:[%s1 + $0xc] sm:$0xf] %vm89, %v84
  // Predicated region
  $region6: #{densenet_forward.46} parent=0 // pred_check
    _
  $region7: #{densenet_forward.46} parent=0 // pred_check_branch
    %95 = sbr.rel (0) target = $region9
  $region8: #{densenet_forward.46} parent=0 // pred_region
    _
  $region9: #{densenet_forward.46} parent=0 // pred_fallthru
    _
  // Predicated region
  $region10: #{densenet_forward.46} parent=0 // pred_check
    _
  $region11: #{densenet_forward.46} parent=0 // pred_check_branch
    %97 = sbr.rel (0) target = $region13
  $region12: #{densenet_forward.46} parent=0 // pred_region
    _
  $region13: #{densenet_forward.46} parent=0 // pred_fallthru
    _

// kernel: densenet_forward.47
$region0: #{densenet_forward.47}
  #allocation0 [shape = 'u32[]', space=smem, size = 0x4, offset = 0x4, fixed_abs, tag = 'smem constant byte address 0x4 - core index']
  #allocation1 [shape = 'u32[144,128]{1,0:T(1,128)}', space=vmem, size = 0x12000, scoped, tag = 'internal scratch']
  #allocation2 [shape = 'f32[1,16]{1,0:T(1,128)}', space=vmem, size = 0x200, scoped, tag = 'scratch operand']
  #allocation3 [shape = 'f32[1,16]{1,0:T(1,128)}', space=vmem, size = 0x200, scoped, tag = 'scratch operand']
  %s0 = inlined_call_operand.vmem [shape: bf16[32,16], index: 0, kind: input, shape index: {}]
  %s1 = inlined_call_operand.vmem [shape: f32[1,16], index: 1, kind: input, shape index: {}]
  %s2 = inlined_call_operand.vmem [shape: f32[1,16], index: 2, kind: input, shape index: {}]
  %s3 = inlined_call_operand.vmem [shape: f32[1,16], index: 3, kind: output, shape index: {0}]
  %s4 = inlined_call_operand.vmem [shape: f32[1,16], index: 4, kind: output, shape index: {1}]
  %5 = xla_tuple %s3, %s4
  %s6 = sld [smem:[#allocation0]]
  $region38: #{densenet_forward.47} parent=0
    _
  %s8 = ssub.s32 1, %s6
  %s9 = scalar_select 0, %s8, %s6
  // Predicated region
  $region2: #{densenet_forward.47} parent=0 // pred_check
    _
  $region3: #{densenet_forward.47} parent=0 // pred_check_branch
    %11 = sbr.rel (0) target = $region5
  $region4: #{densenet_forward.47} parent=0 // pred_region
    _
  $region5: #{densenet_forward.47} parent=0 // pred_fallthru
    _
  // Predicated region
  $region6: #{densenet_forward.47} parent=0 // pred_check
    _
  $region7: #{densenet_forward.47} parent=0 // pred_check_branch
    %13 = sbr.rel (0) target = $region9
  $region8: #{densenet_forward.47} parent=0 // pred_region
    _
  $region9: #{densenet_forward.47} parent=0 // pred_fallthru
    _
  // Predicated region
  $region10: #{densenet_forward.47} parent=0 // pred_check
    _
  $region11: #{densenet_forward.47} parent=0 // pred_check_branch
    %15 = sbr.rel (0) target = $region13
  $region12: #{densenet_forward.47} parent=0 // pred_region
    _
  $region13: #{densenet_forward.47} parent=0 // pred_fallthru
    _
  %p16 = scmp.eq.s32.totalorder 0, 0
  // Predicated region
  $region14: #{densenet_forward.47} parent=0 // pred_check
    %p17 = pneg %p16
  $region15: #{densenet_forward.47} parent=0 // pred_check_branch
    %19 = sbr.rel (%p17) target = $region17
  $region16: #{densenet_forward.47} parent=0 // pred_region
    %vm20 = vcmask 122880
    %21 = vst.msk [vmem:[#allocation2] sm:$0x1] %vm20, 0.0
    %22 = vst.msk [vmem:[#allocation3] sm:$0x1] %vm20, 0.0
  $region17: #{densenet_forward.47} parent=0 // pred_fallthru
    _
  %v23 = vld [vmem:[%s0] sm:$0xf]
  %v24 = vld [vmem:[%s0 + $0x4] sm:$0xf]
  %v25 = vld [vmem:[%s0 + $0x8] sm:$0xf]
  %v26 = vld [vmem:[%s0 + $0xc] sm:$0xf]
  %v27 = vunpack.c.l.bf16 %v23
  %v28 = vunpack.c.l.bf16 %v24
  %v29 = vunpack.c.l.bf16 %v25
  %v30 = vunpack.c.l.bf16 %v26
  %v31 = vld [vmem:[#allocation2] sm:$0x1]
  %vm32 = vcmask 130048
  %v33 = vsel %vm32, %v27, 0.0
  %v34 = vsel %vm32, %v28, 0.0
  %v35 = vadd.f32 %v33, %v34
  %v36 = vsel %vm32, %v29, 0.0
  %v37 = vadd.f32 %v35, %v36
  %v38 = vsel %vm32, %v30, 0.0
  %v39 = vadd.f32 %v37, %v38
  %v40 = vrot.slane %v39, 4
  %v41 = vadd.f32 %v39, %v40
  %v42 = vrot.slane %v41, 2
  %v43 = vadd.f32 %v41, %v42
  %v44 = vrot.slane %v43, 1
  %v45 = vadd.f32 %v43, %v44
  %v46 = vadd.f32 %v31, %v45
  %vm47 = vcmask 122880
  %48 = vst.msk [vmem:[#allocation2] sm:$0x1] %vm47, %v46
  %v49 = vld [vmem:[#allocation3] sm:$0x1]
  %v50 = vmul.f32 %v27, %v27
  %v51 = vmul.f32 %v28, %v28
  %v52 = vmul.f32 %v29, %v29
  %v53 = vmul.f32 %v30, %v30
  %v54 = vsel %vm32, %v50, 0.0
  %v55 = vsel %vm32, %v51, 0.0
  %v56 = vadd.f32 %v54, %v55
  %v57 = vsel %vm32, %v52, 0.0
  %v58 = vadd.f32 %v56, %v57
  %v59 = vsel %vm32, %v53, 0.0
  %v60 = vadd.f32 %v58, %v59
  %v61 = vrot.slane %v60, 4
  %v62 = vadd.f32 %v60, %v61
  %v63 = vrot.slane %v62, 2
  %v64 = vadd.f32 %v62, %v63
  %v65 = vrot.slane %v64, 1
  %v66 = vadd.f32 %v64, %v65
  %v67 = vadd.f32 %v49, %v66
  %68 = vst.msk [vmem:[#allocation3] sm:$0x1] %vm47, %v67
  // Predicated region
  $region18: #{densenet_forward.47} parent=0 // pred_check
    %p69 = pneg %p16
  $region19: #{densenet_forward.47} parent=0 // pred_check_branch
    %71 = sbr.rel (%p69) target = $region21
  $region20: #{densenet_forward.47} parent=0 // pred_region
    %v72 = vld [vmem:[#allocation2] sm:$0x1]
    %v73 = vmul.f32 %v72, 0.03125
    %v74 = vld [vmem:[#allocation3] sm:$0x1]
    %v75 = vmul.f32 %v74, 0.03125
    %v76 = vmul.f32 %v73, %v73
    %v77 = vsub.f32 %v75, %v76
    %v78 = vmax.f32 %v77, 0.0
    %v79 = vadd.f32 %v78, 1e-05
    %v80 = vrsqrt.pop %v79
    %v81 = vld [vmem:[%s1] sm:$0x1]
    %v82 = vmul.f32 %v81, %v80
    %83 = vst.msk [vmem:[%s3] sm:$0x1] %vm47, %v82
    %v84 = vld [vmem:[%s2] sm:$0x1]
    %v85 = vmul.f32 %v73, %v82
    %v86 = vsub.f32 %v84, %v85
    %87 = vst.msk [vmem:[%s4] sm:$0x1] %vm47, %v86
  $region21: #{densenet_forward.47} parent=0 // pred_fallthru
    _
  // Predicated region
  $region22: #{densenet_forward.47} parent=0 // pred_check
    _
  $region23: #{densenet_forward.47} parent=0 // pred_check_branch
    %89 = sbr.rel (0) target = $region25
  $region24: #{densenet_forward.47} parent=0 // pred_region
    _
  $region25: #{densenet_forward.47} parent=0 // pred_fallthru
    _
  // Predicated region
  $region26: #{densenet_forward.47} parent=0 // pred_check
    _
  $region27: #{densenet_forward.47} parent=0 // pred_check_branch
    %91 = sbr.rel (0) target = $region29
  $region28: #{densenet_forward.47} parent=0 // pred_region
    _
  $region29: #{densenet_forward.47} parent=0 // pred_fallthru
    _
  // Predicated region
  $region30: #{densenet_forward.47} parent=0 // pred_check
    _
  $region31: #{densenet_forward.47} parent=0 // pred_check_branch
    %93 = sbr.rel (0) target = $region33
  $region32: #{densenet_forward.47} parent=0 // pred_region
    _
  $region33: #{densenet_forward.47} parent=0 // pred_fallthru
    _
  // Predicated region
  $region34: #{densenet_forward.47} parent=0 // pred_check
    _
  $region35: #{densenet_forward.47} parent=0 // pred_check_branch
    %95 = sbr.rel (0) target = $region37
  $region36: #{densenet_forward.47} parent=0 // pred_region
    _
  $region37: #{densenet_forward.47} parent=0 // pred_fallthru
    _

// kernel: densenet_forward.50
$region0: #{densenet_forward.50}
  #allocation0 [shape = 'u32[]', space=smem, size = 0x4, offset = 0x4, fixed_abs, tag = 'smem constant byte address 0x4 - core index']
  #allocation1 [shape = 'u32[144,128]{1,0:T(1,128)}', space=vmem, size = 0x12000, scoped, tag = 'internal scratch']
  %s0 = inlined_call_operand.vmem [shape: bf16[32,16], index: 0, kind: input, shape index: {}]
  %s1 = inlined_call_operand.vmem [shape: f32[1,16], index: 1, kind: input, shape index: {}]
  %s2 = inlined_call_operand.vmem [shape: f32[1,16], index: 2, kind: input, shape index: {}]
  %s3 = inlined_call_operand.vmem [shape: bf16[32,16], index: 3, kind: output, shape index: {}]
  %s4 = sld [smem:[#allocation0]]
  $region22: #{densenet_forward.50} parent=0
    _
  %s6 = ssub.s32 1, %s4
  %s7 = scalar_select 0, %s6, %s4
  // Predicated region
  $region2: #{densenet_forward.50} parent=0 // pred_check
    _
  $region3: #{densenet_forward.50} parent=0 // pred_check_branch
    %9 = sbr.rel (0) target = $region5
  $region4: #{densenet_forward.50} parent=0 // pred_region
    _
  $region5: #{densenet_forward.50} parent=0 // pred_fallthru
    _
  // Predicated region
  $region6: #{densenet_forward.50} parent=0 // pred_check
    _
  $region7: #{densenet_forward.50} parent=0 // pred_check_branch
    %11 = sbr.rel (0) target = $region9
  $region8: #{densenet_forward.50} parent=0 // pred_region
    _
  $region9: #{densenet_forward.50} parent=0 // pred_fallthru
    _
  // Predicated region
  $region10: #{densenet_forward.50} parent=0 // pred_check
    _
  $region11: #{densenet_forward.50} parent=0 // pred_check_branch
    %13 = sbr.rel (0) target = $region13
  $region12: #{densenet_forward.50} parent=0 // pred_region
    _
  $region13: #{densenet_forward.50} parent=0 // pred_fallthru
    _
  %v14 = vld [vmem:[%s0] sm:$0xf]
  %v15 = vld [vmem:[%s0 + $0x4] sm:$0xf]
  %v16 = vld [vmem:[%s0 + $0x8] sm:$0xf]
  %v17 = vld [vmem:[%s0 + $0xc] sm:$0xf]
  %v18 = vunpack.c.l.bf16 %v14
  %v19 = vunpack.c.l.bf16 %v15
  %v20 = vunpack.c.l.bf16 %v16
  %v21 = vunpack.c.l.bf16 %v17
  %v22 = vld [vmem:[%s1] sm:$0x1]
  %v24 = vlaneseq
  %v25 = vshrl.u32 %v24, 7
  %v26 = vsub.s32 0, %v25
  %v27 = vrot.slane %v22, %v26
  %v29 = vmul.f32 %v18, %v27
  %v30 = vmul.f32 %v19, %v27
  %v31 = vmul.f32 %v20, %v27
  %v32 = vmul.f32 %v21, %v27
  %v33 = vld [vmem:[%s2] sm:$0x1]
  %v35 = vlaneseq
  %v36 = vshrl.u32 %v35, 7
  %v37 = vsub.s32 0, %v36
  %v38 = vrot.slane %v33, %v37
  %v40 = vadd.f32 %v29, %v38
  %v41 = vadd.f32 %v30, %v38
  %v42 = vadd.f32 %v31, %v38
  %v43 = vadd.f32 %v32, %v38
  %v44 = vmax.f32 %v40, 0.0
  %v45 = vmax.f32 %v41, 0.0
  %v46 = vmax.f32 %v42, 0.0
  %v47 = vmax.f32 %v43, 0.0
  %v48 = vpack.c.bf16 %v45, %v44
  %v49 = vpack.c.bf16 %v47, %v46
  %v52 = vunpack.c.l.b16 %v48
  %v53 = vunpack.c.h.b16 %v48
  %v54 = vunpack.c.l.b16 %v49
  %v55 = vunpack.c.h.b16 %v49
  %v56 = vpack.c.b16 %v52, %v52
  %v57 = vpack.c.b16 %v53, %v53
  %v58 = vpack.c.b16 %v54, %v54
  %v59 = vpack.c.b16 %v55, %v55
  %vm64 = vcmask 125952
  %65 = vst.msk [vmem:[%s3] sm:$0xf] %vm64, %v56
  %66 = vst.msk [vmem:[%s3 + $0x4] sm:$0xf] %vm64, %v57
  %67 = vst.msk [vmem:[%s3 + $0x8] sm:$0xf] %vm64, %v58
  %68 = vst.msk [vmem:[%s3 + $0xc] sm:$0xf] %vm64, %v59
  // Predicated region
  $region14: #{densenet_forward.50} parent=0 // pred_check
    _
  $region15: #{densenet_forward.50} parent=0 // pred_check_branch
    %70 = sbr.rel (0) target = $region17
  $region16: #{densenet_forward.50} parent=0 // pred_region
    _
  $region17: #{densenet_forward.50} parent=0 // pred_fallthru
    _
  // Predicated region
  $region18: #{densenet_forward.50} parent=0 // pred_check
    _
  $region19: #{densenet_forward.50} parent=0 // pred_check_branch
    %72 = sbr.rel (0) target = $region21
  $region20: #{densenet_forward.50} parent=0 // pred_region
    _
  $region21: #{densenet_forward.50} parent=0 // pred_fallthru
    _

// kernel: densenet_forward.48
$region0: #{densenet_forward.48}
  #allocation0 [shape = 'u32[]', space=smem, size = 0x4, offset = 0x4, fixed_abs, tag = 'smem constant byte address 0x4 - core index']
  #allocation1 [shape = 'u32[144,128]{1,0:T(1,128)}', space=vmem, size = 0x12000, scoped, tag = 'internal scratch']
  #allocation2 [shape = 'f32[32,128]{1,0:T(8,128)}', space=vmem, size = 0x4000, scoped, tag = 'scratch operand']
  %s0 = inlined_call_operand.vmem [shape: bf16[32,16], index: 0, kind: input, shape index: {}]
  %s1 = inlined_call_operand.vmem [shape: bf16[16,128], index: 1, kind: input, shape index: {}]
  %s2 = inlined_call_operand.vmem [shape: f32[1,16], index: 2, kind: input, shape index: {}]
  %s3 = inlined_call_operand.vmem [shape: f32[1,16], index: 3, kind: input, shape index: {}]
  %s4 = inlined_call_operand.vmem [shape: f32[1,128], index: 4, kind: input, shape index: {}]
  %s5 = inlined_call_operand.vmem [shape: bf16[32,128], index: 5, kind: output, shape index: {}]
  %s6 = sld [smem:[#allocation0]]
  $region38: #{densenet_forward.48} parent=0
    _
  %s8 = ssub.s32 1, %s6
  %s9 = scalar_select 0, %s8, %s6
  // Predicated region
  $region2: #{densenet_forward.48} parent=0 // pred_check
    _
  $region3: #{densenet_forward.48} parent=0 // pred_check_branch
    %11 = sbr.rel (0) target = $region5
  $region4: #{densenet_forward.48} parent=0 // pred_region
    _
  $region5: #{densenet_forward.48} parent=0 // pred_fallthru
    _
  // Predicated region
  $region6: #{densenet_forward.48} parent=0 // pred_check
    _
  $region7: #{densenet_forward.48} parent=0 // pred_check_branch
    %13 = sbr.rel (0) target = $region9
  $region8: #{densenet_forward.48} parent=0 // pred_region
    _
  $region9: #{densenet_forward.48} parent=0 // pred_fallthru
    _
  // Predicated region
  $region10: #{densenet_forward.48} parent=0 // pred_check
    _
  $region11: #{densenet_forward.48} parent=0 // pred_check_branch
    %15 = sbr.rel (0) target = $region13
  $region12: #{densenet_forward.48} parent=0 // pred_region
    _
  $region13: #{densenet_forward.48} parent=0 // pred_fallthru
    _
  // Predicated region
  $region14: #{densenet_forward.48} parent=0 // pred_check
    _
  $region15: #{densenet_forward.48} parent=0 // pred_check_branch
    %17 = sbr.rel (0) target = $region17
  $region16: #{densenet_forward.48} parent=0 // pred_region
    _
  $region17: #{densenet_forward.48} parent=0 // pred_fallthru
    _
  // Predicated region
  $region18: #{densenet_forward.48} parent=0 // pred_check
    _
  $region19: #{densenet_forward.48} parent=0 // pred_check_branch
    %19 = sbr.rel (0) target = $region21
  $region20: #{densenet_forward.48} parent=0 // pred_region
    _
  $region21: #{densenet_forward.48} parent=0 // pred_fallthru
    _
  %p21 = scmp.eq.s32.totalorder 0, 0
  // Predicated region
  $region22: #{densenet_forward.48} parent=0 // pred_check
    %p22 = pneg %p21
  $region23: #{densenet_forward.48} parent=0 // pred_check_branch
    %24 = sbr.rel (%p22) target = $region25
  $region24: #{densenet_forward.48} parent=0 // pred_region
    %25 = vst [vmem:[#allocation2] sm:$0xff] 0.0
    %26 = vst [vmem:[#allocation2 + $0x8] sm:$0xff] 0.0
    %27 = vst [vmem:[#allocation2 + $0x10] sm:$0xff] 0.0
    %28 = vst [vmem:[#allocation2 + $0x18] sm:$0xff] 0.0
  $region25: #{densenet_forward.48} parent=0 // pred_fallthru
    _
  %v29 = vld [vmem:[%s0] sm:$0xf]
  %v30 = vld [vmem:[%s0 + $0x4] sm:$0xf]
  %v31 = vld [vmem:[%s0 + $0x8] sm:$0xf]
  %v32 = vld [vmem:[%s0 + $0xc] sm:$0xf]
  %v33 = vunpack.c.l.bf16 %v29
  %v34 = vunpack.c.l.bf16 %v30
  %v35 = vunpack.c.l.bf16 %v31
  %v36 = vunpack.c.l.bf16 %v32
  %v37 = vld [vmem:[%s2] sm:$0x1]
  %v39 = vlaneseq
  %v40 = vshrl.u32 %v39, 7
  %v41 = vsub.s32 0, %v40
  %v42 = vrot.slane %v37, %v41
  %v44 = vmul.f32 %v33, %v42
  %v45 = vmul.f32 %v34, %v42
  %v46 = vmul.f32 %v35, %v42
  %v47 = vmul.f32 %v36, %v42
  %v48 = vld [vmem:[%s3] sm:$0x1]
  %v50 = vlaneseq
  %v51 = vshrl.u32 %v50, 7
  %v52 = vsub.s32 0, %v51
  %v53 = vrot.slane %v48, %v52
  %v55 = vadd.f32 %v44, %v53
  %v56 = vadd.f32 %v45, %v53
  %v57 = vadd.f32 %v46, %v53
  %v58 = vadd.f32 %v47, %v53
  %v59 = vmax.f32 %v55, 0.0
  %v60 = vmax.f32 %v56, 0.0
  %v61 = vmax.f32 %v57, 0.0
  %v62 = vmax.f32 %v58, 0.0
  %v63 = vpack.c.bf16 %v60, %v59
  %v64 = vpack.c.bf16 %v62, %v61
  %v65 = vld [vmem:[#allocation2] sm:$0xff]
  %v66 = vld [vmem:[#allocation2 + $0x8] sm:$0xff]
  %v67 = vld [vmem:[#allocation2 + $0x10] sm:$0xff]
  %v68 = vld [vmem:[#allocation2 + $0x18] sm:$0xff]
  %v69 = vld [vmem:[%s1] sm:$0xf]
  %v70 = vld [vmem:[%s1 + $0x4] sm:$0xf]
  %v73 = vunpack.c.l.b16 %v69
  %v74 = vunpack.c.l.b16 %v70
  %v75 = vpack.c.b16 %v74, %v73
  %vm77 = vcmask 130048
  %v79 = vsel %vm77, %v63, 0
  %v82 = vsel %vm77, %v64, 0
  %84 = vmatprep.subr.bf16.mxu0 0
  %85 = vmatpush1.bf16.msra.mxu0 %v75
  %86 = vmatprep.subr.bf16.mxu0 0
  %87 = vmatpush1.bf16.msra.mxu0 0
  %88 = vmatprep.subr.bf16.mxu0 0
  %89 = vmatpush1.bf16.msra.mxu0 0
  %90 = vmatprep.subr.bf16.mxu0 0
  %91 = vmatpush1.bf16.msra.mxu0 0
  %92 = vmatprep.subr.bf16.mxu0 0
  %93 = vmatpush1.bf16.msra.mxu0 0
  %94 = vmatprep.subr.bf16.mxu0 0
  %95 = vmatpush1.bf16.msra.mxu0 0
  %96 = vmatprep.subr.bf16.mxu0 0
  %97 = vmatpush1.bf16.msra.mxu0 0
  %98 = vmatprep.subr.bf16.mxu0 0
  %99 = vmatpush1.bf16.msra.mxu0 0
  %100 = vmatprep.subr.bf16.mxu0 0
  %101 = vmatpush1.bf16.msra.mxu0 0
  %102 = vmatprep.subr.bf16.mxu0 0
  %103 = vmatpush1.bf16.msra.mxu0 0
  %104 = vmatprep.subr.bf16.mxu0 0
  %105 = vmatpush1.bf16.msra.mxu0 0
  %106 = vmatprep.subr.bf16.mxu0 0
  %107 = vmatpush1.bf16.msra.mxu0 0
  %108 = vmatprep.subr.bf16.mxu0 0
  %109 = vmatpush1.bf16.msra.mxu0 0
  %110 = vmatprep.subr.bf16.mxu0 0
  %111 = vmatpush1.bf16.msra.mxu0 0
  %112 = vmatprep.subr.bf16.mxu0 0
  %113 = vmatpush1.bf16.msra.mxu0 0
  %114 = vmatprep.subr.bf16.mxu0 0
  %115 = vmatpush1.bf16.msra.mxu0 0
  %116 = vmatprep.mubr.bf16.mxu0 0
  %117 = vmatmul.mubr.bf16.gmra.mrb[0].mxu0 %v79
  %v118 = vpop.f32.mrb[0].mxu0
  %v119 = vadd.f32 0.0, %v118
  %v120 = vpop.f32.mrb[0].mxu0
  %v121 = vpop.f32.mrb[0].mxu0
  %v122 = vadd.f32 0.0, %v121
  %v123 = vpop.f32.mrb[0].mxu0
  %124 = vmatprep.mubr.bf16.mxu0 0
  %125 = vmatmul.mubr.bf16.gmra.mrb[0].mxu0 %v82
  %v126 = vpop.f32.mrb[0].mxu0
  %v127 = vadd.f32 0.0, %v126
  %v128 = vpop.f32.mrb[0].mxu0
  %v129 = vpop.f32.mrb[0].mxu0
  %v130 = vadd.f32 0.0, %v129
  %v131 = vpop.f32.mrb[0].mxu0
  %132 = vdwg.mxu0
  %v133 = vadd.f32 %v65, %v119
  %v134 = vadd.f32 %v66, %v122
  %v135 = vadd.f32 %v67, %v127
  %v136 = vadd.f32 %v68, %v130
  %137 = vst [vmem:[#allocation2] sm:$0xff] %v133
  %138 = vst [vmem:[#allocation2 + $0x8] sm:$0xff] %v134
  %139 = vst [vmem:[#allocation2 + $0x10] sm:$0xff] %v135
  %140 = vst [vmem:[#allocation2 + $0x18] sm:$0xff] %v136
  // Predicated region
  $region26: #{densenet_forward.48} parent=0 // pred_check
    %p141 = pneg %p21
  $region27: #{densenet_forward.48} parent=0 // pred_check_branch
    %143 = sbr.rel (%p141) target = $region29
  $region28: #{densenet_forward.48} parent=0 // pred_region
    %v144 = vld [vmem:[#allocation2] sm:$0xff]
    %v145 = vld [vmem:[#allocation2 + $0x8] sm:$0xff]
    %v146 = vld [vmem:[#allocation2 + $0x10] sm:$0xff]
    %v147 = vld [vmem:[#allocation2 + $0x18] sm:$0xff]
    %v148 = vld [vmem:[%s4] sm:$0x1]
    %v150 = vlaneseq
    %v151 = vshrl.u32 %v150, 7
    %v152 = vsub.s32 0, %v151
    %v153 = vrot.slane %v148, %v152
    %v155 = vadd.f32 %v144, %v153
    %v156 = vadd.f32 %v145, %v153
    %v157 = vadd.f32 %v146, %v153
    %v158 = vadd.f32 %v147, %v153
    %v159 = vpack.c.bf16 %v156, %v155
    %v160 = vpack.c.bf16 %v158, %v157
    %v163 = vunpack.c.l.b16 %v159
    %v164 = vunpack.c.h.b16 %v159
    %v165 = vunpack.c.l.b16 %v160
    %v166 = vunpack.c.h.b16 %v160
    %v167 = vpack.c.b16 %v163, %v163
    %v168 = vpack.c.b16 %v164, %v164
    %v169 = vpack.c.b16 %v165, %v165
    %v170 = vpack.c.b16 %v166, %v166
    %175 = vst [vmem:[%s5] sm:$0xf] %v167
    %176 = vst [vmem:[%s5 + $0x4] sm:$0xf] %v168
    %177 = vst [vmem:[%s5 + $0x8] sm:$0xf] %v169
    %178 = vst [vmem:[%s5 + $0xc] sm:$0xf] %v170
  $region29: #{densenet_forward.48} parent=0 // pred_fallthru
    _
  // Predicated region
  $region30: #{densenet_forward.48} parent=0 // pred_check
    _
  $region31: #{densenet_forward.48} parent=0 // pred_check_branch
    %180 = sbr.rel (0) target = $region33
  $region32: #{densenet_forward.48} parent=0 // pred_region
    _
  $region33: #{densenet_forward.48} parent=0 // pred_fallthru
    _
  // Predicated region
  $region34: #{densenet_forward.48} parent=0 // pred_check
    _
  $region35: #{densenet_forward.48} parent=0 // pred_check_branch
    %182 = sbr.rel (0) target = $region37
  $region36: #{densenet_forward.48} parent=0 // pred_region
    _
  $region37: #{densenet_forward.48} parent=0 // pred_fallthru
    _

// kernel: densenet_forward.51
$region0: #{densenet_forward.51}
  #allocation0 [shape = 'u32[]', space=smem, size = 0x4, offset = 0x4, fixed_abs, tag = 'smem constant byte address 0x4 - core index']
  #allocation1 [shape = 'u32[144,128]{1,0:T(1,128)}', space=vmem, size = 0x12000, scoped, tag = 'internal scratch']
  #allocation2 [shape = 'f32[32,128]{1,0:T(8,128)}', space=vmem, size = 0x4000, scoped, tag = 'scratch operand']
  %s0 = inlined_call_operand.vmem [shape: bf16[32,144], index: 0, kind: input, shape index: {}]
  %s1 = inlined_call_operand.vmem [shape: bf16[144,128], index: 1, kind: input, shape index: {}]
  %s2 = inlined_call_operand.vmem [shape: f32[1,144], index: 2, kind: input, shape index: {}, may-alias: {2,3}]
  %s3 = inlined_call_operand.vmem [shape: f32[1,144], index: 3, kind: input, shape index: {}, may-alias: {2,3}]
  %s4 = inlined_call_operand.vmem [shape: f32[1,128], index: 4, kind: input, shape index: {}]
  %s5 = inlined_call_operand.vmem [shape: bf16[32,128], index: 5, kind: output, shape index: {}]
  %s6 = sld [smem:[#allocation0]]
  $region38: #{densenet_forward.51} parent=0
    _
  %s8 = ssub.s32 1, %s6
  %s9 = scalar_select 0, %s8, %s6
  // Predicated region
  $region2: #{densenet_forward.51} parent=0 // pred_check
    _
  $region3: #{densenet_forward.51} parent=0 // pred_check_branch
    %11 = sbr.rel (0) target = $region5
  $region4: #{densenet_forward.51} parent=0 // pred_region
    _
  $region5: #{densenet_forward.51} parent=0 // pred_fallthru
    _
  // Predicated region
  $region6: #{densenet_forward.51} parent=0 // pred_check
    _
  $region7: #{densenet_forward.51} parent=0 // pred_check_branch
    %13 = sbr.rel (0) target = $region9
  $region8: #{densenet_forward.51} parent=0 // pred_region
    _
  $region9: #{densenet_forward.51} parent=0 // pred_fallthru
    _
  // Predicated region
  $region10: #{densenet_forward.51} parent=0 // pred_check
    _
  $region11: #{densenet_forward.51} parent=0 // pred_check_branch
    %15 = sbr.rel (0) target = $region13
  $region12: #{densenet_forward.51} parent=0 // pred_region
    _
  $region13: #{densenet_forward.51} parent=0 // pred_fallthru
    _
  // Predicated region
  $region14: #{densenet_forward.51} parent=0 // pred_check
    _
  $region15: #{densenet_forward.51} parent=0 // pred_check_branch
    %17 = sbr.rel (0) target = $region17
  $region16: #{densenet_forward.51} parent=0 // pred_region
    _
  $region17: #{densenet_forward.51} parent=0 // pred_fallthru
    _
  // Predicated region
  $region18: #{densenet_forward.51} parent=0 // pred_check
    _
  $region19: #{densenet_forward.51} parent=0 // pred_check_branch
    %19 = sbr.rel (0) target = $region21
  $region20: #{densenet_forward.51} parent=0 // pred_region
    _
  $region21: #{densenet_forward.51} parent=0 // pred_fallthru
    _
  %p21 = scmp.eq.s32.totalorder 0, 0
  // Predicated region
  $region22: #{densenet_forward.51} parent=0 // pred_check
    %p22 = pneg %p21
  $region23: #{densenet_forward.51} parent=0 // pred_check_branch
    %24 = sbr.rel (%p22) target = $region25
  $region24: #{densenet_forward.51} parent=0 // pred_region
    %25 = vst [vmem:[#allocation2] sm:$0xff] 0.0
    %26 = vst [vmem:[#allocation2 + $0x8] sm:$0xff] 0.0
    %27 = vst [vmem:[#allocation2 + $0x10] sm:$0xff] 0.0
    %28 = vst [vmem:[#allocation2 + $0x18] sm:$0xff] 0.0
  $region25: #{densenet_forward.51} parent=0 // pred_fallthru
    _
  %v29 = vld [vmem:[%s0] sm:$0xff]
  %v30 = vld [vmem:[%s0 + $0x8] sm:$0xff]
  %v31 = vld [vmem:[%s0 + $0x10] sm:$0xff]
  %v32 = vld [vmem:[%s0 + $0x18] sm:$0xff]
  %v33 = vld [vmem:[#allocation2] sm:$0xff]
  %v34 = vld [vmem:[#allocation2 + $0x8] sm:$0xff]
  %v35 = vld [vmem:[#allocation2 + $0x10] sm:$0xff]
  %v36 = vld [vmem:[#allocation2 + $0x18] sm:$0xff]
  %v37 = vld [vmem:[%s1] sm:$0xf]
  %v38 = vld [vmem:[%s1 + $0x4] sm:$0xf]
  %v39 = vld [vmem:[%s1 + $0x8] sm:$0xf]
  %v40 = vld [vmem:[%s1 + $0xc] sm:$0xf]
  %v41 = vld [vmem:[%s1 + $0x10] sm:$0xf]
  %v42 = vld [vmem:[%s1 + $0x14] sm:$0xf]
  %v43 = vld [vmem:[%s1 + $0x18] sm:$0xf]
  %v44 = vld [vmem:[%s1 + $0x1c] sm:$0xf]
  %v45 = vld [vmem:[%s1 + $0x20] sm:$0xf]
  %v46 = vld [vmem:[%s1 + $0x24] sm:$0xf]
  %v47 = vld [vmem:[%s1 + $0x28] sm:$0xf]
  %v48 = vld [vmem:[%s1 + $0x2c] sm:$0xf]
  %v49 = vld [vmem:[%s1 + $0x30] sm:$0xf]
  %v50 = vld [vmem:[%s1 + $0x34] sm:$0xf]
  %v51 = vld [vmem:[%s1 + $0x38] sm:$0xf]
  %v52 = vld [vmem:[%s1 + $0x3c] sm:$0xf]
  %v53 = vld [vmem:[%s1 + $0x40] sm:$0xf]
  %v54 = vld [vmem:[%s1 + $0x44] sm:$0xf]
  %v59 = vunpack.c.l.b16 %v29
  %v60 = vunpack.c.h.b16 %v29
  %v61 = vunpack.c.l.b16 %v30
  %v62 = vunpack.c.h.b16 %v30
  %v63 = vunpack.c.l.b16 %v31
  %v64 = vunpack.c.h.b16 %v31
  %v65 = vunpack.c.l.b16 %v32
  %v66 = vunpack.c.h.b16 %v32
  %v67 = vpack.c.b16 %v61, %v59
  %v68 = vpack.c.b16 %v62, %v60
  %v69 = vpack.c.b16 %v65, %v63
  %v70 = vpack.c.b16 %v66, %v64
  %v91 = vunpack.c.l.b16 %v37
  %v92 = vunpack.c.l.b16 %v38
  %v93 = vunpack.c.l.b16 %v39
  %v94 = vunpack.c.l.b16 %v40
  %v95 = vunpack.c.l.b16 %v41
  %v96 = vunpack.c.l.b16 %v42
  %v97 = vunpack.c.l.b16 %v43
  %v98 = vunpack.c.l.b16 %v44
  %v99 = vunpack.c.l.b16 %v45
  %v100 = vunpack.c.l.b16 %v46
  %v101 = vunpack.c.l.b16 %v47
  %v102 = vunpack.c.l.b16 %v48
  %v103 = vunpack.c.l.b16 %v49
  %v104 = vunpack.c.l.b16 %v50
  %v105 = vunpack.c.l.b16 %v51
  %v106 = vunpack.c.l.b16 %v52
  %v107 = vunpack.c.l.b16 %v53
  %v108 = vunpack.c.l.b16 %v54
  %v109 = vpack.c.b16 %v92, %v91
  %v110 = vpack.c.b16 %v94, %v93
  %v111 = vpack.c.b16 %v96, %v95
  %v112 = vpack.c.b16 %v98, %v97
  %v113 = vpack.c.b16 %v100, %v99
  %v114 = vpack.c.b16 %v102, %v101
  %v115 = vpack.c.b16 %v104, %v103
  %v116 = vpack.c.b16 %v106, %v105
  %v117 = vpack.c.b16 %v108, %v107
  %vm127 = vcmask 130048
  %v129 = vsel %vm127, %v68, 0
  %v132 = vsel %vm127, %v70, 0
  %134 = vmatprep.subr.bf16.mxu0 0
  %135 = vmatpush1.bf16.msra.mxu0 %v109
  %136 = vmatprep.subr.bf16.mxu0 0
  %137 = vmatpush1.bf16.msra.mxu0 %v110
  %138 = vmatprep.subr.bf16.mxu0 0
  %139 = vmatpush1.bf16.msra.mxu0 %v111
  %140 = vmatprep.subr.bf16.mxu0 0
  %141 = vmatpush1.bf16.msra.mxu0 %v112
  %142 = vmatprep.subr.bf16.mxu0 0
  %143 = vmatpush1.bf16.msra.mxu0 %v113
  %144 = vmatprep.subr.bf16.mxu0 0
  %145 = vmatpush1.bf16.msra.mxu0 %v114
  %146 = vmatprep.subr.bf16.mxu0 0
  %147 = vmatpush1.bf16.msra.mxu0 %v115
  %148 = vmatprep.subr.bf16.mxu0 0
  %149 = vmatpush1.bf16.msra.mxu0 %v116
  %150 = vmatprep.subr.bf16.mxu0 0
  %151 = vmatpush1.bf16.msra.mxu0 %v117
  %152 = vmatprep.subr.bf16.mxu0 0
  %153 = vmatpush1.bf16.msra.mxu0 0
  %154 = vmatprep.subr.bf16.mxu0 0
  %155 = vmatpush1.bf16.msra.mxu0 0
  %156 = vmatprep.subr.bf16.mxu0 0
  %157 = vmatpush1.bf16.msra.mxu0 0
  %158 = vmatprep.subr.bf16.mxu0 0
  %159 = vmatpush1.bf16.msra.mxu0 0
  %160 = vmatprep.subr.bf16.mxu0 0
  %161 = vmatpush1.bf16.msra.mxu0 0
  %162 = vmatprep.subr.bf16.mxu0 0
  %163 = vmatpush1.bf16.msra.mxu0 0
  %164 = vmatprep.subr.bf16.mxu0 0
  %165 = vmatpush1.bf16.msra.mxu0 0
  %166 = vmatprep.mubr.bf16.mxu0 %v129
  %167 = vmatmul.mubr.bf16.gmra.mrb[0].mxu0 %v67
  %v168 = vpop.f32.mrb[0].mxu0
  %v169 = vadd.f32 0.0, %v168
  %v170 = vpop.f32.mrb[0].mxu0
  %v171 = vpop.f32.mrb[0].mxu0
  %v172 = vadd.f32 0.0, %v171
  %v173 = vpop.f32.mrb[0].mxu0
  %174 = vmatprep.mubr.bf16.mxu0 %v132
  %175 = vmatmul.mubr.bf16.gmra.mrb[0].mxu0 %v69
  %v176 = vpop.f32.mrb[0].mxu0
  %v177 = vadd.f32 0.0, %v176
  %v178 = vpop.f32.mrb[0].mxu0
  %v179 = vpop.f32.mrb[0].mxu0
  %v180 = vadd.f32 0.0, %v179
  %v181 = vpop.f32.mrb[0].mxu0
  %182 = vdwg.mxu0
  %v183 = vadd.f32 %v33, %v169
  %v184 = vadd.f32 %v34, %v172
  %v185 = vadd.f32 %v35, %v177
  %v186 = vadd.f32 %v36, %v180
  %187 = vst [vmem:[#allocation2] sm:$0xff] %v183
  %188 = vst [vmem:[#allocation2 + $0x8] sm:$0xff] %v184
  %189 = vst [vmem:[#allocation2 + $0x10] sm:$0xff] %v185
  %190 = vst [vmem:[#allocation2 + $0x18] sm:$0xff] %v186
  // Predicated region
  $region26: #{densenet_forward.51} parent=0 // pred_check
    %p191 = pneg %p21
  $region27: #{densenet_forward.51} parent=0 // pred_check_branch
    %193 = sbr.rel (%p191) target = $region29
  $region28: #{densenet_forward.51} parent=0 // pred_region
    %v194 = vld [vmem:[#allocation2] sm:$0xff]
    %v195 = vld [vmem:[#allocation2 + $0x8] sm:$0xff]
    %v196 = vld [vmem:[#allocation2 + $0x10] sm:$0xff]
    %v197 = vld [vmem:[#allocation2 + $0x18] sm:$0xff]
    %v198 = vld [vmem:[%s4] sm:$0x1]
    %v200 = vlaneseq
    %v201 = vshrl.u32 %v200, 7
    %v202 = vsub.s32 0, %v201
    %v203 = vrot.slane %v198, %v202
    %v205 = vadd.f32 %v194, %v203
    %v206 = vadd.f32 %v195, %v203
    %v207 = vadd.f32 %v196, %v203
    %v208 = vadd.f32 %v197, %v203
    %v209 = vpack.c.bf16 %v206, %v205
    %v210 = vpack.c.bf16 %v208, %v207
    %v213 = vunpack.c.l.b16 %v209
    %v214 = vunpack.c.h.b16 %v209
    %v215 = vunpack.c.l.b16 %v210
    %v216 = vunpack.c.h.b16 %v210
    %v217 = vpack.c.b16 %v213, %v213
    %v218 = vpack.c.b16 %v214, %v214
    %v219 = vpack.c.b16 %v215, %v215
    %v220 = vpack.c.b16 %v216, %v216
    %225 = vst [vmem:[%s5] sm:$0xf] %v217
    %226 = vst [vmem:[%s5 + $0x4] sm:$0xf] %v218
    %227 = vst [vmem:[%s5 + $0x8] sm:$0xf] %v219
    %228 = vst [vmem:[%s5 + $0xc] sm:$0xf] %v220
  $region29: #{densenet_forward.51} parent=0 // pred_fallthru
    _
  // Predicated region
  $region30: #{densenet_forward.51} parent=0 // pred_check
    _
  $region31: #{densenet_forward.51} parent=0 // pred_check_branch
    %230 = sbr.rel (0) target = $region33
  $region32: #{densenet_forward.51} parent=0 // pred_region
    _
  $region33: #{densenet_forward.51} parent=0 // pred_fallthru
    _
  // Predicated region
  $region34: #{densenet_forward.51} parent=0 // pred_check
    _
  $region35: #{densenet_forward.51} parent=0 // pred_check_branch
    %232 = sbr.rel (0) target = $region37
  $region36: #{densenet_forward.51} parent=0 // pred_region
    _
  $region37: #{densenet_forward.51} parent=0 // pred_fallthru
    _

// kernel: densenet_forward.52
$region0: #{densenet_forward.52}
  #allocation0 [shape = 'u32[]', space=smem, size = 0x4, offset = 0x4, fixed_abs, tag = 'smem constant byte address 0x4 - core index']
  #allocation1 [shape = 'u32[144,128]{1,0:T(1,128)}', space=vmem, size = 0x12000, scoped, tag = 'internal scratch']
  #allocation2 [shape = 'f32[1,24]{1,0:T(1,128)}', space=vmem, size = 0x200, scoped, tag = 'scratch operand']
  #allocation3 [shape = 'f32[1,24]{1,0:T(1,128)}', space=vmem, size = 0x200, scoped, tag = 'scratch operand']
  %s0 = inlined_call_operand.vmem [shape: bf16[32,24], index: 0, kind: input, shape index: {}]
  %s1 = inlined_call_operand.vmem [shape: f32[1,24], index: 1, kind: input, shape index: {}]
  %s2 = inlined_call_operand.vmem [shape: f32[1,24], index: 2, kind: input, shape index: {}]
  %s3 = inlined_call_operand.vmem [shape: f32[1,24], index: 3, kind: output, shape index: {0}]
  %s4 = inlined_call_operand.vmem [shape: f32[1,24], index: 4, kind: output, shape index: {1}]
  %5 = xla_tuple %s3, %s4
  %s6 = sld [smem:[#allocation0]]
  $region38: #{densenet_forward.52} parent=0
    _
  %s8 = ssub.s32 1, %s6
  %s9 = scalar_select 0, %s8, %s6
  // Predicated region
  $region2: #{densenet_forward.52} parent=0 // pred_check
    _
  $region3: #{densenet_forward.52} parent=0 // pred_check_branch
    %11 = sbr.rel (0) target = $region5
  $region4: #{densenet_forward.52} parent=0 // pred_region
    _
  $region5: #{densenet_forward.52} parent=0 // pred_fallthru
    _
  // Predicated region
  $region6: #{densenet_forward.52} parent=0 // pred_check
    _
  $region7: #{densenet_forward.52} parent=0 // pred_check_branch
    %13 = sbr.rel (0) target = $region9
  $region8: #{densenet_forward.52} parent=0 // pred_region
    _
  $region9: #{densenet_forward.52} parent=0 // pred_fallthru
    _
  // Predicated region
  $region10: #{densenet_forward.52} parent=0 // pred_check
    _
  $region11: #{densenet_forward.52} parent=0 // pred_check_branch
    %15 = sbr.rel (0) target = $region13
  $region12: #{densenet_forward.52} parent=0 // pred_region
    _
  $region13: #{densenet_forward.52} parent=0 // pred_fallthru
    _
  %p16 = scmp.eq.s32.totalorder 0, 0
  // Predicated region
  $region14: #{densenet_forward.52} parent=0 // pred_check
    %p17 = pneg %p16
  $region15: #{densenet_forward.52} parent=0 // pred_check_branch
    %19 = sbr.rel (%p17) target = $region17
  $region16: #{densenet_forward.52} parent=0 // pred_region
    %vm20 = vcmask 188416
    %21 = vst.msk [vmem:[#allocation2] sm:$0x1] %vm20, 0.0
    %22 = vst.msk [vmem:[#allocation3] sm:$0x1] %vm20, 0.0
  $region17: #{densenet_forward.52} parent=0 // pred_fallthru
    _
  %v23 = vld [vmem:[%s0] sm:$0xf]
  %v24 = vld [vmem:[%s0 + $0x4] sm:$0xf]
  %v25 = vld [vmem:[%s0 + $0x8] sm:$0xf]
  %v26 = vld [vmem:[%s0 + $0xc] sm:$0xf]
  %v27 = vunpack.c.l.bf16 %v23
  %v28 = vunpack.c.l.bf16 %v24
  %v29 = vunpack.c.l.bf16 %v25
  %v30 = vunpack.c.l.bf16 %v26
  %v31 = vld [vmem:[#allocation2] sm:$0x1]
  %vm32 = vcmask 195584
  %v33 = vsel %vm32, %v27, 0.0
  %v34 = vsel %vm32, %v28, 0.0
  %v35 = vadd.f32 %v33, %v34
  %v36 = vsel %vm32, %v29, 0.0
  %v37 = vadd.f32 %v35, %v36
  %v38 = vsel %vm32, %v30, 0.0
  %v39 = vadd.f32 %v37, %v38
  %v40 = vrot.slane %v39, 4
  %v41 = vadd.f32 %v39, %v40
  %v42 = vrot.slane %v41, 2
  %v43 = vadd.f32 %v41, %v42
  %v44 = vrot.slane %v43, 1
  %v45 = vadd.f32 %v43, %v44
  %v46 = vadd.f32 %v31, %v45
  %vm47 = vcmask 188416
  %48 = vst.msk [vmem:[#allocation2] sm:$0x1] %vm47, %v46
  %v49 = vld [vmem:[#allocation3] sm:$0x1]
  %v50 = vmul.f32 %v27, %v27
  %v51 = vmul.f32 %v28, %v28
  %v52 = vmul.f32 %v29, %v29
  %v53 = vmul.f32 %v30, %v30
  %v54 = vsel %vm32, %v50, 0.0
  %v55 = vsel %vm32, %v51, 0.0
  %v56 = vadd.f32 %v54, %v55
  %v57 = vsel %vm32, %v52, 0.0
  %v58 = vadd.f32 %v56, %v57
  %v59 = vsel %vm32, %v53, 0.0
  %v60 = vadd.f32 %v58, %v59
  %v61 = vrot.slane %v60, 4
  %v62 = vadd.f32 %v60, %v61
  %v63 = vrot.slane %v62, 2
  %v64 = vadd.f32 %v62, %v63
  %v65 = vrot.slane %v64, 1
  %v66 = vadd.f32 %v64, %v65
  %v67 = vadd.f32 %v49, %v66
  %68 = vst.msk [vmem:[#allocation3] sm:$0x1] %vm47, %v67
  // Predicated region
  $region18: #{densenet_forward.52} parent=0 // pred_check
    %p69 = pneg %p16
  $region19: #{densenet_forward.52} parent=0 // pred_check_branch
    %71 = sbr.rel (%p69) target = $region21
  $region20: #{densenet_forward.52} parent=0 // pred_region
    %v72 = vld [vmem:[#allocation2] sm:$0x1]
    %v73 = vmul.f32 %v72, 0.03125
    %v74 = vld [vmem:[#allocation3] sm:$0x1]
    %v75 = vmul.f32 %v74, 0.03125
    %v76 = vmul.f32 %v73, %v73
    %v77 = vsub.f32 %v75, %v76
    %v78 = vmax.f32 %v77, 0.0
    %v79 = vadd.f32 %v78, 1e-05
    %v80 = vrsqrt.pop %v79
    %v81 = vld [vmem:[%s1] sm:$0x1]
    %v82 = vmul.f32 %v81, %v80
    %83 = vst.msk [vmem:[%s3] sm:$0x1] %vm47, %v82
    %v84 = vld [vmem:[%s2] sm:$0x1]
    %v85 = vmul.f32 %v73, %v82
    %v86 = vsub.f32 %v84, %v85
    %87 = vst.msk [vmem:[%s4] sm:$0x1] %vm47, %v86
  $region21: #{densenet_forward.52} parent=0 // pred_fallthru
    _
  // Predicated region
  $region22: #{densenet_forward.52} parent=0 // pred_check
    _
  $region23: #{densenet_forward.52} parent=0 // pred_check_branch
    %89 = sbr.rel (0) target = $region25
  $region24: #{densenet_forward.52} parent=0 // pred_region
    _
  $region25: #{densenet_forward.52} parent=0 // pred_fallthru
    _
  // Predicated region
  $region26: #{densenet_forward.52} parent=0 // pred_check
    _
  $region27: #{densenet_forward.52} parent=0 // pred_check_branch
    %91 = sbr.rel (0) target = $region29
  $region28: #{densenet_forward.52} parent=0 // pred_region
    _
  $region29: #{densenet_forward.52} parent=0 // pred_fallthru
    _
  // Predicated region
  $region30: #{densenet_forward.52} parent=0 // pred_check
    _
  $region31: #{densenet_forward.52} parent=0 // pred_check_branch
    %93 = sbr.rel (0) target = $region33
  $region32: #{densenet_forward.52} parent=0 // pred_region
    _
  $region33: #{densenet_forward.52} parent=0 // pred_fallthru
    _
  // Predicated region
  $region34: #{densenet_forward.52} parent=0 // pred_check
    _
  $region35: #{densenet_forward.52} parent=0 // pred_check_branch
    %95 = sbr.rel (0) target = $region37
  $region36: #{densenet_forward.52} parent=0 // pred_region
    _
  $region37: #{densenet_forward.52} parent=0 // pred_fallthru
    _

// kernel: densenet_forward.53
$region0: #{densenet_forward.53}
  #allocation0 [shape = 'u32[]', space=smem, size = 0x4, offset = 0x4, fixed_abs, tag = 'smem constant byte address 0x4 - core index']
  #allocation1 [shape = 'u32[144,128]{1,0:T(1,128)}', space=vmem, size = 0x12000, scoped, tag = 'internal scratch']
  #allocation2 [shape = 'f32[32,128]{1,0:T(8,128)}', space=vmem, size = 0x4000, scoped, tag = 'scratch operand']
  %s0 = inlined_call_operand.vmem [shape: bf16[32,24], index: 0, kind: input, shape index: {}]
  %s1 = inlined_call_operand.vmem [shape: bf16[24,128], index: 1, kind: input, shape index: {}]
  %s2 = inlined_call_operand.vmem [shape: f32[1,24], index: 2, kind: input, shape index: {}]
  %s3 = inlined_call_operand.vmem [shape: f32[1,24], index: 3, kind: input, shape index: {}]
  %s4 = inlined_call_operand.vmem [shape: f32[1,128], index: 4, kind: input, shape index: {}]
  %s5 = inlined_call_operand.vmem [shape: bf16[32,128], index: 5, kind: output, shape index: {}]
  %s6 = sld [smem:[#allocation0]]
  $region38: #{densenet_forward.53} parent=0
    _
  %s8 = ssub.s32 1, %s6
  %s9 = scalar_select 0, %s8, %s6
  // Predicated region
  $region2: #{densenet_forward.53} parent=0 // pred_check
    _
  $region3: #{densenet_forward.53} parent=0 // pred_check_branch
    %11 = sbr.rel (0) target = $region5
  $region4: #{densenet_forward.53} parent=0 // pred_region
    _
  $region5: #{densenet_forward.53} parent=0 // pred_fallthru
    _
  // Predicated region
  $region6: #{densenet_forward.53} parent=0 // pred_check
    _
  $region7: #{densenet_forward.53} parent=0 // pred_check_branch
    %13 = sbr.rel (0) target = $region9
  $region8: #{densenet_forward.53} parent=0 // pred_region
    _
  $region9: #{densenet_forward.53} parent=0 // pred_fallthru
    _
  // Predicated region
  $region10: #{densenet_forward.53} parent=0 // pred_check
    _
  $region11: #{densenet_forward.53} parent=0 // pred_check_branch
    %15 = sbr.rel (0) target = $region13
  $region12: #{densenet_forward.53} parent=0 // pred_region
    _
  $region13: #{densenet_forward.53} parent=0 // pred_fallthru
    _
  // Predicated region
  $region14: #{densenet_forward.53} parent=0 // pred_check
    _
  $region15: #{densenet_forward.53} parent=0 // pred_check_branch
    %17 = sbr.rel (0) target = $region17
  $region16: #{densenet_forward.53} parent=0 // pred_region
    _
  $region17: #{densenet_forward.53} parent=0 // pred_fallthru
    _
  // Predicated region
  $region18: #{densenet_forward.53} parent=0 // pred_check
    _
  $region19: #{densenet_forward.53} parent=0 // pred_check_branch
    %19 = sbr.rel (0) target = $region21
  $region20: #{densenet_forward.53} parent=0 // pred_region
    _
  $region21: #{densenet_forward.53} parent=0 // pred_fallthru
    _
  %p21 = scmp.eq.s32.totalorder 0, 0
  // Predicated region
  $region22: #{densenet_forward.53} parent=0 // pred_check
    %p22 = pneg %p21
  $region23: #{densenet_forward.53} parent=0 // pred_check_branch
    %24 = sbr.rel (%p22) target = $region25
  $region24: #{densenet_forward.53} parent=0 // pred_region
    %25 = vst [vmem:[#allocation2] sm:$0xff] 0.0
    %26 = vst [vmem:[#allocation2 + $0x8] sm:$0xff] 0.0
    %27 = vst [vmem:[#allocation2 + $0x10] sm:$0xff] 0.0
    %28 = vst [vmem:[#allocation2 + $0x18] sm:$0xff] 0.0
  $region25: #{densenet_forward.53} parent=0 // pred_fallthru
    _
  %v29 = vld [vmem:[%s0] sm:$0xf]
  %v30 = vld [vmem:[%s0 + $0x4] sm:$0xf]
  %v31 = vld [vmem:[%s0 + $0x8] sm:$0xf]
  %v32 = vld [vmem:[%s0 + $0xc] sm:$0xf]
  %v33 = vunpack.c.l.bf16 %v29
  %v34 = vunpack.c.l.bf16 %v30
  %v35 = vunpack.c.l.bf16 %v31
  %v36 = vunpack.c.l.bf16 %v32
  %v37 = vld [vmem:[%s2] sm:$0x1]
  %v39 = vlaneseq
  %v40 = vshrl.u32 %v39, 7
  %v41 = vsub.s32 0, %v40
  %v42 = vrot.slane %v37, %v41
  %v44 = vmul.f32 %v33, %v42
  %v45 = vmul.f32 %v34, %v42
  %v46 = vmul.f32 %v35, %v42
  %v47 = vmul.f32 %v36, %v42
  %v48 = vld [vmem:[%s3] sm:$0x1]
  %v50 = vlaneseq
  %v51 = vshrl.u32 %v50, 7
  %v52 = vsub.s32 0, %v51
  %v53 = vrot.slane %v48, %v52
  %v55 = vadd.f32 %v44, %v53
  %v56 = vadd.f32 %v45, %v53
  %v57 = vadd.f32 %v46, %v53
  %v58 = vadd.f32 %v47, %v53
  %v59 = vmax.f32 %v55, 0.0
  %v60 = vmax.f32 %v56, 0.0
  %v61 = vmax.f32 %v57, 0.0
  %v62 = vmax.f32 %v58, 0.0
  %v63 = vpack.c.bf16 %v60, %v59
  %v64 = vpack.c.bf16 %v62, %v61
  %v65 = vld [vmem:[#allocation2] sm:$0xff]
  %v66 = vld [vmem:[#allocation2 + $0x8] sm:$0xff]
  %v67 = vld [vmem:[#allocation2 + $0x10] sm:$0xff]
  %v68 = vld [vmem:[#allocation2 + $0x18] sm:$0xff]
  %v69 = vld [vmem:[%s1] sm:$0xf]
  %v70 = vld [vmem:[%s1 + $0x4] sm:$0xf]
  %v71 = vld [vmem:[%s1 + $0x8] sm:$0xf]
  %v75 = vunpack.c.l.b16 %v69
  %v76 = vunpack.c.l.b16 %v70
  %v77 = vunpack.c.l.b16 %v71
  %v78 = vpack.c.b16 %v76, %v75
  %v79 = vpack.c.b16 %v77, %v77
  %vm81 = vcmask 195584
  %v83 = vsel %vm81, %v63, 0
  %v86 = vsel %vm81, %v64, 0
  %vm88 = vcmask 1043456
  %v90 = vsel %vm88, %v79, 0
  %92 = vmatprep.subr.bf16.mxu0 0
  %93 = vmatpush1.bf16.msra.mxu0 %v78
  %94 = vmatprep.subr.bf16.mxu0 0
  %95 = vmatpush1.bf16.msra.mxu0 %v90
  %96 = vmatprep.subr.bf16.mxu0 0
  %97 = vmatpush1.bf16.msra.mxu0 0
  %98 = vmatprep.subr.bf16.mxu0 0
  %99 = vmatpush1.bf16.msra.mxu0 0
  %100 = vmatprep.subr.bf16.mxu0 0
  %101 = vmatpush1.bf16.msra.mxu0 0
  %102 = vmatprep.subr.bf16.mxu0 0
  %103 = vmatpush1.bf16.msra.mxu0 0
  %104 = vmatprep.subr.bf16.mxu0 0
  %105 = vmatpush1.bf16.msra.mxu0 0
  %106 = vmatprep.subr.bf16.mxu0 0
  %107 = vmatpush1.bf16.msra.mxu0 0
  %108 = vmatprep.subr.bf16.mxu0 0
  %109 = vmatpush1.bf16.msra.mxu0 0
  %110 = vmatprep.subr.bf16.mxu0 0
  %111 = vmatpush1.bf16.msra.mxu0 0
  %112 = vmatprep.subr.bf16.mxu0 0
  %113 = vmatpush1.bf16.msra.mxu0 0
  %114 = vmatprep.subr.bf16.mxu0 0
  %115 = vmatpush1.bf16.msra.mxu0 0
  %116 = vmatprep.subr.bf16.mxu0 0
  %117 = vmatpush1.bf16.msra.mxu0 0
  %118 = vmatprep.subr.bf16.mxu0 0
  %119 = vmatpush1.bf16.msra.mxu0 0
  %120 = vmatprep.subr.bf16.mxu0 0
  %121 = vmatpush1.bf16.msra.mxu0 0
  %122 = vmatprep.subr.bf16.mxu0 0
  %123 = vmatpush1.bf16.msra.mxu0 0
  %124 = vmatprep.mubr.bf16.mxu0 0
  %125 = vmatmul.mubr.bf16.gmra.mrb[0].mxu0 %v83
  %v126 = vpop.f32.mrb[0].mxu0
  %v127 = vadd.f32 0.0, %v126
  %v128 = vpop.f32.mrb[0].mxu0
  %v129 = vpop.f32.mrb[0].mxu0
  %v130 = vadd.f32 0.0, %v129
  %v131 = vpop.f32.mrb[0].mxu0
  %132 = vmatprep.mubr.bf16.mxu0 0
  %133 = vmatmul.mubr.bf16.gmra.mrb[0].mxu0 %v86
  %v134 = vpop.f32.mrb[0].mxu0
  %v135 = vadd.f32 0.0, %v134
  %v136 = vpop.f32.mrb[0].mxu0
  %v137 = vpop.f32.mrb[0].mxu0
  %v138 = vadd.f32 0.0, %v137
  %v139 = vpop.f32.mrb[0].mxu0
  %140 = vdwg.mxu0
  %v141 = vadd.f32 %v65, %v127
  %v142 = vadd.f32 %v66, %v130
  %v143 = vadd.f32 %v67, %v135
  %v144 = vadd.f32 %v68, %v138
  %145 = vst [vmem:[#allocation2] sm:$0xff] %v141
  %146 = vst [vmem:[#allocation2 + $0x8] sm:$0xff] %v142
  %147 = vst [vmem:[#allocation2 + $0x10] sm:$0xff] %v143
  %148 = vst [vmem:[#allocation2 + $0x18] sm:$0xff] %v144
  // Predicated region
  $region26: #{densenet_forward.53} parent=0 // pred_check
    %p149 = pneg %p21
  $region27: #{densenet_forward.53} parent=0 // pred_check_branch
    %151 = sbr.rel (%p149) target = $region29
  $region28: #{densenet_forward.53} parent=0 // pred_region
    %v152 = vld [vmem:[#allocation2] sm:$0xff]
    %v153 = vld [vmem:[#allocation2 + $0x8] sm:$0xff]
    %v154 = vld [vmem:[#allocation2 + $0x10] sm:$0xff]
    %v155 = vld [vmem:[#allocation2 + $0x18] sm:$0xff]
    %v156 = vld [vmem:[%s4] sm:$0x1]
    %v158 = vlaneseq
    %v159 = vshrl.u32 %v158, 7
    %v160 = vsub.s32 0, %v159
    %v161 = vrot.slane %v156, %v160
    %v163 = vadd.f32 %v152, %v161
    %v164 = vadd.f32 %v153, %v161
    %v165 = vadd.f32 %v154, %v161
    %v166 = vadd.f32 %v155, %v161
    %v167 = vpack.c.bf16 %v164, %v163
    %v168 = vpack.c.bf16 %v166, %v165
    %v171 = vunpack.c.l.b16 %v167
    %v172 = vunpack.c.h.b16 %v167
    %v173 = vunpack.c.l.b16 %v168
    %v174 = vunpack.c.h.b16 %v168
    %v175 = vpack.c.b16 %v171, %v171
    %v176 = vpack.c.b16 %v172, %v172
    %v177 = vpack.c.b16 %v173, %v173
    %v178 = vpack.c.b16 %v174, %v174
    %183 = vst [vmem:[%s5] sm:$0xf] %v175
    %184 = vst [vmem:[%s5 + $0x4] sm:$0xf] %v176
    %185 = vst [vmem:[%s5 + $0x8] sm:$0xf] %v177
    %186 = vst [vmem:[%s5 + $0xc] sm:$0xf] %v178
  $region29: #{densenet_forward.53} parent=0 // pred_fallthru
    _
  // Predicated region
  $region30: #{densenet_forward.53} parent=0 // pred_check
    _
  $region31: #{densenet_forward.53} parent=0 // pred_check_branch
    %188 = sbr.rel (0) target = $region33
  $region32: #{densenet_forward.53} parent=0 // pred_region
    _
  $region33: #{densenet_forward.53} parent=0 // pred_fallthru
    _
  // Predicated region
  $region34: #{densenet_forward.53} parent=0 // pred_check
    _
  $region35: #{densenet_forward.53} parent=0 // pred_check_branch
    %190 = sbr.rel (0) target = $region37
  $region36: #{densenet_forward.53} parent=0 // pred_region
    _
  $region37: #{densenet_forward.53} parent=0 // pred_fallthru
    _

// kernel: densenet_forward.57
$region0: #{densenet_forward.57}
  #allocation0 [shape = 'u32[]', space=smem, size = 0x4, offset = 0x4, fixed_abs, tag = 'smem constant byte address 0x4 - core index']
  #allocation1 [shape = 'u32[144,128]{1,0:T(1,128)}', space=vmem, size = 0x12000, scoped, tag = 'internal scratch']
  #allocation2 [shape = 'f32[1,32]{1,0:T(1,128)}', space=vmem, size = 0x200, scoped, tag = 'scratch operand']
  #allocation3 [shape = 'f32[1,32]{1,0:T(1,128)}', space=vmem, size = 0x200, scoped, tag = 'scratch operand']
  %s0 = inlined_call_operand.vmem [shape: bf16[32,32], index: 0, kind: input, shape index: {}]
  %s1 = inlined_call_operand.vmem [shape: f32[1,32], index: 1, kind: input, shape index: {}]
  %s2 = inlined_call_operand.vmem [shape: f32[1,32], index: 2, kind: input, shape index: {}]
  %s3 = inlined_call_operand.vmem [shape: f32[1,32], index: 3, kind: output, shape index: {0}]
  %s4 = inlined_call_operand.vmem [shape: f32[1,32], index: 4, kind: output, shape index: {1}]
  %5 = xla_tuple %s3, %s4
  %s6 = sld [smem:[#allocation0]]
  $region38: #{densenet_forward.57} parent=0
    _
  %s8 = ssub.s32 1, %s6
  %s9 = scalar_select 0, %s8, %s6
  // Predicated region
  $region2: #{densenet_forward.57} parent=0 // pred_check
    _
  $region3: #{densenet_forward.57} parent=0 // pred_check_branch
    %11 = sbr.rel (0) target = $region5
  $region4: #{densenet_forward.57} parent=0 // pred_region
    _
  $region5: #{densenet_forward.57} parent=0 // pred_fallthru
    _
  // Predicated region
  $region6: #{densenet_forward.57} parent=0 // pred_check
    _
  $region7: #{densenet_forward.57} parent=0 // pred_check_branch
    %13 = sbr.rel (0) target = $region9
  $region8: #{densenet_forward.57} parent=0 // pred_region
    _
  $region9: #{densenet_forward.57} parent=0 // pred_fallthru
    _
  // Predicated region
  $region10: #{densenet_forward.57} parent=0 // pred_check
    _
  $region11: #{densenet_forward.57} parent=0 // pred_check_branch
    %15 = sbr.rel (0) target = $region13
  $region12: #{densenet_forward.57} parent=0 // pred_region
    _
  $region13: #{densenet_forward.57} parent=0 // pred_fallthru
    _
  %p16 = scmp.eq.s32.totalorder 0, 0
  // Predicated region
  $region14: #{densenet_forward.57} parent=0 // pred_check
    %p17 = pneg %p16
  $region15: #{densenet_forward.57} parent=0 // pred_check_branch
    %19 = sbr.rel (%p17) target = $region17
  $region16: #{densenet_forward.57} parent=0 // pred_region
    %vm20 = vcmask 253952
    %21 = vst.msk [vmem:[#allocation2] sm:$0x1] %vm20, 0.0
    %22 = vst.msk [vmem:[#allocation3] sm:$0x1] %vm20, 0.0
  $region17: #{densenet_forward.57} parent=0 // pred_fallthru
    _
  %v23 = vld [vmem:[%s0] sm:$0xf]
  %v24 = vld [vmem:[%s0 + $0x4] sm:$0xf]
  %v25 = vld [vmem:[%s0 + $0x8] sm:$0xf]
  %v26 = vld [vmem:[%s0 + $0xc] sm:$0xf]
  %v27 = vunpack.c.l.bf16 %v23
  %v28 = vunpack.c.l.bf16 %v24
  %v29 = vunpack.c.l.bf16 %v25
  %v30 = vunpack.c.l.bf16 %v26
  %v31 = vld [vmem:[#allocation2] sm:$0x1]
  %vm32 = vcmask 261120
  %v33 = vsel %vm32, %v27, 0.0
  %v34 = vsel %vm32, %v28, 0.0
  %v35 = vadd.f32 %v33, %v34
  %v36 = vsel %vm32, %v29, 0.0
  %v37 = vadd.f32 %v35, %v36
  %v38 = vsel %vm32, %v30, 0.0
  %v39 = vadd.f32 %v37, %v38
  %v40 = vrot.slane %v39, 4
  %v41 = vadd.f32 %v39, %v40
  %v42 = vrot.slane %v41, 2
  %v43 = vadd.f32 %v41, %v42
  %v44 = vrot.slane %v43, 1
  %v45 = vadd.f32 %v43, %v44
  %v46 = vadd.f32 %v31, %v45
  %vm47 = vcmask 253952
  %48 = vst.msk [vmem:[#allocation2] sm:$0x1] %vm47, %v46
  %v49 = vld [vmem:[#allocation3] sm:$0x1]
  %v50 = vmul.f32 %v27, %v27
  %v51 = vmul.f32 %v28, %v28
  %v52 = vmul.f32 %v29, %v29
  %v53 = vmul.f32 %v30, %v30
  %v54 = vsel %vm32, %v50, 0.0
  %v55 = vsel %vm32, %v51, 0.0
  %v56 = vadd.f32 %v54, %v55
  %v57 = vsel %vm32, %v52, 0.0
  %v58 = vadd.f32 %v56, %v57
  %v59 = vsel %vm32, %v53, 0.0
  %v60 = vadd.f32 %v58, %v59
  %v61 = vrot.slane %v60, 4
  %v62 = vadd.f32 %v60, %v61
  %v63 = vrot.slane %v62, 2
  %v64 = vadd.f32 %v62, %v63
  %v65 = vrot.slane %v64, 1
  %v66 = vadd.f32 %v64, %v65
  %v67 = vadd.f32 %v49, %v66
  %68 = vst.msk [vmem:[#allocation3] sm:$0x1] %vm47, %v67
  // Predicated region
  $region18: #{densenet_forward.57} parent=0 // pred_check
    %p69 = pneg %p16
  $region19: #{densenet_forward.57} parent=0 // pred_check_branch
    %71 = sbr.rel (%p69) target = $region21
  $region20: #{densenet_forward.57} parent=0 // pred_region
    %v72 = vld [vmem:[#allocation2] sm:$0x1]
    %v73 = vmul.f32 %v72, 0.03125
    %v74 = vld [vmem:[#allocation3] sm:$0x1]
    %v75 = vmul.f32 %v74, 0.03125
    %v76 = vmul.f32 %v73, %v73
    %v77 = vsub.f32 %v75, %v76
    %v78 = vmax.f32 %v77, 0.0
    %v79 = vadd.f32 %v78, 1e-05
    %v80 = vrsqrt.pop %v79
    %v81 = vld [vmem:[%s1] sm:$0x1]
    %v82 = vmul.f32 %v81, %v80
    %83 = vst.msk [vmem:[%s3] sm:$0x1] %vm47, %v82
    %v84 = vld [vmem:[%s2] sm:$0x1]
    %v85 = vmul.f32 %v73, %v82
    %v86 = vsub.f32 %v84, %v85
    %87 = vst.msk [vmem:[%s4] sm:$0x1] %vm47, %v86
  $region21: #{densenet_forward.57} parent=0 // pred_fallthru
    _
  // Predicated region
  $region22: #{densenet_forward.57} parent=0 // pred_check
    _
  $region23: #{densenet_forward.57} parent=0 // pred_check_branch
    %89 = sbr.rel (0) target = $region25
  $region24: #{densenet_forward.57} parent=0 // pred_region
    _
  $region25: #{densenet_forward.57} parent=0 // pred_fallthru
    _
  // Predicated region
  $region26: #{densenet_forward.57} parent=0 // pred_check
    _
  $region27: #{densenet_forward.57} parent=0 // pred_check_branch
    %91 = sbr.rel (0) target = $region29
  $region28: #{densenet_forward.57} parent=0 // pred_region
    _
  $region29: #{densenet_forward.57} parent=0 // pred_fallthru
    _
  // Predicated region
  $region30: #{densenet_forward.57} parent=0 // pred_check
    _
  $region31: #{densenet_forward.57} parent=0 // pred_check_branch
    %93 = sbr.rel (0) target = $region33
  $region32: #{densenet_forward.57} parent=0 // pred_region
    _
  $region33: #{densenet_forward.57} parent=0 // pred_fallthru
    _
  // Predicated region
  $region34: #{densenet_forward.57} parent=0 // pred_check
    _
  $region35: #{densenet_forward.57} parent=0 // pred_check_branch
    %95 = sbr.rel (0) target = $region37
  $region36: #{densenet_forward.57} parent=0 // pred_region
    _
  $region37: #{densenet_forward.57} parent=0 // pred_fallthru
    _

// kernel: densenet_forward.58
$region0: #{densenet_forward.58}
  #allocation0 [shape = 'u32[]', space=smem, size = 0x4, offset = 0x4, fixed_abs, tag = 'smem constant byte address 0x4 - core index']
  #allocation1 [shape = 'u32[144,128]{1,0:T(1,128)}', space=vmem, size = 0x12000, scoped, tag = 'internal scratch']
  %s0 = inlined_call_operand.vmem [shape: bf16[2,16,32], index: 0, kind: input, shape index: {}]
  %s1 = inlined_call_operand.vmem [shape: f32[1,32], index: 1, kind: input, shape index: {}]
  %s2 = inlined_call_operand.vmem [shape: f32[1,32], index: 2, kind: input, shape index: {}]
  %s3 = inlined_call_operand.vmem [shape: f32[2,32], index: 3, kind: output, shape index: {}]
  %s4 = sld [smem:[#allocation0]]
  $region22: #{densenet_forward.58} parent=0
    _
  %s6 = ssub.s32 1, %s4
  %s7 = scalar_select 0, %s6, %s4
  // Predicated region
  $region2: #{densenet_forward.58} parent=0 // pred_check
    _
  $region3: #{densenet_forward.58} parent=0 // pred_check_branch
    %9 = sbr.rel (0) target = $region5
  $region4: #{densenet_forward.58} parent=0 // pred_region
    _
  $region5: #{densenet_forward.58} parent=0 // pred_fallthru
    _
  // Predicated region
  $region6: #{densenet_forward.58} parent=0 // pred_check
    _
  $region7: #{densenet_forward.58} parent=0 // pred_check_branch
    %11 = sbr.rel (0) target = $region9
  $region8: #{densenet_forward.58} parent=0 // pred_region
    _
  $region9: #{densenet_forward.58} parent=0 // pred_fallthru
    _
  // Predicated region
  $region10: #{densenet_forward.58} parent=0 // pred_check
    _
  $region11: #{densenet_forward.58} parent=0 // pred_check_branch
    %13 = sbr.rel (0) target = $region13
  $region12: #{densenet_forward.58} parent=0 // pred_region
    _
  $region13: #{densenet_forward.58} parent=0 // pred_fallthru
    _
  %v14 = vld [vmem:[%s0] sm:$0xf]
  %v15 = vld [vmem:[%s0 + $0x4] sm:$0xf]
  %v16 = vld [vmem:[%s0 + $0x8] sm:$0xf]
  %v17 = vld [vmem:[%s0 + $0xc] sm:$0xf]
  %v18 = vunpack.c.l.bf16 %v14
  %v19 = vunpack.c.l.bf16 %v15
  %v20 = vunpack.c.l.bf16 %v16
  %v21 = vunpack.c.l.bf16 %v17
  %v22 = vld [vmem:[%s1] sm:$0x1]
  %v24 = vlaneseq
  %v25 = vshrl.u32 %v24, 7
  %v26 = vsub.s32 0, %v25
  %v27 = vrot.slane %v22, %v26
  %v29 = vmul.f32 %v18, %v27
  %v30 = vmul.f32 %v19, %v27
  %v31 = vmul.f32 %v20, %v27
  %v32 = vmul.f32 %v21, %v27
  %v33 = vld [vmem:[%s2] sm:$0x1]
  %v35 = vlaneseq
  %v36 = vshrl.u32 %v35, 7
  %v37 = vsub.s32 0, %v36
  %v38 = vrot.slane %v33, %v37
  %v40 = vadd.f32 %v29, %v38
  %v41 = vadd.f32 %v30, %v38
  %v42 = vadd.f32 %v31, %v38
  %v43 = vadd.f32 %v32, %v38
  %v44 = vmax.f32 %v40, 0.0
  %v45 = vmax.f32 %v41, 0.0
  %v46 = vmax.f32 %v42, 0.0
  %v47 = vmax.f32 %v43, 0.0
  %vm48 = vcmask 261120
  %v49 = vsel %vm48, %v44, 0.0
  %v50 = vsel %vm48, %v45, 0.0
  %v51 = vadd.f32 %v49, %v50
  %v52 = vrot.slane %v51, 4
  %v53 = vadd.f32 %v51, %v52
  %v54 = vrot.slane %v53, 2
  %v55 = vadd.f32 %v53, %v54
  %v56 = vrot.slane %v55, 1
  %v57 = vadd.f32 %v55, %v56
  %v58 = vsel %vm48, %v46, 0.0
  %v59 = vsel %vm48, %v47, 0.0
  %v60 = vadd.f32 %v58, %v59
  %v61 = vrot.slane %v60, 4
  %v62 = vadd.f32 %v60, %v61
  %v63 = vrot.slane %v62, 2
  %v64 = vadd.f32 %v62, %v63
  %v65 = vrot.slane %v64, 1
  %v66 = vadd.f32 %v64, %v65
  %v67 = vmul.f32 %v57, 0.0625
  %v68 = vmul.f32 %v66, 0.0625
  %vm71 = vcmask 1041409
  %v72 = vsel %vm71, %v68, %v67
  %vm74 = vcmask 254976
  %75 = vst.msk [vmem:[%s3] sm:$0x3] %vm74, %v72
  // Predicated region
  $region14: #{densenet_forward.58} parent=0 // pred_check
    _
  $region15: #{densenet_forward.58} parent=0 // pred_check_branch
    %77 = sbr.rel (0) target = $region17
  $region16: #{densenet_forward.58} parent=0 // pred_region
    _
  $region17: #{densenet_forward.58} parent=0 // pred_fallthru
    _
  // Predicated region
  $region18: #{densenet_forward.58} parent=0 // pred_check
    _
  $region19: #{densenet_forward.58} parent=0 // pred_check_branch
    %79 = sbr.rel (0) target = $region21
  $region20: #{densenet_forward.58} parent=0 // pred_region
    _
  $region21: #{densenet_forward.58} parent=0 // pred_fallthru
    _

// kernel: densenet_forward.59
$region0: #{densenet_forward.59}
  #allocation0 [shape = 'u32[]', space=smem, size = 0x4, offset = 0x4, fixed_abs, tag = 'smem constant byte address 0x4 - core index']
  #allocation1 [shape = 'u32[144,128]{1,0:T(1,128)}', space=vmem, size = 0x12000, scoped, tag = 'internal scratch']
  #allocation2 [shape = 'f32[8,128]{1,0:T(8,128)}', space=vmem, size = 0x1000, scoped, tag = 'scratch operand']
  %s0 = inlined_call_operand.vmem [shape: bf16[8,32], index: 0, kind: input, shape index: {}]
  %s1 = inlined_call_operand.vmem [shape: bf16[32,128], index: 1, kind: input, shape index: {}]
  %s2 = inlined_call_operand.vmem [shape: f32[1,32], index: 2, kind: input, shape index: {}, may-alias: {2,3}]
  %s3 = inlined_call_operand.vmem [shape: f32[1,32], index: 3, kind: input, shape index: {}, may-alias: {2,3}]
  %s4 = inlined_call_operand.vmem [shape: f32[1,128], index: 4, kind: input, shape index: {}]
  %s5 = inlined_call_operand.vmem [shape: f32[8,128], index: 5, kind: output, shape index: {}]
  %s6 = sld [smem:[#allocation0]]
  $region38: #{densenet_forward.59} parent=0
    _
  %s8 = ssub.s32 1, %s6
  %s9 = scalar_select 0, %s8, %s6
  // Predicated region
  $region2: #{densenet_forward.59} parent=0 // pred_check
    _
  $region3: #{densenet_forward.59} parent=0 // pred_check_branch
    %11 = sbr.rel (0) target = $region5
  $region4: #{densenet_forward.59} parent=0 // pred_region
    _
  $region5: #{densenet_forward.59} parent=0 // pred_fallthru
    _
  // Predicated region
  $region6: #{densenet_forward.59} parent=0 // pred_check
    _
  $region7: #{densenet_forward.59} parent=0 // pred_check_branch
    %13 = sbr.rel (0) target = $region9
  $region8: #{densenet_forward.59} parent=0 // pred_region
    _
  $region9: #{densenet_forward.59} parent=0 // pred_fallthru
    _
  // Predicated region
  $region10: #{densenet_forward.59} parent=0 // pred_check
    _
  $region11: #{densenet_forward.59} parent=0 // pred_check_branch
    %15 = sbr.rel (0) target = $region13
  $region12: #{densenet_forward.59} parent=0 // pred_region
    _
  $region13: #{densenet_forward.59} parent=0 // pred_fallthru
    _
  // Predicated region
  $region14: #{densenet_forward.59} parent=0 // pred_check
    _
  $region15: #{densenet_forward.59} parent=0 // pred_check_branch
    %17 = sbr.rel (0) target = $region17
  $region16: #{densenet_forward.59} parent=0 // pred_region
    _
  $region17: #{densenet_forward.59} parent=0 // pred_fallthru
    _
  // Predicated region
  $region18: #{densenet_forward.59} parent=0 // pred_check
    _
  $region19: #{densenet_forward.59} parent=0 // pred_check_branch
    %19 = sbr.rel (0) target = $region21
  $region20: #{densenet_forward.59} parent=0 // pred_region
    _
  $region21: #{densenet_forward.59} parent=0 // pred_fallthru
    _
  %p21 = scmp.eq.s32.totalorder 0, 0
  // Predicated region
  $region22: #{densenet_forward.59} parent=0 // pred_check
    %p22 = pneg %p21
  $region23: #{densenet_forward.59} parent=0 // pred_check_branch
    %24 = sbr.rel (%p22) target = $region25
  $region24: #{densenet_forward.59} parent=0 // pred_region
    %25 = vst [vmem:[#allocation2] sm:$0xff] 0.0
  $region25: #{densenet_forward.59} parent=0 // pred_fallthru
    _
  %v26 = vld [vmem:[%s0] sm:$0xf]
  %v27 = vld [vmem:[#allocation2] sm:$0xff]
  %v28 = vld [vmem:[%s1] sm:$0xf]
  %v29 = vld [vmem:[%s1 + $0x4] sm:$0xf]
  %v30 = vld [vmem:[%s1 + $0x8] sm:$0xf]
  %v31 = vld [vmem:[%s1 + $0xc] sm:$0xf]
  %v36 = vunpack.c.l.b16 %v28
  %v37 = vunpack.c.l.b16 %v29
  %v38 = vunpack.c.l.b16 %v30
  %v39 = vunpack.c.l.b16 %v31
  %v40 = vpack.c.b16 %v37, %v36
  %v41 = vpack.c.b16 %v39, %v38
  %vm44 = vcmask 261120
  %v46 = vsel %vm44, %v26, 0
  %48 = vmatprep.subr.bf16.mxu0 0
  %49 = vmatpush1.bf16.msra.mxu0 %v40
  %50 = vmatprep.subr.bf16.mxu0 0
  %51 = vmatpush1.bf16.msra.mxu0 %v41
  %52 = vmatprep.subr.bf16.mxu0 0
  %53 = vmatpush1.bf16.msra.mxu0 0
  %54 = vmatprep.subr.bf16.mxu0 0
  %55 = vmatpush1.bf16.msra.mxu0 0
  %56 = vmatprep.subr.bf16.mxu0 0
  %57 = vmatpush1.bf16.msra.mxu0 0
  %58 = vmatprep.subr.bf16.mxu0 0
  %59 = vmatpush1.bf16.msra.mxu0 0
  %60 = vmatprep.subr.bf16.mxu0 0
  %61 = vmatpush1.bf16.msra.mxu0 0
  %62 = vmatprep.subr.bf16.mxu0 0
  %63 = vmatpush1.bf16.msra.mxu0 0
  %64 = vmatprep.subr.bf16.mxu0 0
  %65 = vmatpush1.bf16.msra.mxu0 0
  %66 = vmatprep.subr.bf16.mxu0 0
  %67 = vmatpush1.bf16.msra.mxu0 0
  %68 = vmatprep.subr.bf16.mxu0 0
  %69 = vmatpush1.bf16.msra.mxu0 0
  %70 = vmatprep.subr.bf16.mxu0 0
  %71 = vmatpush1.bf16.msra.mxu0 0
  %72 = vmatprep.subr.bf16.mxu0 0
  %73 = vmatpush1.bf16.msra.mxu0 0
  %74 = vmatprep.subr.bf16.mxu0 0
  %75 = vmatpush1.bf16.msra.mxu0 0
  %76 = vmatprep.subr.bf16.mxu0 0
  %77 = vmatpush1.bf16.msra.mxu0 0
  %78 = vmatprep.subr.bf16.mxu0 0
  %79 = vmatpush1.bf16.msra.mxu0 0
  %80 = vmatprep.mubr.bf16.mxu0 0
  %81 = vmatmul.mubr.bf16.gmra.mrb[0].mxu0 %v46
  %v82 = vpop.f32.mrb[0].mxu0
  %v83 = vadd.f32 0.0, %v82
  %v84 = vpop.f32.mrb[0].mxu0
  %v85 = vpop.f32.mrb[0].mxu0
  %v86 = vpop.f32.mrb[0].mxu0
  %87 = vdwg.mxu0
  %v88 = vadd.f32 %v27, %v83
  %89 = vst [vmem:[#allocation2] sm:$0xff] %v88
  // Predicated region
  $region26: #{densenet_forward.59} parent=0 // pred_check
    %p90 = pneg %p21
  $region27: #{densenet_forward.59} parent=0 // pred_check_branch
    %92 = sbr.rel (%p90) target = $region29
  $region28: #{densenet_forward.59} parent=0 // pred_region
    %v93 = vld [vmem:[#allocation2] sm:$0xff]
    %v94 = vld [vmem:[%s4] sm:$0x1]
    %v96 = vlaneseq
    %v97 = vshrl.u32 %v96, 7
    %v98 = vsub.s32 0, %v97
    %v99 = vrot.slane %v94, %v98
    %v101 = vadd.f32 %v93, %v99
    %102 = vst [vmem:[%s5] sm:$0xff] %v101
  $region29: #{densenet_forward.59} parent=0 // pred_fallthru
    _
  // Predicated region
  $region30: #{densenet_forward.59} parent=0 // pred_check
    _
  $region31: #{densenet_forward.59} parent=0 // pred_check_branch
    %104 = sbr.rel (0) target = $region33
  $region32: #{densenet_forward.59} parent=0 // pred_region
    _
  $region33: #{densenet_forward.59} parent=0 // pred_fallthru
    _
  // Predicated region
  $region34: #{densenet_forward.59} parent=0 // pred_check
    _
  $region35: #{densenet_forward.59} parent=0 // pred_check_branch
    %106 = sbr.rel (0) target = $region37
  $region36: #{densenet_forward.59} parent=0 // pred_region
    _
  $region37: #{densenet_forward.59} parent=0 // pred_fallthru
    _

</llo_original>
